<compile_context>
chip_gen: v6e
topology: v6e:2x2x1
jax: 0.10.0
libtpu: 0.0.40
codegen_flags: <defaults>
</compile_context>

<pallas_src>
import math
import functools

import jax
import jax.numpy as jnp
from jax import lax
from jax.experimental import pallas as pl
from jax.experimental.pallas import tpu as pltpu

TRANS_DIM = 192                 # trans_dim default
IMG = 256                       # ViT image_size
PATCH = 32                      # ViT patch_size
NPS = IMG // PATCH              # 8 patches per side -> 64 tokens
H_UP = 2 * NPS                  # 16: spatial side after 2x upsample
HW = H_UP * H_UP                # 256 spatial positions
D_PAD = 256                     # trans_dim padded 192 -> 256 (lane-dense)
C_PAD = 128                     # conv channels padded 96 -> 128 (lane-dense)
C_OUT = TRANS_DIM // 2          # 96 real DoubleConv output channels
PATCH_DIM = 3 * PATCH * PATCH   # 3072


# ----------------------------------------------------------------------------
# Fused Pallas kernel: patch-embed -> upsample -> conv/BN/ReLU x2
# ----------------------------------------------------------------------------

def _im2col_3x3(x, m_lo, m_hi):
    """3x3 (pad=1) im2col built fully in-kernel.

    x: (HW, C) fp32, rows flattened as o = oh*16 + ow.
    m_lo / m_hi: (HW, 1) fp32 masks zeroing rows with ow == 0 / ow == 15.
    Returns (HW, 9*C) bf16; tap order t = kw*3 + kh (matches _fold_conv).

    W-direction taps come from pltpu.roll along sublanes (+1 / -1 flat rows)
    with boundary masking; H-direction taps are (8,128)-tile-aligned 16-row
    slice/concat shifts.
    """
    c = x.shape[1]
    left = (pltpu.roll(x, shift=1, axis=0) * m_lo).astype(jnp.bfloat16)       # kw=0
    mid = x.astype(jnp.bfloat16)                                              # kw=1
    right = (pltpu.roll(x, shift=HW - 1, axis=0) * m_hi).astype(jnp.bfloat16)  # kw=2
    zrow = jnp.zeros((H_UP, c), jnp.bfloat16)
    cols = []
    for xd in (left, mid, right):                        # kw = 0, 1, 2
        cols.append(jnp.concatenate([zrow, xd[:HW - H_UP, :]], axis=0))  # kh=0
        cols.append(xd)                                                  # kh=1
        cols.append(jnp.concatenate([xd[H_UP:, :], zrow], axis=0))       # kh=2
    return jnp.concatenate(cols, axis=1)                 # (HW, 9*C)


def _fused_forward_kernel(patches_ref, vit_w_ref, vit_b_ref, up_ref,
                          w1_ref, sb1_ref, w2_ref, sb2_ref, out_ref):
    # 1) ViT stand-in: patch embedding (bf16 MXU operands, fp32 accumulate).
    tok = jnp.dot(patches_ref[...], vit_w_ref[...],
                  preferred_element_type=jnp.float32) + vit_b_ref[...]
    # tok: (64, 256) fp32; channels 192..255 are exactly zero.

    # 2) Bilinear 2x upsample (align_corners=True): one (256,64)x(64,256) matmul.
    up = jnp.dot(up_ref[...], tok, preferred_element_type=jnp.float32)
    # up: (256, 256) fp32, spatial flattened o = oh*16 + ow, channels in lanes.

    # W-boundary masks shared by both convs (zero the wrapped roll rows).
    ow = lax.broadcasted_iota(jnp.int32, (HW, 1), 0) % H_UP
    m_lo = (ow != 0).astype(jnp.float32)
    m_hi = (ow != H_UP - 1).astype(jnp.float32)

    # 3) conv1 + BN + ReLU as ONE long-K matmul (M=256, K=9*256, N=128).
    col1 = _im2col_3x3(up, m_lo, m_hi)                            # (256, 2304)
    acc1 = jnp.dot(col1, w1_ref[...], preferred_element_type=jnp.float32)
    h = jnp.maximum(acc1 * sb1_ref[0:1, :] + sb1_ref[1:2, :], 0.0)  # (256, 128)

    # 4) conv2 + BN + ReLU (M=256, K=9*128, N=128).
    col2 = _im2col_3x3(h, m_lo, m_hi)                             # (256, 1152)
    acc2 = jnp.dot(col2, w2_ref[...], preferred_element_type=jnp.float32)
    y = jnp.maximum(acc2 * sb2_ref[0:1, :] + sb2_ref[1:2, :], 0.0)  # (256, 128)

    # 5) Emit NCHW: (C=96, H*W=256) -> lane-dense 256-wide stores.
    out_ref[...] = jnp.transpose(y)[:C_OUT, :]


def fused_up_doubleconv(patches, vit_w, vit_b, up_map, w1, sb1, w2, sb2):
    B = patches.shape[0]
    return pl.pallas_call(
        _fused_forward_kernel,
        out_shape=jax.ShapeDtypeStruct((B, C_OUT, HW), jnp.float32),
        grid=(B,),
        in_specs=[
            pl.BlockSpec((None, NPS * NPS, PATCH_DIM), lambda b: (b, 0, 0)),
            pl.BlockSpec((PATCH_DIM, D_PAD), lambda b: (0, 0)),
            pl.BlockSpec((1, D_PAD), lambda b: (0, 0)),
            pl.BlockSpec((HW, NPS * NPS), lambda b: (0, 0)),
            pl.BlockSpec((9 * D_PAD, C_PAD), lambda b: (0, 0)),
            pl.BlockSpec((2, C_PAD), lambda b: (0, 0)),
            pl.BlockSpec((9 * C_PAD, C_PAD), lambda b: (0, 0)),
            pl.BlockSpec((2, C_PAD), lambda b: (0, 0)),
        ],
        out_specs=pl.BlockSpec((None, C_OUT, HW), lambda b: (b, 0, 0)),
        compiler_params=pltpu.CompilerParams(
            dimension_semantics=("parallel",),
            vmem_limit_bytes=32 * 1024 * 1024),
    )(patches, vit_w, vit_b, up_map, w1, sb1, w2, sb2)


# ----------------------------------------------------------------------------
# Host-side constant folding (done ONCE, outside the jitted forward)
# ----------------------------------------------------------------------------

def _bilinear_matrix(n_in, n_out):
    """A[i, k] such that out[i] = sum_k A[i, k] * x[k]  (align_corners=True)."""
    i = jnp.arange(n_out, dtype=jnp.float32)
    src = i * (n_in - 1) / (n_out - 1)
    k0 = jnp.clip(jnp.floor(src), 0, n_in - 1).astype(jnp.int32)
    k1 = jnp.clip(k0 + 1, 0, n_in - 1)
    frac = src - k0.astype(jnp.float32)
    A = jnp.zeros((n_out, n_in), jnp.float32)
    A = A.at[jnp.arange(n_out), k0].add(1.0 - frac)
    A = A.at[jnp.arange(n_out), k1].add(frac)
    return A


def _upsample_matrix():
    """U (256, 64): up[oh*16+ow, c] = sum_{ih,iw} U[., ih*8+iw] * feat[ih*8+iw, c]."""
    A = _bilinear_matrix(NPS, H_UP)                       # (16, 8)
    return jnp.einsum('oi,pj->opij', A, A).reshape(HW, NPS * NPS)


def _fold_conv(w, cin_pad, cout_pad):
    """(Cout, Cin, 3, 3) torch conv weight -> (9*cin_pad, cout_pad) bf16.

    Tap ordering t = kw*3 + kh, matching _im2col_3x3."""
    cout, cin = w.shape[:2]
    wp = jnp.zeros((cout_pad, cin_pad, 3, 3), jnp.float32).at[:cout, :cin].set(w)
    blocks = [wp[:, :, kh, kw].T for kw in range(3) for kh in range(3)]
    return jnp.concatenate(blocks, axis=0).astype(jnp.bfloat16)


def _fold_bn(conv_b, gamma, beta, cout_pad, eps=1e-5):
    """conv bias + eval-mode BN (running mean 0 / var 1) -> packed (2, cout_pad)."""
    cout = conv_b.shape[0]
    scale = gamma / jnp.sqrt(1.0 + eps)
    bias = beta + conv_b * scale
    sb = jnp.zeros((2, cout_pad), jnp.float32)
    return sb.at[0, :cout].set(scale).at[1, :cout].set(bias)


def prepare_kernel_operands(params):
    d = TRANS_DIM
    vit_w = jnp.zeros((PATCH_DIM, D_PAD), jnp.float32)
    vit_w = vit_w.at[:, :d].set(params["vit_w"]).astype(jnp.bfloat16)
    vit_b = jnp.zeros((1, D_PAD), jnp.float32).at[0, :d].set(params["vit_b"])

    up_map = _upsample_matrix()                          # (256, 64) fp32

    w1 = _fold_conv(params["c1_w"], D_PAD, C_PAD)        # (2304, 128) bf16
    sb1 = _fold_bn(params["c1_b"], params["bn1_g"], params["bn1_b"], C_PAD)
    w2 = _fold_conv(params["c2_w"], C_PAD, C_PAD)        # (1152, 128) bf16
    sb2 = _fold_bn(params["c2_b"], params["bn2_g"], params["bn2_b"], C_PAD)

    return (vit_w, vit_b, up_map, w1, sb1, w2, sb2)


# ----------------------------------------------------------------------------
# Parameters (deterministic, synthetic)
# ----------------------------------------------------------------------------

def init_params(key):
    d = TRANS_DIM
    mid = d // 2          # DoubleConv mid_channels = in_channels // 2 = 96
    out_c = d // 2        # UP out_channels = trans_dim // 2 = 96
    ks = jax.random.split(key, 8)
    return {
        "vit_w": jax.random.normal(ks[0], (PATCH_DIM, d), jnp.float32) * 0.02,
        "vit_b": jax.random.normal(ks[1], (d,), jnp.float32) * 0.02,
        "c1_w": jax.random.normal(ks[2], (mid, d, 3, 3), jnp.float32) / math.sqrt(d * 9),
        "c1_b": jnp.zeros((mid,), jnp.float32),
        "bn1_g": 1.0 + 0.1 * jax.random.normal(ks[3], (mid,), jnp.float32),
        "bn1_b": 0.1 * jax.random.normal(ks[4], (mid,), jnp.float32),
        "c2_w": jax.random.normal(ks[5], (out_c, mid, 3, 3), jnp.float32) / math.sqrt(mid * 9),
        "c2_b": jnp.zeros((out_c,), jnp.float32),
        "bn2_g": 1.0 + 0.1 * jax.random.normal(ks[6], (out_c,), jnp.float32),
        "bn2_b": 0.1 * jax.random.normal(ks[7], (out_c,), jnp.float32),
    }


# ----------------------------------------------------------------------------
# Forward pass (mirrors trans_shufflenet.forward)
# ----------------------------------------------------------------------------

def trans_shufflenet_forward(x, ops):
    B, C, H, W = x.shape                      # (B, 3, 256, 256) NCHW

    # tmp = x.clone(); tmp.resize_(B, C, 64, 64)  (first B*C*64*64 elements)
    tmp = x.reshape(-1)[: B * C * 64 * 64].reshape(B, C, 64, 64)

    # --- x = self.Vit(x) ---
    # TODO(synk): the real ViT / Encoder (depth-12, ff_glu, residual_attn) is an
    # external dependency not among the provided classes; a deterministic
    # patch-embedding projection (fused into the Pallas kernel) stands in.
    patches = (x.reshape(B, C, NPS, PATCH, NPS, PATCH)
                 .transpose(0, 2, 4, 3, 5, 1)
                 .reshape(B, NPS * NPS, PATCH_DIM)
                 .astype(jnp.bfloat16))

    # Fused: patch-embed -> view(B,8,8,192).permute NCHW -> up1 (bilinear 2x +
    # DoubleConv) -> NCHW, all inside one pallas_call.
    out = fused_up_doubleconv(patches, *ops)          # (B, 96, 256)

    # x = x.view(B, 6, 64, 64); x = cat([x, tmp], dim=1)
    y = out.reshape(B, 6, 64, 64)
    fused = jnp.concatenate([y, tmp], axis=1)         # (B, 9, 64, 64)

    # TODO(synk): torchvision shufflenet_v2_x1_0 backbone is external and not
    # provided; returning the pre-backbone fused feature map.
    return fused


# ----------------------------------------------------------------------------

if __name__ == "__main__":
    key = jax.random.PRNGKey(0)
    kx, kp = jax.random.split(key)

    B = 2
    x = jax.random.normal(kx, (B, 3, IMG, IMG), jnp.float32)
    params = init_params(kp)

    # Constant folding runs exactly once (not inside the per-call forward).
    ops = jax.block_until_ready(prepare_kernel_operands(params))

    fwd = jax.jit(functools.partial(trans_shufflenet_forward, ops=ops))
    out = jax.block_until_ready(fwd(x))

    assert out.shape == (B, 9, 64, 64), out.shape
    assert jnp.isfinite(out).all()
    print("KERNEL_OK")
</pallas_src>

<mosaic_0001>
module attributes {stable_mosaic.version = 11 : i64} {
  func.func @_fused_forward_kernel(%arg0: i32, %arg1: memref<1x64x3072xbf16, #tpu.memory_space<vmem>>, %arg2: memref<3072x256xbf16, #tpu.memory_space<vmem>>, %arg3: memref<1x256xf32, #tpu.memory_space<vmem>>, %arg4: memref<256x64xf32, #tpu.memory_space<vmem>>, %arg5: memref<2304x128xbf16, #tpu.memory_space<vmem>>, %arg6: memref<2x128xf32, #tpu.memory_space<vmem>>, %arg7: memref<1152x128xbf16, #tpu.memory_space<vmem>>, %arg8: memref<2x128xf32, #tpu.memory_space<vmem>>, %arg9: memref<1x96x256xf32, #tpu.memory_space<vmem>>) attributes {dimension_semantics = [#tpu.dimension_semantics<parallel>], iteration_bounds = array<i64: 2>, scalar_prefetch = 0 : i64, scratch_operands = 0 : i64, tpu.core_type = #tpu.core_type<tc>, window_params = [{transform_indices = @transform_0, window_bounds = array<i64: 1, 64, 3072>}, {pipeline_mode = #tpu.pipeline_mode<synchronous>, transform_indices = @transform_1, window_bounds = array<i64: 3072, 256>}, {pipeline_mode = #tpu.pipeline_mode<synchronous>, transform_indices = @transform_2, window_bounds = array<i64: 1, 256>}, {pipeline_mode = #tpu.pipeline_mode<synchronous>, transform_indices = @transform_3, window_bounds = array<i64: 256, 64>}, {pipeline_mode = #tpu.pipeline_mode<synchronous>, transform_indices = @transform_4, window_bounds = array<i64: 2304, 128>}, {pipeline_mode = #tpu.pipeline_mode<synchronous>, transform_indices = @transform_5, window_bounds = array<i64: 2, 128>}, {pipeline_mode = #tpu.pipeline_mode<synchronous>, transform_indices = @transform_6, window_bounds = array<i64: 1152, 128>}, {pipeline_mode = #tpu.pipeline_mode<synchronous>, transform_indices = @transform_7, window_bounds = array<i64: 2, 128>}, {transform_indices = @transform_8, window_bounds = array<i64: 1, 96, 256>}]} {
    %c0 = arith.constant 0 : index
    %c0_0 = arith.constant 0 : index
    %c0_1 = arith.constant 0 : index
    %0 = vector.load %arg1[%c0, %c0_0, %c0_1] : memref<1x64x3072xbf16, #tpu.memory_space<vmem>>, vector<1x64x3072xbf16>
    %1 = vector.shape_cast %0 : vector<1x64x3072xbf16> to vector<64x3072xbf16>
    %c0_2 = arith.constant 0 : index
    %c0_3 = arith.constant 0 : index
    %2 = vector.load %arg2[%c0_2, %c0_3] : memref<3072x256xbf16, #tpu.memory_space<vmem>>, vector<3072x256xbf16>
    %cst = arith.constant dense<0.000000e+00> : vector<64x256xf32>
    %3 = tpu.matmul %1, %2, %cst {dimension_numbers = #tpu.dot_dimension_numbers<[1], [0], [0], [1], [0, 0, 1, 1], [], []>} : vector<64x3072xbf16>, vector<3072x256xbf16>, vector<64x256xf32> -> vector<64x256xf32>
    %c0_4 = arith.constant 0 : index
    %c0_5 = arith.constant 0 : index
    %4 = vector.load %arg3[%c0_4, %c0_5] : memref<1x256xf32, #tpu.memory_space<vmem>>, vector<1x256xf32>
    %5 = vector.broadcast %4 : vector<1x256xf32> to vector<64x256xf32>
    %6 = arith.addf %3, %5 : vector<64x256xf32>
    %c0_6 = arith.constant 0 : index
    %c0_7 = arith.constant 0 : index
    %7 = vector.load %arg4[%c0_6, %c0_7] : memref<256x64xf32, #tpu.memory_space<vmem>>, vector<256x64xf32>
    %cst_8 = arith.constant dense<0.000000e+00> : vector<256x256xf32>
    %8 = tpu.matmul %7, %6, %cst_8 {dimension_numbers = #tpu.dot_dimension_numbers<[1], [0], [0], [1], [0, 0, 1, 1], [], []>} : vector<256x64xf32>, vector<64x256xf32>, vector<256x256xf32> -> vector<256x256xf32>
    %9 = tpu.iota {dimensions = array<i32: 0>} : vector<256x1xi32>
    %c16_i32 = arith.constant 16 : i32
    %c0_i32 = arith.constant 0 : i32
    %10 = arith.cmpi eq, %c16_i32, %c0_i32 : i32
    %c1_i32 = arith.constant 1 : i32
    %11 = arith.select %10, %c1_i32, %c16_i32 : i32
    %12 = vector.broadcast %11 : i32 to vector<256x1xi32>
    %13 = arith.remsi %9, %12 : vector<256x1xi32>
    %c0_i32_9 = arith.constant 0 : i32
    %14 = vector.broadcast %c0_i32_9 : i32 to vector<256x1xi32>
    %15 = arith.cmpi ne, %13, %14 : vector<256x1xi32>
    %c0_i32_10 = arith.constant 0 : i32
    %16 = vector.broadcast %c0_i32_10 : i32 to vector<256x1xi32>
    %17 = arith.cmpi slt, %13, %16 : vector<256x1xi32>
    %c0_i32_11 = arith.constant 0 : i32
    %18 = arith.cmpi slt, %11, %c0_i32_11 : i32
    %19 = vector.broadcast %18 : i1 to vector<256x1xi1>
    %20 = vector.broadcast %19 : vector<256x1xi1> to vector<256x1xi1>
    %21 = arith.xori %17, %20 : vector<256x1xi1>
    %22 = arith.andi %21, %15 : vector<256x1xi1>
    %23 = vector.broadcast %11 : i32 to vector<256x1xi32>
    %24 = arith.addi %13, %23 : vector<256x1xi32>
    %25 = arith.select %22, %24, %13 : vector<256x1xi1>, vector<256x1xi32>
    %c0_i32_12 = arith.constant 0 : i32
    %26 = vector.broadcast %c0_i32_12 : i32 to vector<256x1xi32>
    %27 = arith.cmpi ne, %25, %26 : vector<256x1xi32>
    %28 = arith.extui %27 : vector<256x1xi1> to vector<256x1xi32>
    %29 = arith.sitofp %28 : vector<256x1xi32> to vector<256x1xf32>
    %c15_i32 = arith.constant 15 : i32
    %30 = vector.broadcast %c15_i32 : i32 to vector<256x1xi32>
    %31 = arith.cmpi ne, %25, %30 : vector<256x1xi32>
    %32 = arith.extui %31 : vector<256x1xi1> to vector<256x1xi32>
    %33 = arith.sitofp %32 : vector<256x1xi32> to vector<256x1xf32>
    %c1_i32_13 = arith.constant 1 : i32
    %34 = tpu.dynamic_rotate %8 by %c1_i32_13 dim 0 : vector<256x256xf32>, i32 -> vector<256x256xf32>
    %35 = vector.broadcast %29 : vector<256x1xf32> to vector<256x256xf32>
    %36 = arith.mulf %34, %35 : vector<256x256xf32>
    %37 = arith.truncf %36 : vector<256x256xf32> to vector<256x256xbf16>
    %38 = arith.truncf %8 : vector<256x256xf32> to vector<256x256xbf16>
    %c255_i32 = arith.constant 255 : i32
    %39 = tpu.dynamic_rotate %8 by %c255_i32 dim 0 : vector<256x256xf32>, i32 -> vector<256x256xf32>
    %40 = vector.broadcast %33 : vector<256x1xf32> to vector<256x256xf32>
    %41 = arith.mulf %39, %40 : vector<256x256xf32>
    %42 = arith.truncf %41 : vector<256x256xf32> to vector<256x256xbf16>
    %cst_14 = arith.constant 0.000000e+00 : bf16
    %43 = vector.broadcast %cst_14 : bf16 to vector<16x256xbf16>
    %44 = vector.extract_strided_slice %37 {offsets = [0, 0], sizes = [240, 256], strides = [1, 1]} : vector<256x256xbf16> to vector<240x256xbf16>
    %45 = tpu.concatenate %43, %44 in 0 : vector<16x256xbf16>, vector<240x256xbf16> -> vector<256x256xbf16>
    %46 = vector.extract_strided_slice %37 {offsets = [16, 0], sizes = [240, 256], strides = [1, 1]} : vector<256x256xbf16> to vector<240x256xbf16>
    %47 = tpu.concatenate %46, %43 in 0 : vector<240x256xbf16>, vector<16x256xbf16> -> vector<256x256xbf16>
    %48 = vector.extract_strided_slice %38 {offsets = [0, 0], sizes = [240, 256], strides = [1, 1]} : vector<256x256xbf16> to vector<240x256xbf16>
    %49 = tpu.concatenate %43, %48 in 0 : vector<16x256xbf16>, vector<240x256xbf16> -> vector<256x256xbf16>
    %50 = vector.extract_strided_slice %38 {offsets = [16, 0], sizes = [240, 256], strides = [1, 1]} : vector<256x256xbf16> to vector<240x256xbf16>
    %51 = tpu.concatenate %50, %43 in 0 : vector<240x256xbf16>, vector<16x256xbf16> -> vector<256x256xbf16>
    %52 = vector.extract_strided_slice %42 {offsets = [0, 0], sizes = [240, 256], strides = [1, 1]} : vector<256x256xbf16> to vector<240x256xbf16>
    %53 = tpu.concatenate %43, %52 in 0 : vector<16x256xbf16>, vector<240x256xbf16> -> vector<256x256xbf16>
    %54 = vector.extract_strided_slice %42 {offsets = [16, 0], sizes = [240, 256], strides = [1, 1]} : vector<256x256xbf16> to vector<240x256xbf16>
    %55 = tpu.concatenate %54, %43 in 0 : vector<240x256xbf16>, vector<16x256xbf16> -> vector<256x256xbf16>
    %56 = tpu.concatenate %45, %37, %47, %49, %38, %51, %53, %42, %55 in 1 : vector<256x256xbf16>, vector<256x256xbf16>, vector<256x256xbf16>, vector<256x256xbf16>, vector<256x256xbf16>, vector<256x256xbf16>, vector<256x256xbf16>, vector<256x256xbf16>, vector<256x256xbf16> -> vector<256x2304xbf16>
    %c0_15 = arith.constant 0 : index
    %c0_16 = arith.constant 0 : index
    %57 = vector.load %arg5[%c0_15, %c0_16] : memref<2304x128xbf16, #tpu.memory_space<vmem>>, vector<2304x128xbf16>
    %cst_17 = arith.constant dense<0.000000e+00> : vector<256x128xf32>
    %58 = tpu.matmul %56, %57, %cst_17 {dimension_numbers = #tpu.dot_dimension_numbers<[1], [0], [0], [1], [0, 0, 1, 1], [], []>} : vector<256x2304xbf16>, vector<2304x128xbf16>, vector<256x128xf32> -> vector<256x128xf32>
    %c0_18 = arith.constant 0 : index
    %c0_19 = arith.constant 0 : index
    %59 = vector.load %arg6[%c0_18, %c0_19] : memref<2x128xf32, #tpu.memory_space<vmem>>, vector<1x128xf32>
    %60 = vector.broadcast %59 : vector<1x128xf32> to vector<256x128xf32>
    %61 = arith.mulf %58, %60 : vector<256x128xf32>
    %c1 = arith.constant 1 : index
    %c0_20 = arith.constant 0 : index
    %62 = vector.load %arg6[%c1, %c0_20] : memref<2x128xf32, #tpu.memory_space<vmem>>, vector<1x128xf32>
    %63 = vector.broadcast %62 : vector<1x128xf32> to vector<256x128xf32>
    %64 = arith.addf %61, %63 : vector<256x128xf32>
    %cst_21 = arith.constant 0.000000e+00 : f32
    %65 = vector.broadcast %cst_21 : f32 to vector<256x128xf32>
    %66 = arith.maximumf %64, %65 : vector<256x128xf32>
    %c1_i32_22 = arith.constant 1 : i32
    %67 = tpu.dynamic_rotate %66 by %c1_i32_22 dim 0 : vector<256x128xf32>, i32 -> vector<256x128xf32>
    %68 = vector.broadcast %29 : vector<256x1xf32> to vector<256x128xf32>
    %69 = arith.mulf %67, %68 : vector<256x128xf32>
    %70 = arith.truncf %69 : vector<256x128xf32> to vector<256x128xbf16>
    %71 = arith.truncf %66 : vector<256x128xf32> to vector<256x128xbf16>
    %c255_i32_23 = arith.constant 255 : i32
    %72 = tpu.dynamic_rotate %66 by %c255_i32_23 dim 0 : vector<256x128xf32>, i32 -> vector<256x128xf32>
    %73 = vector.broadcast %33 : vector<256x1xf32> to vector<256x128xf32>
    %74 = arith.mulf %72, %73 : vector<256x128xf32>
    %75 = arith.truncf %74 : vector<256x128xf32> to vector<256x128xbf16>
    %cst_24 = arith.constant 0.000000e+00 : bf16
    %76 = vector.broadcast %cst_24 : bf16 to vector<16x128xbf16>
    %77 = vector.extract_strided_slice %70 {offsets = [0, 0], sizes = [240, 128], strides = [1, 1]} : vector<256x128xbf16> to vector<240x128xbf16>
    %78 = tpu.concatenate %76, %77 in 0 : vector<16x128xbf16>, vector<240x128xbf16> -> vector<256x128xbf16>
    %79 = vector.extract_strided_slice %70 {offsets = [16, 0], sizes = [240, 128], strides = [1, 1]} : vector<256x128xbf16> to vector<240x128xbf16>
    %80 = tpu.concatenate %79, %76 in 0 : vector<240x128xbf16>, vector<16x128xbf16> -> vector<256x128xbf16>
    %81 = vector.extract_strided_slice %71 {offsets = [0, 0], sizes = [240, 128], strides = [1, 1]} : vector<256x128xbf16> to vector<240x128xbf16>
    %82 = tpu.concatenate %76, %81 in 0 : vector<16x128xbf16>, vector<240x128xbf16> -> vector<256x128xbf16>
    %83 = vector.extract_strided_slice %71 {offsets = [16, 0], sizes = [240, 128], strides = [1, 1]} : vector<256x128xbf16> to vector<240x128xbf16>
    %84 = tpu.concatenate %83, %76 in 0 : vector<240x128xbf16>, vector<16x128xbf16> -> vector<256x128xbf16>
    %85 = vector.extract_strided_slice %75 {offsets = [0, 0], sizes = [240, 128], strides = [1, 1]} : vector<256x128xbf16> to vector<240x128xbf16>
    %86 = tpu.concatenate %76, %85 in 0 : vector<16x128xbf16>, vector<240x128xbf16> -> vector<256x128xbf16>
    %87 = vector.extract_strided_slice %75 {offsets = [16, 0], sizes = [240, 128], strides = [1, 1]} : vector<256x128xbf16> to vector<240x128xbf16>
    %88 = tpu.concatenate %87, %76 in 0 : vector<240x128xbf16>, vector<16x128xbf16> -> vector<256x128xbf16>
    %89 = tpu.concatenate %78, %70, %80, %82, %71, %84, %86, %75, %88 in 1 : vector<256x128xbf16>, vector<256x128xbf16>, vector<256x128xbf16>, vector<256x128xbf16>, vector<256x128xbf16>, vector<256x128xbf16>, vector<256x128xbf16>, vector<256x128xbf16>, vector<256x128xbf16> -> vector<256x1152xbf16>
    %c0_25 = arith.constant 0 : index
    %c0_26 = arith.constant 0 : index
    %90 = vector.load %arg7[%c0_25, %c0_26] : memref<1152x128xbf16, #tpu.memory_space<vmem>>, vector<1152x128xbf16>
    %cst_27 = arith.constant dense<0.000000e+00> : vector<256x128xf32>
    %91 = tpu.matmul %89, %90, %cst_27 {dimension_numbers = #tpu.dot_dimension_numbers<[1], [0], [0], [1], [0, 0, 1, 1], [], []>} : vector<256x1152xbf16>, vector<1152x128xbf16>, vector<256x128xf32> -> vector<256x128xf32>
    %c0_28 = arith.constant 0 : index
    %c0_29 = arith.constant 0 : index
    %92 = vector.load %arg8[%c0_28, %c0_29] : memref<2x128xf32, #tpu.memory_space<vmem>>, vector<1x128xf32>
    %93 = vector.broadcast %92 : vector<1x128xf32> to vector<256x128xf32>
    %94 = arith.mulf %91, %93 : vector<256x128xf32>
    %c1_30 = arith.constant 1 : index
    %c0_31 = arith.constant 0 : index
    %95 = vector.load %arg8[%c1_30, %c0_31] : memref<2x128xf32, #tpu.memory_space<vmem>>, vector<1x128xf32>
    %96 = vector.broadcast %95 : vector<1x128xf32> to vector<256x128xf32>
    %97 = arith.addf %94, %96 : vector<256x128xf32>
    %cst_32 = arith.constant 0.000000e+00 : f32
    %98 = vector.broadcast %cst_32 : f32 to vector<256x128xf32>
    %99 = arith.maximumf %97, %98 : vector<256x128xf32>
    %100 = tpu.transpose %99, [1, 0] : vector<256x128xf32> -> vector<128x256xf32>
    %101 = vector.extract_strided_slice %100 {offsets = [0, 0], sizes = [96, 256], strides = [1, 1]} : vector<128x256xf32> to vector<96x256xf32>
    %c0_33 = arith.constant 0 : index
    %c0_34 = arith.constant 0 : index
    %c0_35 = arith.constant 0 : index
    %102 = vector.load %arg9[%c0_33, %c0_34, %c0_35] : memref<1x96x256xf32, #tpu.memory_space<vmem>>, vector<1x96x256xf32>
    %103 = vector.shape_cast %102 : vector<1x96x256xf32> to vector<96x256xf32>
    %104 = vector.shape_cast %101 : vector<96x256xf32> to vector<1x96x256xf32>
    tpu.vector_store %arg9[%c0_33, %c0_34, %c0_35], %104 {strides = array<i32>} : memref<1x96x256xf32, #tpu.memory_space<vmem>>, vector<1x96x256xf32>,
    return
  }
  func.func @transform_0(%arg0: i32) -> (i32, i32, i32) {
    %c0_i32 = arith.constant 0 : i32
    %c0_i32_0 = arith.constant 0 : i32
    %c0_i32_1 = arith.constant 0 : i32
    return %arg0, %c0_i32, %c0_i32_0 : i32, i32, i32
  }
  func.func @transform_1(%arg0: i32) -> (i32, i32) {
    %c0_i32 = arith.constant 0 : i32
    %c0_i32_0 = arith.constant 0 : i32
    %c0_i32_1 = arith.constant 0 : i32
    return %c0_i32, %c0_i32_0 : i32, i32
  }
  func.func @transform_2(%arg0: i32) -> (i32, i32) {
    %c0_i32 = arith.constant 0 : i32
    %c0_i32_0 = arith.constant 0 : i32
    %c0_i32_1 = arith.constant 0 : i32
    return %c0_i32, %c0_i32_0 : i32, i32
  }
  func.func @transform_3(%arg0: i32) -> (i32, i32) {
    %c0_i32 = arith.constant 0 : i32
    %c0_i32_0 = arith.constant 0 : i32
    %c0_i32_1 = arith.constant 0 : i32
    return %c0_i32, %c0_i32_0 : i32, i32
  }
  func.func @transform_4(%arg0: i32) -> (i32, i32) {
    %c0_i32 = arith.constant 0 : i32
    %c0_i32_0 = arith.constant 0 : i32
    %c0_i32_1 = arith.constant 0 : i32
    return %c0_i32, %c0_i32_0 : i32, i32
  }
  func.func @transform_5(%arg0: i32) -> (i32, i32) {
    %c0_i32 = arith.constant 0 : i32
    %c0_i32_0 = arith.constant 0 : i32
    %c0_i32_1 = arith.constant 0 : i32
    return %c0_i32, %c0_i32_0 : i32, i32
  }
  func.func @transform_6(%arg0: i32) -> (i32, i32) {
    %c0_i32 = arith.constant 0 : i32
    %c0_i32_0 = arith.constant 0 : i32
    %c0_i32_1 = arith.constant 0 : i32
    return %c0_i32, %c0_i32_0 : i32, i32
  }
  func.func @transform_7(%arg0: i32) -> (i32, i32) {
    %c0_i32 = arith.constant 0 : i32
    %c0_i32_0 = arith.constant 0 : i32
    %c0_i32_1 = arith.constant 0 : i32
    return %c0_i32, %c0_i32_0 : i32, i32
  }
  func.func @transform_8(%arg0: i32) -> (i32, i32, i32) {
    %c0_i32 = arith.constant 0 : i32
    %c0_i32_0 = arith.constant 0 : i32
    %c0_i32_1 = arith.constant 0 : i32
    return %arg0, %c0_i32, %c0_i32_0 : i32, i32, i32
  }
}

</mosaic_0001>

<llo_original>
// kernel: trans_shufflenet_forward.1
$region0: #{trans_shufflenet_forward.1}
  #allocation0 [shape = 'u32[]', space=smem, size = 0x4, offset = 0x4, fixed_abs, tag = 'smem constant byte address 0x4 - core index']
  #allocation1 [shape = 'u32[144,128]{1,0:T(1,128)}', space=vmem, size = 0x12000, scoped, tag = 'internal scratch']
  %s0 = inlined_call_operand.vmem [shape: bf16[2,64,3072], index: 0, kind: input, shape index: {}]
  %s1 = inlined_call_operand.vmem [shape: bf16[3072,256], index: 1, kind: input, shape index: {}]
  %s2 = inlined_call_operand.vmem [shape: f32[1,256], index: 2, kind: input, shape index: {}]
  %s3 = inlined_call_operand.vmem [shape: f32[256,64], index: 3, kind: input, shape index: {}]
  %s4 = inlined_call_operand.vmem [shape: bf16[2304,128], index: 4, kind: input, shape index: {}]
  %s5 = inlined_call_operand.vmem [shape: f32[2,128], index: 5, kind: input, shape index: {}]
  %s6 = inlined_call_operand.vmem [shape: bf16[1152,128], index: 6, kind: input, shape index: {}]
  %s7 = inlined_call_operand.vmem [shape: f32[2,128], index: 7, kind: input, shape index: {}]
  %s8 = inlined_call_operand.vmem [shape: f32[2,96,256], index: 8, kind: output, shape index: {}]
  %s9 = sld [smem:[#allocation0]]
  $region65: #{trans_shufflenet_forward.1} parent=0
    _
  %s11 = ssub.s32 1, %s9
  %s12 = scalar_select 0, %s11, %s9
  loop: start=0, step=1, limit=4
  $region2: #{trans_shufflenet_forward.1} parent=0 // loop_pre_header
    _
  $region3: #{trans_shufflenet_forward.1} parent=0 // loop_header
    %s14 = sphi 0, %s18
    %p15 = scmp.ge.s32.totalorder %s14, 4
    %s24 = sphi 0, %s26
    %s27 = sphi 0, %s24
    %s28 = sphi 0, %s27
    %s44 = sphi 0, %s28
    %s48 = sphi 0, %s48
    %s50 = sphi 0, %s48
    %s51 = sphi 0, %s50
    %s65 = sphi 0, %s51
    %s69 = sphi 0, %s69
    %s71 = sphi 0, %s69
    %s72 = sphi 0, %s71
    %s86 = sphi 0, %s72
    %s90 = sphi 0, %s90
    %s92 = sphi 0, %s90
    %s93 = sphi 0, %s92
    %s107 = sphi 0, %s93
    %s111 = sphi 0, %s111
    %s113 = sphi 0, %s111
    %s114 = sphi 0, %s113
    %s128 = sphi 0, %s114
    %s132 = sphi 0, %s132
    %s134 = sphi 0, %s132
    %s135 = sphi 0, %s134
    %s149 = sphi 0, %s135
    %s153 = sphi 0, %s153
    %s155 = sphi 0, %s153
    %s156 = sphi 0, %s155
    %s170 = sphi 0, %s156
    %s174 = sphi 0, %s174
    %s176 = sphi 0, %s174
    %s177 = sphi 0, %s176
    %s191 = sphi 0, %s177
    %s197 = sphi 0, %s199
    %s200 = sphi 0, %s197
    %s201 = sphi 0, %s200
    %s217 = sphi 0, %s201
  $region4: #{trans_shufflenet_forward.1} parent=0 // loop_header_branch
    %17 = sbr.rel (%p15) target = $region8
  $region5: #{trans_shufflenet_forward.1} parent=0 // loop_body
    %s19 = ssub.s32 %s14, 1
    %s20 = ssub.s32 %s14, 2
    %s21 = sadd.s32 %s14, 1
    %s22 = ssub.s32 %s14, %s21
    %p23 = scmp.eq.s32.totalorder %s22, 0
    %s25 = sadd.s32 %s24, 1
    %s26 = scalar_select %p23, %s24, %s25
    %p29 = pneg %p23
    %p30 = scmp.eq.s32.totalorder %s14, 1
    %p31 = por %p29, %p30
    %p32 = scmp.ne.s32.totalorder %s24, %s27
    %p33 = scmp.eq.s32.totalorder %s14, 0
    %p34 = por %p32, %p33
    %p35 = scmp.ne.s32.totalorder %s24, %s27
    %p36 = scmp.eq.s32.totalorder %s19, 1
    %p37 = por %p35, %p36
    %p38 = scmp.ne.s32.totalorder %s27, %s28
    %p39 = scmp.eq.s32.totalorder %s19, 0
    %p40 = por %p38, %p39
    %p41 = scmp.ne.s32.totalorder %s27, %s28
    %p42 = scmp.eq.s32.totalorder %s20, 1
    %p43 = por %p41, %p42
    %p45 = scmp.ne.s32.totalorder %s28, %s44
    %p46 = scmp.eq.s32.totalorder %s20, 0
    %p47 = por %p45, %p46
    %s49 = sadd.s32 %s48, 1
    %p52 = scmp.eq.s32.totalorder %s14, 1
    %p53 = scmp.ne.s32.totalorder %s48, %s50
    %p54 = scmp.eq.s32.totalorder %s14, 0
    %p55 = por %p53, %p54
    %p56 = scmp.ne.s32.totalorder %s48, %s50
    %p57 = scmp.eq.s32.totalorder %s19, 1
    %p58 = por %p56, %p57
    %p59 = scmp.ne.s32.totalorder %s50, %s51
    %p60 = scmp.eq.s32.totalorder %s19, 0
    %p61 = por %p59, %p60
    %p62 = scmp.ne.s32.totalorder %s50, %s51
    %p63 = scmp.eq.s32.totalorder %s20, 1
    %p64 = por %p62, %p63
    %p66 = scmp.ne.s32.totalorder %s51, %s65
    %p67 = scmp.eq.s32.totalorder %s20, 0
    %p68 = por %p66, %p67
    %s70 = sadd.s32 %s69, 1
    %p73 = scmp.eq.s32.totalorder %s14, 1
    %p74 = scmp.ne.s32.totalorder %s69, %s71
    %p75 = scmp.eq.s32.totalorder %s14, 0
    %p76 = por %p74, %p75
    %p77 = scmp.ne.s32.totalorder %s69, %s71
    %p78 = scmp.eq.s32.totalorder %s19, 1
    %p79 = por %p77, %p78
    %p80 = scmp.ne.s32.totalorder %s71, %s72
    %p81 = scmp.eq.s32.totalorder %s19, 0
    %p82 = por %p80, %p81
    %p83 = scmp.ne.s32.totalorder %s71, %s72
    %p84 = scmp.eq.s32.totalorder %s20, 1
    %p85 = por %p83, %p84
    %p87 = scmp.ne.s32.totalorder %s72, %s86
    %p88 = scmp.eq.s32.totalorder %s20, 0
    %p89 = por %p87, %p88
    %s91 = sadd.s32 %s90, 1
    %p94 = scmp.eq.s32.totalorder %s14, 1
    %p95 = scmp.ne.s32.totalorder %s90, %s92
    %p96 = scmp.eq.s32.totalorder %s14, 0
    %p97 = por %p95, %p96
    %p98 = scmp.ne.s32.totalorder %s90, %s92
    %p99 = scmp.eq.s32.totalorder %s19, 1
    %p100 = por %p98, %p99
    %p101 = scmp.ne.s32.totalorder %s92, %s93
    %p102 = scmp.eq.s32.totalorder %s19, 0
    %p103 = por %p101, %p102
    %p104 = scmp.ne.s32.totalorder %s92, %s93
    %p105 = scmp.eq.s32.totalorder %s20, 1
    %p106 = por %p104, %p105
    %p108 = scmp.ne.s32.totalorder %s93, %s107
    %p109 = scmp.eq.s32.totalorder %s20, 0
    %p110 = por %p108, %p109
    %s112 = sadd.s32 %s111, 1
    %p115 = scmp.eq.s32.totalorder %s14, 1
    %p116 = scmp.ne.s32.totalorder %s111, %s113
    %p117 = scmp.eq.s32.totalorder %s14, 0
    %p118 = por %p116, %p117
    %p119 = scmp.ne.s32.totalorder %s111, %s113
    %p120 = scmp.eq.s32.totalorder %s19, 1
    %p121 = por %p119, %p120
    %p122 = scmp.ne.s32.totalorder %s113, %s114
    %p123 = scmp.eq.s32.totalorder %s19, 0
    %p124 = por %p122, %p123
    %p125 = scmp.ne.s32.totalorder %s113, %s114
    %p126 = scmp.eq.s32.totalorder %s20, 1
    %p127 = por %p125, %p126
    %p129 = scmp.ne.s32.totalorder %s114, %s128
    %p130 = scmp.eq.s32.totalorder %s20, 0
    %p131 = por %p129, %p130
    %s133 = sadd.s32 %s132, 1
    %p136 = scmp.eq.s32.totalorder %s14, 1
    %p137 = scmp.ne.s32.totalorder %s132, %s134
    %p138 = scmp.eq.s32.totalorder %s14, 0
    %p139 = por %p137, %p138
    %p140 = scmp.ne.s32.totalorder %s132, %s134
    %p141 = scmp.eq.s32.totalorder %s19, 1
    %p142 = por %p140, %p141
    %p143 = scmp.ne.s32.totalorder %s134, %s135
    %p144 = scmp.eq.s32.totalorder %s19, 0
    %p145 = por %p143, %p144
    %p146 = scmp.ne.s32.totalorder %s134, %s135
    %p147 = scmp.eq.s32.totalorder %s20, 1
    %p148 = por %p146, %p147
    %p150 = scmp.ne.s32.totalorder %s135, %s149
    %p151 = scmp.eq.s32.totalorder %s20, 0
    %p152 = por %p150, %p151
    %s154 = sadd.s32 %s153, 1
    %p157 = scmp.eq.s32.totalorder %s14, 1
    %p158 = scmp.ne.s32.totalorder %s153, %s155
    %p159 = scmp.eq.s32.totalorder %s14, 0
    %p160 = por %p158, %p159
    %p161 = scmp.ne.s32.totalorder %s153, %s155
    %p162 = scmp.eq.s32.totalorder %s19, 1
    %p163 = por %p161, %p162
    %p164 = scmp.ne.s32.totalorder %s155, %s156
    %p165 = scmp.eq.s32.totalorder %s19, 0
    %p166 = por %p164, %p165
    %p167 = scmp.ne.s32.totalorder %s155, %s156
    %p168 = scmp.eq.s32.totalorder %s20, 1
    %p169 = por %p167, %p168
    %p171 = scmp.ne.s32.totalorder %s156, %s170
    %p172 = scmp.eq.s32.totalorder %s20, 0
    %p173 = por %p171, %p172
    %s175 = sadd.s32 %s174, 1
    %p178 = scmp.eq.s32.totalorder %s14, 1
    %p179 = scmp.ne.s32.totalorder %s174, %s176
    %p180 = scmp.eq.s32.totalorder %s14, 0
    %p181 = por %p179, %p180
    %p182 = scmp.ne.s32.totalorder %s174, %s176
    %p183 = scmp.eq.s32.totalorder %s19, 1
    %p184 = por %p182, %p183
    %p185 = scmp.ne.s32.totalorder %s176, %s177
    %p186 = scmp.eq.s32.totalorder %s19, 0
    %p187 = por %p185, %p186
    %p188 = scmp.ne.s32.totalorder %s176, %s177
    %p189 = scmp.eq.s32.totalorder %s20, 1
    %p190 = por %p188, %p189
    %p192 = scmp.ne.s32.totalorder %s177, %s191
    %p193 = scmp.eq.s32.totalorder %s20, 0
    %p194 = por %p192, %p193
    %s195 = ssub.s32 %s14, %s21
    %p196 = scmp.eq.s32.totalorder %s195, 0
    %s198 = sadd.s32 %s197, 1
    %s199 = scalar_select %p196, %s197, %s198
    %p202 = pneg %p196
    %p203 = scmp.eq.s32.totalorder %s14, 1
    %p204 = por %p202, %p203
    %p205 = scmp.ne.s32.totalorder %s197, %s200
    %p206 = scmp.eq.s32.totalorder %s14, 0
    %p207 = por %p205, %p206
    %p208 = scmp.ne.s32.totalorder %s197, %s200
    %p209 = scmp.eq.s32.totalorder %s19, 1
    %p210 = por %p208, %p209
    %p211 = scmp.ne.s32.totalorder %s200, %s201
    %p212 = scmp.eq.s32.totalorder %s19, 0
    %p213 = por %p211, %p212
    %p214 = scmp.ne.s32.totalorder %s200, %s201
    %p215 = scmp.eq.s32.totalorder %s20, 1
    %p216 = por %p214, %p215
    %p218 = scmp.ne.s32.totalorder %s201, %s217
    %p219 = scmp.eq.s32.totalorder %s20, 0
    %p220 = por %p218, %p219
    %p221 = scmp.le.s32.totalorder 1, %s14
    %p222 = scmp.lt.s32.totalorder %s14, 3
    %p223 = pnand %p221, %p222
    %p224 = pneg %p223
    // Predicated region
    $region9: #{trans_shufflenet_forward.1} parent=5 // pred_check
      _
    $region10: #{trans_shufflenet_forward.1} parent=5 // pred_check_branch
      %226 = sbr.rel (%p223) target = $region12
    $region11: #{trans_shufflenet_forward.1} parent=5 // pred_region
      %s227 = ssub.s32 %s14, 1
      // Predicated region
      $region13: #{trans_shufflenet_forward.1} parent=11 // pred_check
        %p228 = pneg %p61
      $region14: #{trans_shufflenet_forward.1} parent=11 // pred_check_branch
        %230 = sbr.rel (%p228) target = $region16
      $region15: #{trans_shufflenet_forward.1} parent=11 // pred_region
        _
      $region16: #{trans_shufflenet_forward.1} parent=11 // pred_fallthru
        _
      // Predicated region
      $region17: #{trans_shufflenet_forward.1} parent=11 // pred_check
        %p231 = pneg %p82
      $region18: #{trans_shufflenet_forward.1} parent=11 // pred_check_branch
        %233 = sbr.rel (%p231) target = $region20
      $region19: #{trans_shufflenet_forward.1} parent=11 // pred_region
        _
      $region20: #{trans_shufflenet_forward.1} parent=11 // pred_fallthru
        _
      // Predicated region
      $region21: #{trans_shufflenet_forward.1} parent=11 // pred_check
        %p234 = pneg %p103
      $region22: #{trans_shufflenet_forward.1} parent=11 // pred_check_branch
        %236 = sbr.rel (%p234) target = $region24
      $region23: #{trans_shufflenet_forward.1} parent=11 // pred_region
        _
      $region24: #{trans_shufflenet_forward.1} parent=11 // pred_fallthru
        _
      // Predicated region
      $region25: #{trans_shufflenet_forward.1} parent=11 // pred_check
        %p237 = pneg %p124
      $region26: #{trans_shufflenet_forward.1} parent=11 // pred_check_branch
        %239 = sbr.rel (%p237) target = $region28
      $region27: #{trans_shufflenet_forward.1} parent=11 // pred_region
        _
      $region28: #{trans_shufflenet_forward.1} parent=11 // pred_fallthru
        _
      // Predicated region
      $region29: #{trans_shufflenet_forward.1} parent=11 // pred_check
        %p240 = pneg %p145
      $region30: #{trans_shufflenet_forward.1} parent=11 // pred_check_branch
        %242 = sbr.rel (%p240) target = $region32
      $region31: #{trans_shufflenet_forward.1} parent=11 // pred_region
        _
      $region32: #{trans_shufflenet_forward.1} parent=11 // pred_fallthru
        _
      // Predicated region
      $region33: #{trans_shufflenet_forward.1} parent=11 // pred_check
        %p243 = pneg %p166
      $region34: #{trans_shufflenet_forward.1} parent=11 // pred_check_branch
        %245 = sbr.rel (%p243) target = $region36
      $region35: #{trans_shufflenet_forward.1} parent=11 // pred_region
        _
      $region36: #{trans_shufflenet_forward.1} parent=11 // pred_fallthru
        _
      // Predicated region
      $region37: #{trans_shufflenet_forward.1} parent=11 // pred_check
        %p246 = pneg %p187
      $region38: #{trans_shufflenet_forward.1} parent=11 // pred_check_branch
        %248 = sbr.rel (%p246) target = $region40
      $region39: #{trans_shufflenet_forward.1} parent=11 // pred_region
        _
      $region40: #{trans_shufflenet_forward.1} parent=11 // pred_fallthru
        _
    $region12: #{trans_shufflenet_forward.1} parent=5 // pred_fallthru
      _
    %p249 = scmp.lt.s32.totalorder %s14, 2
    // Predicated region
    $region41: #{trans_shufflenet_forward.1} parent=5 // pred_check
      %p250 = pneg %p249
    $region42: #{trans_shufflenet_forward.1} parent=5 // pred_check_branch
      %252 = sbr.rel (%p250) target = $region44
    $region43: #{trans_shufflenet_forward.1} parent=5 // pred_region
      // Predicated region
      $region45: #{trans_shufflenet_forward.1} parent=43 // pred_check
        %p253 = pneg %p34
      $region46: #{trans_shufflenet_forward.1} parent=43 // pred_check_branch
        %255 = sbr.rel (%p253) target = $region48
      $region47: #{trans_shufflenet_forward.1} parent=43 // pred_region
        %p256 = scmp.lt.s32.totalorder %s14, 1
        %s257 = scalar_select %p256, %s14, 1
        %s258 = smul.addr %s257, 192
        %s259 = smul.addr %s258, 4
        %s260 = scalar_lea.vmem %s0, %s259
      $region48: #{trans_shufflenet_forward.1} parent=43 // pred_fallthru
        _
    $region44: #{trans_shufflenet_forward.1} parent=5 // pred_fallthru
      _
    %p261 = scmp.le.s32.totalorder 1, %s14
    %p262 = scmp.lt.s32.totalorder %s14, 3
    %p263 = pnand %p261, %p262
    %p264 = pneg %p263
    // Predicated region
    $region49: #{trans_shufflenet_forward.1} parent=5 // pred_check
      _
    $region50: #{trans_shufflenet_forward.1} parent=5 // pred_check_branch
      %266 = sbr.rel (%p263) target = $region52
    $region51: #{trans_shufflenet_forward.1} parent=5 // pred_region
      %s267 = ssub.s32 %s14, 1
      %p268 = scmp.lt.s32.totalorder %s19, 1
      %s269 = scalar_select %p268, %s19, 1
      %s270 = smul.addr %s269, 192
      %s271 = smul.addr %s270, 4
      %s272 = scalar_lea.vmem %s0, %s271
      %p273 = pneg %p40
      %p274 = pneg %p37
      %p275 = pneg %p61
      %p276 = pneg %p58
      %p277 = pneg %p82
      %p278 = pneg %p79
      %p279 = pneg %p103
      %p280 = pneg %p100
      %p281 = pneg %p124
      %p282 = pneg %p121
      %p283 = pneg %p145
      %p284 = pneg %p142
      %p285 = pneg %p166
      %p286 = pneg %p163
      %p287 = pneg %p187
      %p288 = pneg %p184
      %p289 = pneg %p213
      %p290 = pneg %p210
      %p291 = scmp.lt.s32.totalorder %s19, 1
      %s292 = scalar_select %p291, %s19, 1
      %s293 = smul.addr %s292, 24
      %s294 = smul.addr %s293, 8
      %s295 = scalar_lea.vmem %s8, %s294
      %p296 = scmp.lt.s32.totalorder %s19, 1
      %s297 = scalar_select %p296, %s19, 1
      %s298 = smul.addr %s297, 192
      %s299 = smul.addr %s298, 4
      %s300 = scalar_lea.vmem %s0, %s299
      %p301 = scmp.lt.s32.totalorder %s19, 1
      %s302 = scalar_select %p301, %s19, 1
      %s303 = smul.addr %s302, 24
      %s304 = smul.addr %s303, 8
      %s305 = scalar_lea.vmem %s8, %s304
      %v307 = vld [vmem:[%s300] sm:$0xff]
      %v308 = vld [vmem:[%s300 + $0x8] sm:$0xff]
      %v309 = vld [vmem:[%s300 + $0x10] sm:$0xff]
      %v310 = vld [vmem:[%s300 + $0x18] sm:$0xff]
      %v311 = vld [vmem:[%s300 + $0x20] sm:$0xff]
      %v312 = vld [vmem:[%s300 + $0x28] sm:$0xff]
      %v313 = vld [vmem:[%s300 + $0x30] sm:$0xff]
      %v314 = vld [vmem:[%s300 + $0x38] sm:$0xff]
      %v315 = vld [vmem:[%s300 + $0x40] sm:$0xff]
      %v316 = vld [vmem:[%s300 + $0x48] sm:$0xff]
      %v317 = vld [vmem:[%s300 + $0x50] sm:$0xff]
      %v318 = vld [vmem:[%s300 + $0x58] sm:$0xff]
      %v319 = vld [vmem:[%s300 + $0x60] sm:$0xff]
      %v320 = vld [vmem:[%s300 + $0x68] sm:$0xff]
      %v321 = vld [vmem:[%s300 + $0x70] sm:$0xff]
      %v322 = vld [vmem:[%s300 + $0x78] sm:$0xff]
      %v323 = vld [vmem:[%s300 + $0x80] sm:$0xff]
      %v324 = vld [vmem:[%s300 + $0x88] sm:$0xff]
      %v325 = vld [vmem:[%s300 + $0x90] sm:$0xff]
      %v326 = vld [vmem:[%s300 + $0x98] sm:$0xff]
      %v327 = vld [vmem:[%s300 + $0xa0] sm:$0xff]
      %v328 = vld [vmem:[%s300 + $0xa8] sm:$0xff]
      %v329 = vld [vmem:[%s300 + $0xb0] sm:$0xff]
      %v330 = vld [vmem:[%s300 + $0xb8] sm:$0xff]
      %v331 = vld [vmem:[%s300 + $0xc0] sm:$0xff]
      %v332 = vld [vmem:[%s300 + $0xc8] sm:$0xff]
      %v333 = vld [vmem:[%s300 + $0xd0] sm:$0xff]
      %v334 = vld [vmem:[%s300 + $0xd8] sm:$0xff]
      %v335 = vld [vmem:[%s300 + $0xe0] sm:$0xff]
      %v336 = vld [vmem:[%s300 + $0xe8] sm:$0xff]
      %v337 = vld [vmem:[%s300 + $0xf0] sm:$0xff]
      %v338 = vld [vmem:[%s300 + $0xf8] sm:$0xff]
      %v339 = vld [vmem:[%s300 + $0x100] sm:$0xff]
      %v340 = vld [vmem:[%s300 + $0x108] sm:$0xff]
      %v341 = vld [vmem:[%s300 + $0x110] sm:$0xff]
      %v342 = vld [vmem:[%s300 + $0x118] sm:$0xff]
      %v343 = vld [vmem:[%s300 + $0x120] sm:$0xff]
      %v344 = vld [vmem:[%s300 + $0x128] sm:$0xff]
      %v345 = vld [vmem:[%s300 + $0x130] sm:$0xff]
      %v346 = vld [vmem:[%s300 + $0x138] sm:$0xff]
      %v347 = vld [vmem:[%s300 + $0x140] sm:$0xff]
      %v348 = vld [vmem:[%s300 + $0x148] sm:$0xff]
      %v349 = vld [vmem:[%s300 + $0x150] sm:$0xff]
      %v350 = vld [vmem:[%s300 + $0x158] sm:$0xff]
      %v351 = vld [vmem:[%s300 + $0x160] sm:$0xff]
      %v352 = vld [vmem:[%s300 + $0x168] sm:$0xff]
      %v353 = vld [vmem:[%s300 + $0x170] sm:$0xff]
      %v354 = vld [vmem:[%s300 + $0x178] sm:$0xff]
      %v355 = vld [vmem:[%s300 + $0x180] sm:$0xff]
      %v356 = vld [vmem:[%s300 + $0x188] sm:$0xff]
      %v357 = vld [vmem:[%s300 + $0x190] sm:$0xff]
      %v358 = vld [vmem:[%s300 + $0x198] sm:$0xff]
      %v359 = vld [vmem:[%s300 + $0x1a0] sm:$0xff]
      %v360 = vld [vmem:[%s300 + $0x1a8] sm:$0xff]
      %v361 = vld [vmem:[%s300 + $0x1b0] sm:$0xff]
      %v362 = vld [vmem:[%s300 + $0x1b8] sm:$0xff]
      %v363 = vld [vmem:[%s300 + $0x1c0] sm:$0xff]
      %v364 = vld [vmem:[%s300 + $0x1c8] sm:$0xff]
      %v365 = vld [vmem:[%s300 + $0x1d0] sm:$0xff]
      %v366 = vld [vmem:[%s300 + $0x1d8] sm:$0xff]
      %v367 = vld [vmem:[%s300 + $0x1e0] sm:$0xff]
      %v368 = vld [vmem:[%s300 + $0x1e8] sm:$0xff]
      %v369 = vld [vmem:[%s300 + $0x1f0] sm:$0xff]
      %v370 = vld [vmem:[%s300 + $0x1f8] sm:$0xff]
      %v371 = vld [vmem:[%s300 + $0x200] sm:$0xff]
      %v372 = vld [vmem:[%s300 + $0x208] sm:$0xff]
      %v373 = vld [vmem:[%s300 + $0x210] sm:$0xff]
      %v374 = vld [vmem:[%s300 + $0x218] sm:$0xff]
      %v375 = vld [vmem:[%s300 + $0x220] sm:$0xff]
      %v376 = vld [vmem:[%s300 + $0x228] sm:$0xff]
      %v377 = vld [vmem:[%s300 + $0x230] sm:$0xff]
      %v378 = vld [vmem:[%s300 + $0x238] sm:$0xff]
      %v379 = vld [vmem:[%s300 + $0x240] sm:$0xff]
      %v380 = vld [vmem:[%s300 + $0x248] sm:$0xff]
      %v381 = vld [vmem:[%s300 + $0x250] sm:$0xff]
      %v382 = vld [vmem:[%s300 + $0x258] sm:$0xff]
      %v383 = vld [vmem:[%s300 + $0x260] sm:$0xff]
      %v384 = vld [vmem:[%s300 + $0x268] sm:$0xff]
      %v385 = vld [vmem:[%s300 + $0x270] sm:$0xff]
      %v386 = vld [vmem:[%s300 + $0x278] sm:$0xff]
      %v387 = vld [vmem:[%s300 + $0x280] sm:$0xff]
      %v388 = vld [vmem:[%s300 + $0x288] sm:$0xff]
      %v389 = vld [vmem:[%s300 + $0x290] sm:$0xff]
      %v390 = vld [vmem:[%s300 + $0x298] sm:$0xff]
      %v391 = vld [vmem:[%s300 + $0x2a0] sm:$0xff]
      %v392 = vld [vmem:[%s300 + $0x2a8] sm:$0xff]
      %v393 = vld [vmem:[%s300 + $0x2b0] sm:$0xff]
      %v394 = vld [vmem:[%s300 + $0x2b8] sm:$0xff]
      %v395 = vld [vmem:[%s300 + $0x2c0] sm:$0xff]
      %v396 = vld [vmem:[%s300 + $0x2c8] sm:$0xff]
      %v397 = vld [vmem:[%s300 + $0x2d0] sm:$0xff]
      %v398 = vld [vmem:[%s300 + $0x2d8] sm:$0xff]
      %v399 = vld [vmem:[%s300 + $0x2e0] sm:$0xff]
      %v400 = vld [vmem:[%s300 + $0x2e8] sm:$0xff]
      %v401 = vld [vmem:[%s300 + $0x2f0] sm:$0xff]
      %v402 = vld [vmem:[%s300 + $0x2f8] sm:$0xff]
      %v403 = vld [vmem:[%s1] sm:$0xff]
      %v404 = vld [vmem:[%s1 + $0x8] sm:$0xff]
      %v405 = vld [vmem:[%s1 + $0x10] sm:$0xff]
      %v406 = vld [vmem:[%s1 + $0x18] sm:$0xff]
      %v407 = vld [vmem:[%s1 + $0x20] sm:$0xff]
      %v408 = vld [vmem:[%s1 + $0x28] sm:$0xff]
      %v409 = vld [vmem:[%s1 + $0x30] sm:$0xff]
      %v410 = vld [vmem:[%s1 + $0x38] sm:$0xff]
      %v411 = vld [vmem:[%s1 + $0x40] sm:$0xff]
      %v412 = vld [vmem:[%s1 + $0x48] sm:$0xff]
      %v413 = vld [vmem:[%s1 + $0x50] sm:$0xff]
      %v414 = vld [vmem:[%s1 + $0x58] sm:$0xff]
      %v415 = vld [vmem:[%s1 + $0x60] sm:$0xff]
      %v416 = vld [vmem:[%s1 + $0x68] sm:$0xff]
      %v417 = vld [vmem:[%s1 + $0x70] sm:$0xff]
      %v418 = vld [vmem:[%s1 + $0x78] sm:$0xff]
      %v419 = vld [vmem:[%s1 + $0x80] sm:$0xff]
      %v420 = vld [vmem:[%s1 + $0x88] sm:$0xff]
      %v421 = vld [vmem:[%s1 + $0x90] sm:$0xff]
      %v422 = vld [vmem:[%s1 + $0x98] sm:$0xff]
      %v423 = vld [vmem:[%s1 + $0xa0] sm:$0xff]
      %v424 = vld [vmem:[%s1 + $0xa8] sm:$0xff]
      %v425 = vld [vmem:[%s1 + $0xb0] sm:$0xff]
      %v426 = vld [vmem:[%s1 + $0xb8] sm:$0xff]
      %v427 = vld [vmem:[%s1 + $0xc0] sm:$0xff]
      %v428 = vld [vmem:[%s1 + $0xc8] sm:$0xff]
      %v429 = vld [vmem:[%s1 + $0xd0] sm:$0xff]
      %v430 = vld [vmem:[%s1 + $0xd8] sm:$0xff]
      %v431 = vld [vmem:[%s1 + $0xe0] sm:$0xff]
      %v432 = vld [vmem:[%s1 + $0xe8] sm:$0xff]
      %v433 = vld [vmem:[%s1 + $0xf0] sm:$0xff]
      %v434 = vld [vmem:[%s1 + $0xf8] sm:$0xff]
      %v435 = vld [vmem:[%s1 + $0x100] sm:$0xff]
      %v436 = vld [vmem:[%s1 + $0x108] sm:$0xff]
      %v437 = vld [vmem:[%s1 + $0x110] sm:$0xff]
      %v438 = vld [vmem:[%s1 + $0x118] sm:$0xff]
      %v439 = vld [vmem:[%s1 + $0x120] sm:$0xff]
      %v440 = vld [vmem:[%s1 + $0x128] sm:$0xff]
      %v441 = vld [vmem:[%s1 + $0x130] sm:$0xff]
      %v442 = vld [vmem:[%s1 + $0x138] sm:$0xff]
      %v443 = vld [vmem:[%s1 + $0x140] sm:$0xff]
      %v444 = vld [vmem:[%s1 + $0x148] sm:$0xff]
      %v445 = vld [vmem:[%s1 + $0x150] sm:$0xff]
      %v446 = vld [vmem:[%s1 + $0x158] sm:$0xff]
      %v447 = vld [vmem:[%s1 + $0x160] sm:$0xff]
      %v448 = vld [vmem:[%s1 + $0x168] sm:$0xff]
      %v449 = vld [vmem:[%s1 + $0x170] sm:$0xff]
      %v450 = vld [vmem:[%s1 + $0x178] sm:$0xff]
      %v451 = vld [vmem:[%s1 + $0x180] sm:$0xff]
      %v452 = vld [vmem:[%s1 + $0x188] sm:$0xff]
      %v453 = vld [vmem:[%s1 + $0x190] sm:$0xff]
      %v454 = vld [vmem:[%s1 + $0x198] sm:$0xff]
      %v455 = vld [vmem:[%s1 + $0x1a0] sm:$0xff]
      %v456 = vld [vmem:[%s1 + $0x1a8] sm:$0xff]
      %v457 = vld [vmem:[%s1 + $0x1b0] sm:$0xff]
      %v458 = vld [vmem:[%s1 + $0x1b8] sm:$0xff]
      %v459 = vld [vmem:[%s1 + $0x1c0] sm:$0xff]
      %v460 = vld [vmem:[%s1 + $0x1c8] sm:$0xff]
      %v461 = vld [vmem:[%s1 + $0x1d0] sm:$0xff]
      %v462 = vld [vmem:[%s1 + $0x1d8] sm:$0xff]
      %v463 = vld [vmem:[%s1 + $0x1e0] sm:$0xff]
      %v464 = vld [vmem:[%s1 + $0x1e8] sm:$0xff]
      %v465 = vld [vmem:[%s1 + $0x1f0] sm:$0xff]
      %v466 = vld [vmem:[%s1 + $0x1f8] sm:$0xff]
      %v467 = vld [vmem:[%s1 + $0x200] sm:$0xff]
      %v468 = vld [vmem:[%s1 + $0x208] sm:$0xff]
      %v469 = vld [vmem:[%s1 + $0x210] sm:$0xff]
      %v470 = vld [vmem:[%s1 + $0x218] sm:$0xff]
      %v471 = vld [vmem:[%s1 + $0x220] sm:$0xff]
      %v472 = vld [vmem:[%s1 + $0x228] sm:$0xff]
      %v473 = vld [vmem:[%s1 + $0x230] sm:$0xff]
      %v474 = vld [vmem:[%s1 + $0x238] sm:$0xff]
      %v475 = vld [vmem:[%s1 + $0x240] sm:$0xff]
      %v476 = vld [vmem:[%s1 + $0x248] sm:$0xff]
      %v477 = vld [vmem:[%s1 + $0x250] sm:$0xff]
      %v478 = vld [vmem:[%s1 + $0x258] sm:$0xff]
      %v479 = vld [vmem:[%s1 + $0x260] sm:$0xff]
      %v480 = vld [vmem:[%s1 + $0x268] sm:$0xff]
      %v481 = vld [vmem:[%s1 + $0x270] sm:$0xff]
      %v482 = vld [vmem:[%s1 + $0x278] sm:$0xff]
      %v483 = vld [vmem:[%s1 + $0x280] sm:$0xff]
      %v484 = vld [vmem:[%s1 + $0x288] sm:$0xff]
      %v485 = vld [vmem:[%s1 + $0x290] sm:$0xff]
      %v486 = vld [vmem:[%s1 + $0x298] sm:$0xff]
      %v487 = vld [vmem:[%s1 + $0x2a0] sm:$0xff]
      %v488 = vld [vmem:[%s1 + $0x2a8] sm:$0xff]
      %v489 = vld [vmem:[%s1 + $0x2b0] sm:$0xff]
      %v490 = vld [vmem:[%s1 + $0x2b8] sm:$0xff]
      %v491 = vld [vmem:[%s1 + $0x2c0] sm:$0xff]
      %v492 = vld [vmem:[%s1 + $0x2c8] sm:$0xff]
      %v493 = vld [vmem:[%s1 + $0x2d0] sm:$0xff]
      %v494 = vld [vmem:[%s1 + $0x2d8] sm:$0xff]
      %v495 = vld [vmem:[%s1 + $0x2e0] sm:$0xff]
      %v496 = vld [vmem:[%s1 + $0x2e8] sm:$0xff]
      %v497 = vld [vmem:[%s1 + $0x2f0] sm:$0xff]
      %v498 = vld [vmem:[%s1 + $0x2f8] sm:$0xff]
      %v499 = vld [vmem:[%s1 + $0x300] sm:$0xff]
      %v500 = vld [vmem:[%s1 + $0x308] sm:$0xff]
      %v501 = vld [vmem:[%s1 + $0x310] sm:$0xff]
      %v502 = vld [vmem:[%s1 + $0x318] sm:$0xff]
      %v503 = vld [vmem:[%s1 + $0x320] sm:$0xff]
      %v504 = vld [vmem:[%s1 + $0x328] sm:$0xff]
      %v505 = vld [vmem:[%s1 + $0x330] sm:$0xff]
      %v506 = vld [vmem:[%s1 + $0x338] sm:$0xff]
      %v507 = vld [vmem:[%s1 + $0x340] sm:$0xff]
      %v508 = vld [vmem:[%s1 + $0x348] sm:$0xff]
      %v509 = vld [vmem:[%s1 + $0x350] sm:$0xff]
      %v510 = vld [vmem:[%s1 + $0x358] sm:$0xff]
      %v511 = vld [vmem:[%s1 + $0x360] sm:$0xff]
      %v512 = vld [vmem:[%s1 + $0x368] sm:$0xff]
      %v513 = vld [vmem:[%s1 + $0x370] sm:$0xff]
      %v514 = vld [vmem:[%s1 + $0x378] sm:$0xff]
      %v515 = vld [vmem:[%s1 + $0x380] sm:$0xff]
      %v516 = vld [vmem:[%s1 + $0x388] sm:$0xff]
      %v517 = vld [vmem:[%s1 + $0x390] sm:$0xff]
      %v518 = vld [vmem:[%s1 + $0x398] sm:$0xff]
      %v519 = vld [vmem:[%s1 + $0x3a0] sm:$0xff]
      %v520 = vld [vmem:[%s1 + $0x3a8] sm:$0xff]
      %v521 = vld [vmem:[%s1 + $0x3b0] sm:$0xff]
      %v522 = vld [vmem:[%s1 + $0x3b8] sm:$0xff]
      %v523 = vld [vmem:[%s1 + $0x3c0] sm:$0xff]
      %v524 = vld [vmem:[%s1 + $0x3c8] sm:$0xff]
      %v525 = vld [vmem:[%s1 + $0x3d0] sm:$0xff]
      %v526 = vld [vmem:[%s1 + $0x3d8] sm:$0xff]
      %v527 = vld [vmem:[%s1 + $0x3e0] sm:$0xff]
      %v528 = vld [vmem:[%s1 + $0x3e8] sm:$0xff]
      %v529 = vld [vmem:[%s1 + $0x3f0] sm:$0xff]
      %v530 = vld [vmem:[%s1 + $0x3f8] sm:$0xff]
      %v531 = vld [vmem:[%s1 + $0x400] sm:$0xff]
      %v532 = vld [vmem:[%s1 + $0x408] sm:$0xff]
      %v533 = vld [vmem:[%s1 + $0x410] sm:$0xff]
      %v534 = vld [vmem:[%s1 + $0x418] sm:$0xff]
      %v535 = vld [vmem:[%s1 + $0x420] sm:$0xff]
      %v536 = vld [vmem:[%s1 + $0x428] sm:$0xff]
      %v537 = vld [vmem:[%s1 + $0x430] sm:$0xff]
      %v538 = vld [vmem:[%s1 + $0x438] sm:$0xff]
      %v539 = vld [vmem:[%s1 + $0x440] sm:$0xff]
      %v540 = vld [vmem:[%s1 + $0x448] sm:$0xff]
      %v541 = vld [vmem:[%s1 + $0x450] sm:$0xff]
      %v542 = vld [vmem:[%s1 + $0x458] sm:$0xff]
      %v543 = vld [vmem:[%s1 + $0x460] sm:$0xff]
      %v544 = vld [vmem:[%s1 + $0x468] sm:$0xff]
      %v545 = vld [vmem:[%s1 + $0x470] sm:$0xff]
      %v546 = vld [vmem:[%s1 + $0x478] sm:$0xff]
      %v547 = vld [vmem:[%s1 + $0x480] sm:$0xff]
      %v548 = vld [vmem:[%s1 + $0x488] sm:$0xff]
      %v549 = vld [vmem:[%s1 + $0x490] sm:$0xff]
      %v550 = vld [vmem:[%s1 + $0x498] sm:$0xff]
      %v551 = vld [vmem:[%s1 + $0x4a0] sm:$0xff]
      %v552 = vld [vmem:[%s1 + $0x4a8] sm:$0xff]
      %v553 = vld [vmem:[%s1 + $0x4b0] sm:$0xff]
      %v554 = vld [vmem:[%s1 + $0x4b8] sm:$0xff]
      %v555 = vld [vmem:[%s1 + $0x4c0] sm:$0xff]
      %v556 = vld [vmem:[%s1 + $0x4c8] sm:$0xff]
      %v557 = vld [vmem:[%s1 + $0x4d0] sm:$0xff]
      %v558 = vld [vmem:[%s1 + $0x4d8] sm:$0xff]
      %v559 = vld [vmem:[%s1 + $0x4e0] sm:$0xff]
      %v560 = vld [vmem:[%s1 + $0x4e8] sm:$0xff]
      %v561 = vld [vmem:[%s1 + $0x4f0] sm:$0xff]
      %v562 = vld [vmem:[%s1 + $0x4f8] sm:$0xff]
      %v563 = vld [vmem:[%s1 + $0x500] sm:$0xff]
      %v564 = vld [vmem:[%s1 + $0x508] sm:$0xff]
      %v565 = vld [vmem:[%s1 + $0x510] sm:$0xff]
      %v566 = vld [vmem:[%s1 + $0x518] sm:$0xff]
      %v567 = vld [vmem:[%s1 + $0x520] sm:$0xff]
      %v568 = vld [vmem:[%s1 + $0x528] sm:$0xff]
      %v569 = vld [vmem:[%s1 + $0x530] sm:$0xff]
      %v570 = vld [vmem:[%s1 + $0x538] sm:$0xff]
      %v571 = vld [vmem:[%s1 + $0x540] sm:$0xff]
      %v572 = vld [vmem:[%s1 + $0x548] sm:$0xff]
      %v573 = vld [vmem:[%s1 + $0x550] sm:$0xff]
      %v574 = vld [vmem:[%s1 + $0x558] sm:$0xff]
      %v575 = vld [vmem:[%s1 + $0x560] sm:$0xff]
      %v576 = vld [vmem:[%s1 + $0x568] sm:$0xff]
      %v577 = vld [vmem:[%s1 + $0x570] sm:$0xff]
      %v578 = vld [vmem:[%s1 + $0x578] sm:$0xff]
      %v579 = vld [vmem:[%s1 + $0x580] sm:$0xff]
      %v580 = vld [vmem:[%s1 + $0x588] sm:$0xff]
      %v581 = vld [vmem:[%s1 + $0x590] sm:$0xff]
      %v582 = vld [vmem:[%s1 + $0x598] sm:$0xff]
      %v583 = vld [vmem:[%s1 + $0x5a0] sm:$0xff]
      %v584 = vld [vmem:[%s1 + $0x5a8] sm:$0xff]
      %v585 = vld [vmem:[%s1 + $0x5b0] sm:$0xff]
      %v586 = vld [vmem:[%s1 + $0x5b8] sm:$0xff]
      %v587 = vld [vmem:[%s1 + $0x5c0] sm:$0xff]
      %v588 = vld [vmem:[%s1 + $0x5c8] sm:$0xff]
      %v589 = vld [vmem:[%s1 + $0x5d0] sm:$0xff]
      %v590 = vld [vmem:[%s1 + $0x5d8] sm:$0xff]
      %v591 = vld [vmem:[%s1 + $0x5e0] sm:$0xff]
      %v592 = vld [vmem:[%s1 + $0x5e8] sm:$0xff]
      %v593 = vld [vmem:[%s1 + $0x5f0] sm:$0xff]
      %v594 = vld [vmem:[%s1 + $0x5f8] sm:$0xff]
      %v595 = vld [vmem:[%s1 + $0x600] sm:$0xff]
      %v596 = vld [vmem:[%s1 + $0x608] sm:$0xff]
      %v597 = vld [vmem:[%s1 + $0x610] sm:$0xff]
      %v598 = vld [vmem:[%s1 + $0x618] sm:$0xff]
      %v599 = vld [vmem:[%s1 + $0x620] sm:$0xff]
      %v600 = vld [vmem:[%s1 + $0x628] sm:$0xff]
      %v601 = vld [vmem:[%s1 + $0x630] sm:$0xff]
      %v602 = vld [vmem:[%s1 + $0x638] sm:$0xff]
      %v603 = vld [vmem:[%s1 + $0x640] sm:$0xff]
      %v604 = vld [vmem:[%s1 + $0x648] sm:$0xff]
      %v605 = vld [vmem:[%s1 + $0x650] sm:$0xff]
      %v606 = vld [vmem:[%s1 + $0x658] sm:$0xff]
      %v607 = vld [vmem:[%s1 + $0x660] sm:$0xff]
      %v608 = vld [vmem:[%s1 + $0x668] sm:$0xff]
      %v609 = vld [vmem:[%s1 + $0x670] sm:$0xff]
      %v610 = vld [vmem:[%s1 + $0x678] sm:$0xff]
      %v611 = vld [vmem:[%s1 + $0x680] sm:$0xff]
      %v612 = vld [vmem:[%s1 + $0x688] sm:$0xff]
      %v613 = vld [vmem:[%s1 + $0x690] sm:$0xff]
      %v614 = vld [vmem:[%s1 + $0x698] sm:$0xff]
      %v615 = vld [vmem:[%s1 + $0x6a0] sm:$0xff]
      %v616 = vld [vmem:[%s1 + $0x6a8] sm:$0xff]
      %v617 = vld [vmem:[%s1 + $0x6b0] sm:$0xff]
      %v618 = vld [vmem:[%s1 + $0x6b8] sm:$0xff]
      %v619 = vld [vmem:[%s1 + $0x6c0] sm:$0xff]
      %v620 = vld [vmem:[%s1 + $0x6c8] sm:$0xff]
      %v621 = vld [vmem:[%s1 + $0x6d0] sm:$0xff]
      %v622 = vld [vmem:[%s1 + $0x6d8] sm:$0xff]
      %v623 = vld [vmem:[%s1 + $0x6e0] sm:$0xff]
      %v624 = vld [vmem:[%s1 + $0x6e8] sm:$0xff]
      %v625 = vld [vmem:[%s1 + $0x6f0] sm:$0xff]
      %v626 = vld [vmem:[%s1 + $0x6f8] sm:$0xff]
      %v627 = vld [vmem:[%s1 + $0x700] sm:$0xff]
      %v628 = vld [vmem:[%s1 + $0x708] sm:$0xff]
      %v629 = vld [vmem:[%s1 + $0x710] sm:$0xff]
      %v630 = vld [vmem:[%s1 + $0x718] sm:$0xff]
      %v631 = vld [vmem:[%s1 + $0x720] sm:$0xff]
      %v632 = vld [vmem:[%s1 + $0x728] sm:$0xff]
      %v633 = vld [vmem:[%s1 + $0x730] sm:$0xff]
      %v634 = vld [vmem:[%s1 + $0x738] sm:$0xff]
      %v635 = vld [vmem:[%s1 + $0x740] sm:$0xff]
      %v636 = vld [vmem:[%s1 + $0x748] sm:$0xff]
      %v637 = vld [vmem:[%s1 + $0x750] sm:$0xff]
      %v638 = vld [vmem:[%s1 + $0x758] sm:$0xff]
      %v639 = vld [vmem:[%s1 + $0x760] sm:$0xff]
      %v640 = vld [vmem:[%s1 + $0x768] sm:$0xff]
      %v641 = vld [vmem:[%s1 + $0x770] sm:$0xff]
      %v642 = vld [vmem:[%s1 + $0x778] sm:$0xff]
      %v643 = vld [vmem:[%s1 + $0x780] sm:$0xff]
      %v644 = vld [vmem:[%s1 + $0x788] sm:$0xff]
      %v645 = vld [vmem:[%s1 + $0x790] sm:$0xff]
      %v646 = vld [vmem:[%s1 + $0x798] sm:$0xff]
      %v647 = vld [vmem:[%s1 + $0x7a0] sm:$0xff]
      %v648 = vld [vmem:[%s1 + $0x7a8] sm:$0xff]
      %v649 = vld [vmem:[%s1 + $0x7b0] sm:$0xff]
      %v650 = vld [vmem:[%s1 + $0x7b8] sm:$0xff]
      %v651 = vld [vmem:[%s1 + $0x7c0] sm:$0xff]
      %v652 = vld [vmem:[%s1 + $0x7c8] sm:$0xff]
      %v653 = vld [vmem:[%s1 + $0x7d0] sm:$0xff]
      %v654 = vld [vmem:[%s1 + $0x7d8] sm:$0xff]
      %v655 = vld [vmem:[%s1 + $0x7e0] sm:$0xff]
      %v656 = vld [vmem:[%s1 + $0x7e8] sm:$0xff]
      %v657 = vld [vmem:[%s1 + $0x7f0] sm:$0xff]
      %v658 = vld [vmem:[%s1 + $0x7f8] sm:$0xff]
      %v659 = vld [vmem:[%s1 + $0x800] sm:$0xff]
      %v660 = vld [vmem:[%s1 + $0x808] sm:$0xff]
      %v661 = vld [vmem:[%s1 + $0x810] sm:$0xff]
      %v662 = vld [vmem:[%s1 + $0x818] sm:$0xff]
      %v663 = vld [vmem:[%s1 + $0x820] sm:$0xff]
      %v664 = vld [vmem:[%s1 + $0x828] sm:$0xff]
      %v665 = vld [vmem:[%s1 + $0x830] sm:$0xff]
      %v666 = vld [vmem:[%s1 + $0x838] sm:$0xff]
      %v667 = vld [vmem:[%s1 + $0x840] sm:$0xff]
      %v668 = vld [vmem:[%s1 + $0x848] sm:$0xff]
      %v669 = vld [vmem:[%s1 + $0x850] sm:$0xff]
      %v670 = vld [vmem:[%s1 + $0x858] sm:$0xff]
      %v671 = vld [vmem:[%s1 + $0x860] sm:$0xff]
      %v672 = vld [vmem:[%s1 + $0x868] sm:$0xff]
      %v673 = vld [vmem:[%s1 + $0x870] sm:$0xff]
      %v674 = vld [vmem:[%s1 + $0x878] sm:$0xff]
      %v675 = vld [vmem:[%s1 + $0x880] sm:$0xff]
      %v676 = vld [vmem:[%s1 + $0x888] sm:$0xff]
      %v677 = vld [vmem:[%s1 + $0x890] sm:$0xff]
      %v678 = vld [vmem:[%s1 + $0x898] sm:$0xff]
      %v679 = vld [vmem:[%s1 + $0x8a0] sm:$0xff]
      %v680 = vld [vmem:[%s1 + $0x8a8] sm:$0xff]
      %v681 = vld [vmem:[%s1 + $0x8b0] sm:$0xff]
      %v682 = vld [vmem:[%s1 + $0x8b8] sm:$0xff]
      %v683 = vld [vmem:[%s1 + $0x8c0] sm:$0xff]
      %v684 = vld [vmem:[%s1 + $0x8c8] sm:$0xff]
      %v685 = vld [vmem:[%s1 + $0x8d0] sm:$0xff]
      %v686 = vld [vmem:[%s1 + $0x8d8] sm:$0xff]
      %v687 = vld [vmem:[%s1 + $0x8e0] sm:$0xff]
      %v688 = vld [vmem:[%s1 + $0x8e8] sm:$0xff]
      %v689 = vld [vmem:[%s1 + $0x8f0] sm:$0xff]
      %v690 = vld [vmem:[%s1 + $0x8f8] sm:$0xff]
      %v691 = vld [vmem:[%s1 + $0x900] sm:$0xff]
      %v692 = vld [vmem:[%s1 + $0x908] sm:$0xff]
      %v693 = vld [vmem:[%s1 + $0x910] sm:$0xff]
      %v694 = vld [vmem:[%s1 + $0x918] sm:$0xff]
      %v695 = vld [vmem:[%s1 + $0x920] sm:$0xff]
      %v696 = vld [vmem:[%s1 + $0x928] sm:$0xff]
      %v697 = vld [vmem:[%s1 + $0x930] sm:$0xff]
      %v698 = vld [vmem:[%s1 + $0x938] sm:$0xff]
      %v699 = vld [vmem:[%s1 + $0x940] sm:$0xff]
      %v700 = vld [vmem:[%s1 + $0x948] sm:$0xff]
      %v701 = vld [vmem:[%s1 + $0x950] sm:$0xff]
      %v702 = vld [vmem:[%s1 + $0x958] sm:$0xff]
      %v703 = vld [vmem:[%s1 + $0x960] sm:$0xff]
      %v704 = vld [vmem:[%s1 + $0x968] sm:$0xff]
      %v705 = vld [vmem:[%s1 + $0x970] sm:$0xff]
      %v706 = vld [vmem:[%s1 + $0x978] sm:$0xff]
      %v707 = vld [vmem:[%s1 + $0x980] sm:$0xff]
      %v708 = vld [vmem:[%s1 + $0x988] sm:$0xff]
      %v709 = vld [vmem:[%s1 + $0x990] sm:$0xff]
      %v710 = vld [vmem:[%s1 + $0x998] sm:$0xff]
      %v711 = vld [vmem:[%s1 + $0x9a0] sm:$0xff]
      %v712 = vld [vmem:[%s1 + $0x9a8] sm:$0xff]
      %v713 = vld [vmem:[%s1 + $0x9b0] sm:$0xff]
      %v714 = vld [vmem:[%s1 + $0x9b8] sm:$0xff]
      %v715 = vld [vmem:[%s1 + $0x9c0] sm:$0xff]
      %v716 = vld [vmem:[%s1 + $0x9c8] sm:$0xff]
      %v717 = vld [vmem:[%s1 + $0x9d0] sm:$0xff]
      %v718 = vld [vmem:[%s1 + $0x9d8] sm:$0xff]
      %v719 = vld [vmem:[%s1 + $0x9e0] sm:$0xff]
      %v720 = vld [vmem:[%s1 + $0x9e8] sm:$0xff]
      %v721 = vld [vmem:[%s1 + $0x9f0] sm:$0xff]
      %v722 = vld [vmem:[%s1 + $0x9f8] sm:$0xff]
      %v723 = vld [vmem:[%s1 + $0xa00] sm:$0xff]
      %v724 = vld [vmem:[%s1 + $0xa08] sm:$0xff]
      %v725 = vld [vmem:[%s1 + $0xa10] sm:$0xff]
      %v726 = vld [vmem:[%s1 + $0xa18] sm:$0xff]
      %v727 = vld [vmem:[%s1 + $0xa20] sm:$0xff]
      %v728 = vld [vmem:[%s1 + $0xa28] sm:$0xff]
      %v729 = vld [vmem:[%s1 + $0xa30] sm:$0xff]
      %v730 = vld [vmem:[%s1 + $0xa38] sm:$0xff]
      %v731 = vld [vmem:[%s1 + $0xa40] sm:$0xff]
      %v732 = vld [vmem:[%s1 + $0xa48] sm:$0xff]
      %v733 = vld [vmem:[%s1 + $0xa50] sm:$0xff]
      %v734 = vld [vmem:[%s1 + $0xa58] sm:$0xff]
      %v735 = vld [vmem:[%s1 + $0xa60] sm:$0xff]
      %v736 = vld [vmem:[%s1 + $0xa68] sm:$0xff]
      %v737 = vld [vmem:[%s1 + $0xa70] sm:$0xff]
      %v738 = vld [vmem:[%s1 + $0xa78] sm:$0xff]
      %v739 = vld [vmem:[%s1 + $0xa80] sm:$0xff]
      %v740 = vld [vmem:[%s1 + $0xa88] sm:$0xff]
      %v741 = vld [vmem:[%s1 + $0xa90] sm:$0xff]
      %v742 = vld [vmem:[%s1 + $0xa98] sm:$0xff]
      %v743 = vld [vmem:[%s1 + $0xaa0] sm:$0xff]
      %v744 = vld [vmem:[%s1 + $0xaa8] sm:$0xff]
      %v745 = vld [vmem:[%s1 + $0xab0] sm:$0xff]
      %v746 = vld [vmem:[%s1 + $0xab8] sm:$0xff]
      %v747 = vld [vmem:[%s1 + $0xac0] sm:$0xff]
      %v748 = vld [vmem:[%s1 + $0xac8] sm:$0xff]
      %v749 = vld [vmem:[%s1 + $0xad0] sm:$0xff]
      %v750 = vld [vmem:[%s1 + $0xad8] sm:$0xff]
      %v751 = vld [vmem:[%s1 + $0xae0] sm:$0xff]
      %v752 = vld [vmem:[%s1 + $0xae8] sm:$0xff]
      %v753 = vld [vmem:[%s1 + $0xaf0] sm:$0xff]
      %v754 = vld [vmem:[%s1 + $0xaf8] sm:$0xff]
      %v755 = vld [vmem:[%s1 + $0xb00] sm:$0xff]
      %v756 = vld [vmem:[%s1 + $0xb08] sm:$0xff]
      %v757 = vld [vmem:[%s1 + $0xb10] sm:$0xff]
      %v758 = vld [vmem:[%s1 + $0xb18] sm:$0xff]
      %v759 = vld [vmem:[%s1 + $0xb20] sm:$0xff]
      %v760 = vld [vmem:[%s1 + $0xb28] sm:$0xff]
      %v761 = vld [vmem:[%s1 + $0xb30] sm:$0xff]
      %v762 = vld [vmem:[%s1 + $0xb38] sm:$0xff]
      %v763 = vld [vmem:[%s1 + $0xb40] sm:$0xff]
      %v764 = vld [vmem:[%s1 + $0xb48] sm:$0xff]
      %v765 = vld [vmem:[%s1 + $0xb50] sm:$0xff]
      %v766 = vld [vmem:[%s1 + $0xb58] sm:$0xff]
      %v767 = vld [vmem:[%s1 + $0xb60] sm:$0xff]
      %v768 = vld [vmem:[%s1 + $0xb68] sm:$0xff]
      %v769 = vld [vmem:[%s1 + $0xb70] sm:$0xff]
      %v770 = vld [vmem:[%s1 + $0xb78] sm:$0xff]
      %v771 = vld [vmem:[%s1 + $0xb80] sm:$0xff]
      %v772 = vld [vmem:[%s1 + $0xb88] sm:$0xff]
      %v773 = vld [vmem:[%s1 + $0xb90] sm:$0xff]
      %v774 = vld [vmem:[%s1 + $0xb98] sm:$0xff]
      %v775 = vld [vmem:[%s1 + $0xba0] sm:$0xff]
      %v776 = vld [vmem:[%s1 + $0xba8] sm:$0xff]
      %v777 = vld [vmem:[%s1 + $0xbb0] sm:$0xff]
      %v778 = vld [vmem:[%s1 + $0xbb8] sm:$0xff]
      %v779 = vld [vmem:[%s1 + $0xbc0] sm:$0xff]
      %v780 = vld [vmem:[%s1 + $0xbc8] sm:$0xff]
      %v781 = vld [vmem:[%s1 + $0xbd0] sm:$0xff]
      %v782 = vld [vmem:[%s1 + $0xbd8] sm:$0xff]
      %v783 = vld [vmem:[%s1 + $0xbe0] sm:$0xff]
      %v784 = vld [vmem:[%s1 + $0xbe8] sm:$0xff]
      %v785 = vld [vmem:[%s1 + $0xbf0] sm:$0xff]
      %v786 = vld [vmem:[%s1 + $0xbf8] sm:$0xff]
      %v787 = vld [vmem:[%s2] sm:$0x3]
      %v789 = vlaneseq
      %v790 = vshrl.u32 %v789, 7
      %v791 = vsub.s32 0, %v790
      %v792 = vrot.slane %v787, %v791
      %v793 = vlaneseq
      %v794 = vshrl.u32 %v793, 7
      %v795 = vsub.s32 1, %v794
      %v796 = vrot.slane %v787, %v795
      %v895 = vunpack.c.l.b16 %v307
      %v896 = vunpack.c.h.b16 %v307
      %v897 = vunpack.c.l.b16 %v308
      %v898 = vunpack.c.h.b16 %v308
      %v899 = vunpack.c.l.b16 %v309
      %v900 = vunpack.c.h.b16 %v309
      %v901 = vunpack.c.l.b16 %v310
      %v902 = vunpack.c.h.b16 %v310
      %v903 = vunpack.c.l.b16 %v311
      %v904 = vunpack.c.h.b16 %v311
      %v905 = vunpack.c.l.b16 %v312
      %v906 = vunpack.c.h.b16 %v312
      %v907 = vunpack.c.l.b16 %v313
      %v908 = vunpack.c.h.b16 %v313
      %v909 = vunpack.c.l.b16 %v314
      %v910 = vunpack.c.h.b16 %v314
      %v911 = vunpack.c.l.b16 %v315
      %v912 = vunpack.c.h.b16 %v315
      %v913 = vunpack.c.l.b16 %v316
      %v914 = vunpack.c.h.b16 %v316
      %v915 = vunpack.c.l.b16 %v317
      %v916 = vunpack.c.h.b16 %v317
      %v917 = vunpack.c.l.b16 %v318
      %v918 = vunpack.c.h.b16 %v318
      %v919 = vunpack.c.l.b16 %v319
      %v920 = vunpack.c.h.b16 %v319
      %v921 = vunpack.c.l.b16 %v320
      %v922 = vunpack.c.h.b16 %v320
      %v923 = vunpack.c.l.b16 %v321
      %v924 = vunpack.c.h.b16 %v321
      %v925 = vunpack.c.l.b16 %v322
      %v926 = vunpack.c.h.b16 %v322
      %v927 = vunpack.c.l.b16 %v323
      %v928 = vunpack.c.h.b16 %v323
      %v929 = vunpack.c.l.b16 %v324
      %v930 = vunpack.c.h.b16 %v324
      %v931 = vunpack.c.l.b16 %v325
      %v932 = vunpack.c.h.b16 %v325
      %v933 = vunpack.c.l.b16 %v326
      %v934 = vunpack.c.h.b16 %v326
      %v935 = vunpack.c.l.b16 %v327
      %v936 = vunpack.c.h.b16 %v327
      %v937 = vunpack.c.l.b16 %v328
      %v938 = vunpack.c.h.b16 %v328
      %v939 = vunpack.c.l.b16 %v329
      %v940 = vunpack.c.h.b16 %v329
      %v941 = vunpack.c.l.b16 %v330
      %v942 = vunpack.c.h.b16 %v330
      %v943 = vunpack.c.l.b16 %v331
      %v944 = vunpack.c.h.b16 %v331
      %v945 = vunpack.c.l.b16 %v332
      %v946 = vunpack.c.h.b16 %v332
      %v947 = vunpack.c.l.b16 %v333
      %v948 = vunpack.c.h.b16 %v333
      %v949 = vunpack.c.l.b16 %v334
      %v950 = vunpack.c.h.b16 %v334
      %v951 = vunpack.c.l.b16 %v335
      %v952 = vunpack.c.h.b16 %v335
      %v953 = vunpack.c.l.b16 %v336
      %v954 = vunpack.c.h.b16 %v336
      %v955 = vunpack.c.l.b16 %v337
      %v956 = vunpack.c.h.b16 %v337
      %v957 = vunpack.c.l.b16 %v338
      %v958 = vunpack.c.h.b16 %v338
      %v959 = vunpack.c.l.b16 %v339
      %v960 = vunpack.c.h.b16 %v339
      %v961 = vunpack.c.l.b16 %v340
      %v962 = vunpack.c.h.b16 %v340
      %v963 = vunpack.c.l.b16 %v341
      %v964 = vunpack.c.h.b16 %v341
      %v965 = vunpack.c.l.b16 %v342
      %v966 = vunpack.c.h.b16 %v342
      %v967 = vunpack.c.l.b16 %v343
      %v968 = vunpack.c.h.b16 %v343
      %v969 = vunpack.c.l.b16 %v344
      %v970 = vunpack.c.h.b16 %v344
      %v971 = vunpack.c.l.b16 %v345
      %v972 = vunpack.c.h.b16 %v345
      %v973 = vunpack.c.l.b16 %v346
      %v974 = vunpack.c.h.b16 %v346
      %v975 = vunpack.c.l.b16 %v347
      %v976 = vunpack.c.h.b16 %v347
      %v977 = vunpack.c.l.b16 %v348
      %v978 = vunpack.c.h.b16 %v348
      %v979 = vunpack.c.l.b16 %v349
      %v980 = vunpack.c.h.b16 %v349
      %v981 = vunpack.c.l.b16 %v350
      %v982 = vunpack.c.h.b16 %v350
      %v983 = vunpack.c.l.b16 %v351
      %v984 = vunpack.c.h.b16 %v351
      %v985 = vunpack.c.l.b16 %v352
      %v986 = vunpack.c.h.b16 %v352
      %v987 = vunpack.c.l.b16 %v353
      %v988 = vunpack.c.h.b16 %v353
      %v989 = vunpack.c.l.b16 %v354
      %v990 = vunpack.c.h.b16 %v354
      %v991 = vunpack.c.l.b16 %v355
      %v992 = vunpack.c.h.b16 %v355
      %v993 = vunpack.c.l.b16 %v356
      %v994 = vunpack.c.h.b16 %v356
      %v995 = vunpack.c.l.b16 %v357
      %v996 = vunpack.c.h.b16 %v357
      %v997 = vunpack.c.l.b16 %v358
      %v998 = vunpack.c.h.b16 %v358
      %v999 = vunpack.c.l.b16 %v359
      %v1000 = vunpack.c.h.b16 %v359
      %v1001 = vunpack.c.l.b16 %v360
      %v1002 = vunpack.c.h.b16 %v360
      %v1003 = vunpack.c.l.b16 %v361
      %v1004 = vunpack.c.h.b16 %v361
      %v1005 = vunpack.c.l.b16 %v362
      %v1006 = vunpack.c.h.b16 %v362
      %v1007 = vunpack.c.l.b16 %v363
      %v1008 = vunpack.c.h.b16 %v363
      %v1009 = vunpack.c.l.b16 %v364
      %v1010 = vunpack.c.h.b16 %v364
      %v1011 = vunpack.c.l.b16 %v365
      %v1012 = vunpack.c.h.b16 %v365
      %v1013 = vunpack.c.l.b16 %v366
      %v1014 = vunpack.c.h.b16 %v366
      %v1015 = vunpack.c.l.b16 %v367
      %v1016 = vunpack.c.h.b16 %v367
      %v1017 = vunpack.c.l.b16 %v368
      %v1018 = vunpack.c.h.b16 %v368
      %v1019 = vunpack.c.l.b16 %v369
      %v1020 = vunpack.c.h.b16 %v369
      %v1021 = vunpack.c.l.b16 %v370
      %v1022 = vunpack.c.h.b16 %v370
      %v1023 = vunpack.c.l.b16 %v371
      %v1024 = vunpack.c.h.b16 %v371
      %v1025 = vunpack.c.l.b16 %v372
      %v1026 = vunpack.c.h.b16 %v372
      %v1027 = vunpack.c.l.b16 %v373
      %v1028 = vunpack.c.h.b16 %v373
      %v1029 = vunpack.c.l.b16 %v374
      %v1030 = vunpack.c.h.b16 %v374
      %v1031 = vunpack.c.l.b16 %v375
      %v1032 = vunpack.c.h.b16 %v375
      %v1033 = vunpack.c.l.b16 %v376
      %v1034 = vunpack.c.h.b16 %v376
      %v1035 = vunpack.c.l.b16 %v377
      %v1036 = vunpack.c.h.b16 %v377
      %v1037 = vunpack.c.l.b16 %v378
      %v1038 = vunpack.c.h.b16 %v378
      %v1039 = vunpack.c.l.b16 %v379
      %v1040 = vunpack.c.h.b16 %v379
      %v1041 = vunpack.c.l.b16 %v380
      %v1042 = vunpack.c.h.b16 %v380
      %v1043 = vunpack.c.l.b16 %v381
      %v1044 = vunpack.c.h.b16 %v381
      %v1045 = vunpack.c.l.b16 %v382
      %v1046 = vunpack.c.h.b16 %v382
      %v1047 = vunpack.c.l.b16 %v383
      %v1048 = vunpack.c.h.b16 %v383
      %v1049 = vunpack.c.l.b16 %v384
      %v1050 = vunpack.c.h.b16 %v384
      %v1051 = vunpack.c.l.b16 %v385
      %v1052 = vunpack.c.h.b16 %v385
      %v1053 = vunpack.c.l.b16 %v386
      %v1054 = vunpack.c.h.b16 %v386
      %v1055 = vunpack.c.l.b16 %v387
      %v1056 = vunpack.c.h.b16 %v387
      %v1057 = vunpack.c.l.b16 %v388
      %v1058 = vunpack.c.h.b16 %v388
      %v1059 = vunpack.c.l.b16 %v389
      %v1060 = vunpack.c.h.b16 %v389
      %v1061 = vunpack.c.l.b16 %v390
      %v1062 = vunpack.c.h.b16 %v390
      %v1063 = vunpack.c.l.b16 %v391
      %v1064 = vunpack.c.h.b16 %v391
      %v1065 = vunpack.c.l.b16 %v392
      %v1066 = vunpack.c.h.b16 %v392
      %v1067 = vunpack.c.l.b16 %v393
      %v1068 = vunpack.c.h.b16 %v393
      %v1069 = vunpack.c.l.b16 %v394
      %v1070 = vunpack.c.h.b16 %v394
      %v1071 = vunpack.c.l.b16 %v395
      %v1072 = vunpack.c.h.b16 %v395
      %v1073 = vunpack.c.l.b16 %v396
      %v1074 = vunpack.c.h.b16 %v396
      %v1075 = vunpack.c.l.b16 %v397
      %v1076 = vunpack.c.h.b16 %v397
      %v1077 = vunpack.c.l.b16 %v398
      %v1078 = vunpack.c.h.b16 %v398
      %v1079 = vunpack.c.l.b16 %v399
      %v1080 = vunpack.c.h.b16 %v399
      %v1081 = vunpack.c.l.b16 %v400
      %v1082 = vunpack.c.h.b16 %v400
      %v1083 = vunpack.c.l.b16 %v401
      %v1084 = vunpack.c.h.b16 %v401
      %v1085 = vunpack.c.l.b16 %v402
      %v1086 = vunpack.c.h.b16 %v402
      %v1087 = vpack.c.b16 %v919, %v895
      %v1088 = vpack.c.b16 %v920, %v896
      %v1089 = vpack.c.b16 %v921, %v897
      %v1090 = vpack.c.b16 %v922, %v898
      %v1091 = vpack.c.b16 %v923, %v899
      %v1092 = vpack.c.b16 %v924, %v900
      %v1093 = vpack.c.b16 %v925, %v901
      %v1094 = vpack.c.b16 %v926, %v902
      %v1095 = vpack.c.b16 %v927, %v903
      %v1096 = vpack.c.b16 %v928, %v904
      %v1097 = vpack.c.b16 %v929, %v905
      %v1098 = vpack.c.b16 %v930, %v906
      %v1099 = vpack.c.b16 %v931, %v907
      %v1100 = vpack.c.b16 %v932, %v908
      %v1101 = vpack.c.b16 %v933, %v909
      %v1102 = vpack.c.b16 %v934, %v910
      %v1103 = vpack.c.b16 %v935, %v911
      %v1104 = vpack.c.b16 %v936, %v912
      %v1105 = vpack.c.b16 %v937, %v913
      %v1106 = vpack.c.b16 %v938, %v914
      %v1107 = vpack.c.b16 %v939, %v915
      %v1108 = vpack.c.b16 %v940, %v916
      %v1109 = vpack.c.b16 %v941, %v917
      %v1110 = vpack.c.b16 %v942, %v918
      %v1111 = vpack.c.b16 %v967, %v943
      %v1112 = vpack.c.b16 %v968, %v944
      %v1113 = vpack.c.b16 %v969, %v945
      %v1114 = vpack.c.b16 %v970, %v946
      %v1115 = vpack.c.b16 %v971, %v947
      %v1116 = vpack.c.b16 %v972, %v948
      %v1117 = vpack.c.b16 %v973, %v949
      %v1118 = vpack.c.b16 %v974, %v950
      %v1119 = vpack.c.b16 %v975, %v951
      %v1120 = vpack.c.b16 %v976, %v952
      %v1121 = vpack.c.b16 %v977, %v953
      %v1122 = vpack.c.b16 %v978, %v954
      %v1123 = vpack.c.b16 %v979, %v955
      %v1124 = vpack.c.b16 %v980, %v956
      %v1125 = vpack.c.b16 %v981, %v957
      %v1126 = vpack.c.b16 %v982, %v958
      %v1127 = vpack.c.b16 %v983, %v959
      %v1128 = vpack.c.b16 %v984, %v960
      %v1129 = vpack.c.b16 %v985, %v961
      %v1130 = vpack.c.b16 %v986, %v962
      %v1131 = vpack.c.b16 %v987, %v963
      %v1132 = vpack.c.b16 %v988, %v964
      %v1133 = vpack.c.b16 %v989, %v965
      %v1134 = vpack.c.b16 %v990, %v966
      %v1135 = vpack.c.b16 %v1015, %v991
      %v1136 = vpack.c.b16 %v1016, %v992
      %v1137 = vpack.c.b16 %v1017, %v993
      %v1138 = vpack.c.b16 %v1018, %v994
      %v1139 = vpack.c.b16 %v1019, %v995
      %v1140 = vpack.c.b16 %v1020, %v996
      %v1141 = vpack.c.b16 %v1021, %v997
      %v1142 = vpack.c.b16 %v1022, %v998
      %v1143 = vpack.c.b16 %v1023, %v999
      %v1144 = vpack.c.b16 %v1024, %v1000
      %v1145 = vpack.c.b16 %v1025, %v1001
      %v1146 = vpack.c.b16 %v1026, %v1002
      %v1147 = vpack.c.b16 %v1027, %v1003
      %v1148 = vpack.c.b16 %v1028, %v1004
      %v1149 = vpack.c.b16 %v1029, %v1005
      %v1150 = vpack.c.b16 %v1030, %v1006
      %v1151 = vpack.c.b16 %v1031, %v1007
      %v1152 = vpack.c.b16 %v1032, %v1008
      %v1153 = vpack.c.b16 %v1033, %v1009
      %v1154 = vpack.c.b16 %v1034, %v1010
      %v1155 = vpack.c.b16 %v1035, %v1011
      %v1156 = vpack.c.b16 %v1036, %v1012
      %v1157 = vpack.c.b16 %v1037, %v1013
      %v1158 = vpack.c.b16 %v1038, %v1014
      %v1159 = vpack.c.b16 %v1063, %v1039
      %v1160 = vpack.c.b16 %v1064, %v1040
      %v1161 = vpack.c.b16 %v1065, %v1041
      %v1162 = vpack.c.b16 %v1066, %v1042
      %v1163 = vpack.c.b16 %v1067, %v1043
      %v1164 = vpack.c.b16 %v1068, %v1044
      %v1165 = vpack.c.b16 %v1069, %v1045
      %v1166 = vpack.c.b16 %v1070, %v1046
      %v1167 = vpack.c.b16 %v1071, %v1047
      %v1168 = vpack.c.b16 %v1072, %v1048
      %v1169 = vpack.c.b16 %v1073, %v1049
      %v1170 = vpack.c.b16 %v1074, %v1050
      %v1171 = vpack.c.b16 %v1075, %v1051
      %v1172 = vpack.c.b16 %v1076, %v1052
      %v1173 = vpack.c.b16 %v1077, %v1053
      %v1174 = vpack.c.b16 %v1078, %v1054
      %v1175 = vpack.c.b16 %v1079, %v1055
      %v1176 = vpack.c.b16 %v1080, %v1056
      %v1177 = vpack.c.b16 %v1081, %v1057
      %v1178 = vpack.c.b16 %v1082, %v1058
      %v1179 = vpack.c.b16 %v1083, %v1059
      %v1180 = vpack.c.b16 %v1084, %v1060
      %v1181 = vpack.c.b16 %v1085, %v1061
      %v1182 = vpack.c.b16 %v1086, %v1062
      %v1663 = vunpack.c.l.b16 %v403
      %v1664 = vunpack.c.h.b16 %v403
      %v1665 = vunpack.c.l.b16 %v404
      %v1666 = vunpack.c.h.b16 %v404
      %v1667 = vunpack.c.l.b16 %v405
      %v1668 = vunpack.c.h.b16 %v405
      %v1669 = vunpack.c.l.b16 %v406
      %v1670 = vunpack.c.h.b16 %v406
      %v1671 = vunpack.c.l.b16 %v407
      %v1672 = vunpack.c.h.b16 %v407
      %v1673 = vunpack.c.l.b16 %v408
      %v1674 = vunpack.c.h.b16 %v408
      %v1675 = vunpack.c.l.b16 %v409
      %v1676 = vunpack.c.h.b16 %v409
      %v1677 = vunpack.c.l.b16 %v410
      %v1678 = vunpack.c.h.b16 %v410
      %v1679 = vunpack.c.l.b16 %v411
      %v1680 = vunpack.c.h.b16 %v411
      %v1681 = vunpack.c.l.b16 %v412
      %v1682 = vunpack.c.h.b16 %v412
      %v1683 = vunpack.c.l.b16 %v413
      %v1684 = vunpack.c.h.b16 %v413
      %v1685 = vunpack.c.l.b16 %v414
      %v1686 = vunpack.c.h.b16 %v414
      %v1687 = vunpack.c.l.b16 %v415
      %v1688 = vunpack.c.h.b16 %v415
      %v1689 = vunpack.c.l.b16 %v416
      %v1690 = vunpack.c.h.b16 %v416
      %v1691 = vunpack.c.l.b16 %v417
      %v1692 = vunpack.c.h.b16 %v417
      %v1693 = vunpack.c.l.b16 %v418
      %v1694 = vunpack.c.h.b16 %v418
      %v1695 = vunpack.c.l.b16 %v419
      %v1696 = vunpack.c.h.b16 %v419
      %v1697 = vunpack.c.l.b16 %v420
      %v1698 = vunpack.c.h.b16 %v420
      %v1699 = vunpack.c.l.b16 %v421
      %v1700 = vunpack.c.h.b16 %v421
      %v1701 = vunpack.c.l.b16 %v422
      %v1702 = vunpack.c.h.b16 %v422
      %v1703 = vunpack.c.l.b16 %v423
      %v1704 = vunpack.c.h.b16 %v423
      %v1705 = vunpack.c.l.b16 %v424
      %v1706 = vunpack.c.h.b16 %v424
      %v1707 = vunpack.c.l.b16 %v425
      %v1708 = vunpack.c.h.b16 %v425
      %v1709 = vunpack.c.l.b16 %v426
      %v1710 = vunpack.c.h.b16 %v426
      %v1711 = vunpack.c.l.b16 %v427
      %v1712 = vunpack.c.h.b16 %v427
      %v1713 = vunpack.c.l.b16 %v428
      %v1714 = vunpack.c.h.b16 %v428
      %v1715 = vunpack.c.l.b16 %v429
      %v1716 = vunpack.c.h.b16 %v429
      %v1717 = vunpack.c.l.b16 %v430
      %v1718 = vunpack.c.h.b16 %v430
      %v1719 = vunpack.c.l.b16 %v431
      %v1720 = vunpack.c.h.b16 %v431
      %v1721 = vunpack.c.l.b16 %v432
      %v1722 = vunpack.c.h.b16 %v432
      %v1723 = vunpack.c.l.b16 %v433
      %v1724 = vunpack.c.h.b16 %v433
      %v1725 = vunpack.c.l.b16 %v434
      %v1726 = vunpack.c.h.b16 %v434
      %v1727 = vunpack.c.l.b16 %v435
      %v1728 = vunpack.c.h.b16 %v435
      %v1729 = vunpack.c.l.b16 %v436
      %v1730 = vunpack.c.h.b16 %v436
      %v1731 = vunpack.c.l.b16 %v437
      %v1732 = vunpack.c.h.b16 %v437
      %v1733 = vunpack.c.l.b16 %v438
      %v1734 = vunpack.c.h.b16 %v438
      %v1735 = vunpack.c.l.b16 %v439
      %v1736 = vunpack.c.h.b16 %v439
      %v1737 = vunpack.c.l.b16 %v440
      %v1738 = vunpack.c.h.b16 %v440
      %v1739 = vunpack.c.l.b16 %v441
      %v1740 = vunpack.c.h.b16 %v441
      %v1741 = vunpack.c.l.b16 %v442
      %v1742 = vunpack.c.h.b16 %v442
      %v1743 = vunpack.c.l.b16 %v443
      %v1744 = vunpack.c.h.b16 %v443
      %v1745 = vunpack.c.l.b16 %v444
      %v1746 = vunpack.c.h.b16 %v444
      %v1747 = vunpack.c.l.b16 %v445
      %v1748 = vunpack.c.h.b16 %v445
      %v1749 = vunpack.c.l.b16 %v446
      %v1750 = vunpack.c.h.b16 %v446
      %v1751 = vunpack.c.l.b16 %v447
      %v1752 = vunpack.c.h.b16 %v447
      %v1753 = vunpack.c.l.b16 %v448
      %v1754 = vunpack.c.h.b16 %v448
      %v1755 = vunpack.c.l.b16 %v449
      %v1756 = vunpack.c.h.b16 %v449
      %v1757 = vunpack.c.l.b16 %v450
      %v1758 = vunpack.c.h.b16 %v450
      %v1759 = vunpack.c.l.b16 %v451
      %v1760 = vunpack.c.h.b16 %v451
      %v1761 = vunpack.c.l.b16 %v452
      %v1762 = vunpack.c.h.b16 %v452
      %v1763 = vunpack.c.l.b16 %v453
      %v1764 = vunpack.c.h.b16 %v453
      %v1765 = vunpack.c.l.b16 %v454
      %v1766 = vunpack.c.h.b16 %v454
      %v1767 = vunpack.c.l.b16 %v455
      %v1768 = vunpack.c.h.b16 %v455
      %v1769 = vunpack.c.l.b16 %v456
      %v1770 = vunpack.c.h.b16 %v456
      %v1771 = vunpack.c.l.b16 %v457
      %v1772 = vunpack.c.h.b16 %v457
      %v1773 = vunpack.c.l.b16 %v458
      %v1774 = vunpack.c.h.b16 %v458
      %v1775 = vunpack.c.l.b16 %v459
      %v1776 = vunpack.c.h.b16 %v459
      %v1777 = vunpack.c.l.b16 %v460
      %v1778 = vunpack.c.h.b16 %v460
      %v1779 = vunpack.c.l.b16 %v461
      %v1780 = vunpack.c.h.b16 %v461
      %v1781 = vunpack.c.l.b16 %v462
      %v1782 = vunpack.c.h.b16 %v462
      %v1783 = vunpack.c.l.b16 %v463
      %v1784 = vunpack.c.h.b16 %v463
      %v1785 = vunpack.c.l.b16 %v464
      %v1786 = vunpack.c.h.b16 %v464
      %v1787 = vunpack.c.l.b16 %v465
      %v1788 = vunpack.c.h.b16 %v465
      %v1789 = vunpack.c.l.b16 %v466
      %v1790 = vunpack.c.h.b16 %v466
      %v1791 = vunpack.c.l.b16 %v467
      %v1792 = vunpack.c.h.b16 %v467
      %v1793 = vunpack.c.l.b16 %v468
      %v1794 = vunpack.c.h.b16 %v468
      %v1795 = vunpack.c.l.b16 %v469
      %v1796 = vunpack.c.h.b16 %v469
      %v1797 = vunpack.c.l.b16 %v470
      %v1798 = vunpack.c.h.b16 %v470
      %v1799 = vunpack.c.l.b16 %v471
      %v1800 = vunpack.c.h.b16 %v471
      %v1801 = vunpack.c.l.b16 %v472
      %v1802 = vunpack.c.h.b16 %v472
      %v1803 = vunpack.c.l.b16 %v473
      %v1804 = vunpack.c.h.b16 %v473
      %v1805 = vunpack.c.l.b16 %v474
      %v1806 = vunpack.c.h.b16 %v474
      %v1807 = vunpack.c.l.b16 %v475
      %v1808 = vunpack.c.h.b16 %v475
      %v1809 = vunpack.c.l.b16 %v476
      %v1810 = vunpack.c.h.b16 %v476
      %v1811 = vunpack.c.l.b16 %v477
      %v1812 = vunpack.c.h.b16 %v477
      %v1813 = vunpack.c.l.b16 %v478
      %v1814 = vunpack.c.h.b16 %v478
      %v1815 = vunpack.c.l.b16 %v479
      %v1816 = vunpack.c.h.b16 %v479
      %v1817 = vunpack.c.l.b16 %v480
      %v1818 = vunpack.c.h.b16 %v480
      %v1819 = vunpack.c.l.b16 %v481
      %v1820 = vunpack.c.h.b16 %v481
      %v1821 = vunpack.c.l.b16 %v482
      %v1822 = vunpack.c.h.b16 %v482
      %v1823 = vunpack.c.l.b16 %v483
      %v1824 = vunpack.c.h.b16 %v483
      %v1825 = vunpack.c.l.b16 %v484
      %v1826 = vunpack.c.h.b16 %v484
      %v1827 = vunpack.c.l.b16 %v485
      %v1828 = vunpack.c.h.b16 %v485
      %v1829 = vunpack.c.l.b16 %v486
      %v1830 = vunpack.c.h.b16 %v486
      %v1831 = vunpack.c.l.b16 %v487
      %v1832 = vunpack.c.h.b16 %v487
      %v1833 = vunpack.c.l.b16 %v488
      %v1834 = vunpack.c.h.b16 %v488
      %v1835 = vunpack.c.l.b16 %v489
      %v1836 = vunpack.c.h.b16 %v489
      %v1837 = vunpack.c.l.b16 %v490
      %v1838 = vunpack.c.h.b16 %v490
      %v1839 = vunpack.c.l.b16 %v491
      %v1840 = vunpack.c.h.b16 %v491
      %v1841 = vunpack.c.l.b16 %v492
      %v1842 = vunpack.c.h.b16 %v492
      %v1843 = vunpack.c.l.b16 %v493
      %v1844 = vunpack.c.h.b16 %v493
      %v1845 = vunpack.c.l.b16 %v494
      %v1846 = vunpack.c.h.b16 %v494
      %v1847 = vunpack.c.l.b16 %v495
      %v1848 = vunpack.c.h.b16 %v495
      %v1849 = vunpack.c.l.b16 %v496
      %v1850 = vunpack.c.h.b16 %v496
      %v1851 = vunpack.c.l.b16 %v497
      %v1852 = vunpack.c.h.b16 %v497
      %v1853 = vunpack.c.l.b16 %v498
      %v1854 = vunpack.c.h.b16 %v498
      %v1855 = vunpack.c.l.b16 %v499
      %v1856 = vunpack.c.h.b16 %v499
      %v1857 = vunpack.c.l.b16 %v500
      %v1858 = vunpack.c.h.b16 %v500
      %v1859 = vunpack.c.l.b16 %v501
      %v1860 = vunpack.c.h.b16 %v501
      %v1861 = vunpack.c.l.b16 %v502
      %v1862 = vunpack.c.h.b16 %v502
      %v1863 = vunpack.c.l.b16 %v503
      %v1864 = vunpack.c.h.b16 %v503
      %v1865 = vunpack.c.l.b16 %v504
      %v1866 = vunpack.c.h.b16 %v504
      %v1867 = vunpack.c.l.b16 %v505
      %v1868 = vunpack.c.h.b16 %v505
      %v1869 = vunpack.c.l.b16 %v506
      %v1870 = vunpack.c.h.b16 %v506
      %v1871 = vunpack.c.l.b16 %v507
      %v1872 = vunpack.c.h.b16 %v507
      %v1873 = vunpack.c.l.b16 %v508
      %v1874 = vunpack.c.h.b16 %v508
      %v1875 = vunpack.c.l.b16 %v509
      %v1876 = vunpack.c.h.b16 %v509
      %v1877 = vunpack.c.l.b16 %v510
      %v1878 = vunpack.c.h.b16 %v510
      %v1879 = vunpack.c.l.b16 %v511
      %v1880 = vunpack.c.h.b16 %v511
      %v1881 = vunpack.c.l.b16 %v512
      %v1882 = vunpack.c.h.b16 %v512
      %v1883 = vunpack.c.l.b16 %v513
      %v1884 = vunpack.c.h.b16 %v513
      %v1885 = vunpack.c.l.b16 %v514
      %v1886 = vunpack.c.h.b16 %v514
      %v1887 = vunpack.c.l.b16 %v515
      %v1888 = vunpack.c.h.b16 %v515
      %v1889 = vunpack.c.l.b16 %v516
      %v1890 = vunpack.c.h.b16 %v516
      %v1891 = vunpack.c.l.b16 %v517
      %v1892 = vunpack.c.h.b16 %v517
      %v1893 = vunpack.c.l.b16 %v518
      %v1894 = vunpack.c.h.b16 %v518
      %v1895 = vunpack.c.l.b16 %v519
      %v1896 = vunpack.c.h.b16 %v519
      %v1897 = vunpack.c.l.b16 %v520
      %v1898 = vunpack.c.h.b16 %v520
      %v1899 = vunpack.c.l.b16 %v521
      %v1900 = vunpack.c.h.b16 %v521
      %v1901 = vunpack.c.l.b16 %v522
      %v1902 = vunpack.c.h.b16 %v522
      %v1903 = vunpack.c.l.b16 %v523
      %v1904 = vunpack.c.h.b16 %v523
      %v1905 = vunpack.c.l.b16 %v524
      %v1906 = vunpack.c.h.b16 %v524
      %v1907 = vunpack.c.l.b16 %v525
      %v1908 = vunpack.c.h.b16 %v525
      %v1909 = vunpack.c.l.b16 %v526
      %v1910 = vunpack.c.h.b16 %v526
      %v1911 = vunpack.c.l.b16 %v527
      %v1912 = vunpack.c.h.b16 %v527
      %v1913 = vunpack.c.l.b16 %v528
      %v1914 = vunpack.c.h.b16 %v528
      %v1915 = vunpack.c.l.b16 %v529
      %v1916 = vunpack.c.h.b16 %v529
      %v1917 = vunpack.c.l.b16 %v530
      %v1918 = vunpack.c.h.b16 %v530
      %v1919 = vunpack.c.l.b16 %v531
      %v1920 = vunpack.c.h.b16 %v531
      %v1921 = vunpack.c.l.b16 %v532
      %v1922 = vunpack.c.h.b16 %v532
      %v1923 = vunpack.c.l.b16 %v533
      %v1924 = vunpack.c.h.b16 %v533
      %v1925 = vunpack.c.l.b16 %v534
      %v1926 = vunpack.c.h.b16 %v534
      %v1927 = vunpack.c.l.b16 %v535
      %v1928 = vunpack.c.h.b16 %v535
      %v1929 = vunpack.c.l.b16 %v536
      %v1930 = vunpack.c.h.b16 %v536
      %v1931 = vunpack.c.l.b16 %v537
      %v1932 = vunpack.c.h.b16 %v537
      %v1933 = vunpack.c.l.b16 %v538
      %v1934 = vunpack.c.h.b16 %v538
      %v1935 = vunpack.c.l.b16 %v539
      %v1936 = vunpack.c.h.b16 %v539
      %v1937 = vunpack.c.l.b16 %v540
      %v1938 = vunpack.c.h.b16 %v540
      %v1939 = vunpack.c.l.b16 %v541
      %v1940 = vunpack.c.h.b16 %v541
      %v1941 = vunpack.c.l.b16 %v542
      %v1942 = vunpack.c.h.b16 %v542
      %v1943 = vunpack.c.l.b16 %v543
      %v1944 = vunpack.c.h.b16 %v543
      %v1945 = vunpack.c.l.b16 %v544
      %v1946 = vunpack.c.h.b16 %v544
      %v1947 = vunpack.c.l.b16 %v545
      %v1948 = vunpack.c.h.b16 %v545
      %v1949 = vunpack.c.l.b16 %v546
      %v1950 = vunpack.c.h.b16 %v546
      %v1951 = vunpack.c.l.b16 %v547
      %v1952 = vunpack.c.h.b16 %v547
      %v1953 = vunpack.c.l.b16 %v548
      %v1954 = vunpack.c.h.b16 %v548
      %v1955 = vunpack.c.l.b16 %v549
      %v1956 = vunpack.c.h.b16 %v549
      %v1957 = vunpack.c.l.b16 %v550
      %v1958 = vunpack.c.h.b16 %v550
      %v1959 = vunpack.c.l.b16 %v551
      %v1960 = vunpack.c.h.b16 %v551
      %v1961 = vunpack.c.l.b16 %v552
      %v1962 = vunpack.c.h.b16 %v552
      %v1963 = vunpack.c.l.b16 %v553
      %v1964 = vunpack.c.h.b16 %v553
      %v1965 = vunpack.c.l.b16 %v554
      %v1966 = vunpack.c.h.b16 %v554
      %v1967 = vunpack.c.l.b16 %v555
      %v1968 = vunpack.c.h.b16 %v555
      %v1969 = vunpack.c.l.b16 %v556
      %v1970 = vunpack.c.h.b16 %v556
      %v1971 = vunpack.c.l.b16 %v557
      %v1972 = vunpack.c.h.b16 %v557
      %v1973 = vunpack.c.l.b16 %v558
      %v1974 = vunpack.c.h.b16 %v558
      %v1975 = vunpack.c.l.b16 %v559
      %v1976 = vunpack.c.h.b16 %v559
      %v1977 = vunpack.c.l.b16 %v560
      %v1978 = vunpack.c.h.b16 %v560
      %v1979 = vunpack.c.l.b16 %v561
      %v1980 = vunpack.c.h.b16 %v561
      %v1981 = vunpack.c.l.b16 %v562
      %v1982 = vunpack.c.h.b16 %v562
      %v1983 = vunpack.c.l.b16 %v563
      %v1984 = vunpack.c.h.b16 %v563
      %v1985 = vunpack.c.l.b16 %v564
      %v1986 = vunpack.c.h.b16 %v564
      %v1987 = vunpack.c.l.b16 %v565
      %v1988 = vunpack.c.h.b16 %v565
      %v1989 = vunpack.c.l.b16 %v566
      %v1990 = vunpack.c.h.b16 %v566
      %v1991 = vunpack.c.l.b16 %v567
      %v1992 = vunpack.c.h.b16 %v567
      %v1993 = vunpack.c.l.b16 %v568
      %v1994 = vunpack.c.h.b16 %v568
      %v1995 = vunpack.c.l.b16 %v569
      %v1996 = vunpack.c.h.b16 %v569
      %v1997 = vunpack.c.l.b16 %v570
      %v1998 = vunpack.c.h.b16 %v570
      %v1999 = vunpack.c.l.b16 %v571
      %v2000 = vunpack.c.h.b16 %v571
      %v2001 = vunpack.c.l.b16 %v572
      %v2002 = vunpack.c.h.b16 %v572
      %v2003 = vunpack.c.l.b16 %v573
      %v2004 = vunpack.c.h.b16 %v573
      %v2005 = vunpack.c.l.b16 %v574
      %v2006 = vunpack.c.h.b16 %v574
      %v2007 = vunpack.c.l.b16 %v575
      %v2008 = vunpack.c.h.b16 %v575
      %v2009 = vunpack.c.l.b16 %v576
      %v2010 = vunpack.c.h.b16 %v576
      %v2011 = vunpack.c.l.b16 %v577
      %v2012 = vunpack.c.h.b16 %v577
      %v2013 = vunpack.c.l.b16 %v578
      %v2014 = vunpack.c.h.b16 %v578
      %v2015 = vunpack.c.l.b16 %v579
      %v2016 = vunpack.c.h.b16 %v579
      %v2017 = vunpack.c.l.b16 %v580
      %v2018 = vunpack.c.h.b16 %v580
      %v2019 = vunpack.c.l.b16 %v581
      %v2020 = vunpack.c.h.b16 %v581
      %v2021 = vunpack.c.l.b16 %v582
      %v2022 = vunpack.c.h.b16 %v582
      %v2023 = vunpack.c.l.b16 %v583
      %v2024 = vunpack.c.h.b16 %v583
      %v2025 = vunpack.c.l.b16 %v584
      %v2026 = vunpack.c.h.b16 %v584
      %v2027 = vunpack.c.l.b16 %v585
      %v2028 = vunpack.c.h.b16 %v585
      %v2029 = vunpack.c.l.b16 %v586
      %v2030 = vunpack.c.h.b16 %v586
      %v2031 = vunpack.c.l.b16 %v587
      %v2032 = vunpack.c.h.b16 %v587
      %v2033 = vunpack.c.l.b16 %v588
      %v2034 = vunpack.c.h.b16 %v588
      %v2035 = vunpack.c.l.b16 %v589
      %v2036 = vunpack.c.h.b16 %v589
      %v2037 = vunpack.c.l.b16 %v590
      %v2038 = vunpack.c.h.b16 %v590
      %v2039 = vunpack.c.l.b16 %v591
      %v2040 = vunpack.c.h.b16 %v591
      %v2041 = vunpack.c.l.b16 %v592
      %v2042 = vunpack.c.h.b16 %v592
      %v2043 = vunpack.c.l.b16 %v593
      %v2044 = vunpack.c.h.b16 %v593
      %v2045 = vunpack.c.l.b16 %v594
      %v2046 = vunpack.c.h.b16 %v594
      %v2047 = vunpack.c.l.b16 %v595
      %v2048 = vunpack.c.h.b16 %v595
      %v2049 = vunpack.c.l.b16 %v596
      %v2050 = vunpack.c.h.b16 %v596
      %v2051 = vunpack.c.l.b16 %v597
      %v2052 = vunpack.c.h.b16 %v597
      %v2053 = vunpack.c.l.b16 %v598
      %v2054 = vunpack.c.h.b16 %v598
      %v2055 = vunpack.c.l.b16 %v599
      %v2056 = vunpack.c.h.b16 %v599
      %v2057 = vunpack.c.l.b16 %v600
      %v2058 = vunpack.c.h.b16 %v600
      %v2059 = vunpack.c.l.b16 %v601
      %v2060 = vunpack.c.h.b16 %v601
      %v2061 = vunpack.c.l.b16 %v602
      %v2062 = vunpack.c.h.b16 %v602
      %v2063 = vunpack.c.l.b16 %v603
      %v2064 = vunpack.c.h.b16 %v603
      %v2065 = vunpack.c.l.b16 %v604
      %v2066 = vunpack.c.h.b16 %v604
      %v2067 = vunpack.c.l.b16 %v605
      %v2068 = vunpack.c.h.b16 %v605
      %v2069 = vunpack.c.l.b16 %v606
      %v2070 = vunpack.c.h.b16 %v606
      %v2071 = vunpack.c.l.b16 %v607
      %v2072 = vunpack.c.h.b16 %v607
      %v2073 = vunpack.c.l.b16 %v608
      %v2074 = vunpack.c.h.b16 %v608
      %v2075 = vunpack.c.l.b16 %v609
      %v2076 = vunpack.c.h.b16 %v609
      %v2077 = vunpack.c.l.b16 %v610
      %v2078 = vunpack.c.h.b16 %v610
      %v2079 = vunpack.c.l.b16 %v611
      %v2080 = vunpack.c.h.b16 %v611
      %v2081 = vunpack.c.l.b16 %v612
      %v2082 = vunpack.c.h.b16 %v612
      %v2083 = vunpack.c.l.b16 %v613
      %v2084 = vunpack.c.h.b16 %v613
      %v2085 = vunpack.c.l.b16 %v614
      %v2086 = vunpack.c.h.b16 %v614
      %v2087 = vunpack.c.l.b16 %v615
      %v2088 = vunpack.c.h.b16 %v615
      %v2089 = vunpack.c.l.b16 %v616
      %v2090 = vunpack.c.h.b16 %v616
      %v2091 = vunpack.c.l.b16 %v617
      %v2092 = vunpack.c.h.b16 %v617
      %v2093 = vunpack.c.l.b16 %v618
      %v2094 = vunpack.c.h.b16 %v618
      %v2095 = vunpack.c.l.b16 %v619
      %v2096 = vunpack.c.h.b16 %v619
      %v2097 = vunpack.c.l.b16 %v620
      %v2098 = vunpack.c.h.b16 %v620
      %v2099 = vunpack.c.l.b16 %v621
      %v2100 = vunpack.c.h.b16 %v621
      %v2101 = vunpack.c.l.b16 %v622
      %v2102 = vunpack.c.h.b16 %v622
      %v2103 = vunpack.c.l.b16 %v623
      %v2104 = vunpack.c.h.b16 %v623
      %v2105 = vunpack.c.l.b16 %v624
      %v2106 = vunpack.c.h.b16 %v624
      %v2107 = vunpack.c.l.b16 %v625
      %v2108 = vunpack.c.h.b16 %v625
      %v2109 = vunpack.c.l.b16 %v626
      %v2110 = vunpack.c.h.b16 %v626
      %v2111 = vunpack.c.l.b16 %v627
      %v2112 = vunpack.c.h.b16 %v627
      %v2113 = vunpack.c.l.b16 %v628
      %v2114 = vunpack.c.h.b16 %v628
      %v2115 = vunpack.c.l.b16 %v629
      %v2116 = vunpack.c.h.b16 %v629
      %v2117 = vunpack.c.l.b16 %v630
      %v2118 = vunpack.c.h.b16 %v630
      %v2119 = vunpack.c.l.b16 %v631
      %v2120 = vunpack.c.h.b16 %v631
      %v2121 = vunpack.c.l.b16 %v632
      %v2122 = vunpack.c.h.b16 %v632
      %v2123 = vunpack.c.l.b16 %v633
      %v2124 = vunpack.c.h.b16 %v633
      %v2125 = vunpack.c.l.b16 %v634
      %v2126 = vunpack.c.h.b16 %v634
      %v2127 = vunpack.c.l.b16 %v635
      %v2128 = vunpack.c.h.b16 %v635
      %v2129 = vunpack.c.l.b16 %v636
      %v2130 = vunpack.c.h.b16 %v636
      %v2131 = vunpack.c.l.b16 %v637
      %v2132 = vunpack.c.h.b16 %v637
      %v2133 = vunpack.c.l.b16 %v638
      %v2134 = vunpack.c.h.b16 %v638
      %v2135 = vunpack.c.l.b16 %v639
      %v2136 = vunpack.c.h.b16 %v639
      %v2137 = vunpack.c.l.b16 %v640
      %v2138 = vunpack.c.h.b16 %v640
      %v2139 = vunpack.c.l.b16 %v641
      %v2140 = vunpack.c.h.b16 %v641
      %v2141 = vunpack.c.l.b16 %v642
      %v2142 = vunpack.c.h.b16 %v642
      %v2143 = vunpack.c.l.b16 %v643
      %v2144 = vunpack.c.h.b16 %v643
      %v2145 = vunpack.c.l.b16 %v644
      %v2146 = vunpack.c.h.b16 %v644
      %v2147 = vunpack.c.l.b16 %v645
      %v2148 = vunpack.c.h.b16 %v645
      %v2149 = vunpack.c.l.b16 %v646
      %v2150 = vunpack.c.h.b16 %v646
      %v2151 = vunpack.c.l.b16 %v647
      %v2152 = vunpack.c.h.b16 %v647
      %v2153 = vunpack.c.l.b16 %v648
      %v2154 = vunpack.c.h.b16 %v648
      %v2155 = vunpack.c.l.b16 %v649
      %v2156 = vunpack.c.h.b16 %v649
      %v2157 = vunpack.c.l.b16 %v650
      %v2158 = vunpack.c.h.b16 %v650
      %v2159 = vunpack.c.l.b16 %v651
      %v2160 = vunpack.c.h.b16 %v651
      %v2161 = vunpack.c.l.b16 %v652
      %v2162 = vunpack.c.h.b16 %v652
      %v2163 = vunpack.c.l.b16 %v653
      %v2164 = vunpack.c.h.b16 %v653
      %v2165 = vunpack.c.l.b16 %v654
      %v2166 = vunpack.c.h.b16 %v654
      %v2167 = vunpack.c.l.b16 %v655
      %v2168 = vunpack.c.h.b16 %v655
      %v2169 = vunpack.c.l.b16 %v656
      %v2170 = vunpack.c.h.b16 %v656
      %v2171 = vunpack.c.l.b16 %v657
      %v2172 = vunpack.c.h.b16 %v657
      %v2173 = vunpack.c.l.b16 %v658
      %v2174 = vunpack.c.h.b16 %v658
      %v2175 = vunpack.c.l.b16 %v659
      %v2176 = vunpack.c.h.b16 %v659
      %v2177 = vunpack.c.l.b16 %v660
      %v2178 = vunpack.c.h.b16 %v660
      %v2179 = vunpack.c.l.b16 %v661
      %v2180 = vunpack.c.h.b16 %v661
      %v2181 = vunpack.c.l.b16 %v662
      %v2182 = vunpack.c.h.b16 %v662
      %v2183 = vunpack.c.l.b16 %v663
      %v2184 = vunpack.c.h.b16 %v663
      %v2185 = vunpack.c.l.b16 %v664
      %v2186 = vunpack.c.h.b16 %v664
      %v2187 = vunpack.c.l.b16 %v665
      %v2188 = vunpack.c.h.b16 %v665
      %v2189 = vunpack.c.l.b16 %v666
      %v2190 = vunpack.c.h.b16 %v666
      %v2191 = vunpack.c.l.b16 %v667
      %v2192 = vunpack.c.h.b16 %v667
      %v2193 = vunpack.c.l.b16 %v668
      %v2194 = vunpack.c.h.b16 %v668
      %v2195 = vunpack.c.l.b16 %v669
      %v2196 = vunpack.c.h.b16 %v669
      %v2197 = vunpack.c.l.b16 %v670
      %v2198 = vunpack.c.h.b16 %v670
      %v2199 = vunpack.c.l.b16 %v671
      %v2200 = vunpack.c.h.b16 %v671
      %v2201 = vunpack.c.l.b16 %v672
      %v2202 = vunpack.c.h.b16 %v672
      %v2203 = vunpack.c.l.b16 %v673
      %v2204 = vunpack.c.h.b16 %v673
      %v2205 = vunpack.c.l.b16 %v674
      %v2206 = vunpack.c.h.b16 %v674
      %v2207 = vunpack.c.l.b16 %v675
      %v2208 = vunpack.c.h.b16 %v675
      %v2209 = vunpack.c.l.b16 %v676
      %v2210 = vunpack.c.h.b16 %v676
      %v2211 = vunpack.c.l.b16 %v677
      %v2212 = vunpack.c.h.b16 %v677
      %v2213 = vunpack.c.l.b16 %v678
      %v2214 = vunpack.c.h.b16 %v678
      %v2215 = vunpack.c.l.b16 %v679
      %v2216 = vunpack.c.h.b16 %v679
      %v2217 = vunpack.c.l.b16 %v680
      %v2218 = vunpack.c.h.b16 %v680
      %v2219 = vunpack.c.l.b16 %v681
      %v2220 = vunpack.c.h.b16 %v681
      %v2221 = vunpack.c.l.b16 %v682
      %v2222 = vunpack.c.h.b16 %v682
      %v2223 = vunpack.c.l.b16 %v683
      %v2224 = vunpack.c.h.b16 %v683
      %v2225 = vunpack.c.l.b16 %v684
      %v2226 = vunpack.c.h.b16 %v684
      %v2227 = vunpack.c.l.b16 %v685
      %v2228 = vunpack.c.h.b16 %v685
      %v2229 = vunpack.c.l.b16 %v686
      %v2230 = vunpack.c.h.b16 %v686
      %v2231 = vunpack.c.l.b16 %v687
      %v2232 = vunpack.c.h.b16 %v687
      %v2233 = vunpack.c.l.b16 %v688
      %v2234 = vunpack.c.h.b16 %v688
      %v2235 = vunpack.c.l.b16 %v689
      %v2236 = vunpack.c.h.b16 %v689
      %v2237 = vunpack.c.l.b16 %v690
      %v2238 = vunpack.c.h.b16 %v690
      %v2239 = vunpack.c.l.b16 %v691
      %v2240 = vunpack.c.h.b16 %v691
      %v2241 = vunpack.c.l.b16 %v692
      %v2242 = vunpack.c.h.b16 %v692
      %v2243 = vunpack.c.l.b16 %v693
      %v2244 = vunpack.c.h.b16 %v693
      %v2245 = vunpack.c.l.b16 %v694
      %v2246 = vunpack.c.h.b16 %v694
      %v2247 = vunpack.c.l.b16 %v695
      %v2248 = vunpack.c.h.b16 %v695
      %v2249 = vunpack.c.l.b16 %v696
      %v2250 = vunpack.c.h.b16 %v696
      %v2251 = vunpack.c.l.b16 %v697
      %v2252 = vunpack.c.h.b16 %v697
      %v2253 = vunpack.c.l.b16 %v698
      %v2254 = vunpack.c.h.b16 %v698
      %v2255 = vunpack.c.l.b16 %v699
      %v2256 = vunpack.c.h.b16 %v699
      %v2257 = vunpack.c.l.b16 %v700
      %v2258 = vunpack.c.h.b16 %v700
      %v2259 = vunpack.c.l.b16 %v701
      %v2260 = vunpack.c.h.b16 %v701
      %v2261 = vunpack.c.l.b16 %v702
      %v2262 = vunpack.c.h.b16 %v702
      %v2263 = vunpack.c.l.b16 %v703
      %v2264 = vunpack.c.h.b16 %v703
      %v2265 = vunpack.c.l.b16 %v704
      %v2266 = vunpack.c.h.b16 %v704
      %v2267 = vunpack.c.l.b16 %v705
      %v2268 = vunpack.c.h.b16 %v705
      %v2269 = vunpack.c.l.b16 %v706
      %v2270 = vunpack.c.h.b16 %v706
      %v2271 = vunpack.c.l.b16 %v707
      %v2272 = vunpack.c.h.b16 %v707
      %v2273 = vunpack.c.l.b16 %v708
      %v2274 = vunpack.c.h.b16 %v708
      %v2275 = vunpack.c.l.b16 %v709
      %v2276 = vunpack.c.h.b16 %v709
      %v2277 = vunpack.c.l.b16 %v710
      %v2278 = vunpack.c.h.b16 %v710
      %v2279 = vunpack.c.l.b16 %v711
      %v2280 = vunpack.c.h.b16 %v711
      %v2281 = vunpack.c.l.b16 %v712
      %v2282 = vunpack.c.h.b16 %v712
      %v2283 = vunpack.c.l.b16 %v713
      %v2284 = vunpack.c.h.b16 %v713
      %v2285 = vunpack.c.l.b16 %v714
      %v2286 = vunpack.c.h.b16 %v714
      %v2287 = vunpack.c.l.b16 %v715
      %v2288 = vunpack.c.h.b16 %v715
      %v2289 = vunpack.c.l.b16 %v716
      %v2290 = vunpack.c.h.b16 %v716
      %v2291 = vunpack.c.l.b16 %v717
      %v2292 = vunpack.c.h.b16 %v717
      %v2293 = vunpack.c.l.b16 %v718
      %v2294 = vunpack.c.h.b16 %v718
      %v2295 = vunpack.c.l.b16 %v719
      %v2296 = vunpack.c.h.b16 %v719
      %v2297 = vunpack.c.l.b16 %v720
      %v2298 = vunpack.c.h.b16 %v720
      %v2299 = vunpack.c.l.b16 %v721
      %v2300 = vunpack.c.h.b16 %v721
      %v2301 = vunpack.c.l.b16 %v722
      %v2302 = vunpack.c.h.b16 %v722
      %v2303 = vunpack.c.l.b16 %v723
      %v2304 = vunpack.c.h.b16 %v723
      %v2305 = vunpack.c.l.b16 %v724
      %v2306 = vunpack.c.h.b16 %v724
      %v2307 = vunpack.c.l.b16 %v725
      %v2308 = vunpack.c.h.b16 %v725
      %v2309 = vunpack.c.l.b16 %v726
      %v2310 = vunpack.c.h.b16 %v726
      %v2311 = vunpack.c.l.b16 %v727
      %v2312 = vunpack.c.h.b16 %v727
      %v2313 = vunpack.c.l.b16 %v728
      %v2314 = vunpack.c.h.b16 %v728
      %v2315 = vunpack.c.l.b16 %v729
      %v2316 = vunpack.c.h.b16 %v729
      %v2317 = vunpack.c.l.b16 %v730
      %v2318 = vunpack.c.h.b16 %v730
      %v2319 = vunpack.c.l.b16 %v731
      %v2320 = vunpack.c.h.b16 %v731
      %v2321 = vunpack.c.l.b16 %v732
      %v2322 = vunpack.c.h.b16 %v732
      %v2323 = vunpack.c.l.b16 %v733
      %v2324 = vunpack.c.h.b16 %v733
      %v2325 = vunpack.c.l.b16 %v734
      %v2326 = vunpack.c.h.b16 %v734
      %v2327 = vunpack.c.l.b16 %v735
      %v2328 = vunpack.c.h.b16 %v735
      %v2329 = vunpack.c.l.b16 %v736
      %v2330 = vunpack.c.h.b16 %v736
      %v2331 = vunpack.c.l.b16 %v737
      %v2332 = vunpack.c.h.b16 %v737
      %v2333 = vunpack.c.l.b16 %v738
      %v2334 = vunpack.c.h.b16 %v738
      %v2335 = vunpack.c.l.b16 %v739
      %v2336 = vunpack.c.h.b16 %v739
      %v2337 = vunpack.c.l.b16 %v740
      %v2338 = vunpack.c.h.b16 %v740
      %v2339 = vunpack.c.l.b16 %v741
      %v2340 = vunpack.c.h.b16 %v741
      %v2341 = vunpack.c.l.b16 %v742
      %v2342 = vunpack.c.h.b16 %v742
      %v2343 = vunpack.c.l.b16 %v743
      %v2344 = vunpack.c.h.b16 %v743
      %v2345 = vunpack.c.l.b16 %v744
      %v2346 = vunpack.c.h.b16 %v744
      %v2347 = vunpack.c.l.b16 %v745
      %v2348 = vunpack.c.h.b16 %v745
      %v2349 = vunpack.c.l.b16 %v746
      %v2350 = vunpack.c.h.b16 %v746
      %v2351 = vunpack.c.l.b16 %v747
      %v2352 = vunpack.c.h.b16 %v747
      %v2353 = vunpack.c.l.b16 %v748
      %v2354 = vunpack.c.h.b16 %v748
      %v2355 = vunpack.c.l.b16 %v749
      %v2356 = vunpack.c.h.b16 %v749
      %v2357 = vunpack.c.l.b16 %v750
      %v2358 = vunpack.c.h.b16 %v750
      %v2359 = vunpack.c.l.b16 %v751
      %v2360 = vunpack.c.h.b16 %v751
      %v2361 = vunpack.c.l.b16 %v752
      %v2362 = vunpack.c.h.b16 %v752
      %v2363 = vunpack.c.l.b16 %v753
      %v2364 = vunpack.c.h.b16 %v753
      %v2365 = vunpack.c.l.b16 %v754
      %v2366 = vunpack.c.h.b16 %v754
      %v2367 = vunpack.c.l.b16 %v755
      %v2368 = vunpack.c.h.b16 %v755
      %v2369 = vunpack.c.l.b16 %v756
      %v2370 = vunpack.c.h.b16 %v756
      %v2371 = vunpack.c.l.b16 %v757
      %v2372 = vunpack.c.h.b16 %v757
      %v2373 = vunpack.c.l.b16 %v758
      %v2374 = vunpack.c.h.b16 %v758
      %v2375 = vunpack.c.l.b16 %v759
      %v2376 = vunpack.c.h.b16 %v759
      %v2377 = vunpack.c.l.b16 %v760
      %v2378 = vunpack.c.h.b16 %v760
      %v2379 = vunpack.c.l.b16 %v761
      %v2380 = vunpack.c.h.b16 %v761
      %v2381 = vunpack.c.l.b16 %v762
      %v2382 = vunpack.c.h.b16 %v762
      %v2383 = vunpack.c.l.b16 %v763
      %v2384 = vunpack.c.h.b16 %v763
      %v2385 = vunpack.c.l.b16 %v764
      %v2386 = vunpack.c.h.b16 %v764
      %v2387 = vunpack.c.l.b16 %v765
      %v2388 = vunpack.c.h.b16 %v765
      %v2389 = vunpack.c.l.b16 %v766
      %v2390 = vunpack.c.h.b16 %v766
      %v2391 = vunpack.c.l.b16 %v767
      %v2392 = vunpack.c.h.b16 %v767
      %v2393 = vunpack.c.l.b16 %v768
      %v2394 = vunpack.c.h.b16 %v768
      %v2395 = vunpack.c.l.b16 %v769
      %v2396 = vunpack.c.h.b16 %v769
      %v2397 = vunpack.c.l.b16 %v770
      %v2398 = vunpack.c.h.b16 %v770
      %v2399 = vunpack.c.l.b16 %v771
      %v2400 = vunpack.c.h.b16 %v771
      %v2401 = vunpack.c.l.b16 %v772
      %v2402 = vunpack.c.h.b16 %v772
      %v2403 = vunpack.c.l.b16 %v773
      %v2404 = vunpack.c.h.b16 %v773
      %v2405 = vunpack.c.l.b16 %v774
      %v2406 = vunpack.c.h.b16 %v774
      %v2407 = vunpack.c.l.b16 %v775
      %v2408 = vunpack.c.h.b16 %v775
      %v2409 = vunpack.c.l.b16 %v776
      %v2410 = vunpack.c.h.b16 %v776
      %v2411 = vunpack.c.l.b16 %v777
      %v2412 = vunpack.c.h.b16 %v777
      %v2413 = vunpack.c.l.b16 %v778
      %v2414 = vunpack.c.h.b16 %v778
      %v2415 = vunpack.c.l.b16 %v779
      %v2416 = vunpack.c.h.b16 %v779
      %v2417 = vunpack.c.l.b16 %v780
      %v2418 = vunpack.c.h.b16 %v780
      %v2419 = vunpack.c.l.b16 %v781
      %v2420 = vunpack.c.h.b16 %v781
      %v2421 = vunpack.c.l.b16 %v782
      %v2422 = vunpack.c.h.b16 %v782
      %v2423 = vunpack.c.l.b16 %v783
      %v2424 = vunpack.c.h.b16 %v783
      %v2425 = vunpack.c.l.b16 %v784
      %v2426 = vunpack.c.h.b16 %v784
      %v2427 = vunpack.c.l.b16 %v785
      %v2428 = vunpack.c.h.b16 %v785
      %v2429 = vunpack.c.l.b16 %v786
      %v2430 = vunpack.c.h.b16 %v786
      %v2431 = vpack.c.b16 %v1665, %v1663
      %v2432 = vpack.c.b16 %v1666, %v1664
      %v2433 = vpack.c.b16 %v1669, %v1667
      %v2434 = vpack.c.b16 %v1670, %v1668
      %v2435 = vpack.c.b16 %v1673, %v1671
      %v2436 = vpack.c.b16 %v1674, %v1672
      %v2437 = vpack.c.b16 %v1677, %v1675
      %v2438 = vpack.c.b16 %v1678, %v1676
      %v2439 = vpack.c.b16 %v1681, %v1679
      %v2440 = vpack.c.b16 %v1682, %v1680
      %v2441 = vpack.c.b16 %v1685, %v1683
      %v2442 = vpack.c.b16 %v1686, %v1684
      %v2443 = vpack.c.b16 %v1689, %v1687
      %v2444 = vpack.c.b16 %v1690, %v1688
      %v2445 = vpack.c.b16 %v1693, %v1691
      %v2446 = vpack.c.b16 %v1694, %v1692
      %v2447 = vpack.c.b16 %v1697, %v1695
      %v2448 = vpack.c.b16 %v1698, %v1696
      %v2449 = vpack.c.b16 %v1701, %v1699
      %v2450 = vpack.c.b16 %v1702, %v1700
      %v2451 = vpack.c.b16 %v1705, %v1703
      %v2452 = vpack.c.b16 %v1706, %v1704
      %v2453 = vpack.c.b16 %v1709, %v1707
      %v2454 = vpack.c.b16 %v1710, %v1708
      %v2455 = vpack.c.b16 %v1713, %v1711
      %v2456 = vpack.c.b16 %v1714, %v1712
      %v2457 = vpack.c.b16 %v1717, %v1715
      %v2458 = vpack.c.b16 %v1718, %v1716
      %v2459 = vpack.c.b16 %v1721, %v1719
      %v2460 = vpack.c.b16 %v1722, %v1720
      %v2461 = vpack.c.b16 %v1725, %v1723
      %v2462 = vpack.c.b16 %v1726, %v1724
      %v2463 = vpack.c.b16 %v1729, %v1727
      %v2464 = vpack.c.b16 %v1730, %v1728
      %v2465 = vpack.c.b16 %v1733, %v1731
      %v2466 = vpack.c.b16 %v1734, %v1732
      %v2467 = vpack.c.b16 %v1737, %v1735
      %v2468 = vpack.c.b16 %v1738, %v1736
      %v2469 = vpack.c.b16 %v1741, %v1739
      %v2470 = vpack.c.b16 %v1742, %v1740
      %v2471 = vpack.c.b16 %v1745, %v1743
      %v2472 = vpack.c.b16 %v1746, %v1744
      %v2473 = vpack.c.b16 %v1749, %v1747
      %v2474 = vpack.c.b16 %v1750, %v1748
      %v2475 = vpack.c.b16 %v1753, %v1751
      %v2476 = vpack.c.b16 %v1754, %v1752
      %v2477 = vpack.c.b16 %v1757, %v1755
      %v2478 = vpack.c.b16 %v1758, %v1756
      %v2479 = vpack.c.b16 %v1761, %v1759
      %v2480 = vpack.c.b16 %v1762, %v1760
      %v2481 = vpack.c.b16 %v1765, %v1763
      %v2482 = vpack.c.b16 %v1766, %v1764
      %v2483 = vpack.c.b16 %v1769, %v1767
      %v2484 = vpack.c.b16 %v1770, %v1768
      %v2485 = vpack.c.b16 %v1773, %v1771
      %v2486 = vpack.c.b16 %v1774, %v1772
      %v2487 = vpack.c.b16 %v1777, %v1775
      %v2488 = vpack.c.b16 %v1778, %v1776
      %v2489 = vpack.c.b16 %v1781, %v1779
      %v2490 = vpack.c.b16 %v1782, %v1780
      %v2491 = vpack.c.b16 %v1785, %v1783
      %v2492 = vpack.c.b16 %v1786, %v1784
      %v2493 = vpack.c.b16 %v1789, %v1787
      %v2494 = vpack.c.b16 %v1790, %v1788
      %v2495 = vpack.c.b16 %v1793, %v1791
      %v2496 = vpack.c.b16 %v1794, %v1792
      %v2497 = vpack.c.b16 %v1797, %v1795
      %v2498 = vpack.c.b16 %v1798, %v1796
      %v2499 = vpack.c.b16 %v1801, %v1799
      %v2500 = vpack.c.b16 %v1802, %v1800
      %v2501 = vpack.c.b16 %v1805, %v1803
      %v2502 = vpack.c.b16 %v1806, %v1804
      %v2503 = vpack.c.b16 %v1809, %v1807
      %v2504 = vpack.c.b16 %v1810, %v1808
      %v2505 = vpack.c.b16 %v1813, %v1811
      %v2506 = vpack.c.b16 %v1814, %v1812
      %v2507 = vpack.c.b16 %v1817, %v1815
      %v2508 = vpack.c.b16 %v1818, %v1816
      %v2509 = vpack.c.b16 %v1821, %v1819
      %v2510 = vpack.c.b16 %v1822, %v1820
      %v2511 = vpack.c.b16 %v1825, %v1823
      %v2512 = vpack.c.b16 %v1826, %v1824
      %v2513 = vpack.c.b16 %v1829, %v1827
      %v2514 = vpack.c.b16 %v1830, %v1828
      %v2515 = vpack.c.b16 %v1833, %v1831
      %v2516 = vpack.c.b16 %v1834, %v1832
      %v2517 = vpack.c.b16 %v1837, %v1835
      %v2518 = vpack.c.b16 %v1838, %v1836
      %v2519 = vpack.c.b16 %v1841, %v1839
      %v2520 = vpack.c.b16 %v1842, %v1840
      %v2521 = vpack.c.b16 %v1845, %v1843
      %v2522 = vpack.c.b16 %v1846, %v1844
      %v2523 = vpack.c.b16 %v1849, %v1847
      %v2524 = vpack.c.b16 %v1850, %v1848
      %v2525 = vpack.c.b16 %v1853, %v1851
      %v2526 = vpack.c.b16 %v1854, %v1852
      %v2527 = vpack.c.b16 %v1857, %v1855
      %v2528 = vpack.c.b16 %v1858, %v1856
      %v2529 = vpack.c.b16 %v1861, %v1859
      %v2530 = vpack.c.b16 %v1862, %v1860
      %v2531 = vpack.c.b16 %v1865, %v1863
      %v2532 = vpack.c.b16 %v1866, %v1864
      %v2533 = vpack.c.b16 %v1869, %v1867
      %v2534 = vpack.c.b16 %v1870, %v1868
      %v2535 = vpack.c.b16 %v1873, %v1871
      %v2536 = vpack.c.b16 %v1874, %v1872
      %v2537 = vpack.c.b16 %v1877, %v1875
      %v2538 = vpack.c.b16 %v1878, %v1876
      %v2539 = vpack.c.b16 %v1881, %v1879
      %v2540 = vpack.c.b16 %v1882, %v1880
      %v2541 = vpack.c.b16 %v1885, %v1883
      %v2542 = vpack.c.b16 %v1886, %v1884
      %v2543 = vpack.c.b16 %v1889, %v1887
      %v2544 = vpack.c.b16 %v1890, %v1888
      %v2545 = vpack.c.b16 %v1893, %v1891
      %v2546 = vpack.c.b16 %v1894, %v1892
      %v2547 = vpack.c.b16 %v1897, %v1895
      %v2548 = vpack.c.b16 %v1898, %v1896
      %v2549 = vpack.c.b16 %v1901, %v1899
      %v2550 = vpack.c.b16 %v1902, %v1900
      %v2551 = vpack.c.b16 %v1905, %v1903
      %v2552 = vpack.c.b16 %v1906, %v1904
      %v2553 = vpack.c.b16 %v1909, %v1907
      %v2554 = vpack.c.b16 %v1910, %v1908
      %v2555 = vpack.c.b16 %v1913, %v1911
      %v2556 = vpack.c.b16 %v1914, %v1912
      %v2557 = vpack.c.b16 %v1917, %v1915
      %v2558 = vpack.c.b16 %v1918, %v1916
      %v2559 = vpack.c.b16 %v1921, %v1919
      %v2560 = vpack.c.b16 %v1922, %v1920
      %v2561 = vpack.c.b16 %v1925, %v1923
      %v2562 = vpack.c.b16 %v1926, %v1924
      %v2563 = vpack.c.b16 %v1929, %v1927
      %v2564 = vpack.c.b16 %v1930, %v1928
      %v2565 = vpack.c.b16 %v1933, %v1931
      %v2566 = vpack.c.b16 %v1934, %v1932
      %v2567 = vpack.c.b16 %v1937, %v1935
      %v2568 = vpack.c.b16 %v1938, %v1936
      %v2569 = vpack.c.b16 %v1941, %v1939
      %v2570 = vpack.c.b16 %v1942, %v1940
      %v2571 = vpack.c.b16 %v1945, %v1943
      %v2572 = vpack.c.b16 %v1946, %v1944
      %v2573 = vpack.c.b16 %v1949, %v1947
      %v2574 = vpack.c.b16 %v1950, %v1948
      %v2575 = vpack.c.b16 %v1953, %v1951
      %v2576 = vpack.c.b16 %v1954, %v1952
      %v2577 = vpack.c.b16 %v1957, %v1955
      %v2578 = vpack.c.b16 %v1958, %v1956
      %v2579 = vpack.c.b16 %v1961, %v1959
      %v2580 = vpack.c.b16 %v1962, %v1960
      %v2581 = vpack.c.b16 %v1965, %v1963
      %v2582 = vpack.c.b16 %v1966, %v1964
      %v2583 = vpack.c.b16 %v1969, %v1967
      %v2584 = vpack.c.b16 %v1970, %v1968
      %v2585 = vpack.c.b16 %v1973, %v1971
      %v2586 = vpack.c.b16 %v1974, %v1972
      %v2587 = vpack.c.b16 %v1977, %v1975
      %v2588 = vpack.c.b16 %v1978, %v1976
      %v2589 = vpack.c.b16 %v1981, %v1979
      %v2590 = vpack.c.b16 %v1982, %v1980
      %v2591 = vpack.c.b16 %v1985, %v1983
      %v2592 = vpack.c.b16 %v1986, %v1984
      %v2593 = vpack.c.b16 %v1989, %v1987
      %v2594 = vpack.c.b16 %v1990, %v1988
      %v2595 = vpack.c.b16 %v1993, %v1991
      %v2596 = vpack.c.b16 %v1994, %v1992
      %v2597 = vpack.c.b16 %v1997, %v1995
      %v2598 = vpack.c.b16 %v1998, %v1996
      %v2599 = vpack.c.b16 %v2001, %v1999
      %v2600 = vpack.c.b16 %v2002, %v2000
      %v2601 = vpack.c.b16 %v2005, %v2003
      %v2602 = vpack.c.b16 %v2006, %v2004
      %v2603 = vpack.c.b16 %v2009, %v2007
      %v2604 = vpack.c.b16 %v2010, %v2008
      %v2605 = vpack.c.b16 %v2013, %v2011
      %v2606 = vpack.c.b16 %v2014, %v2012
      %v2607 = vpack.c.b16 %v2017, %v2015
      %v2608 = vpack.c.b16 %v2018, %v2016
      %v2609 = vpack.c.b16 %v2021, %v2019
      %v2610 = vpack.c.b16 %v2022, %v2020
      %v2611 = vpack.c.b16 %v2025, %v2023
      %v2612 = vpack.c.b16 %v2026, %v2024
      %v2613 = vpack.c.b16 %v2029, %v2027
      %v2614 = vpack.c.b16 %v2030, %v2028
      %v2615 = vpack.c.b16 %v2033, %v2031
      %v2616 = vpack.c.b16 %v2034, %v2032
      %v2617 = vpack.c.b16 %v2037, %v2035
      %v2618 = vpack.c.b16 %v2038, %v2036
      %v2619 = vpack.c.b16 %v2041, %v2039
      %v2620 = vpack.c.b16 %v2042, %v2040
      %v2621 = vpack.c.b16 %v2045, %v2043
      %v2622 = vpack.c.b16 %v2046, %v2044
      %v2623 = vpack.c.b16 %v2049, %v2047
      %v2624 = vpack.c.b16 %v2050, %v2048
      %v2625 = vpack.c.b16 %v2053, %v2051
      %v2626 = vpack.c.b16 %v2054, %v2052
      %v2627 = vpack.c.b16 %v2057, %v2055
      %v2628 = vpack.c.b16 %v2058, %v2056
      %v2629 = vpack.c.b16 %v2061, %v2059
      %v2630 = vpack.c.b16 %v2062, %v2060
      %v2631 = vpack.c.b16 %v2065, %v2063
      %v2632 = vpack.c.b16 %v2066, %v2064
      %v2633 = vpack.c.b16 %v2069, %v2067
      %v2634 = vpack.c.b16 %v2070, %v2068
      %v2635 = vpack.c.b16 %v2073, %v2071
      %v2636 = vpack.c.b16 %v2074, %v2072
      %v2637 = vpack.c.b16 %v2077, %v2075
      %v2638 = vpack.c.b16 %v2078, %v2076
      %v2639 = vpack.c.b16 %v2081, %v2079
      %v2640 = vpack.c.b16 %v2082, %v2080
      %v2641 = vpack.c.b16 %v2085, %v2083
      %v2642 = vpack.c.b16 %v2086, %v2084
      %v2643 = vpack.c.b16 %v2089, %v2087
      %v2644 = vpack.c.b16 %v2090, %v2088
      %v2645 = vpack.c.b16 %v2093, %v2091
      %v2646 = vpack.c.b16 %v2094, %v2092
      %v2647 = vpack.c.b16 %v2097, %v2095
      %v2648 = vpack.c.b16 %v2098, %v2096
      %v2649 = vpack.c.b16 %v2101, %v2099
      %v2650 = vpack.c.b16 %v2102, %v2100
      %v2651 = vpack.c.b16 %v2105, %v2103
      %v2652 = vpack.c.b16 %v2106, %v2104
      %v2653 = vpack.c.b16 %v2109, %v2107
      %v2654 = vpack.c.b16 %v2110, %v2108
      %v2655 = vpack.c.b16 %v2113, %v2111
      %v2656 = vpack.c.b16 %v2114, %v2112
      %v2657 = vpack.c.b16 %v2117, %v2115
      %v2658 = vpack.c.b16 %v2118, %v2116
      %v2659 = vpack.c.b16 %v2121, %v2119
      %v2660 = vpack.c.b16 %v2122, %v2120
      %v2661 = vpack.c.b16 %v2125, %v2123
      %v2662 = vpack.c.b16 %v2126, %v2124
      %v2663 = vpack.c.b16 %v2129, %v2127
      %v2664 = vpack.c.b16 %v2130, %v2128
      %v2665 = vpack.c.b16 %v2133, %v2131
      %v2666 = vpack.c.b16 %v2134, %v2132
      %v2667 = vpack.c.b16 %v2137, %v2135
      %v2668 = vpack.c.b16 %v2138, %v2136
      %v2669 = vpack.c.b16 %v2141, %v2139
      %v2670 = vpack.c.b16 %v2142, %v2140
      %v2671 = vpack.c.b16 %v2145, %v2143
      %v2672 = vpack.c.b16 %v2146, %v2144
      %v2673 = vpack.c.b16 %v2149, %v2147
      %v2674 = vpack.c.b16 %v2150, %v2148
      %v2675 = vpack.c.b16 %v2153, %v2151
      %v2676 = vpack.c.b16 %v2154, %v2152
      %v2677 = vpack.c.b16 %v2157, %v2155
      %v2678 = vpack.c.b16 %v2158, %v2156
      %v2679 = vpack.c.b16 %v2161, %v2159
      %v2680 = vpack.c.b16 %v2162, %v2160
      %v2681 = vpack.c.b16 %v2165, %v2163
      %v2682 = vpack.c.b16 %v2166, %v2164
      %v2683 = vpack.c.b16 %v2169, %v2167
      %v2684 = vpack.c.b16 %v2170, %v2168
      %v2685 = vpack.c.b16 %v2173, %v2171
      %v2686 = vpack.c.b16 %v2174, %v2172
      %v2687 = vpack.c.b16 %v2177, %v2175
      %v2688 = vpack.c.b16 %v2178, %v2176
      %v2689 = vpack.c.b16 %v2181, %v2179
      %v2690 = vpack.c.b16 %v2182, %v2180
      %v2691 = vpack.c.b16 %v2185, %v2183
      %v2692 = vpack.c.b16 %v2186, %v2184
      %v2693 = vpack.c.b16 %v2189, %v2187
      %v2694 = vpack.c.b16 %v2190, %v2188
      %v2695 = vpack.c.b16 %v2193, %v2191
      %v2696 = vpack.c.b16 %v2194, %v2192
      %v2697 = vpack.c.b16 %v2197, %v2195
      %v2698 = vpack.c.b16 %v2198, %v2196
      %v2699 = vpack.c.b16 %v2201, %v2199
      %v2700 = vpack.c.b16 %v2202, %v2200
      %v2701 = vpack.c.b16 %v2205, %v2203
      %v2702 = vpack.c.b16 %v2206, %v2204
      %v2703 = vpack.c.b16 %v2209, %v2207
      %v2704 = vpack.c.b16 %v2210, %v2208
      %v2705 = vpack.c.b16 %v2213, %v2211
      %v2706 = vpack.c.b16 %v2214, %v2212
      %v2707 = vpack.c.b16 %v2217, %v2215
      %v2708 = vpack.c.b16 %v2218, %v2216
      %v2709 = vpack.c.b16 %v2221, %v2219
      %v2710 = vpack.c.b16 %v2222, %v2220
      %v2711 = vpack.c.b16 %v2225, %v2223
      %v2712 = vpack.c.b16 %v2226, %v2224
      %v2713 = vpack.c.b16 %v2229, %v2227
      %v2714 = vpack.c.b16 %v2230, %v2228
      %v2715 = vpack.c.b16 %v2233, %v2231
      %v2716 = vpack.c.b16 %v2234, %v2232
      %v2717 = vpack.c.b16 %v2237, %v2235
      %v2718 = vpack.c.b16 %v2238, %v2236
      %v2719 = vpack.c.b16 %v2241, %v2239
      %v2720 = vpack.c.b16 %v2242, %v2240
      %v2721 = vpack.c.b16 %v2245, %v2243
      %v2722 = vpack.c.b16 %v2246, %v2244
      %v2723 = vpack.c.b16 %v2249, %v2247
      %v2724 = vpack.c.b16 %v2250, %v2248
      %v2725 = vpack.c.b16 %v2253, %v2251
      %v2726 = vpack.c.b16 %v2254, %v2252
      %v2727 = vpack.c.b16 %v2257, %v2255
      %v2728 = vpack.c.b16 %v2258, %v2256
      %v2729 = vpack.c.b16 %v2261, %v2259
      %v2730 = vpack.c.b16 %v2262, %v2260
      %v2731 = vpack.c.b16 %v2265, %v2263
      %v2732 = vpack.c.b16 %v2266, %v2264
      %v2733 = vpack.c.b16 %v2269, %v2267
      %v2734 = vpack.c.b16 %v2270, %v2268
      %v2735 = vpack.c.b16 %v2273, %v2271
      %v2736 = vpack.c.b16 %v2274, %v2272
      %v2737 = vpack.c.b16 %v2277, %v2275
      %v2738 = vpack.c.b16 %v2278, %v2276
      %v2739 = vpack.c.b16 %v2281, %v2279
      %v2740 = vpack.c.b16 %v2282, %v2280
      %v2741 = vpack.c.b16 %v2285, %v2283
      %v2742 = vpack.c.b16 %v2286, %v2284
      %v2743 = vpack.c.b16 %v2289, %v2287
      %v2744 = vpack.c.b16 %v2290, %v2288
      %v2745 = vpack.c.b16 %v2293, %v2291
      %v2746 = vpack.c.b16 %v2294, %v2292
      %v2747 = vpack.c.b16 %v2297, %v2295
      %v2748 = vpack.c.b16 %v2298, %v2296
      %v2749 = vpack.c.b16 %v2301, %v2299
      %v2750 = vpack.c.b16 %v2302, %v2300
      %v2751 = vpack.c.b16 %v2305, %v2303
      %v2752 = vpack.c.b16 %v2306, %v2304
      %v2753 = vpack.c.b16 %v2309, %v2307
      %v2754 = vpack.c.b16 %v2310, %v2308
      %v2755 = vpack.c.b16 %v2313, %v2311
      %v2756 = vpack.c.b16 %v2314, %v2312
      %v2757 = vpack.c.b16 %v2317, %v2315
      %v2758 = vpack.c.b16 %v2318, %v2316
      %v2759 = vpack.c.b16 %v2321, %v2319
      %v2760 = vpack.c.b16 %v2322, %v2320
      %v2761 = vpack.c.b16 %v2325, %v2323
      %v2762 = vpack.c.b16 %v2326, %v2324
      %v2763 = vpack.c.b16 %v2329, %v2327
      %v2764 = vpack.c.b16 %v2330, %v2328
      %v2765 = vpack.c.b16 %v2333, %v2331
      %v2766 = vpack.c.b16 %v2334, %v2332
      %v2767 = vpack.c.b16 %v2337, %v2335
      %v2768 = vpack.c.b16 %v2338, %v2336
      %v2769 = vpack.c.b16 %v2341, %v2339
      %v2770 = vpack.c.b16 %v2342, %v2340
      %v2771 = vpack.c.b16 %v2345, %v2343
      %v2772 = vpack.c.b16 %v2346, %v2344
      %v2773 = vpack.c.b16 %v2349, %v2347
      %v2774 = vpack.c.b16 %v2350, %v2348
      %v2775 = vpack.c.b16 %v2353, %v2351
      %v2776 = vpack.c.b16 %v2354, %v2352
      %v2777 = vpack.c.b16 %v2357, %v2355
      %v2778 = vpack.c.b16 %v2358, %v2356
      %v2779 = vpack.c.b16 %v2361, %v2359
      %v2780 = vpack.c.b16 %v2362, %v2360
      %v2781 = vpack.c.b16 %v2365, %v2363
      %v2782 = vpack.c.b16 %v2366, %v2364
      %v2783 = vpack.c.b16 %v2369, %v2367
      %v2784 = vpack.c.b16 %v2370, %v2368
      %v2785 = vpack.c.b16 %v2373, %v2371
      %v2786 = vpack.c.b16 %v2374, %v2372
      %v2787 = vpack.c.b16 %v2377, %v2375
      %v2788 = vpack.c.b16 %v2378, %v2376
      %v2789 = vpack.c.b16 %v2381, %v2379
      %v2790 = vpack.c.b16 %v2382, %v2380
      %v2791 = vpack.c.b16 %v2385, %v2383
      %v2792 = vpack.c.b16 %v2386, %v2384
      %v2793 = vpack.c.b16 %v2389, %v2387
      %v2794 = vpack.c.b16 %v2390, %v2388
      %v2795 = vpack.c.b16 %v2393, %v2391
      %v2796 = vpack.c.b16 %v2394, %v2392
      %v2797 = vpack.c.b16 %v2397, %v2395
      %v2798 = vpack.c.b16 %v2398, %v2396
      %v2799 = vpack.c.b16 %v2401, %v2399
      %v2800 = vpack.c.b16 %v2402, %v2400
      %v2801 = vpack.c.b16 %v2405, %v2403
      %v2802 = vpack.c.b16 %v2406, %v2404
      %v2803 = vpack.c.b16 %v2409, %v2407
      %v2804 = vpack.c.b16 %v2410, %v2408
      %v2805 = vpack.c.b16 %v2413, %v2411
      %v2806 = vpack.c.b16 %v2414, %v2412
      %v2807 = vpack.c.b16 %v2417, %v2415
      %v2808 = vpack.c.b16 %v2418, %v2416
      %v2809 = vpack.c.b16 %v2421, %v2419
      %v2810 = vpack.c.b16 %v2422, %v2420
      %v2811 = vpack.c.b16 %v2425, %v2423
      %v2812 = vpack.c.b16 %v2426, %v2424
      %v2813 = vpack.c.b16 %v2429, %v2427
      %v2814 = vpack.c.b16 %v2430, %v2428
      %3199 = vmatprep.subr.bf16.mxu0 %v2446
      %3200 = vmatpush1.bf16.msra.mxu0 %v2445
      %3201 = vmatprep.subr.bf16.mxu0 %v2444
      %3202 = vmatpush1.bf16.msra.mxu0 %v2443
      %3203 = vmatprep.subr.bf16.mxu0 %v2442
      %3204 = vmatpush1.bf16.msra.mxu0 %v2441
      %3205 = vmatprep.subr.bf16.mxu0 %v2440
      %3206 = vmatpush1.bf16.msra.mxu0 %v2439
      %3207 = vmatprep.subr.bf16.mxu0 %v2438
      %3208 = vmatpush1.bf16.msra.mxu0 %v2437
      %3209 = vmatprep.subr.bf16.mxu0 %v2436
      %3210 = vmatpush1.bf16.msra.mxu0 %v2435
      %3211 = vmatprep.subr.bf16.mxu0 %v2434
      %3212 = vmatpush1.bf16.msra.mxu0 %v2433
      %3213 = vmatprep.subr.bf16.mxu0 %v2432
      %3214 = vmatpush1.bf16.msra.mxu0 %v2431
      %3215 = vmatprep.subr.bf16.mxu0 %v2462
      %3216 = vmatpush2.bf16.msra.mxu0 %v2461
      %3217 = vmatprep.subr.bf16.mxu0 %v2460
      %3218 = vmatpush2.bf16.msra.mxu0 %v2459
      %3219 = vmatprep.subr.bf16.mxu0 %v2458
      %3220 = vmatpush2.bf16.msra.mxu0 %v2457
      %3221 = vmatprep.subr.bf16.mxu0 %v2456
      %3222 = vmatpush2.bf16.msra.mxu0 %v2455
      %3223 = vmatprep.subr.bf16.mxu0 %v2454
      %3224 = vmatpush2.bf16.msra.mxu0 %v2453
      %3225 = vmatprep.subr.bf16.mxu0 %v2452
      %3226 = vmatpush2.bf16.msra.mxu0 %v2451
      %3227 = vmatprep.subr.bf16.mxu0 %v2450
      %3228 = vmatpush2.bf16.msra.mxu0 %v2449
      %3229 = vmatprep.subr.bf16.mxu0 %v2448
      %3230 = vmatpush2.bf16.msra.mxu0 %v2447
      %3231 = vmatprep.mubr.bf16.mxu0 %v1088
      %3232 = vmatmul.mubr.bf16.gmra.mxu0 %v1087
      %v3233 = vpop.f32.mrf.mxu0
      %v3234 = vadd.f32 %v792, %v3233
      %v3235 = vpop.f32.mrf.mxu0
      %v3236 = vadd.f32 %v796, %v3235
      %v3237 = vpop.f32.mrf.mxu0
      %v3238 = vadd.f32 %v792, %v3237
      %v3239 = vpop.f32.mrf.mxu0
      %v3240 = vadd.f32 %v796, %v3239
      %3241 = vmatprep.mubr.bf16.mxu0 %v1112
      %3242 = vmatmul.mubr.bf16.gmra.mxu0 %v1111
      %v3243 = vpop.f32.mrf.mxu0
      %v3244 = vadd.f32 %v792, %v3243
      %v3245 = vpop.f32.mrf.mxu0
      %v3246 = vadd.f32 %v796, %v3245
      %v3247 = vpop.f32.mrf.mxu0
      %v3248 = vadd.f32 %v792, %v3247
      %v3249 = vpop.f32.mrf.mxu0
      %v3250 = vadd.f32 %v796, %v3249
      %3251 = vmatprep.mubr.bf16.mxu0 %v1136
      %3252 = vmatmul.mubr.bf16.gmra.mxu0 %v1135
      %v3253 = vpop.f32.mrf.mxu0
      %v3254 = vadd.f32 %v792, %v3253
      %v3255 = vpop.f32.mrf.mxu0
      %v3256 = vadd.f32 %v796, %v3255
      %v3257 = vpop.f32.mrf.mxu0
      %v3258 = vadd.f32 %v792, %v3257
      %v3259 = vpop.f32.mrf.mxu0
      %v3260 = vadd.f32 %v796, %v3259
      %3261 = vmatprep.mubr.bf16.mxu0 %v1160
      %3262 = vmatmul.mubr.bf16.gmra.mxu0 %v1159
      %v3263 = vpop.f32.mrf.mxu0
      %v3264 = vadd.f32 %v792, %v3263
      %v3265 = vpop.f32.mrf.mxu0
      %v3266 = vadd.f32 %v796, %v3265
      %v3267 = vpop.f32.mrf.mxu0
      %v3268 = vadd.f32 %v792, %v3267
      %v3269 = vpop.f32.mrf.mxu0
      %v3270 = vadd.f32 %v796, %v3269
      %3271 = vdwg.mxu0
      %3272 = vmatprep.subr.bf16.mxu0 %v2478
      %3273 = vmatpush1.bf16.msra.mxu0 %v2477
      %3274 = vmatprep.subr.bf16.mxu0 %v2476
      %3275 = vmatpush1.bf16.msra.mxu0 %v2475
      %3276 = vmatprep.subr.bf16.mxu0 %v2474
      %3277 = vmatpush1.bf16.msra.mxu0 %v2473
      %3278 = vmatprep.subr.bf16.mxu0 %v2472
      %3279 = vmatpush1.bf16.msra.mxu0 %v2471
      %3280 = vmatprep.subr.bf16.mxu0 %v2470
      %3281 = vmatpush1.bf16.msra.mxu0 %v2469
      %3282 = vmatprep.subr.bf16.mxu0 %v2468
      %3283 = vmatpush1.bf16.msra.mxu0 %v2467
      %3284 = vmatprep.subr.bf16.mxu0 %v2466
      %3285 = vmatpush1.bf16.msra.mxu0 %v2465
      %3286 = vmatprep.subr.bf16.mxu0 %v2464
      %3287 = vmatpush1.bf16.msra.mxu0 %v2463
      %3288 = vmatprep.subr.bf16.mxu0 %v2494
      %3289 = vmatpush2.bf16.msra.mxu0 %v2493
      %3290 = vmatprep.subr.bf16.mxu0 %v2492
      %3291 = vmatpush2.bf16.msra.mxu0 %v2491
      %3292 = vmatprep.subr.bf16.mxu0 %v2490
      %3293 = vmatpush2.bf16.msra.mxu0 %v2489
      %3294 = vmatprep.subr.bf16.mxu0 %v2488
      %3295 = vmatpush2.bf16.msra.mxu0 %v2487
      %3296 = vmatprep.subr.bf16.mxu0 %v2486
      %3297 = vmatpush2.bf16.msra.mxu0 %v2485
      %3298 = vmatprep.subr.bf16.mxu0 %v2484
      %3299 = vmatpush2.bf16.msra.mxu0 %v2483
      %3300 = vmatprep.subr.bf16.mxu0 %v2482
      %3301 = vmatpush2.bf16.msra.mxu0 %v2481
      %3302 = vmatprep.subr.bf16.mxu0 %v2480
      %3303 = vmatpush2.bf16.msra.mxu0 %v2479
      %3304 = vmatprep.mubr.bf16.mxu0 %v1090
      %3305 = vmatmul.mubr.bf16.gmra.mxu0 %v1089
      %v3306 = vpop.f32.mrf.mxu0
      %v3307 = vadd.f32 %v3234, %v3306
      %v3308 = vpop.f32.mrf.mxu0
      %v3309 = vadd.f32 %v3236, %v3308
      %v3310 = vpop.f32.mrf.mxu0
      %v3311 = vadd.f32 %v3238, %v3310
      %v3312 = vpop.f32.mrf.mxu0
      %v3313 = vadd.f32 %v3240, %v3312
      %3314 = vmatprep.mubr.bf16.mxu0 %v1114
      %3315 = vmatmul.mubr.bf16.gmra.mxu0 %v1113
      %v3316 = vpop.f32.mrf.mxu0
      %v3317 = vadd.f32 %v3244, %v3316
      %v3318 = vpop.f32.mrf.mxu0
      %v3319 = vadd.f32 %v3246, %v3318
      %v3320 = vpop.f32.mrf.mxu0
      %v3321 = vadd.f32 %v3248, %v3320
      %v3322 = vpop.f32.mrf.mxu0
      %v3323 = vadd.f32 %v3250, %v3322
      %3324 = vmatprep.mubr.bf16.mxu0 %v1138
      %3325 = vmatmul.mubr.bf16.gmra.mxu0 %v1137
      %v3326 = vpop.f32.mrf.mxu0
      %v3327 = vadd.f32 %v3254, %v3326
      %v3328 = vpop.f32.mrf.mxu0
      %v3329 = vadd.f32 %v3256, %v3328
      %v3330 = vpop.f32.mrf.mxu0
      %v3331 = vadd.f32 %v3258, %v3330
      %v3332 = vpop.f32.mrf.mxu0
      %v3333 = vadd.f32 %v3260, %v3332
      %3334 = vmatprep.mubr.bf16.mxu0 %v1162
      %3335 = vmatmul.mubr.bf16.gmra.mxu0 %v1161
      %v3336 = vpop.f32.mrf.mxu0
      %v3337 = vadd.f32 %v3264, %v3336
      %v3338 = vpop.f32.mrf.mxu0
      %v3339 = vadd.f32 %v3266, %v3338
      %v3340 = vpop.f32.mrf.mxu0
      %v3341 = vadd.f32 %v3268, %v3340
      %v3342 = vpop.f32.mrf.mxu0
      %v3343 = vadd.f32 %v3270, %v3342
      %3344 = vdwg.mxu0
      %3345 = vmatprep.subr.bf16.mxu0 %v2510
      %3346 = vmatpush1.bf16.msra.mxu0 %v2509
      %3347 = vmatprep.subr.bf16.mxu0 %v2508
      %3348 = vmatpush1.bf16.msra.mxu0 %v2507
      %3349 = vmatprep.subr.bf16.mxu0 %v2506
      %3350 = vmatpush1.bf16.msra.mxu0 %v2505
      %3351 = vmatprep.subr.bf16.mxu0 %v2504
      %3352 = vmatpush1.bf16.msra.mxu0 %v2503
      %3353 = vmatprep.subr.bf16.mxu0 %v2502
      %3354 = vmatpush1.bf16.msra.mxu0 %v2501
      %3355 = vmatprep.subr.bf16.mxu0 %v2500
      %3356 = vmatpush1.bf16.msra.mxu0 %v2499
      %3357 = vmatprep.subr.bf16.mxu0 %v2498
      %3358 = vmatpush1.bf16.msra.mxu0 %v2497
      %3359 = vmatprep.subr.bf16.mxu0 %v2496
      %3360 = vmatpush1.bf16.msra.mxu0 %v2495
      %3361 = vmatprep.subr.bf16.mxu0 %v2526
      %3362 = vmatpush2.bf16.msra.mxu0 %v2525
      %3363 = vmatprep.subr.bf16.mxu0 %v2524
      %3364 = vmatpush2.bf16.msra.mxu0 %v2523
      %3365 = vmatprep.subr.bf16.mxu0 %v2522
      %3366 = vmatpush2.bf16.msra.mxu0 %v2521
      %3367 = vmatprep.subr.bf16.mxu0 %v2520
      %3368 = vmatpush2.bf16.msra.mxu0 %v2519
      %3369 = vmatprep.subr.bf16.mxu0 %v2518
      %3370 = vmatpush2.bf16.msra.mxu0 %v2517
      %3371 = vmatprep.subr.bf16.mxu0 %v2516
      %3372 = vmatpush2.bf16.msra.mxu0 %v2515
      %3373 = vmatprep.subr.bf16.mxu0 %v2514
      %3374 = vmatpush2.bf16.msra.mxu0 %v2513
      %3375 = vmatprep.subr.bf16.mxu0 %v2512
      %3376 = vmatpush2.bf16.msra.mxu0 %v2511
      %3377 = vmatprep.mubr.bf16.mxu0 %v1092
      %3378 = vmatmul.mubr.bf16.gmra.mxu0 %v1091
      %v3379 = vpop.f32.mrf.mxu0
      %v3380 = vadd.f32 %v3307, %v3379
      %v3381 = vpop.f32.mrf.mxu0
      %v3382 = vadd.f32 %v3309, %v3381
      %v3383 = vpop.f32.mrf.mxu0
      %v3384 = vadd.f32 %v3311, %v3383
      %v3385 = vpop.f32.mrf.mxu0
      %v3386 = vadd.f32 %v3313, %v3385
      %3387 = vmatprep.mubr.bf16.mxu0 %v1116
      %3388 = vmatmul.mubr.bf16.gmra.mxu0 %v1115
      %v3389 = vpop.f32.mrf.mxu0
      %v3390 = vadd.f32 %v3317, %v3389
      %v3391 = vpop.f32.mrf.mxu0
      %v3392 = vadd.f32 %v3319, %v3391
      %v3393 = vpop.f32.mrf.mxu0
      %v3394 = vadd.f32 %v3321, %v3393
      %v3395 = vpop.f32.mrf.mxu0
      %v3396 = vadd.f32 %v3323, %v3395
      %3397 = vmatprep.mubr.bf16.mxu0 %v1140
      %3398 = vmatmul.mubr.bf16.gmra.mxu0 %v1139
      %v3399 = vpop.f32.mrf.mxu0
      %v3400 = vadd.f32 %v3327, %v3399
      %v3401 = vpop.f32.mrf.mxu0
      %v3402 = vadd.f32 %v3329, %v3401
      %v3403 = vpop.f32.mrf.mxu0
      %v3404 = vadd.f32 %v3331, %v3403
      %v3405 = vpop.f32.mrf.mxu0
      %v3406 = vadd.f32 %v3333, %v3405
      %3407 = vmatprep.mubr.bf16.mxu0 %v1164
      %3408 = vmatmul.mubr.bf16.gmra.mxu0 %v1163
      %v3409 = vpop.f32.mrf.mxu0
      %v3410 = vadd.f32 %v3337, %v3409
      %v3411 = vpop.f32.mrf.mxu0
      %v3412 = vadd.f32 %v3339, %v3411
      %v3413 = vpop.f32.mrf.mxu0
      %v3414 = vadd.f32 %v3341, %v3413
      %v3415 = vpop.f32.mrf.mxu0
      %v3416 = vadd.f32 %v3343, %v3415
      %3417 = vdwg.mxu0
      %3418 = vmatprep.subr.bf16.mxu0 %v2542
      %3419 = vmatpush1.bf16.msra.mxu0 %v2541
      %3420 = vmatprep.subr.bf16.mxu0 %v2540
      %3421 = vmatpush1.bf16.msra.mxu0 %v2539
      %3422 = vmatprep.subr.bf16.mxu0 %v2538
      %3423 = vmatpush1.bf16.msra.mxu0 %v2537
      %3424 = vmatprep.subr.bf16.mxu0 %v2536
      %3425 = vmatpush1.bf16.msra.mxu0 %v2535
      %3426 = vmatprep.subr.bf16.mxu0 %v2534
      %3427 = vmatpush1.bf16.msra.mxu0 %v2533
      %3428 = vmatprep.subr.bf16.mxu0 %v2532
      %3429 = vmatpush1.bf16.msra.mxu0 %v2531
      %3430 = vmatprep.subr.bf16.mxu0 %v2530
      %3431 = vmatpush1.bf16.msra.mxu0 %v2529
      %3432 = vmatprep.subr.bf16.mxu0 %v2528
      %3433 = vmatpush1.bf16.msra.mxu0 %v2527
      %3434 = vmatprep.subr.bf16.mxu0 %v2558
      %3435 = vmatpush2.bf16.msra.mxu0 %v2557
      %3436 = vmatprep.subr.bf16.mxu0 %v2556
      %3437 = vmatpush2.bf16.msra.mxu0 %v2555
      %3438 = vmatprep.subr.bf16.mxu0 %v2554
      %3439 = vmatpush2.bf16.msra.mxu0 %v2553
      %3440 = vmatprep.subr.bf16.mxu0 %v2552
      %3441 = vmatpush2.bf16.msra.mxu0 %v2551
      %3442 = vmatprep.subr.bf16.mxu0 %v2550
      %3443 = vmatpush2.bf16.msra.mxu0 %v2549
      %3444 = vmatprep.subr.bf16.mxu0 %v2548
      %3445 = vmatpush2.bf16.msra.mxu0 %v2547
      %3446 = vmatprep.subr.bf16.mxu0 %v2546
      %3447 = vmatpush2.bf16.msra.mxu0 %v2545
      %3448 = vmatprep.subr.bf16.mxu0 %v2544
      %3449 = vmatpush2.bf16.msra.mxu0 %v2543
      %3450 = vmatprep.mubr.bf16.mxu0 %v1094
      %3451 = vmatmul.mubr.bf16.gmra.mxu0 %v1093
      %v3452 = vpop.f32.mrf.mxu0
      %v3453 = vadd.f32 %v3380, %v3452
      %v3454 = vpop.f32.mrf.mxu0
      %v3455 = vadd.f32 %v3382, %v3454
      %v3456 = vpop.f32.mrf.mxu0
      %v3457 = vadd.f32 %v3384, %v3456
      %v3458 = vpop.f32.mrf.mxu0
      %v3459 = vadd.f32 %v3386, %v3458
      %3460 = vmatprep.mubr.bf16.mxu0 %v1118
      %3461 = vmatmul.mubr.bf16.gmra.mxu0 %v1117
      %v3462 = vpop.f32.mrf.mxu0
      %v3463 = vadd.f32 %v3390, %v3462
      %v3464 = vpop.f32.mrf.mxu0
      %v3465 = vadd.f32 %v3392, %v3464
      %v3466 = vpop.f32.mrf.mxu0
      %v3467 = vadd.f32 %v3394, %v3466
      %v3468 = vpop.f32.mrf.mxu0
      %v3469 = vadd.f32 %v3396, %v3468
      %3470 = vmatprep.mubr.bf16.mxu0 %v1142
      %3471 = vmatmul.mubr.bf16.gmra.mxu0 %v1141
      %v3472 = vpop.f32.mrf.mxu0
      %v3473 = vadd.f32 %v3400, %v3472
      %v3474 = vpop.f32.mrf.mxu0
      %v3475 = vadd.f32 %v3402, %v3474
      %v3476 = vpop.f32.mrf.mxu0
      %v3477 = vadd.f32 %v3404, %v3476
      %v3478 = vpop.f32.mrf.mxu0
      %v3479 = vadd.f32 %v3406, %v3478
      %3480 = vmatprep.mubr.bf16.mxu0 %v1166
      %3481 = vmatmul.mubr.bf16.gmra.mxu0 %v1165
      %v3482 = vpop.f32.mrf.mxu0
      %v3483 = vadd.f32 %v3410, %v3482
      %v3484 = vpop.f32.mrf.mxu0
      %v3485 = vadd.f32 %v3412, %v3484
      %v3486 = vpop.f32.mrf.mxu0
      %v3487 = vadd.f32 %v3414, %v3486
      %v3488 = vpop.f32.mrf.mxu0
      %v3489 = vadd.f32 %v3416, %v3488
      %3490 = vdwg.mxu0
      %3491 = vmatprep.subr.bf16.mxu0 %v2574
      %3492 = vmatpush1.bf16.msra.mxu0 %v2573
      %3493 = vmatprep.subr.bf16.mxu0 %v2572
      %3494 = vmatpush1.bf16.msra.mxu0 %v2571
      %3495 = vmatprep.subr.bf16.mxu0 %v2570
      %3496 = vmatpush1.bf16.msra.mxu0 %v2569
      %3497 = vmatprep.subr.bf16.mxu0 %v2568
      %3498 = vmatpush1.bf16.msra.mxu0 %v2567
      %3499 = vmatprep.subr.bf16.mxu0 %v2566
      %3500 = vmatpush1.bf16.msra.mxu0 %v2565
      %3501 = vmatprep.subr.bf16.mxu0 %v2564
      %3502 = vmatpush1.bf16.msra.mxu0 %v2563
      %3503 = vmatprep.subr.bf16.mxu0 %v2562
      %3504 = vmatpush1.bf16.msra.mxu0 %v2561
      %3505 = vmatprep.subr.bf16.mxu0 %v2560
      %3506 = vmatpush1.bf16.msra.mxu0 %v2559
      %3507 = vmatprep.subr.bf16.mxu0 %v2590
      %3508 = vmatpush2.bf16.msra.mxu0 %v2589
      %3509 = vmatprep.subr.bf16.mxu0 %v2588
      %3510 = vmatpush2.bf16.msra.mxu0 %v2587
      %3511 = vmatprep.subr.bf16.mxu0 %v2586
      %3512 = vmatpush2.bf16.msra.mxu0 %v2585
      %3513 = vmatprep.subr.bf16.mxu0 %v2584
      %3514 = vmatpush2.bf16.msra.mxu0 %v2583
      %3515 = vmatprep.subr.bf16.mxu0 %v2582
      %3516 = vmatpush2.bf16.msra.mxu0 %v2581
      %3517 = vmatprep.subr.bf16.mxu0 %v2580
      %3518 = vmatpush2.bf16.msra.mxu0 %v2579
      %3519 = vmatprep.subr.bf16.mxu0 %v2578
      %3520 = vmatpush2.bf16.msra.mxu0 %v2577
      %3521 = vmatprep.subr.bf16.mxu0 %v2576
      %3522 = vmatpush2.bf16.msra.mxu0 %v2575
      %3523 = vmatprep.mubr.bf16.mxu0 %v1096
      %3524 = vmatmul.mubr.bf16.gmra.mxu0 %v1095
      %v3525 = vpop.f32.mrf.mxu0
      %v3526 = vadd.f32 %v3453, %v3525
      %v3527 = vpop.f32.mrf.mxu0
      %v3528 = vadd.f32 %v3455, %v3527
      %v3529 = vpop.f32.mrf.mxu0
      %v3530 = vadd.f32 %v3457, %v3529
      %v3531 = vpop.f32.mrf.mxu0
      %v3532 = vadd.f32 %v3459, %v3531
      %3533 = vmatprep.mubr.bf16.mxu0 %v1120
      %3534 = vmatmul.mubr.bf16.gmra.mxu0 %v1119
      %v3535 = vpop.f32.mrf.mxu0
      %v3536 = vadd.f32 %v3463, %v3535
      %v3537 = vpop.f32.mrf.mxu0
      %v3538 = vadd.f32 %v3465, %v3537
      %v3539 = vpop.f32.mrf.mxu0
      %v3540 = vadd.f32 %v3467, %v3539
      %v3541 = vpop.f32.mrf.mxu0
      %v3542 = vadd.f32 %v3469, %v3541
      %3543 = vmatprep.mubr.bf16.mxu0 %v1144
      %3544 = vmatmul.mubr.bf16.gmra.mxu0 %v1143
      %v3545 = vpop.f32.mrf.mxu0
      %v3546 = vadd.f32 %v3473, %v3545
      %v3547 = vpop.f32.mrf.mxu0
      %v3548 = vadd.f32 %v3475, %v3547
      %v3549 = vpop.f32.mrf.mxu0
      %v3550 = vadd.f32 %v3477, %v3549
      %v3551 = vpop.f32.mrf.mxu0
      %v3552 = vadd.f32 %v3479, %v3551
      %3553 = vmatprep.mubr.bf16.mxu0 %v1168
      %3554 = vmatmul.mubr.bf16.gmra.mxu0 %v1167
      %v3555 = vpop.f32.mrf.mxu0
      %v3556 = vadd.f32 %v3483, %v3555
      %v3557 = vpop.f32.mrf.mxu0
      %v3558 = vadd.f32 %v3485, %v3557
      %v3559 = vpop.f32.mrf.mxu0
      %v3560 = vadd.f32 %v3487, %v3559
      %v3561 = vpop.f32.mrf.mxu0
      %v3562 = vadd.f32 %v3489, %v3561
      %3563 = vdwg.mxu0
      %3564 = vmatprep.subr.bf16.mxu0 %v2606
      %3565 = vmatpush1.bf16.msra.mxu0 %v2605
      %3566 = vmatprep.subr.bf16.mxu0 %v2604
      %3567 = vmatpush1.bf16.msra.mxu0 %v2603
      %3568 = vmatprep.subr.bf16.mxu0 %v2602
      %3569 = vmatpush1.bf16.msra.mxu0 %v2601
      %3570 = vmatprep.subr.bf16.mxu0 %v2600
      %3571 = vmatpush1.bf16.msra.mxu0 %v2599
      %3572 = vmatprep.subr.bf16.mxu0 %v2598
      %3573 = vmatpush1.bf16.msra.mxu0 %v2597
      %3574 = vmatprep.subr.bf16.mxu0 %v2596
      %3575 = vmatpush1.bf16.msra.mxu0 %v2595
      %3576 = vmatprep.subr.bf16.mxu0 %v2594
      %3577 = vmatpush1.bf16.msra.mxu0 %v2593
      %3578 = vmatprep.subr.bf16.mxu0 %v2592
      %3579 = vmatpush1.bf16.msra.mxu0 %v2591
      %3580 = vmatprep.subr.bf16.mxu0 %v2622
      %3581 = vmatpush2.bf16.msra.mxu0 %v2621
      %3582 = vmatprep.subr.bf16.mxu0 %v2620
      %3583 = vmatpush2.bf16.msra.mxu0 %v2619
      %3584 = vmatprep.subr.bf16.mxu0 %v2618
      %3585 = vmatpush2.bf16.msra.mxu0 %v2617
      %3586 = vmatprep.subr.bf16.mxu0 %v2616
      %3587 = vmatpush2.bf16.msra.mxu0 %v2615
      %3588 = vmatprep.subr.bf16.mxu0 %v2614
      %3589 = vmatpush2.bf16.msra.mxu0 %v2613
      %3590 = vmatprep.subr.bf16.mxu0 %v2612
      %3591 = vmatpush2.bf16.msra.mxu0 %v2611
      %3592 = vmatprep.subr.bf16.mxu0 %v2610
      %3593 = vmatpush2.bf16.msra.mxu0 %v2609
      %3594 = vmatprep.subr.bf16.mxu0 %v2608
      %3595 = vmatpush2.bf16.msra.mxu0 %v2607
      %3596 = vmatprep.mubr.bf16.mxu0 %v1098
      %3597 = vmatmul.mubr.bf16.gmra.mxu0 %v1097
      %v3598 = vpop.f32.mrf.mxu0
      %v3599 = vadd.f32 %v3526, %v3598
      %v3600 = vpop.f32.mrf.mxu0
      %v3601 = vadd.f32 %v3528, %v3600
      %v3602 = vpop.f32.mrf.mxu0
      %v3603 = vadd.f32 %v3530, %v3602
      %v3604 = vpop.f32.mrf.mxu0
      %v3605 = vadd.f32 %v3532, %v3604
      %3606 = vmatprep.mubr.bf16.mxu0 %v1122
      %3607 = vmatmul.mubr.bf16.gmra.mxu0 %v1121
      %v3608 = vpop.f32.mrf.mxu0
      %v3609 = vadd.f32 %v3536, %v3608
      %v3610 = vpop.f32.mrf.mxu0
      %v3611 = vadd.f32 %v3538, %v3610
      %v3612 = vpop.f32.mrf.mxu0
      %v3613 = vadd.f32 %v3540, %v3612
      %v3614 = vpop.f32.mrf.mxu0
      %v3615 = vadd.f32 %v3542, %v3614
      %3616 = vmatprep.mubr.bf16.mxu0 %v1146
      %3617 = vmatmul.mubr.bf16.gmra.mxu0 %v1145
      %v3618 = vpop.f32.mrf.mxu0
      %v3619 = vadd.f32 %v3546, %v3618
      %v3620 = vpop.f32.mrf.mxu0
      %v3621 = vadd.f32 %v3548, %v3620
      %v3622 = vpop.f32.mrf.mxu0
      %v3623 = vadd.f32 %v3550, %v3622
      %v3624 = vpop.f32.mrf.mxu0
      %v3625 = vadd.f32 %v3552, %v3624
      %3626 = vmatprep.mubr.bf16.mxu0 %v1170
      %3627 = vmatmul.mubr.bf16.gmra.mxu0 %v1169
      %v3628 = vpop.f32.mrf.mxu0
      %v3629 = vadd.f32 %v3556, %v3628
      %v3630 = vpop.f32.mrf.mxu0
      %v3631 = vadd.f32 %v3558, %v3630
      %v3632 = vpop.f32.mrf.mxu0
      %v3633 = vadd.f32 %v3560, %v3632
      %v3634 = vpop.f32.mrf.mxu0
      %v3635 = vadd.f32 %v3562, %v3634
      %3636 = vdwg.mxu0
      %3637 = vmatprep.subr.bf16.mxu0 %v2638
      %3638 = vmatpush1.bf16.msra.mxu0 %v2637
      %3639 = vmatprep.subr.bf16.mxu0 %v2636
      %3640 = vmatpush1.bf16.msra.mxu0 %v2635
      %3641 = vmatprep.subr.bf16.mxu0 %v2634
      %3642 = vmatpush1.bf16.msra.mxu0 %v2633
      %3643 = vmatprep.subr.bf16.mxu0 %v2632
      %3644 = vmatpush1.bf16.msra.mxu0 %v2631
      %3645 = vmatprep.subr.bf16.mxu0 %v2630
      %3646 = vmatpush1.bf16.msra.mxu0 %v2629
      %3647 = vmatprep.subr.bf16.mxu0 %v2628
      %3648 = vmatpush1.bf16.msra.mxu0 %v2627
      %3649 = vmatprep.subr.bf16.mxu0 %v2626
      %3650 = vmatpush1.bf16.msra.mxu0 %v2625
      %3651 = vmatprep.subr.bf16.mxu0 %v2624
      %3652 = vmatpush1.bf16.msra.mxu0 %v2623
      %3653 = vmatprep.subr.bf16.mxu0 %v2654
      %3654 = vmatpush2.bf16.msra.mxu0 %v2653
      %3655 = vmatprep.subr.bf16.mxu0 %v2652
      %3656 = vmatpush2.bf16.msra.mxu0 %v2651
      %3657 = vmatprep.subr.bf16.mxu0 %v2650
      %3658 = vmatpush2.bf16.msra.mxu0 %v2649
      %3659 = vmatprep.subr.bf16.mxu0 %v2648
      %3660 = vmatpush2.bf16.msra.mxu0 %v2647
      %3661 = vmatprep.subr.bf16.mxu0 %v2646
      %3662 = vmatpush2.bf16.msra.mxu0 %v2645
      %3663 = vmatprep.subr.bf16.mxu0 %v2644
      %3664 = vmatpush2.bf16.msra.mxu0 %v2643
      %3665 = vmatprep.subr.bf16.mxu0 %v2642
      %3666 = vmatpush2.bf16.msra.mxu0 %v2641
      %3667 = vmatprep.subr.bf16.mxu0 %v2640
      %3668 = vmatpush2.bf16.msra.mxu0 %v2639
      %3669 = vmatprep.mubr.bf16.mxu0 %v1100
      %3670 = vmatmul.mubr.bf16.gmra.mxu0 %v1099
      %v3671 = vpop.f32.mrf.mxu0
      %v3672 = vadd.f32 %v3599, %v3671
      %v3673 = vpop.f32.mrf.mxu0
      %v3674 = vadd.f32 %v3601, %v3673
      %v3675 = vpop.f32.mrf.mxu0
      %v3676 = vadd.f32 %v3603, %v3675
      %v3677 = vpop.f32.mrf.mxu0
      %v3678 = vadd.f32 %v3605, %v3677
      %3679 = vmatprep.mubr.bf16.mxu0 %v1124
      %3680 = vmatmul.mubr.bf16.gmra.mxu0 %v1123
      %v3681 = vpop.f32.mrf.mxu0
      %v3682 = vadd.f32 %v3609, %v3681
      %v3683 = vpop.f32.mrf.mxu0
      %v3684 = vadd.f32 %v3611, %v3683
      %v3685 = vpop.f32.mrf.mxu0
      %v3686 = vadd.f32 %v3613, %v3685
      %v3687 = vpop.f32.mrf.mxu0
      %v3688 = vadd.f32 %v3615, %v3687
      %3689 = vmatprep.mubr.bf16.mxu0 %v1148
      %3690 = vmatmul.mubr.bf16.gmra.mxu0 %v1147
      %v3691 = vpop.f32.mrf.mxu0
      %v3692 = vadd.f32 %v3619, %v3691
      %v3693 = vpop.f32.mrf.mxu0
      %v3694 = vadd.f32 %v3621, %v3693
      %v3695 = vpop.f32.mrf.mxu0
      %v3696 = vadd.f32 %v3623, %v3695
      %v3697 = vpop.f32.mrf.mxu0
      %v3698 = vadd.f32 %v3625, %v3697
      %3699 = vmatprep.mubr.bf16.mxu0 %v1172
      %3700 = vmatmul.mubr.bf16.gmra.mxu0 %v1171
      %v3701 = vpop.f32.mrf.mxu0
      %v3702 = vadd.f32 %v3629, %v3701
      %v3703 = vpop.f32.mrf.mxu0
      %v3704 = vadd.f32 %v3631, %v3703
      %v3705 = vpop.f32.mrf.mxu0
      %v3706 = vadd.f32 %v3633, %v3705
      %v3707 = vpop.f32.mrf.mxu0
      %v3708 = vadd.f32 %v3635, %v3707
      %3709 = vdwg.mxu0
      %3710 = vmatprep.subr.bf16.mxu0 %v2670
      %3711 = vmatpush1.bf16.msra.mxu0 %v2669
      %3712 = vmatprep.subr.bf16.mxu0 %v2668
      %3713 = vmatpush1.bf16.msra.mxu0 %v2667
      %3714 = vmatprep.subr.bf16.mxu0 %v2666
      %3715 = vmatpush1.bf16.msra.mxu0 %v2665
      %3716 = vmatprep.subr.bf16.mxu0 %v2664
      %3717 = vmatpush1.bf16.msra.mxu0 %v2663
      %3718 = vmatprep.subr.bf16.mxu0 %v2662
      %3719 = vmatpush1.bf16.msra.mxu0 %v2661
      %3720 = vmatprep.subr.bf16.mxu0 %v2660
      %3721 = vmatpush1.bf16.msra.mxu0 %v2659
      %3722 = vmatprep.subr.bf16.mxu0 %v2658
      %3723 = vmatpush1.bf16.msra.mxu0 %v2657
      %3724 = vmatprep.subr.bf16.mxu0 %v2656
      %3725 = vmatpush1.bf16.msra.mxu0 %v2655
      %3726 = vmatprep.subr.bf16.mxu0 %v2686
      %3727 = vmatpush2.bf16.msra.mxu0 %v2685
      %3728 = vmatprep.subr.bf16.mxu0 %v2684
      %3729 = vmatpush2.bf16.msra.mxu0 %v2683
      %3730 = vmatprep.subr.bf16.mxu0 %v2682
      %3731 = vmatpush2.bf16.msra.mxu0 %v2681
      %3732 = vmatprep.subr.bf16.mxu0 %v2680
      %3733 = vmatpush2.bf16.msra.mxu0 %v2679
      %3734 = vmatprep.subr.bf16.mxu0 %v2678
      %3735 = vmatpush2.bf16.msra.mxu0 %v2677
      %3736 = vmatprep.subr.bf16.mxu0 %v2676
      %3737 = vmatpush2.bf16.msra.mxu0 %v2675
      %3738 = vmatprep.subr.bf16.mxu0 %v2674
      %3739 = vmatpush2.bf16.msra.mxu0 %v2673
      %3740 = vmatprep.subr.bf16.mxu0 %v2672
      %3741 = vmatpush2.bf16.msra.mxu0 %v2671
      %3742 = vmatprep.mubr.bf16.mxu0 %v1102
      %3743 = vmatmul.mubr.bf16.gmra.mxu0 %v1101
      %v3744 = vpop.f32.mrf.mxu0
      %v3745 = vadd.f32 %v3672, %v3744
      %v3746 = vpop.f32.mrf.mxu0
      %v3747 = vadd.f32 %v3674, %v3746
      %v3748 = vpop.f32.mrf.mxu0
      %v3749 = vadd.f32 %v3676, %v3748
      %v3750 = vpop.f32.mrf.mxu0
      %v3751 = vadd.f32 %v3678, %v3750
      %3752 = vmatprep.mubr.bf16.mxu0 %v1126
      %3753 = vmatmul.mubr.bf16.gmra.mxu0 %v1125
      %v3754 = vpop.f32.mrf.mxu0
      %v3755 = vadd.f32 %v3682, %v3754
      %v3756 = vpop.f32.mrf.mxu0
      %v3757 = vadd.f32 %v3684, %v3756
      %v3758 = vpop.f32.mrf.mxu0
      %v3759 = vadd.f32 %v3686, %v3758
      %v3760 = vpop.f32.mrf.mxu0
      %v3761 = vadd.f32 %v3688, %v3760
      %3762 = vmatprep.mubr.bf16.mxu0 %v1150
      %3763 = vmatmul.mubr.bf16.gmra.mxu0 %v1149
      %v3764 = vpop.f32.mrf.mxu0
      %v3765 = vadd.f32 %v3692, %v3764
      %v3766 = vpop.f32.mrf.mxu0
      %v3767 = vadd.f32 %v3694, %v3766
      %v3768 = vpop.f32.mrf.mxu0
      %v3769 = vadd.f32 %v3696, %v3768
      %v3770 = vpop.f32.mrf.mxu0
      %v3771 = vadd.f32 %v3698, %v3770
      %3772 = vmatprep.mubr.bf16.mxu0 %v1174
      %3773 = vmatmul.mubr.bf16.gmra.mxu0 %v1173
      %v3774 = vpop.f32.mrf.mxu0
      %v3775 = vadd.f32 %v3702, %v3774
      %v3776 = vpop.f32.mrf.mxu0
      %v3777 = vadd.f32 %v3704, %v3776
      %v3778 = vpop.f32.mrf.mxu0
      %v3779 = vadd.f32 %v3706, %v3778
      %v3780 = vpop.f32.mrf.mxu0
      %v3781 = vadd.f32 %v3708, %v3780
      %3782 = vdwg.mxu0
      %3783 = vmatprep.subr.bf16.mxu0 %v2702
      %3784 = vmatpush1.bf16.msra.mxu0 %v2701
      %3785 = vmatprep.subr.bf16.mxu0 %v2700
      %3786 = vmatpush1.bf16.msra.mxu0 %v2699
      %3787 = vmatprep.subr.bf16.mxu0 %v2698
      %3788 = vmatpush1.bf16.msra.mxu0 %v2697
      %3789 = vmatprep.subr.bf16.mxu0 %v2696
      %3790 = vmatpush1.bf16.msra.mxu0 %v2695
      %3791 = vmatprep.subr.bf16.mxu0 %v2694
      %3792 = vmatpush1.bf16.msra.mxu0 %v2693
      %3793 = vmatprep.subr.bf16.mxu0 %v2692
      %3794 = vmatpush1.bf16.msra.mxu0 %v2691
      %3795 = vmatprep.subr.bf16.mxu0 %v2690
      %3796 = vmatpush1.bf16.msra.mxu0 %v2689
      %3797 = vmatprep.subr.bf16.mxu0 %v2688
      %3798 = vmatpush1.bf16.msra.mxu0 %v2687
      %3799 = vmatprep.subr.bf16.mxu0 %v2718
      %3800 = vmatpush2.bf16.msra.mxu0 %v2717
      %3801 = vmatprep.subr.bf16.mxu0 %v2716
      %3802 = vmatpush2.bf16.msra.mxu0 %v2715
      %3803 = vmatprep.subr.bf16.mxu0 %v2714
      %3804 = vmatpush2.bf16.msra.mxu0 %v2713
      %3805 = vmatprep.subr.bf16.mxu0 %v2712
      %3806 = vmatpush2.bf16.msra.mxu0 %v2711
      %3807 = vmatprep.subr.bf16.mxu0 %v2710
      %3808 = vmatpush2.bf16.msra.mxu0 %v2709
      %3809 = vmatprep.subr.bf16.mxu0 %v2708
      %3810 = vmatpush2.bf16.msra.mxu0 %v2707
      %3811 = vmatprep.subr.bf16.mxu0 %v2706
      %3812 = vmatpush2.bf16.msra.mxu0 %v2705
      %3813 = vmatprep.subr.bf16.mxu0 %v2704
      %3814 = vmatpush2.bf16.msra.mxu0 %v2703
      %3815 = vmatprep.mubr.bf16.mxu0 %v1104
      %3816 = vmatmul.mubr.bf16.gmra.mxu0 %v1103
      %v3817 = vpop.f32.mrf.mxu0
      %v3818 = vadd.f32 %v3745, %v3817
      %v3819 = vpop.f32.mrf.mxu0
      %v3820 = vadd.f32 %v3747, %v3819
      %v3821 = vpop.f32.mrf.mxu0
      %v3822 = vadd.f32 %v3749, %v3821
      %v3823 = vpop.f32.mrf.mxu0
      %v3824 = vadd.f32 %v3751, %v3823
      %3825 = vmatprep.mubr.bf16.mxu0 %v1128
      %3826 = vmatmul.mubr.bf16.gmra.mxu0 %v1127
      %v3827 = vpop.f32.mrf.mxu0
      %v3828 = vadd.f32 %v3755, %v3827
      %v3829 = vpop.f32.mrf.mxu0
      %v3830 = vadd.f32 %v3757, %v3829
      %v3831 = vpop.f32.mrf.mxu0
      %v3832 = vadd.f32 %v3759, %v3831
      %v3833 = vpop.f32.mrf.mxu0
      %v3834 = vadd.f32 %v3761, %v3833
      %3835 = vmatprep.mubr.bf16.mxu0 %v1152
      %3836 = vmatmul.mubr.bf16.gmra.mxu0 %v1151
      %v3837 = vpop.f32.mrf.mxu0
      %v3838 = vadd.f32 %v3765, %v3837
      %v3839 = vpop.f32.mrf.mxu0
      %v3840 = vadd.f32 %v3767, %v3839
      %v3841 = vpop.f32.mrf.mxu0
      %v3842 = vadd.f32 %v3769, %v3841
      %v3843 = vpop.f32.mrf.mxu0
      %v3844 = vadd.f32 %v3771, %v3843
      %3845 = vmatprep.mubr.bf16.mxu0 %v1176
      %3846 = vmatmul.mubr.bf16.gmra.mxu0 %v1175
      %v3847 = vpop.f32.mrf.mxu0
      %v3848 = vadd.f32 %v3775, %v3847
      %v3849 = vpop.f32.mrf.mxu0
      %v3850 = vadd.f32 %v3777, %v3849
      %v3851 = vpop.f32.mrf.mxu0
      %v3852 = vadd.f32 %v3779, %v3851
      %v3853 = vpop.f32.mrf.mxu0
      %v3854 = vadd.f32 %v3781, %v3853
      %3855 = vdwg.mxu0
      %3856 = vmatprep.subr.bf16.mxu0 %v2734
      %3857 = vmatpush1.bf16.msra.mxu0 %v2733
      %3858 = vmatprep.subr.bf16.mxu0 %v2732
      %3859 = vmatpush1.bf16.msra.mxu0 %v2731
      %3860 = vmatprep.subr.bf16.mxu0 %v2730
      %3861 = vmatpush1.bf16.msra.mxu0 %v2729
      %3862 = vmatprep.subr.bf16.mxu0 %v2728
      %3863 = vmatpush1.bf16.msra.mxu0 %v2727
      %3864 = vmatprep.subr.bf16.mxu0 %v2726
      %3865 = vmatpush1.bf16.msra.mxu0 %v2725
      %3866 = vmatprep.subr.bf16.mxu0 %v2724
      %3867 = vmatpush1.bf16.msra.mxu0 %v2723
      %3868 = vmatprep.subr.bf16.mxu0 %v2722
      %3869 = vmatpush1.bf16.msra.mxu0 %v2721
      %3870 = vmatprep.subr.bf16.mxu0 %v2720
      %3871 = vmatpush1.bf16.msra.mxu0 %v2719
      %3872 = vmatprep.subr.bf16.mxu0 %v2750
      %3873 = vmatpush2.bf16.msra.mxu0 %v2749
      %3874 = vmatprep.subr.bf16.mxu0 %v2748
      %3875 = vmatpush2.bf16.msra.mxu0 %v2747
      %3876 = vmatprep.subr.bf16.mxu0 %v2746
      %3877 = vmatpush2.bf16.msra.mxu0 %v2745
      %3878 = vmatprep.subr.bf16.mxu0 %v2744
      %3879 = vmatpush2.bf16.msra.mxu0 %v2743
      %3880 = vmatprep.subr.bf16.mxu0 %v2742
      %3881 = vmatpush2.bf16.msra.mxu0 %v2741
      %3882 = vmatprep.subr.bf16.mxu0 %v2740
      %3883 = vmatpush2.bf16.msra.mxu0 %v2739
      %3884 = vmatprep.subr.bf16.mxu0 %v2738
      %3885 = vmatpush2.bf16.msra.mxu0 %v2737
      %3886 = vmatprep.subr.bf16.mxu0 %v2736
      %3887 = vmatpush2.bf16.msra.mxu0 %v2735
      %3888 = vmatprep.mubr.bf16.mxu0 %v1106
      %3889 = vmatmul.mubr.bf16.gmra.mxu0 %v1105
      %v3890 = vpop.f32.mrf.mxu0
      %v3891 = vadd.f32 %v3818, %v3890
      %v3892 = vpop.f32.mrf.mxu0
      %v3893 = vadd.f32 %v3820, %v3892
      %v3894 = vpop.f32.mrf.mxu0
      %v3895 = vadd.f32 %v3822, %v3894
      %v3896 = vpop.f32.mrf.mxu0
      %v3897 = vadd.f32 %v3824, %v3896
      %3898 = vmatprep.mubr.bf16.mxu0 %v1130
      %3899 = vmatmul.mubr.bf16.gmra.mxu0 %v1129
      %v3900 = vpop.f32.mrf.mxu0
      %v3901 = vadd.f32 %v3828, %v3900
      %v3902 = vpop.f32.mrf.mxu0
      %v3903 = vadd.f32 %v3830, %v3902
      %v3904 = vpop.f32.mrf.mxu0
      %v3905 = vadd.f32 %v3832, %v3904
      %v3906 = vpop.f32.mrf.mxu0
      %v3907 = vadd.f32 %v3834, %v3906
      %3908 = vmatprep.mubr.bf16.mxu0 %v1154
      %3909 = vmatmul.mubr.bf16.gmra.mxu0 %v1153
      %v3910 = vpop.f32.mrf.mxu0
      %v3911 = vadd.f32 %v3838, %v3910
      %v3912 = vpop.f32.mrf.mxu0
      %v3913 = vadd.f32 %v3840, %v3912
      %v3914 = vpop.f32.mrf.mxu0
      %v3915 = vadd.f32 %v3842, %v3914
      %v3916 = vpop.f32.mrf.mxu0
      %v3917 = vadd.f32 %v3844, %v3916
      %3918 = vmatprep.mubr.bf16.mxu0 %v1178
      %3919 = vmatmul.mubr.bf16.gmra.mxu0 %v1177
      %v3920 = vpop.f32.mrf.mxu0
      %v3921 = vadd.f32 %v3848, %v3920
      %v3922 = vpop.f32.mrf.mxu0
      %v3923 = vadd.f32 %v3850, %v3922
      %v3924 = vpop.f32.mrf.mxu0
      %v3925 = vadd.f32 %v3852, %v3924
      %v3926 = vpop.f32.mrf.mxu0
      %v3927 = vadd.f32 %v3854, %v3926
      %3928 = vdwg.mxu0
      %3929 = vmatprep.subr.bf16.mxu0 %v2766
      %3930 = vmatpush1.bf16.msra.mxu0 %v2765
      %3931 = vmatprep.subr.bf16.mxu0 %v2764
      %3932 = vmatpush1.bf16.msra.mxu0 %v2763
      %3933 = vmatprep.subr.bf16.mxu0 %v2762
      %3934 = vmatpush1.bf16.msra.mxu0 %v2761
      %3935 = vmatprep.subr.bf16.mxu0 %v2760
      %3936 = vmatpush1.bf16.msra.mxu0 %v2759
      %3937 = vmatprep.subr.bf16.mxu0 %v2758
      %3938 = vmatpush1.bf16.msra.mxu0 %v2757
      %3939 = vmatprep.subr.bf16.mxu0 %v2756
      %3940 = vmatpush1.bf16.msra.mxu0 %v2755
      %3941 = vmatprep.subr.bf16.mxu0 %v2754
      %3942 = vmatpush1.bf16.msra.mxu0 %v2753
      %3943 = vmatprep.subr.bf16.mxu0 %v2752
      %3944 = vmatpush1.bf16.msra.mxu0 %v2751
      %3945 = vmatprep.subr.bf16.mxu0 %v2782
      %3946 = vmatpush2.bf16.msra.mxu0 %v2781
      %3947 = vmatprep.subr.bf16.mxu0 %v2780
      %3948 = vmatpush2.bf16.msra.mxu0 %v2779
      %3949 = vmatprep.subr.bf16.mxu0 %v2778
      %3950 = vmatpush2.bf16.msra.mxu0 %v2777
      %3951 = vmatprep.subr.bf16.mxu0 %v2776
      %3952 = vmatpush2.bf16.msra.mxu0 %v2775
      %3953 = vmatprep.subr.bf16.mxu0 %v2774
      %3954 = vmatpush2.bf16.msra.mxu0 %v2773
      %3955 = vmatprep.subr.bf16.mxu0 %v2772
      %3956 = vmatpush2.bf16.msra.mxu0 %v2771
      %3957 = vmatprep.subr.bf16.mxu0 %v2770
      %3958 = vmatpush2.bf16.msra.mxu0 %v2769
      %3959 = vmatprep.subr.bf16.mxu0 %v2768
      %3960 = vmatpush2.bf16.msra.mxu0 %v2767
      %3961 = vmatprep.mubr.bf16.mxu0 %v1108
      %3962 = vmatmul.mubr.bf16.gmra.mxu0 %v1107
      %v3963 = vpop.f32.mrf.mxu0
      %v3964 = vadd.f32 %v3891, %v3963
      %v3965 = vpop.f32.mrf.mxu0
      %v3966 = vadd.f32 %v3893, %v3965
      %v3967 = vpop.f32.mrf.mxu0
      %v3968 = vadd.f32 %v3895, %v3967
      %v3969 = vpop.f32.mrf.mxu0
      %v3970 = vadd.f32 %v3897, %v3969
      %3971 = vmatprep.mubr.bf16.mxu0 %v1132
      %3972 = vmatmul.mubr.bf16.gmra.mxu0 %v1131
      %v3973 = vpop.f32.mrf.mxu0
      %v3974 = vadd.f32 %v3901, %v3973
      %v3975 = vpop.f32.mrf.mxu0
      %v3976 = vadd.f32 %v3903, %v3975
      %v3977 = vpop.f32.mrf.mxu0
      %v3978 = vadd.f32 %v3905, %v3977
      %v3979 = vpop.f32.mrf.mxu0
      %v3980 = vadd.f32 %v3907, %v3979
      %3981 = vmatprep.mubr.bf16.mxu0 %v1156
      %3982 = vmatmul.mubr.bf16.gmra.mxu0 %v1155
      %v3983 = vpop.f32.mrf.mxu0
      %v3984 = vadd.f32 %v3911, %v3983
      %v3985 = vpop.f32.mrf.mxu0
      %v3986 = vadd.f32 %v3913, %v3985
      %v3987 = vpop.f32.mrf.mxu0
      %v3988 = vadd.f32 %v3915, %v3987
      %v3989 = vpop.f32.mrf.mxu0
      %v3990 = vadd.f32 %v3917, %v3989
      %3991 = vmatprep.mubr.bf16.mxu0 %v1180
      %3992 = vmatmul.mubr.bf16.gmra.mxu0 %v1179
      %v3993 = vpop.f32.mrf.mxu0
      %v3994 = vadd.f32 %v3921, %v3993
      %v3995 = vpop.f32.mrf.mxu0
      %v3996 = vadd.f32 %v3923, %v3995
      %v3997 = vpop.f32.mrf.mxu0
      %v3998 = vadd.f32 %v3925, %v3997
      %v3999 = vpop.f32.mrf.mxu0
      %v4000 = vadd.f32 %v3927, %v3999
      %4001 = vdwg.mxu0
      %4002 = vmatprep.subr.bf16.mxu0 %v2798
      %4003 = vmatpush1.bf16.msra.mxu0 %v2797
      %4004 = vmatprep.subr.bf16.mxu0 %v2796
      %4005 = vmatpush1.bf16.msra.mxu0 %v2795
      %4006 = vmatprep.subr.bf16.mxu0 %v2794
      %4007 = vmatpush1.bf16.msra.mxu0 %v2793
      %4008 = vmatprep.subr.bf16.mxu0 %v2792
      %4009 = vmatpush1.bf16.msra.mxu0 %v2791
      %4010 = vmatprep.subr.bf16.mxu0 %v2790
      %4011 = vmatpush1.bf16.msra.mxu0 %v2789
      %4012 = vmatprep.subr.bf16.mxu0 %v2788
      %4013 = vmatpush1.bf16.msra.mxu0 %v2787
      %4014 = vmatprep.subr.bf16.mxu0 %v2786
      %4015 = vmatpush1.bf16.msra.mxu0 %v2785
      %4016 = vmatprep.subr.bf16.mxu0 %v2784
      %4017 = vmatpush1.bf16.msra.mxu0 %v2783
      %4018 = vmatprep.subr.bf16.mxu0 %v2814
      %4019 = vmatpush2.bf16.msra.mxu0 %v2813
      %4020 = vmatprep.subr.bf16.mxu0 %v2812
      %4021 = vmatpush2.bf16.msra.mxu0 %v2811
      %4022 = vmatprep.subr.bf16.mxu0 %v2810
      %4023 = vmatpush2.bf16.msra.mxu0 %v2809
      %4024 = vmatprep.subr.bf16.mxu0 %v2808
      %4025 = vmatpush2.bf16.msra.mxu0 %v2807
      %4026 = vmatprep.subr.bf16.mxu0 %v2806
      %4027 = vmatpush2.bf16.msra.mxu0 %v2805
      %4028 = vmatprep.subr.bf16.mxu0 %v2804
      %4029 = vmatpush2.bf16.msra.mxu0 %v2803
      %4030 = vmatprep.subr.bf16.mxu0 %v2802
      %4031 = vmatpush2.bf16.msra.mxu0 %v2801
      %4032 = vmatprep.subr.bf16.mxu0 %v2800
      %4033 = vmatpush2.bf16.msra.mxu0 %v2799
      %4034 = vmatprep.mubr.bf16.mxu0 %v1110
      %4035 = vmatmul.mubr.bf16.gmra.mxu0 %v1109
      %v4036 = vpop.f32.mrf.mxu0
      %v4037 = vadd.f32 %v3964, %v4036
      %v4038 = vpop.f32.mrf.mxu0
      %v4039 = vadd.f32 %v3966, %v4038
      %v4040 = vpop.f32.mrf.mxu0
      %v4041 = vadd.f32 %v3968, %v4040
      %v4042 = vpop.f32.mrf.mxu0
      %v4043 = vadd.f32 %v3970, %v4042
      %4044 = vmatprep.mubr.bf16.mxu0 %v1134
      %4045 = vmatmul.mubr.bf16.gmra.mxu0 %v1133
      %v4046 = vpop.f32.mrf.mxu0
      %v4047 = vadd.f32 %v3974, %v4046
      %v4048 = vpop.f32.mrf.mxu0
      %v4049 = vadd.f32 %v3976, %v4048
      %v4050 = vpop.f32.mrf.mxu0
      %v4051 = vadd.f32 %v3978, %v4050
      %v4052 = vpop.f32.mrf.mxu0
      %v4053 = vadd.f32 %v3980, %v4052
      %4054 = vmatprep.mubr.bf16.mxu0 %v1158
      %4055 = vmatmul.mubr.bf16.gmra.mxu0 %v1157
      %v4056 = vpop.f32.mrf.mxu0
      %v4057 = vadd.f32 %v3984, %v4056
      %v4058 = vpop.f32.mrf.mxu0
      %v4059 = vadd.f32 %v3986, %v4058
      %v4060 = vpop.f32.mrf.mxu0
      %v4061 = vadd.f32 %v3988, %v4060
      %v4062 = vpop.f32.mrf.mxu0
      %v4063 = vadd.f32 %v3990, %v4062
      %4064 = vmatprep.mubr.bf16.mxu0 %v1182
      %4065 = vmatmul.mubr.bf16.gmra.mxu0 %v1181
      %v4066 = vpop.f32.mrf.mxu0
      %v4067 = vadd.f32 %v3994, %v4066
      %v4068 = vpop.f32.mrf.mxu0
      %v4069 = vadd.f32 %v3996, %v4068
      %v4070 = vpop.f32.mrf.mxu0
      %v4071 = vadd.f32 %v3998, %v4070
      %v4072 = vpop.f32.mrf.mxu0
      %v4073 = vadd.f32 %v4000, %v4072
      %4074 = vdwg.mxu0
      %v4075 = vld [vmem:[%s3] sm:$0xff]
      %v4076 = vld [vmem:[%s3 + $0x8] sm:$0xff]
      %v4077 = vld [vmem:[%s3 + $0x10] sm:$0xff]
      %v4078 = vld [vmem:[%s3 + $0x18] sm:$0xff]
      %v4079 = vld [vmem:[%s3 + $0x20] sm:$0xff]
      %v4080 = vld [vmem:[%s3 + $0x28] sm:$0xff]
      %v4081 = vld [vmem:[%s3 + $0x30] sm:$0xff]
      %v4082 = vld [vmem:[%s3 + $0x38] sm:$0xff]
      %v4083 = vld [vmem:[%s3 + $0x40] sm:$0xff]
      %v4084 = vld [vmem:[%s3 + $0x48] sm:$0xff]
      %v4085 = vld [vmem:[%s3 + $0x50] sm:$0xff]
      %v4086 = vld [vmem:[%s3 + $0x58] sm:$0xff]
      %v4087 = vld [vmem:[%s3 + $0x60] sm:$0xff]
      %v4088 = vld [vmem:[%s3 + $0x68] sm:$0xff]
      %v4089 = vld [vmem:[%s3 + $0x70] sm:$0xff]
      %v4090 = vld [vmem:[%s3 + $0x78] sm:$0xff]
      %v4091 = vld [vmem:[%s3 + $0x80] sm:$0xff]
      %v4092 = vld [vmem:[%s3 + $0x88] sm:$0xff]
      %v4093 = vld [vmem:[%s3 + $0x90] sm:$0xff]
      %v4094 = vld [vmem:[%s3 + $0x98] sm:$0xff]
      %v4095 = vld [vmem:[%s3 + $0xa0] sm:$0xff]
      %v4096 = vld [vmem:[%s3 + $0xa8] sm:$0xff]
      %v4097 = vld [vmem:[%s3 + $0xb0] sm:$0xff]
      %v4098 = vld [vmem:[%s3 + $0xb8] sm:$0xff]
      %v4099 = vld [vmem:[%s3 + $0xc0] sm:$0xff]
      %v4100 = vld [vmem:[%s3 + $0xc8] sm:$0xff]
      %v4101 = vld [vmem:[%s3 + $0xd0] sm:$0xff]
      %v4102 = vld [vmem:[%s3 + $0xd8] sm:$0xff]
      %v4103 = vld [vmem:[%s3 + $0xe0] sm:$0xff]
      %v4104 = vld [vmem:[%s3 + $0xe8] sm:$0xff]
      %v4105 = vld [vmem:[%s3 + $0xf0] sm:$0xff]
      %v4106 = vld [vmem:[%s3 + $0xf8] sm:$0xff]
      %vm4107 = vcmask 523264
      %v4109 = vsel %vm4107, %v4075, 0
      %v4112 = vsel %vm4107, %v4076, 0
      %v4115 = vsel %vm4107, %v4077, 0
      %v4118 = vsel %vm4107, %v4078, 0
      %v4121 = vsel %vm4107, %v4079, 0
      %v4124 = vsel %vm4107, %v4080, 0
      %v4127 = vsel %vm4107, %v4081, 0
      %v4130 = vsel %vm4107, %v4082, 0
      %v4133 = vsel %vm4107, %v4083, 0
      %v4136 = vsel %vm4107, %v4084, 0
      %v4139 = vsel %vm4107, %v4085, 0
      %v4142 = vsel %vm4107, %v4086, 0
      %v4145 = vsel %vm4107, %v4087, 0
      %v4148 = vsel %vm4107, %v4088, 0
      %v4151 = vsel %vm4107, %v4089, 0
      %v4154 = vsel %vm4107, %v4090, 0
      %v4157 = vsel %vm4107, %v4091, 0
      %v4160 = vsel %vm4107, %v4092, 0
      %v4163 = vsel %vm4107, %v4093, 0
      %v4166 = vsel %vm4107, %v4094, 0
      %v4169 = vsel %vm4107, %v4095, 0
      %v4172 = vsel %vm4107, %v4096, 0
      %v4175 = vsel %vm4107, %v4097, 0
      %v4178 = vsel %vm4107, %v4098, 0
      %v4181 = vsel %vm4107, %v4099, 0
      %v4184 = vsel %vm4107, %v4100, 0
      %v4187 = vsel %vm4107, %v4101, 0
      %v4190 = vsel %vm4107, %v4102, 0
      %v4193 = vsel %vm4107, %v4103, 0
      %v4196 = vsel %vm4107, %v4104, 0
      %v4199 = vsel %vm4107, %v4105, 0
      %v4202 = vsel %vm4107, %v4106, 0
      %4204 = vmatprep.subr.mxu0 0.0
      %4205 = vmatpush1.msra.mxu0 0.0
      %4206 = vmatprep.subr.mxu0 0.0
      %4207 = vmatpush1.msra.mxu0 0.0
      %4208 = vmatprep.subr.mxu0 0.0
      %4209 = vmatpush1.msra.mxu0 0.0
      %4210 = vmatprep.subr.mxu0 0.0
      %4211 = vmatpush1.msra.mxu0 0.0
      %4212 = vmatprep.subr.mxu0 0.0
      %4213 = vmatpush1.msra.mxu0 0.0
      %4214 = vmatprep.subr.mxu0 0.0
      %4215 = vmatpush1.msra.mxu0 0.0
      %4216 = vmatprep.subr.mxu0 0.0
      %4217 = vmatpush1.msra.mxu0 0.0
      %4218 = vmatprep.subr.mxu0 0.0
      %4219 = vmatpush1.msra.mxu0 0.0
      %4220 = vmatprep.subr.mxu0 %v4073
      %4221 = vmatpush1.msra.mxu0 %v4071
      %4222 = vmatprep.subr.mxu0 %v4069
      %4223 = vmatpush1.msra.mxu0 %v4067
      %4224 = vmatprep.subr.mxu0 %v4063
      %4225 = vmatpush1.msra.mxu0 %v4061
      %4226 = vmatprep.subr.mxu0 %v4059
      %4227 = vmatpush1.msra.mxu0 %v4057
      %4228 = vmatprep.subr.mxu0 %v4053
      %4229 = vmatpush1.msra.mxu0 %v4051
      %4230 = vmatprep.subr.mxu0 %v4049
      %4231 = vmatpush1.msra.mxu0 %v4047
      %4232 = vmatprep.subr.mxu0 %v4043
      %4233 = vmatpush1.msra.mxu0 %v4041
      %4234 = vmatprep.subr.mxu0 %v4039
      %4235 = vmatpush1.msra.mxu0 %v4037
      %4236 = vmatprep.subr.mxu0 0.0
      %4237 = vmatpush2.msra.mxu0 0.0
      %4238 = vmatprep.subr.mxu0 0.0
      %4239 = vmatpush2.msra.mxu0 0.0
      %4240 = vmatprep.subr.mxu0 0.0
      %4241 = vmatpush2.msra.mxu0 0.0
      %4242 = vmatprep.subr.mxu0 0.0
      %4243 = vmatpush2.msra.mxu0 0.0
      %4244 = vmatprep.subr.mxu0 0.0
      %4245 = vmatpush2.msra.mxu0 0.0
      %4246 = vmatprep.subr.mxu0 0.0
      %4247 = vmatpush2.msra.mxu0 0.0
      %4248 = vmatprep.subr.mxu0 0.0
      %4249 = vmatpush2.msra.mxu0 0.0
      %4250 = vmatprep.subr.mxu0 0.0
      %4251 = vmatpush2.msra.mxu0 0.0
      %4252 = vmatprep.subr.mxu0 0.0
      %4253 = vmatpush2.msra.mxu0 0.0
      %4254 = vmatprep.subr.mxu0 0.0
      %4255 = vmatpush2.msra.mxu0 0.0
      %4256 = vmatprep.subr.mxu0 0.0
      %4257 = vmatpush2.msra.mxu0 0.0
      %4258 = vmatprep.subr.mxu0 0.0
      %4259 = vmatpush2.msra.mxu0 0.0
      %4260 = vmatprep.subr.mxu0 0.0
      %4261 = vmatpush2.msra.mxu0 0.0
      %4262 = vmatprep.subr.mxu0 0.0
      %4263 = vmatpush2.msra.mxu0 0.0
      %4264 = vmatprep.subr.mxu0 0.0
      %4265 = vmatpush2.msra.mxu0 0.0
      %4266 = vmatprep.subr.mxu0 0.0
      %4267 = vmatpush2.msra.mxu0 0.0
      %4268 = vmatprep.mubr.f32.mxu0 0.0
      %4269 = vmatmul.mubr.f32.gmra.mxu0 %v4109
      %v4270 = vpop.f32.mrf.mxu0
      %v4271 = vadd.f32 0.0, %v4270
      %v4272 = vpop.f32.mrf.mxu0
      %v4273 = vadd.f32 0.0, %v4272
      %4274 = vmatprep.mubr.f32.mxu0 0.0
      %4275 = vmatmul.mubr.f32.gmra.mxu0 %v4112
      %v4276 = vpop.f32.mrf.mxu0
      %v4277 = vadd.f32 0.0, %v4276
      %v4278 = vpop.f32.mrf.mxu0
      %v4279 = vadd.f32 0.0, %v4278
      %4280 = vmatprep.mubr.f32.mxu0 0.0
      %4281 = vmatmul.mubr.f32.gmra.mxu0 %v4115
      %v4282 = vpop.f32.mrf.mxu0
      %v4283 = vadd.f32 0.0, %v4282
      %v4284 = vpop.f32.mrf.mxu0
      %v4285 = vadd.f32 0.0, %v4284
      %4286 = vmatprep.mubr.f32.mxu0 0.0
      %4287 = vmatmul.mubr.f32.gmra.mxu0 %v4118
      %v4288 = vpop.f32.mrf.mxu0
      %v4289 = vadd.f32 0.0, %v4288
      %v4290 = vpop.f32.mrf.mxu0
      %v4291 = vadd.f32 0.0, %v4290
      %4292 = vmatprep.mubr.f32.mxu0 0.0
      %4293 = vmatmul.mubr.f32.gmra.mxu0 %v4121
      %v4294 = vpop.f32.mrf.mxu0
      %v4295 = vadd.f32 0.0, %v4294
      %v4296 = vpop.f32.mrf.mxu0
      %v4297 = vadd.f32 0.0, %v4296
      %4298 = vmatprep.mubr.f32.mxu0 0.0
      %4299 = vmatmul.mubr.f32.gmra.mxu0 %v4124
      %v4300 = vpop.f32.mrf.mxu0
      %v4301 = vadd.f32 0.0, %v4300
      %v4302 = vpop.f32.mrf.mxu0
      %v4303 = vadd.f32 0.0, %v4302
      %4304 = vmatprep.mubr.f32.mxu0 0.0
      %4305 = vmatmul.mubr.f32.gmra.mxu0 %v4127
      %v4306 = vpop.f32.mrf.mxu0
      %v4307 = vadd.f32 0.0, %v4306
      %v4308 = vpop.f32.mrf.mxu0
      %v4309 = vadd.f32 0.0, %v4308
      %4310 = vmatprep.mubr.f32.mxu0 0.0
      %4311 = vmatmul.mubr.f32.gmra.mxu0 %v4130
      %v4312 = vpop.f32.mrf.mxu0
      %v4313 = vadd.f32 0.0, %v4312
      %v4314 = vpop.f32.mrf.mxu0
      %v4315 = vadd.f32 0.0, %v4314
      %4316 = vmatprep.mubr.f32.mxu0 0.0
      %4317 = vmatmul.mubr.f32.gmra.mxu0 %v4133
      %v4318 = vpop.f32.mrf.mxu0
      %v4319 = vadd.f32 0.0, %v4318
      %v4320 = vpop.f32.mrf.mxu0
      %v4321 = vadd.f32 0.0, %v4320
      %4322 = vmatprep.mubr.f32.mxu0 0.0
      %4323 = vmatmul.mubr.f32.gmra.mxu0 %v4136
      %v4324 = vpop.f32.mrf.mxu0
      %v4325 = vadd.f32 0.0, %v4324
      %v4326 = vpop.f32.mrf.mxu0
      %v4327 = vadd.f32 0.0, %v4326
      %4328 = vmatprep.mubr.f32.mxu0 0.0
      %4329 = vmatmul.mubr.f32.gmra.mxu0 %v4139
      %v4330 = vpop.f32.mrf.mxu0
      %v4331 = vadd.f32 0.0, %v4330
      %v4332 = vpop.f32.mrf.mxu0
      %v4333 = vadd.f32 0.0, %v4332
      %4334 = vmatprep.mubr.f32.mxu0 0.0
      %4335 = vmatmul.mubr.f32.gmra.mxu0 %v4142
      %v4336 = vpop.f32.mrf.mxu0
      %v4337 = vadd.f32 0.0, %v4336
      %v4338 = vpop.f32.mrf.mxu0
      %v4339 = vadd.f32 0.0, %v4338
      %4340 = vmatprep.mubr.f32.mxu0 0.0
      %4341 = vmatmul.mubr.f32.gmra.mxu0 %v4145
      %v4342 = vpop.f32.mrf.mxu0
      %v4343 = vadd.f32 0.0, %v4342
      %v4344 = vpop.f32.mrf.mxu0
      %v4345 = vadd.f32 0.0, %v4344
      %4346 = vmatprep.mubr.f32.mxu0 0.0
      %4347 = vmatmul.mubr.f32.gmra.mxu0 %v4148
      %v4348 = vpop.f32.mrf.mxu0
      %v4349 = vadd.f32 0.0, %v4348
      %v4350 = vpop.f32.mrf.mxu0
      %v4351 = vadd.f32 0.0, %v4350
      %4352 = vmatprep.mubr.f32.mxu0 0.0
      %4353 = vmatmul.mubr.f32.gmra.mxu0 %v4151
      %v4354 = vpop.f32.mrf.mxu0
      %v4355 = vadd.f32 0.0, %v4354
      %v4356 = vpop.f32.mrf.mxu0
      %v4357 = vadd.f32 0.0, %v4356
      %4358 = vmatprep.mubr.f32.mxu0 0.0
      %4359 = vmatmul.mubr.f32.gmra.mxu0 %v4154
      %v4360 = vpop.f32.mrf.mxu0
      %v4361 = vadd.f32 0.0, %v4360
      %v4362 = vpop.f32.mrf.mxu0
      %v4363 = vadd.f32 0.0, %v4362
      %4364 = vmatprep.mubr.f32.mxu0 0.0
      %4365 = vmatmul.mubr.f32.gmra.mxu0 %v4157
      %v4366 = vpop.f32.mrf.mxu0
      %v4367 = vadd.f32 0.0, %v4366
      %v4368 = vpop.f32.mrf.mxu0
      %v4369 = vadd.f32 0.0, %v4368
      %4370 = vmatprep.mubr.f32.mxu0 0.0
      %4371 = vmatmul.mubr.f32.gmra.mxu0 %v4160
      %v4372 = vpop.f32.mrf.mxu0
      %v4373 = vadd.f32 0.0, %v4372
      %v4374 = vpop.f32.mrf.mxu0
      %v4375 = vadd.f32 0.0, %v4374
      %4376 = vmatprep.mubr.f32.mxu0 0.0
      %4377 = vmatmul.mubr.f32.gmra.mxu0 %v4163
      %v4378 = vpop.f32.mrf.mxu0
      %v4379 = vadd.f32 0.0, %v4378
      %v4380 = vpop.f32.mrf.mxu0
      %v4381 = vadd.f32 0.0, %v4380
      %4382 = vmatprep.mubr.f32.mxu0 0.0
      %4383 = vmatmul.mubr.f32.gmra.mxu0 %v4166
      %v4384 = vpop.f32.mrf.mxu0
      %v4385 = vadd.f32 0.0, %v4384
      %v4386 = vpop.f32.mrf.mxu0
      %v4387 = vadd.f32 0.0, %v4386
      %4388 = vmatprep.mubr.f32.mxu0 0.0
      %4389 = vmatmul.mubr.f32.gmra.mxu0 %v4169
      %v4390 = vpop.f32.mrf.mxu0
      %v4391 = vadd.f32 0.0, %v4390
      %v4392 = vpop.f32.mrf.mxu0
      %v4393 = vadd.f32 0.0, %v4392
      %4394 = vmatprep.mubr.f32.mxu0 0.0
      %4395 = vmatmul.mubr.f32.gmra.mxu0 %v4172
      %v4396 = vpop.f32.mrf.mxu0
      %v4397 = vadd.f32 0.0, %v4396
      %v4398 = vpop.f32.mrf.mxu0
      %v4399 = vadd.f32 0.0, %v4398
      %4400 = vmatprep.mubr.f32.mxu0 0.0
      %4401 = vmatmul.mubr.f32.gmra.mxu0 %v4175
      %v4402 = vpop.f32.mrf.mxu0
      %v4403 = vadd.f32 0.0, %v4402
      %v4404 = vpop.f32.mrf.mxu0
      %v4405 = vadd.f32 0.0, %v4404
      %4406 = vmatprep.mubr.f32.mxu0 0.0
      %4407 = vmatmul.mubr.f32.gmra.mxu0 %v4178
      %v4408 = vpop.f32.mrf.mxu0
      %v4409 = vadd.f32 0.0, %v4408
      %v4410 = vpop.f32.mrf.mxu0
      %v4411 = vadd.f32 0.0, %v4410
      %4412 = vmatprep.mubr.f32.mxu0 0.0
      %4413 = vmatmul.mubr.f32.gmra.mxu0 %v4181
      %v4414 = vpop.f32.mrf.mxu0
      %v4415 = vadd.f32 0.0, %v4414
      %v4416 = vpop.f32.mrf.mxu0
      %v4417 = vadd.f32 0.0, %v4416
      %4418 = vmatprep.mubr.f32.mxu0 0.0
      %4419 = vmatmul.mubr.f32.gmra.mxu0 %v4184
      %v4420 = vpop.f32.mrf.mxu0
      %v4421 = vadd.f32 0.0, %v4420
      %v4422 = vpop.f32.mrf.mxu0
      %v4423 = vadd.f32 0.0, %v4422
      %4424 = vmatprep.mubr.f32.mxu0 0.0
      %4425 = vmatmul.mubr.f32.gmra.mxu0 %v4187
      %v4426 = vpop.f32.mrf.mxu0
      %v4427 = vadd.f32 0.0, %v4426
      %v4428 = vpop.f32.mrf.mxu0
      %v4429 = vadd.f32 0.0, %v4428
      %4430 = vmatprep.mubr.f32.mxu0 0.0
      %4431 = vmatmul.mubr.f32.gmra.mxu0 %v4190
      %v4432 = vpop.f32.mrf.mxu0
      %v4433 = vadd.f32 0.0, %v4432
      %v4434 = vpop.f32.mrf.mxu0
      %v4435 = vadd.f32 0.0, %v4434
      %4436 = vmatprep.mubr.f32.mxu0 0.0
      %4437 = vmatmul.mubr.f32.gmra.mxu0 %v4193
      %v4438 = vpop.f32.mrf.mxu0
      %v4439 = vadd.f32 0.0, %v4438
      %v4440 = vpop.f32.mrf.mxu0
      %v4441 = vadd.f32 0.0, %v4440
      %4442 = vmatprep.mubr.f32.mxu0 0.0
      %4443 = vmatmul.mubr.f32.gmra.mxu0 %v4196
      %v4444 = vpop.f32.mrf.mxu0
      %v4445 = vadd.f32 0.0, %v4444
      %v4446 = vpop.f32.mrf.mxu0
      %v4447 = vadd.f32 0.0, %v4446
      %4448 = vmatprep.mubr.f32.mxu0 0.0
      %4449 = vmatmul.mubr.f32.gmra.mxu0 %v4199
      %v4450 = vpop.f32.mrf.mxu0
      %v4451 = vadd.f32 0.0, %v4450
      %v4452 = vpop.f32.mrf.mxu0
      %v4453 = vadd.f32 0.0, %v4452
      %4454 = vmatprep.mubr.f32.mxu0 0.0
      %4455 = vmatmul.mubr.f32.gmra.mxu0 %v4202
      %v4456 = vpop.f32.mrf.mxu0
      %v4457 = vadd.f32 0.0, %v4456
      %v4458 = vpop.f32.mrf.mxu0
      %v4459 = vadd.f32 0.0, %v4458
      %4460 = vdwg.mxu0
      %v4461 = vlaneseq
      %v4462 = vshrl.u32 %v4461, 7
      %v4463 = vadd.s32 %v4462, 8
      %v4464 = vadd.s32 %v4462, 16
      %v4465 = vadd.s32 %v4462, 24
      %v4466 = vadd.s32 %v4462, 32
      %v4467 = vadd.s32 %v4462, 40
      %v4468 = vadd.s32 %v4462, 48
      %v4469 = vadd.s32 %v4462, 56
      %v4470 = vadd.s32 %v4462, 64
      %v4471 = vadd.s32 %v4462, 72
      %v4472 = vadd.s32 %v4462, 80
      %v4473 = vadd.s32 %v4462, 88
      %v4474 = vadd.s32 %v4462, 96
      %v4475 = vadd.s32 %v4462, 104
      %v4476 = vadd.s32 %v4462, 112
      %v4477 = vadd.s32 %v4462, 120
      %v4478 = vadd.s32 %v4462, 128
      %v4479 = vadd.s32 %v4462, 136
      %v4480 = vadd.s32 %v4462, 144
      %v4481 = vadd.s32 %v4462, 152
      %v4482 = vadd.s32 %v4462, 160
      %v4483 = vadd.s32 %v4462, 168
      %v4484 = vadd.s32 %v4462, 176
      %v4485 = vadd.s32 %v4462, 184
      %v4486 = vadd.s32 %v4462, 192
      %v4487 = vadd.s32 %v4462, 200
      %v4488 = vadd.s32 %v4462, 208
      %v4489 = vadd.s32 %v4462, 216
      %v4490 = vadd.s32 %v4462, 224
      %v4491 = vadd.s32 %v4462, 232
      %v4492 = vadd.s32 %v4462, 240
      %v4493 = vadd.s32 %v4462, 248
      %vm4494 = vcmp.lt.s32.totalorder %v4462, 0
      %v4495 = vsub.s32 0, %v4462
      %v4496 = vsel %vm4494, %v4495, %v4462
      %v4497 = vshrl.u32 %v4496, 4
      %v4498 = vand.u32 %v4496, 15
      %v4499 = vsub.s32 0, %v4498
      %v4500 = vsel %vm4494, %v4499, %v4498
      %vm4501 = vcmp.lt.s32.totalorder %v4463, 0
      %v4502 = vsub.s32 0, %v4463
      %v4503 = vsel %vm4501, %v4502, %v4463
      %v4504 = vshrl.u32 %v4503, 4
      %v4505 = vand.u32 %v4503, 15
      %v4506 = vsub.s32 0, %v4505
      %v4507 = vsel %vm4501, %v4506, %v4505
      %vm4508 = vcmp.lt.s32.totalorder %v4464, 0
      %v4509 = vsub.s32 0, %v4464
      %v4510 = vsel %vm4508, %v4509, %v4464
      %v4511 = vshrl.u32 %v4510, 4
      %v4512 = vand.u32 %v4510, 15
      %v4513 = vsub.s32 0, %v4512
      %v4514 = vsel %vm4508, %v4513, %v4512
      %vm4515 = vcmp.lt.s32.totalorder %v4465, 0
      %v4516 = vsub.s32 0, %v4465
      %v4517 = vsel %vm4515, %v4516, %v4465
      %v4518 = vshrl.u32 %v4517, 4
      %v4519 = vand.u32 %v4517, 15
      %v4520 = vsub.s32 0, %v4519
      %v4521 = vsel %vm4515, %v4520, %v4519
      %vm4522 = vcmp.lt.s32.totalorder %v4466, 0
      %v4523 = vsub.s32 0, %v4466
      %v4524 = vsel %vm4522, %v4523, %v4466
      %v4525 = vshrl.u32 %v4524, 4
      %v4526 = vand.u32 %v4524, 15
      %v4527 = vsub.s32 0, %v4526
      %v4528 = vsel %vm4522, %v4527, %v4526
      %vm4529 = vcmp.lt.s32.totalorder %v4467, 0
      %v4530 = vsub.s32 0, %v4467
      %v4531 = vsel %vm4529, %v4530, %v4467
      %v4532 = vshrl.u32 %v4531, 4
      %v4533 = vand.u32 %v4531, 15
      %v4534 = vsub.s32 0, %v4533
      %v4535 = vsel %vm4529, %v4534, %v4533
      %vm4536 = vcmp.lt.s32.totalorder %v4468, 0
      %v4537 = vsub.s32 0, %v4468
      %v4538 = vsel %vm4536, %v4537, %v4468
      %v4539 = vshrl.u32 %v4538, 4
      %v4540 = vand.u32 %v4538, 15
      %v4541 = vsub.s32 0, %v4540
      %v4542 = vsel %vm4536, %v4541, %v4540
      %vm4543 = vcmp.lt.s32.totalorder %v4469, 0
      %v4544 = vsub.s32 0, %v4469
      %v4545 = vsel %vm4543, %v4544, %v4469
      %v4546 = vshrl.u32 %v4545, 4
      %v4547 = vand.u32 %v4545, 15
      %v4548 = vsub.s32 0, %v4547
      %v4549 = vsel %vm4543, %v4548, %v4547
      %vm4550 = vcmp.lt.s32.totalorder %v4470, 0
      %v4551 = vsub.s32 0, %v4470
      %v4552 = vsel %vm4550, %v4551, %v4470
      %v4553 = vshrl.u32 %v4552, 4
      %v4554 = vand.u32 %v4552, 15
      %v4555 = vsub.s32 0, %v4554
      %v4556 = vsel %vm4550, %v4555, %v4554
      %vm4557 = vcmp.lt.s32.totalorder %v4471, 0
      %v4558 = vsub.s32 0, %v4471
      %v4559 = vsel %vm4557, %v4558, %v4471
      %v4560 = vshrl.u32 %v4559, 4
      %v4561 = vand.u32 %v4559, 15
      %v4562 = vsub.s32 0, %v4561
      %v4563 = vsel %vm4557, %v4562, %v4561
      %vm4564 = vcmp.lt.s32.totalorder %v4472, 0
      %v4565 = vsub.s32 0, %v4472
      %v4566 = vsel %vm4564, %v4565, %v4472
      %v4567 = vshrl.u32 %v4566, 4
      %v4568 = vand.u32 %v4566, 15
      %v4569 = vsub.s32 0, %v4568
      %v4570 = vsel %vm4564, %v4569, %v4568
      %vm4571 = vcmp.lt.s32.totalorder %v4473, 0
      %v4572 = vsub.s32 0, %v4473
      %v4573 = vsel %vm4571, %v4572, %v4473
      %v4574 = vshrl.u32 %v4573, 4
      %v4575 = vand.u32 %v4573, 15
      %v4576 = vsub.s32 0, %v4575
      %v4577 = vsel %vm4571, %v4576, %v4575
      %vm4578 = vcmp.lt.s32.totalorder %v4474, 0
      %v4579 = vsub.s32 0, %v4474
      %v4580 = vsel %vm4578, %v4579, %v4474
      %v4581 = vshrl.u32 %v4580, 4
      %v4582 = vand.u32 %v4580, 15
      %v4583 = vsub.s32 0, %v4582
      %v4584 = vsel %vm4578, %v4583, %v4582
      %vm4585 = vcmp.lt.s32.totalorder %v4475, 0
      %v4586 = vsub.s32 0, %v4475
      %v4587 = vsel %vm4585, %v4586, %v4475
      %v4588 = vshrl.u32 %v4587, 4
      %v4589 = vand.u32 %v4587, 15
      %v4590 = vsub.s32 0, %v4589
      %v4591 = vsel %vm4585, %v4590, %v4589
      %vm4592 = vcmp.lt.s32.totalorder %v4476, 0
      %v4593 = vsub.s32 0, %v4476
      %v4594 = vsel %vm4592, %v4593, %v4476
      %v4595 = vshrl.u32 %v4594, 4
      %v4596 = vand.u32 %v4594, 15
      %v4597 = vsub.s32 0, %v4596
      %v4598 = vsel %vm4592, %v4597, %v4596
      %vm4599 = vcmp.lt.s32.totalorder %v4477, 0
      %v4600 = vsub.s32 0, %v4477
      %v4601 = vsel %vm4599, %v4600, %v4477
      %v4602 = vshrl.u32 %v4601, 4
      %v4603 = vand.u32 %v4601, 15
      %v4604 = vsub.s32 0, %v4603
      %v4605 = vsel %vm4599, %v4604, %v4603
      %vm4606 = vcmp.lt.s32.totalorder %v4478, 0
      %v4607 = vsub.s32 0, %v4478
      %v4608 = vsel %vm4606, %v4607, %v4478
      %v4609 = vshrl.u32 %v4608, 4
      %v4610 = vand.u32 %v4608, 15
      %v4611 = vsub.s32 0, %v4610
      %v4612 = vsel %vm4606, %v4611, %v4610
      %vm4613 = vcmp.lt.s32.totalorder %v4479, 0
      %v4614 = vsub.s32 0, %v4479
      %v4615 = vsel %vm4613, %v4614, %v4479
      %v4616 = vshrl.u32 %v4615, 4
      %v4617 = vand.u32 %v4615, 15
      %v4618 = vsub.s32 0, %v4617
      %v4619 = vsel %vm4613, %v4618, %v4617
      %vm4620 = vcmp.lt.s32.totalorder %v4480, 0
      %v4621 = vsub.s32 0, %v4480
      %v4622 = vsel %vm4620, %v4621, %v4480
      %v4623 = vshrl.u32 %v4622, 4
      %v4624 = vand.u32 %v4622, 15
      %v4625 = vsub.s32 0, %v4624
      %v4626 = vsel %vm4620, %v4625, %v4624
      %vm4627 = vcmp.lt.s32.totalorder %v4481, 0
      %v4628 = vsub.s32 0, %v4481
      %v4629 = vsel %vm4627, %v4628, %v4481
      %v4630 = vshrl.u32 %v4629, 4
      %v4631 = vand.u32 %v4629, 15
      %v4632 = vsub.s32 0, %v4631
      %v4633 = vsel %vm4627, %v4632, %v4631
      %vm4634 = vcmp.lt.s32.totalorder %v4482, 0
      %v4635 = vsub.s32 0, %v4482
      %v4636 = vsel %vm4634, %v4635, %v4482
      %v4637 = vshrl.u32 %v4636, 4
      %v4638 = vand.u32 %v4636, 15
      %v4639 = vsub.s32 0, %v4638
      %v4640 = vsel %vm4634, %v4639, %v4638
      %vm4641 = vcmp.lt.s32.totalorder %v4483, 0
      %v4642 = vsub.s32 0, %v4483
      %v4643 = vsel %vm4641, %v4642, %v4483
      %v4644 = vshrl.u32 %v4643, 4
      %v4645 = vand.u32 %v4643, 15
      %v4646 = vsub.s32 0, %v4645
      %v4647 = vsel %vm4641, %v4646, %v4645
      %vm4648 = vcmp.lt.s32.totalorder %v4484, 0
      %v4649 = vsub.s32 0, %v4484
      %v4650 = vsel %vm4648, %v4649, %v4484
      %v4651 = vshrl.u32 %v4650, 4
      %v4652 = vand.u32 %v4650, 15
      %v4653 = vsub.s32 0, %v4652
      %v4654 = vsel %vm4648, %v4653, %v4652
      %vm4655 = vcmp.lt.s32.totalorder %v4485, 0
      %v4656 = vsub.s32 0, %v4485
      %v4657 = vsel %vm4655, %v4656, %v4485
      %v4658 = vshrl.u32 %v4657, 4
      %v4659 = vand.u32 %v4657, 15
      %v4660 = vsub.s32 0, %v4659
      %v4661 = vsel %vm4655, %v4660, %v4659
      %vm4662 = vcmp.lt.s32.totalorder %v4486, 0
      %v4663 = vsub.s32 0, %v4486
      %v4664 = vsel %vm4662, %v4663, %v4486
      %v4665 = vshrl.u32 %v4664, 4
      %v4666 = vand.u32 %v4664, 15
      %v4667 = vsub.s32 0, %v4666
      %v4668 = vsel %vm4662, %v4667, %v4666
      %vm4669 = vcmp.lt.s32.totalorder %v4487, 0
      %v4670 = vsub.s32 0, %v4487
      %v4671 = vsel %vm4669, %v4670, %v4487
      %v4672 = vshrl.u32 %v4671, 4
      %v4673 = vand.u32 %v4671, 15
      %v4674 = vsub.s32 0, %v4673
      %v4675 = vsel %vm4669, %v4674, %v4673
      %vm4676 = vcmp.lt.s32.totalorder %v4488, 0
      %v4677 = vsub.s32 0, %v4488
      %v4678 = vsel %vm4676, %v4677, %v4488
      %v4679 = vshrl.u32 %v4678, 4
      %v4680 = vand.u32 %v4678, 15
      %v4681 = vsub.s32 0, %v4680
      %v4682 = vsel %vm4676, %v4681, %v4680
      %vm4683 = vcmp.lt.s32.totalorder %v4489, 0
      %v4684 = vsub.s32 0, %v4489
      %v4685 = vsel %vm4683, %v4684, %v4489
      %v4686 = vshrl.u32 %v4685, 4
      %v4687 = vand.u32 %v4685, 15
      %v4688 = vsub.s32 0, %v4687
      %v4689 = vsel %vm4683, %v4688, %v4687
      %vm4690 = vcmp.lt.s32.totalorder %v4490, 0
      %v4691 = vsub.s32 0, %v4490
      %v4692 = vsel %vm4690, %v4691, %v4490
      %v4693 = vshrl.u32 %v4692, 4
      %v4694 = vand.u32 %v4692, 15
      %v4695 = vsub.s32 0, %v4694
      %v4696 = vsel %vm4690, %v4695, %v4694
      %vm4697 = vcmp.lt.s32.totalorder %v4491, 0
      %v4698 = vsub.s32 0, %v4491
      %v4699 = vsel %vm4697, %v4698, %v4491
      %v4700 = vshrl.u32 %v4699, 4
      %v4701 = vand.u32 %v4699, 15
      %v4702 = vsub.s32 0, %v4701
      %v4703 = vsel %vm4697, %v4702, %v4701
      %vm4704 = vcmp.lt.s32.totalorder %v4492, 0
      %v4705 = vsub.s32 0, %v4492
      %v4706 = vsel %vm4704, %v4705, %v4492
      %v4707 = vshrl.u32 %v4706, 4
      %v4708 = vand.u32 %v4706, 15
      %v4709 = vsub.s32 0, %v4708
      %v4710 = vsel %vm4704, %v4709, %v4708
      %vm4711 = vcmp.lt.s32.totalorder %v4493, 0
      %v4712 = vsub.s32 0, %v4493
      %v4713 = vsel %vm4711, %v4712, %v4493
      %v4714 = vshrl.u32 %v4713, 4
      %v4715 = vand.u32 %v4713, 15
      %v4716 = vsub.s32 0, %v4715
      %v4717 = vsel %vm4711, %v4716, %v4715
      %vm4718 = vcmp.ne.s32.totalorder %v4500, 0
      %vm4719 = vcmp.ne.s32.totalorder %v4507, 0
      %vm4720 = vcmp.ne.s32.totalorder %v4514, 0
      %vm4721 = vcmp.ne.s32.totalorder %v4521, 0
      %vm4722 = vcmp.ne.s32.totalorder %v4528, 0
      %vm4723 = vcmp.ne.s32.totalorder %v4535, 0
      %vm4724 = vcmp.ne.s32.totalorder %v4542, 0
      %vm4725 = vcmp.ne.s32.totalorder %v4549, 0
      %vm4726 = vcmp.ne.s32.totalorder %v4556, 0
      %vm4727 = vcmp.ne.s32.totalorder %v4563, 0
      %vm4728 = vcmp.ne.s32.totalorder %v4570, 0
      %vm4729 = vcmp.ne.s32.totalorder %v4577, 0
      %vm4730 = vcmp.ne.s32.totalorder %v4584, 0
      %vm4731 = vcmp.ne.s32.totalorder %v4591, 0
      %vm4732 = vcmp.ne.s32.totalorder %v4598, 0
      %vm4733 = vcmp.ne.s32.totalorder %v4605, 0
      %vm4734 = vcmp.ne.s32.totalorder %v4612, 0
      %vm4735 = vcmp.ne.s32.totalorder %v4619, 0
      %vm4736 = vcmp.ne.s32.totalorder %v4626, 0
      %vm4737 = vcmp.ne.s32.totalorder %v4633, 0
      %vm4738 = vcmp.ne.s32.totalorder %v4640, 0
      %vm4739 = vcmp.ne.s32.totalorder %v4647, 0
      %vm4740 = vcmp.ne.s32.totalorder %v4654, 0
      %vm4741 = vcmp.ne.s32.totalorder %v4661, 0
      %vm4742 = vcmp.ne.s32.totalorder %v4668, 0
      %vm4743 = vcmp.ne.s32.totalorder %v4675, 0
      %vm4744 = vcmp.ne.s32.totalorder %v4682, 0
      %vm4745 = vcmp.ne.s32.totalorder %v4689, 0
      %vm4746 = vcmp.ne.s32.totalorder %v4696, 0
      %vm4747 = vcmp.ne.s32.totalorder %v4703, 0
      %vm4748 = vcmp.ne.s32.totalorder %v4710, 0
      %vm4749 = vcmp.ne.s32.totalorder %v4717, 0
      %vm4750 = vcmp.lt.s32.totalorder %v4500, 0
      %vm4751 = vcmp.lt.s32.totalorder %v4507, 0
      %vm4752 = vcmp.lt.s32.totalorder %v4514, 0
      %vm4753 = vcmp.lt.s32.totalorder %v4521, 0
      %vm4754 = vcmp.lt.s32.totalorder %v4528, 0
      %vm4755 = vcmp.lt.s32.totalorder %v4535, 0
      %vm4756 = vcmp.lt.s32.totalorder %v4542, 0
      %vm4757 = vcmp.lt.s32.totalorder %v4549, 0
      %vm4758 = vcmp.lt.s32.totalorder %v4556, 0
      %vm4759 = vcmp.lt.s32.totalorder %v4563, 0
      %vm4760 = vcmp.lt.s32.totalorder %v4570, 0
      %vm4761 = vcmp.lt.s32.totalorder %v4577, 0
      %vm4762 = vcmp.lt.s32.totalorder %v4584, 0
      %vm4763 = vcmp.lt.s32.totalorder %v4591, 0
      %vm4764 = vcmp.lt.s32.totalorder %v4598, 0
      %vm4765 = vcmp.lt.s32.totalorder %v4605, 0
      %vm4766 = vcmp.lt.s32.totalorder %v4612, 0
      %vm4767 = vcmp.lt.s32.totalorder %v4619, 0
      %vm4768 = vcmp.lt.s32.totalorder %v4626, 0
      %vm4769 = vcmp.lt.s32.totalorder %v4633, 0
      %vm4770 = vcmp.lt.s32.totalorder %v4640, 0
      %vm4771 = vcmp.lt.s32.totalorder %v4647, 0
      %vm4772 = vcmp.lt.s32.totalorder %v4654, 0
      %vm4773 = vcmp.lt.s32.totalorder %v4661, 0
      %vm4774 = vcmp.lt.s32.totalorder %v4668, 0
      %vm4775 = vcmp.lt.s32.totalorder %v4675, 0
      %vm4776 = vcmp.lt.s32.totalorder %v4682, 0
      %vm4777 = vcmp.lt.s32.totalorder %v4689, 0
      %vm4778 = vcmp.lt.s32.totalorder %v4696, 0
      %vm4779 = vcmp.lt.s32.totalorder %v4703, 0
      %vm4780 = vcmp.lt.s32.totalorder %v4710, 0
      %vm4781 = vcmp.lt.s32.totalorder %v4717, 0
      %vm4782 = vmand %vm4750, %vm4718
      %vm4783 = vmand %vm4751, %vm4719
      %vm4784 = vmand %vm4752, %vm4720
      %vm4785 = vmand %vm4753, %vm4721
      %vm4786 = vmand %vm4754, %vm4722
      %vm4787 = vmand %vm4755, %vm4723
      %vm4788 = vmand %vm4756, %vm4724
      %vm4789 = vmand %vm4757, %vm4725
      %vm4790 = vmand %vm4758, %vm4726
      %vm4791 = vmand %vm4759, %vm4727
      %vm4792 = vmand %vm4760, %vm4728
      %vm4793 = vmand %vm4761, %vm4729
      %vm4794 = vmand %vm4762, %vm4730
      %vm4795 = vmand %vm4763, %vm4731
      %vm4796 = vmand %vm4764, %vm4732
      %vm4797 = vmand %vm4765, %vm4733
      %vm4798 = vmand %vm4766, %vm4734
      %vm4799 = vmand %vm4767, %vm4735
      %vm4800 = vmand %vm4768, %vm4736
      %vm4801 = vmand %vm4769, %vm4737
      %vm4802 = vmand %vm4770, %vm4738
      %vm4803 = vmand %vm4771, %vm4739
      %vm4804 = vmand %vm4772, %vm4740
      %vm4805 = vmand %vm4773, %vm4741
      %vm4806 = vmand %vm4774, %vm4742
      %vm4807 = vmand %vm4775, %vm4743
      %vm4808 = vmand %vm4776, %vm4744
      %vm4809 = vmand %vm4777, %vm4745
      %vm4810 = vmand %vm4778, %vm4746
      %vm4811 = vmand %vm4779, %vm4747
      %vm4812 = vmand %vm4780, %vm4748
      %vm4813 = vmand %vm4781, %vm4749
      %v4814 = vadd.s32 %v4500, 16
      %v4815 = vadd.s32 %v4507, 16
      %v4816 = vadd.s32 %v4514, 16
      %v4817 = vadd.s32 %v4521, 16
      %v4818 = vadd.s32 %v4528, 16
      %v4819 = vadd.s32 %v4535, 16
      %v4820 = vadd.s32 %v4542, 16
      %v4821 = vadd.s32 %v4549, 16
      %v4822 = vadd.s32 %v4556, 16
      %v4823 = vadd.s32 %v4563, 16
      %v4824 = vadd.s32 %v4570, 16
      %v4825 = vadd.s32 %v4577, 16
      %v4826 = vadd.s32 %v4584, 16
      %v4827 = vadd.s32 %v4591, 16
      %v4828 = vadd.s32 %v4598, 16
      %v4829 = vadd.s32 %v4605, 16
      %v4830 = vadd.s32 %v4612, 16
      %v4831 = vadd.s32 %v4619, 16
      %v4832 = vadd.s32 %v4626, 16
      %v4833 = vadd.s32 %v4633, 16
      %v4834 = vadd.s32 %v4640, 16
      %v4835 = vadd.s32 %v4647, 16
      %v4836 = vadd.s32 %v4654, 16
      %v4837 = vadd.s32 %v4661, 16
      %v4838 = vadd.s32 %v4668, 16
      %v4839 = vadd.s32 %v4675, 16
      %v4840 = vadd.s32 %v4682, 16
      %v4841 = vadd.s32 %v4689, 16
      %v4842 = vadd.s32 %v4696, 16
      %v4843 = vadd.s32 %v4703, 16
      %v4844 = vadd.s32 %v4710, 16
      %v4845 = vadd.s32 %v4717, 16
      %v4846 = vsel %vm4782, %v4814, %v4500
      %v4847 = vsel %vm4783, %v4815, %v4507
      %v4848 = vsel %vm4784, %v4816, %v4514
      %v4849 = vsel %vm4785, %v4817, %v4521
      %v4850 = vsel %vm4786, %v4818, %v4528
      %v4851 = vsel %vm4787, %v4819, %v4535
      %v4852 = vsel %vm4788, %v4820, %v4542
      %v4853 = vsel %vm4789, %v4821, %v4549
      %v4854 = vsel %vm4790, %v4822, %v4556
      %v4855 = vsel %vm4791, %v4823, %v4563
      %v4856 = vsel %vm4792, %v4824, %v4570
      %v4857 = vsel %vm4793, %v4825, %v4577
      %v4858 = vsel %vm4794, %v4826, %v4584
      %v4859 = vsel %vm4795, %v4827, %v4591
      %v4860 = vsel %vm4796, %v4828, %v4598
      %v4861 = vsel %vm4797, %v4829, %v4605
      %v4862 = vsel %vm4798, %v4830, %v4612
      %v4863 = vsel %vm4799, %v4831, %v4619
      %v4864 = vsel %vm4800, %v4832, %v4626
      %v4865 = vsel %vm4801, %v4833, %v4633
      %v4866 = vsel %vm4802, %v4834, %v4640
      %v4867 = vsel %vm4803, %v4835, %v4647
      %v4868 = vsel %vm4804, %v4836, %v4654
      %v4869 = vsel %vm4805, %v4837, %v4661
      %v4870 = vsel %vm4806, %v4838, %v4668
      %v4871 = vsel %vm4807, %v4839, %v4675
      %v4872 = vsel %vm4808, %v4840, %v4682
      %v4873 = vsel %vm4809, %v4841, %v4689
      %v4874 = vsel %vm4810, %v4842, %v4696
      %v4875 = vsel %vm4811, %v4843, %v4703
      %v4876 = vsel %vm4812, %v4844, %v4710
      %v4877 = vsel %vm4813, %v4845, %v4717
      %vm4878 = vcmp.ne.s32.totalorder %v4846, 0
      %vm4879 = vcmp.ne.s32.totalorder %v4847, 0
      %vm4880 = vcmp.ne.s32.totalorder %v4848, 0
      %vm4881 = vcmp.ne.s32.totalorder %v4849, 0
      %vm4882 = vcmp.ne.s32.totalorder %v4850, 0
      %vm4883 = vcmp.ne.s32.totalorder %v4851, 0
      %vm4884 = vcmp.ne.s32.totalorder %v4852, 0
      %vm4885 = vcmp.ne.s32.totalorder %v4853, 0
      %vm4886 = vcmp.ne.s32.totalorder %v4854, 0
      %vm4887 = vcmp.ne.s32.totalorder %v4855, 0
      %vm4888 = vcmp.ne.s32.totalorder %v4856, 0
      %vm4889 = vcmp.ne.s32.totalorder %v4857, 0
      %vm4890 = vcmp.ne.s32.totalorder %v4858, 0
      %vm4891 = vcmp.ne.s32.totalorder %v4859, 0
      %vm4892 = vcmp.ne.s32.totalorder %v4860, 0
      %vm4893 = vcmp.ne.s32.totalorder %v4861, 0
      %vm4894 = vcmp.ne.s32.totalorder %v4862, 0
      %vm4895 = vcmp.ne.s32.totalorder %v4863, 0
      %vm4896 = vcmp.ne.s32.totalorder %v4864, 0
      %vm4897 = vcmp.ne.s32.totalorder %v4865, 0
      %vm4898 = vcmp.ne.s32.totalorder %v4866, 0
      %vm4899 = vcmp.ne.s32.totalorder %v4867, 0
      %vm4900 = vcmp.ne.s32.totalorder %v4868, 0
      %vm4901 = vcmp.ne.s32.totalorder %v4869, 0
      %vm4902 = vcmp.ne.s32.totalorder %v4870, 0
      %vm4903 = vcmp.ne.s32.totalorder %v4871, 0
      %vm4904 = vcmp.ne.s32.totalorder %v4872, 0
      %vm4905 = vcmp.ne.s32.totalorder %v4873, 0
      %vm4906 = vcmp.ne.s32.totalorder %v4874, 0
      %vm4907 = vcmp.ne.s32.totalorder %v4875, 0
      %vm4908 = vcmp.ne.s32.totalorder %v4876, 0
      %vm4909 = vcmp.ne.s32.totalorder %v4877, 0
      %v4910 = vsel %vm4878, 1, 0
      %v4911 = vsel %vm4879, 1, 0
      %v4912 = vsel %vm4880, 1, 0
      %v4913 = vsel %vm4881, 1, 0
      %v4914 = vsel %vm4882, 1, 0
      %v4915 = vsel %vm4883, 1, 0
      %v4916 = vsel %vm4884, 1, 0
      %v4917 = vsel %vm4885, 1, 0
      %v4918 = vsel %vm4886, 1, 0
      %v4919 = vsel %vm4887, 1, 0
      %v4920 = vsel %vm4888, 1, 0
      %v4921 = vsel %vm4889, 1, 0
      %v4922 = vsel %vm4890, 1, 0
      %v4923 = vsel %vm4891, 1, 0
      %v4924 = vsel %vm4892, 1, 0
      %v4925 = vsel %vm4893, 1, 0
      %v4926 = vsel %vm4894, 1, 0
      %v4927 = vsel %vm4895, 1, 0
      %v4928 = vsel %vm4896, 1, 0
      %v4929 = vsel %vm4897, 1, 0
      %v4930 = vsel %vm4898, 1, 0
      %v4931 = vsel %vm4899, 1, 0
      %v4932 = vsel %vm4900, 1, 0
      %v4933 = vsel %vm4901, 1, 0
      %v4934 = vsel %vm4902, 1, 0
      %v4935 = vsel %vm4903, 1, 0
      %v4936 = vsel %vm4904, 1, 0
      %v4937 = vsel %vm4905, 1, 0
      %v4938 = vsel %vm4906, 1, 0
      %v4939 = vsel %vm4907, 1, 0
      %v4940 = vsel %vm4908, 1, 0
      %v4941 = vsel %vm4909, 1, 0
      %v4942 = vcvt.s32.f32 %v4910
      %v4943 = vcvt.s32.f32 %v4911
      %v4944 = vcvt.s32.f32 %v4912
      %v4945 = vcvt.s32.f32 %v4913
      %v4946 = vcvt.s32.f32 %v4914
      %v4947 = vcvt.s32.f32 %v4915
      %v4948 = vcvt.s32.f32 %v4916
      %v4949 = vcvt.s32.f32 %v4917
      %v4950 = vcvt.s32.f32 %v4918
      %v4951 = vcvt.s32.f32 %v4919
      %v4952 = vcvt.s32.f32 %v4920
      %v4953 = vcvt.s32.f32 %v4921
      %v4954 = vcvt.s32.f32 %v4922
      %v4955 = vcvt.s32.f32 %v4923
      %v4956 = vcvt.s32.f32 %v4924
      %v4957 = vcvt.s32.f32 %v4925
      %v4958 = vcvt.s32.f32 %v4926
      %v4959 = vcvt.s32.f32 %v4927
      %v4960 = vcvt.s32.f32 %v4928
      %v4961 = vcvt.s32.f32 %v4929
      %v4962 = vcvt.s32.f32 %v4930
      %v4963 = vcvt.s32.f32 %v4931
      %v4964 = vcvt.s32.f32 %v4932
      %v4965 = vcvt.s32.f32 %v4933
      %v4966 = vcvt.s32.f32 %v4934
      %v4967 = vcvt.s32.f32 %v4935
      %v4968 = vcvt.s32.f32 %v4936
      %v4969 = vcvt.s32.f32 %v4937
      %v4970 = vcvt.s32.f32 %v4938
      %v4971 = vcvt.s32.f32 %v4939
      %v4972 = vcvt.s32.f32 %v4940
      %v4973 = vcvt.s32.f32 %v4941
      %vm4974 = vcmp.ne.s32.totalorder %v4846, 15
      %vm4975 = vcmp.ne.s32.totalorder %v4847, 15
      %vm4976 = vcmp.ne.s32.totalorder %v4848, 15
      %vm4977 = vcmp.ne.s32.totalorder %v4849, 15
      %vm4978 = vcmp.ne.s32.totalorder %v4850, 15
      %vm4979 = vcmp.ne.s32.totalorder %v4851, 15
      %vm4980 = vcmp.ne.s32.totalorder %v4852, 15
      %vm4981 = vcmp.ne.s32.totalorder %v4853, 15
      %vm4982 = vcmp.ne.s32.totalorder %v4854, 15
      %vm4983 = vcmp.ne.s32.totalorder %v4855, 15
      %vm4984 = vcmp.ne.s32.totalorder %v4856, 15
      %vm4985 = vcmp.ne.s32.totalorder %v4857, 15
      %vm4986 = vcmp.ne.s32.totalorder %v4858, 15
      %vm4987 = vcmp.ne.s32.totalorder %v4859, 15
      %vm4988 = vcmp.ne.s32.totalorder %v4860, 15
      %vm4989 = vcmp.ne.s32.totalorder %v4861, 15
      %vm4990 = vcmp.ne.s32.totalorder %v4862, 15
      %vm4991 = vcmp.ne.s32.totalorder %v4863, 15
      %vm4992 = vcmp.ne.s32.totalorder %v4864, 15
      %vm4993 = vcmp.ne.s32.totalorder %v4865, 15
      %vm4994 = vcmp.ne.s32.totalorder %v4866, 15
      %vm4995 = vcmp.ne.s32.totalorder %v4867, 15
      %vm4996 = vcmp.ne.s32.totalorder %v4868, 15
      %vm4997 = vcmp.ne.s32.totalorder %v4869, 15
      %vm4998 = vcmp.ne.s32.totalorder %v4870, 15
      %vm4999 = vcmp.ne.s32.totalorder %v4871, 15
      %vm5000 = vcmp.ne.s32.totalorder %v4872, 15
      %vm5001 = vcmp.ne.s32.totalorder %v4873, 15
      %vm5002 = vcmp.ne.s32.totalorder %v4874, 15
      %vm5003 = vcmp.ne.s32.totalorder %v4875, 15
      %vm5004 = vcmp.ne.s32.totalorder %v4876, 15
      %vm5005 = vcmp.ne.s32.totalorder %v4877, 15
      %v5006 = vsel %vm4974, 1, 0
      %v5007 = vsel %vm4975, 1, 0
      %v5008 = vsel %vm4976, 1, 0
      %v5009 = vsel %vm4977, 1, 0
      %v5010 = vsel %vm4978, 1, 0
      %v5011 = vsel %vm4979, 1, 0
      %v5012 = vsel %vm4980, 1, 0
      %v5013 = vsel %vm4981, 1, 0
      %v5014 = vsel %vm4982, 1, 0
      %v5015 = vsel %vm4983, 1, 0
      %v5016 = vsel %vm4984, 1, 0
      %v5017 = vsel %vm4985, 1, 0
      %v5018 = vsel %vm4986, 1, 0
      %v5019 = vsel %vm4987, 1, 0
      %v5020 = vsel %vm4988, 1, 0
      %v5021 = vsel %vm4989, 1, 0
      %v5022 = vsel %vm4990, 1, 0
      %v5023 = vsel %vm4991, 1, 0
      %v5024 = vsel %vm4992, 1, 0
      %v5025 = vsel %vm4993, 1, 0
      %v5026 = vsel %vm4994, 1, 0
      %v5027 = vsel %vm4995, 1, 0
      %v5028 = vsel %vm4996, 1, 0
      %v5029 = vsel %vm4997, 1, 0
      %v5030 = vsel %vm4998, 1, 0
      %v5031 = vsel %vm4999, 1, 0
      %v5032 = vsel %vm5000, 1, 0
      %v5033 = vsel %vm5001, 1, 0
      %v5034 = vsel %vm5002, 1, 0
      %v5035 = vsel %vm5003, 1, 0
      %v5036 = vsel %vm5004, 1, 0
      %v5037 = vsel %vm5005, 1, 0
      %v5038 = vcvt.s32.f32 %v5006
      %v5039 = vcvt.s32.f32 %v5007
      %v5040 = vcvt.s32.f32 %v5008
      %v5041 = vcvt.s32.f32 %v5009
      %v5042 = vcvt.s32.f32 %v5010
      %v5043 = vcvt.s32.f32 %v5011
      %v5044 = vcvt.s32.f32 %v5012
      %v5045 = vcvt.s32.f32 %v5013
      %v5046 = vcvt.s32.f32 %v5014
      %v5047 = vcvt.s32.f32 %v5015
      %v5048 = vcvt.s32.f32 %v5016
      %v5049 = vcvt.s32.f32 %v5017
      %v5050 = vcvt.s32.f32 %v5018
      %v5051 = vcvt.s32.f32 %v5019
      %v5052 = vcvt.s32.f32 %v5020
      %v5053 = vcvt.s32.f32 %v5021
      %v5054 = vcvt.s32.f32 %v5022
      %v5055 = vcvt.s32.f32 %v5023
      %v5056 = vcvt.s32.f32 %v5024
      %v5057 = vcvt.s32.f32 %v5025
      %v5058 = vcvt.s32.f32 %v5026
      %v5059 = vcvt.s32.f32 %v5027
      %v5060 = vcvt.s32.f32 %v5028
      %v5061 = vcvt.s32.f32 %v5029
      %v5062 = vcvt.s32.f32 %v5030
      %v5063 = vcvt.s32.f32 %v5031
      %v5064 = vcvt.s32.f32 %v5032
      %v5065 = vcvt.s32.f32 %v5033
      %v5066 = vcvt.s32.f32 %v5034
      %v5067 = vcvt.s32.f32 %v5035
      %v5068 = vcvt.s32.f32 %v5036
      %v5069 = vcvt.s32.f32 %v5037
      %v5070 = vrot.slane %v4271, 7
      %v5071 = vrot.slane %v4273, 7
      %v5072 = vrot.slane %v4277, 7
      %v5073 = vrot.slane %v4279, 7
      %v5074 = vrot.slane %v4283, 7
      %v5075 = vrot.slane %v4285, 7
      %v5076 = vrot.slane %v4289, 7
      %v5077 = vrot.slane %v4291, 7
      %v5078 = vrot.slane %v4295, 7
      %v5079 = vrot.slane %v4297, 7
      %v5080 = vrot.slane %v4301, 7
      %v5081 = vrot.slane %v4303, 7
      %v5082 = vrot.slane %v4307, 7
      %v5083 = vrot.slane %v4309, 7
      %v5084 = vrot.slane %v4313, 7
      %v5085 = vrot.slane %v4315, 7
      %v5086 = vrot.slane %v4319, 7
      %v5087 = vrot.slane %v4321, 7
      %v5088 = vrot.slane %v4325, 7
      %v5089 = vrot.slane %v4327, 7
      %v5090 = vrot.slane %v4331, 7
      %v5091 = vrot.slane %v4333, 7
      %v5092 = vrot.slane %v4337, 7
      %v5093 = vrot.slane %v4339, 7
      %v5094 = vrot.slane %v4343, 7
      %v5095 = vrot.slane %v4345, 7
      %v5096 = vrot.slane %v4349, 7
      %v5097 = vrot.slane %v4351, 7
      %v5098 = vrot.slane %v4355, 7
      %v5099 = vrot.slane %v4357, 7
      %v5100 = vrot.slane %v4361, 7
      %v5101 = vrot.slane %v4363, 7
      %v5102 = vrot.slane %v4367, 7
      %v5103 = vrot.slane %v4369, 7
      %v5104 = vrot.slane %v4373, 7
      %v5105 = vrot.slane %v4375, 7
      %v5106 = vrot.slane %v4379, 7
      %v5107 = vrot.slane %v4381, 7
      %v5108 = vrot.slane %v4385, 7
      %v5109 = vrot.slane %v4387, 7
      %v5110 = vrot.slane %v4391, 7
      %v5111 = vrot.slane %v4393, 7
      %v5112 = vrot.slane %v4397, 7
      %v5113 = vrot.slane %v4399, 7
      %v5114 = vrot.slane %v4403, 7
      %v5115 = vrot.slane %v4405, 7
      %v5116 = vrot.slane %v4409, 7
      %v5117 = vrot.slane %v4411, 7
      %v5118 = vrot.slane %v4415, 7
      %v5119 = vrot.slane %v4417, 7
      %v5120 = vrot.slane %v4421, 7
      %v5121 = vrot.slane %v4423, 7
      %v5122 = vrot.slane %v4427, 7
      %v5123 = vrot.slane %v4429, 7
      %v5124 = vrot.slane %v4433, 7
      %v5125 = vrot.slane %v4435, 7
      %v5126 = vrot.slane %v4439, 7
      %v5127 = vrot.slane %v4441, 7
      %v5128 = vrot.slane %v4445, 7
      %v5129 = vrot.slane %v4447, 7
      %v5130 = vrot.slane %v4451, 7
      %v5131 = vrot.slane %v4453, 7
      %v5132 = vrot.slane %v4457, 7
      %v5133 = vrot.slane %v4459, 7
      %vm5134 = vcmp.lt.s32.totalorder %v4462, 1
      %v5135 = vsel %vm5134, %v5130, %v5132
      %v5136 = vsel %vm5134, %v5131, %v5133
      %v5137 = vsel %vm5134, %v5128, %v5130
      %v5138 = vsel %vm5134, %v5129, %v5131
      %v5139 = vsel %vm5134, %v5126, %v5128
      %v5140 = vsel %vm5134, %v5127, %v5129
      %v5141 = vsel %vm5134, %v5124, %v5126
      %v5142 = vsel %vm5134, %v5125, %v5127
      %v5143 = vsel %vm5134, %v5122, %v5124
      %v5144 = vsel %vm5134, %v5123, %v5125
      %v5145 = vsel %vm5134, %v5120, %v5122
      %v5146 = vsel %vm5134, %v5121, %v5123
      %v5147 = vsel %vm5134, %v5118, %v5120
      %v5148 = vsel %vm5134, %v5119, %v5121
      %v5149 = vsel %vm5134, %v5116, %v5118
      %v5150 = vsel %vm5134, %v5117, %v5119
      %v5151 = vsel %vm5134, %v5114, %v5116
      %v5152 = vsel %vm5134, %v5115, %v5117
      %v5153 = vsel %vm5134, %v5112, %v5114
      %v5154 = vsel %vm5134, %v5113, %v5115
      %v5155 = vsel %vm5134, %v5110, %v5112
      %v5156 = vsel %vm5134, %v5111, %v5113
      %v5157 = vsel %vm5134, %v5108, %v5110
      %v5158 = vsel %vm5134, %v5109, %v5111
      %v5159 = vsel %vm5134, %v5106, %v5108
      %v5160 = vsel %vm5134, %v5107, %v5109
      %v5161 = vsel %vm5134, %v5104, %v5106
      %v5162 = vsel %vm5134, %v5105, %v5107
      %v5163 = vsel %vm5134, %v5102, %v5104
      %v5164 = vsel %vm5134, %v5103, %v5105
      %v5165 = vsel %vm5134, %v5100, %v5102
      %v5166 = vsel %vm5134, %v5101, %v5103
      %v5167 = vsel %vm5134, %v5098, %v5100
      %v5168 = vsel %vm5134, %v5099, %v5101
      %v5169 = vsel %vm5134, %v5096, %v5098
      %v5170 = vsel %vm5134, %v5097, %v5099
      %v5171 = vsel %vm5134, %v5094, %v5096
      %v5172 = vsel %vm5134, %v5095, %v5097
      %v5173 = vsel %vm5134, %v5092, %v5094
      %v5174 = vsel %vm5134, %v5093, %v5095
      %v5175 = vsel %vm5134, %v5090, %v5092
      %v5176 = vsel %vm5134, %v5091, %v5093
      %v5177 = vsel %vm5134, %v5088, %v5090
      %v5178 = vsel %vm5134, %v5089, %v5091
      %v5179 = vsel %vm5134, %v5086, %v5088
      %v5180 = vsel %vm5134, %v5087, %v5089
      %v5181 = vsel %vm5134, %v5084, %v5086
      %v5182 = vsel %vm5134, %v5085, %v5087
      %v5183 = vsel %vm5134, %v5082, %v5084
      %v5184 = vsel %vm5134, %v5083, %v5085
      %v5185 = vsel %vm5134, %v5080, %v5082
      %v5186 = vsel %vm5134, %v5081, %v5083
      %v5187 = vsel %vm5134, %v5078, %v5080
      %v5188 = vsel %vm5134, %v5079, %v5081
      %v5189 = vsel %vm5134, %v5076, %v5078
      %v5190 = vsel %vm5134, %v5077, %v5079
      %v5191 = vsel %vm5134, %v5074, %v5076
      %v5192 = vsel %vm5134, %v5075, %v5077
      %v5193 = vsel %vm5134, %v5072, %v5074
      %v5194 = vsel %vm5134, %v5073, %v5075
      %v5195 = vsel %vm5134, %v5070, %v5072
      %v5196 = vsel %vm5134, %v5071, %v5073
      %v5197 = vsel %vm5134, %v5132, %v5070
      %v5198 = vsel %vm5134, %v5133, %v5071
      %v5199 = vmul.f32 %v5197, %v4942
      %v5200 = vmul.f32 %v5198, %v4942
      %v5201 = vmul.f32 %v5195, %v4943
      %v5202 = vmul.f32 %v5196, %v4943
      %v5203 = vmul.f32 %v5193, %v4944
      %v5204 = vmul.f32 %v5194, %v4944
      %v5205 = vmul.f32 %v5191, %v4945
      %v5206 = vmul.f32 %v5192, %v4945
      %v5207 = vmul.f32 %v5189, %v4946
      %v5208 = vmul.f32 %v5190, %v4946
      %v5209 = vmul.f32 %v5187, %v4947
      %v5210 = vmul.f32 %v5188, %v4947
      %v5211 = vmul.f32 %v5185, %v4948
      %v5212 = vmul.f32 %v5186, %v4948
      %v5213 = vmul.f32 %v5183, %v4949
      %v5214 = vmul.f32 %v5184, %v4949
      %v5215 = vmul.f32 %v5181, %v4950
      %v5216 = vmul.f32 %v5182, %v4950
      %v5217 = vmul.f32 %v5179, %v4951
      %v5218 = vmul.f32 %v5180, %v4951
      %v5219 = vmul.f32 %v5177, %v4952
      %v5220 = vmul.f32 %v5178, %v4952
      %v5221 = vmul.f32 %v5175, %v4953
      %v5222 = vmul.f32 %v5176, %v4953
      %v5223 = vmul.f32 %v5173, %v4954
      %v5224 = vmul.f32 %v5174, %v4954
      %v5225 = vmul.f32 %v5171, %v4955
      %v5226 = vmul.f32 %v5172, %v4955
      %v5227 = vmul.f32 %v5169, %v4956
      %v5228 = vmul.f32 %v5170, %v4956
      %v5229 = vmul.f32 %v5167, %v4957
      %v5230 = vmul.f32 %v5168, %v4957
      %v5231 = vmul.f32 %v5165, %v4958
      %v5232 = vmul.f32 %v5166, %v4958
      %v5233 = vmul.f32 %v5163, %v4959
      %v5234 = vmul.f32 %v5164, %v4959
      %v5235 = vmul.f32 %v5161, %v4960
      %v5236 = vmul.f32 %v5162, %v4960
      %v5237 = vmul.f32 %v5159, %v4961
      %v5238 = vmul.f32 %v5160, %v4961
      %v5239 = vmul.f32 %v5157, %v4962
      %v5240 = vmul.f32 %v5158, %v4962
      %v5241 = vmul.f32 %v5155, %v4963
      %v5242 = vmul.f32 %v5156, %v4963
      %v5243 = vmul.f32 %v5153, %v4964
      %v5244 = vmul.f32 %v5154, %v4964
      %v5245 = vmul.f32 %v5151, %v4965
      %v5246 = vmul.f32 %v5152, %v4965
      %v5247 = vmul.f32 %v5149, %v4966
      %v5248 = vmul.f32 %v5150, %v4966
      %v5249 = vmul.f32 %v5147, %v4967
      %v5250 = vmul.f32 %v5148, %v4967
      %v5251 = vmul.f32 %v5145, %v4968
      %v5252 = vmul.f32 %v5146, %v4968
      %v5253 = vmul.f32 %v5143, %v4969
      %v5254 = vmul.f32 %v5144, %v4969
      %v5255 = vmul.f32 %v5141, %v4970
      %v5256 = vmul.f32 %v5142, %v4970
      %v5257 = vmul.f32 %v5139, %v4971
      %v5258 = vmul.f32 %v5140, %v4971
      %v5259 = vmul.f32 %v5137, %v4972
      %v5260 = vmul.f32 %v5138, %v4972
      %v5261 = vmul.f32 %v5135, %v4973
      %v5262 = vmul.f32 %v5136, %v4973
      %v5263 = vpack.c.bf16 %v5201, %v5199
      %v5264 = vpack.c.bf16 %v5202, %v5200
      %v5265 = vpack.c.bf16 %v5205, %v5203
      %v5266 = vpack.c.bf16 %v5206, %v5204
      %v5267 = vpack.c.bf16 %v5209, %v5207
      %v5268 = vpack.c.bf16 %v5210, %v5208
      %v5269 = vpack.c.bf16 %v5213, %v5211
      %v5270 = vpack.c.bf16 %v5214, %v5212
      %v5271 = vpack.c.bf16 %v5217, %v5215
      %v5272 = vpack.c.bf16 %v5218, %v5216
      %v5273 = vpack.c.bf16 %v5221, %v5219
      %v5274 = vpack.c.bf16 %v5222, %v5220
      %v5275 = vpack.c.bf16 %v5225, %v5223
      %v5276 = vpack.c.bf16 %v5226, %v5224
      %v5277 = vpack.c.bf16 %v5229, %v5227
      %v5278 = vpack.c.bf16 %v5230, %v5228
      %v5279 = vpack.c.bf16 %v5233, %v5231
      %v5280 = vpack.c.bf16 %v5234, %v5232
      %v5281 = vpack.c.bf16 %v5237, %v5235
      %v5282 = vpack.c.bf16 %v5238, %v5236
      %v5283 = vpack.c.bf16 %v5241, %v5239
      %v5284 = vpack.c.bf16 %v5242, %v5240
      %v5285 = vpack.c.bf16 %v5245, %v5243
      %v5286 = vpack.c.bf16 %v5246, %v5244
      %v5287 = vpack.c.bf16 %v5249, %v5247
      %v5288 = vpack.c.bf16 %v5250, %v5248
      %v5289 = vpack.c.bf16 %v5253, %v5251
      %v5290 = vpack.c.bf16 %v5254, %v5252
      %v5291 = vpack.c.bf16 %v5257, %v5255
      %v5292 = vpack.c.bf16 %v5258, %v5256
      %v5293 = vpack.c.bf16 %v5261, %v5259
      %v5294 = vpack.c.bf16 %v5262, %v5260
      %v5295 = vpack.c.bf16 %v4277, %v4271
      %v5296 = vpack.c.bf16 %v4279, %v4273
      %v5297 = vpack.c.bf16 %v4289, %v4283
      %v5298 = vpack.c.bf16 %v4291, %v4285
      %v5299 = vpack.c.bf16 %v4301, %v4295
      %v5300 = vpack.c.bf16 %v4303, %v4297
      %v5301 = vpack.c.bf16 %v4313, %v4307
      %v5302 = vpack.c.bf16 %v4315, %v4309
      %v5303 = vpack.c.bf16 %v4325, %v4319
      %v5304 = vpack.c.bf16 %v4327, %v4321
      %v5305 = vpack.c.bf16 %v4337, %v4331
      %v5306 = vpack.c.bf16 %v4339, %v4333
      %v5307 = vpack.c.bf16 %v4349, %v4343
      %v5308 = vpack.c.bf16 %v4351, %v4345
      %v5309 = vpack.c.bf16 %v4361, %v4355
      %v5310 = vpack.c.bf16 %v4363, %v4357
      %v5311 = vpack.c.bf16 %v4373, %v4367
      %v5312 = vpack.c.bf16 %v4375, %v4369
      %v5313 = vpack.c.bf16 %v4385, %v4379
      %v5314 = vpack.c.bf16 %v4387, %v4381
      %v5315 = vpack.c.bf16 %v4397, %v4391
      %v5316 = vpack.c.bf16 %v4399, %v4393
      %v5317 = vpack.c.bf16 %v4409, %v4403
      %v5318 = vpack.c.bf16 %v4411, %v4405
      %v5319 = vpack.c.bf16 %v4421, %v4415
      %v5320 = vpack.c.bf16 %v4423, %v4417
      %v5321 = vpack.c.bf16 %v4433, %v4427
      %v5322 = vpack.c.bf16 %v4435, %v4429
      %v5323 = vpack.c.bf16 %v4445, %v4439
      %v5324 = vpack.c.bf16 %v4447, %v4441
      %v5325 = vpack.c.bf16 %v4457, %v4451
      %v5326 = vpack.c.bf16 %v4459, %v4453
      %v5327 = vrot.slane %v4271, 1
      %v5328 = vrot.slane %v4273, 1
      %v5329 = vrot.slane %v4277, 1
      %v5330 = vrot.slane %v4279, 1
      %v5331 = vrot.slane %v4283, 1
      %v5332 = vrot.slane %v4285, 1
      %v5333 = vrot.slane %v4289, 1
      %v5334 = vrot.slane %v4291, 1
      %v5335 = vrot.slane %v4295, 1
      %v5336 = vrot.slane %v4297, 1
      %v5337 = vrot.slane %v4301, 1
      %v5338 = vrot.slane %v4303, 1
      %v5339 = vrot.slane %v4307, 1
      %v5340 = vrot.slane %v4309, 1
      %v5341 = vrot.slane %v4313, 1
      %v5342 = vrot.slane %v4315, 1
      %v5343 = vrot.slane %v4319, 1
      %v5344 = vrot.slane %v4321, 1
      %v5345 = vrot.slane %v4325, 1
      %v5346 = vrot.slane %v4327, 1
      %v5347 = vrot.slane %v4331, 1
      %v5348 = vrot.slane %v4333, 1
      %v5349 = vrot.slane %v4337, 1
      %v5350 = vrot.slane %v4339, 1
      %v5351 = vrot.slane %v4343, 1
      %v5352 = vrot.slane %v4345, 1
      %v5353 = vrot.slane %v4349, 1
      %v5354 = vrot.slane %v4351, 1
      %v5355 = vrot.slane %v4355, 1
      %v5356 = vrot.slane %v4357, 1
      %v5357 = vrot.slane %v4361, 1
      %v5358 = vrot.slane %v4363, 1
      %v5359 = vrot.slane %v4367, 1
      %v5360 = vrot.slane %v4369, 1
      %v5361 = vrot.slane %v4373, 1
      %v5362 = vrot.slane %v4375, 1
      %v5363 = vrot.slane %v4379, 1
      %v5364 = vrot.slane %v4381, 1
      %v5365 = vrot.slane %v4385, 1
      %v5366 = vrot.slane %v4387, 1
      %v5367 = vrot.slane %v4391, 1
      %v5368 = vrot.slane %v4393, 1
      %v5369 = vrot.slane %v4397, 1
      %v5370 = vrot.slane %v4399, 1
      %v5371 = vrot.slane %v4403, 1
      %v5372 = vrot.slane %v4405, 1
      %v5373 = vrot.slane %v4409, 1
      %v5374 = vrot.slane %v4411, 1
      %v5375 = vrot.slane %v4415, 1
      %v5376 = vrot.slane %v4417, 1
      %v5377 = vrot.slane %v4421, 1
      %v5378 = vrot.slane %v4423, 1
      %v5379 = vrot.slane %v4427, 1
      %v5380 = vrot.slane %v4429, 1
      %v5381 = vrot.slane %v4433, 1
      %v5382 = vrot.slane %v4435, 1
      %v5383 = vrot.slane %v4439, 1
      %v5384 = vrot.slane %v4441, 1
      %v5385 = vrot.slane %v4445, 1
      %v5386 = vrot.slane %v4447, 1
      %v5387 = vrot.slane %v4451, 1
      %v5388 = vrot.slane %v4453, 1
      %v5389 = vrot.slane %v4457, 1
      %v5390 = vrot.slane %v4459, 1
      %vm5391 = vcmp.lt.s32.totalorder %v4462, 7
      %v5392 = vsel %vm5391, %v5387, %v5389
      %v5393 = vsel %vm5391, %v5388, %v5390
      %v5394 = vsel %vm5391, %v5385, %v5387
      %v5395 = vsel %vm5391, %v5386, %v5388
      %v5396 = vsel %vm5391, %v5383, %v5385
      %v5397 = vsel %vm5391, %v5384, %v5386
      %v5398 = vsel %vm5391, %v5381, %v5383
      %v5399 = vsel %vm5391, %v5382, %v5384
      %v5400 = vsel %vm5391, %v5379, %v5381
      %v5401 = vsel %vm5391, %v5380, %v5382
      %v5402 = vsel %vm5391, %v5377, %v5379
      %v5403 = vsel %vm5391, %v5378, %v5380
      %v5404 = vsel %vm5391, %v5375, %v5377
      %v5405 = vsel %vm5391, %v5376, %v5378
      %v5406 = vsel %vm5391, %v5373, %v5375
      %v5407 = vsel %vm5391, %v5374, %v5376
      %v5408 = vsel %vm5391, %v5371, %v5373
      %v5409 = vsel %vm5391, %v5372, %v5374
      %v5410 = vsel %vm5391, %v5369, %v5371
      %v5411 = vsel %vm5391, %v5370, %v5372
      %v5412 = vsel %vm5391, %v5367, %v5369
      %v5413 = vsel %vm5391, %v5368, %v5370
      %v5414 = vsel %vm5391, %v5365, %v5367
      %v5415 = vsel %vm5391, %v5366, %v5368
      %v5416 = vsel %vm5391, %v5363, %v5365
      %v5417 = vsel %vm5391, %v5364, %v5366
      %v5418 = vsel %vm5391, %v5361, %v5363
      %v5419 = vsel %vm5391, %v5362, %v5364
      %v5420 = vsel %vm5391, %v5359, %v5361
      %v5421 = vsel %vm5391, %v5360, %v5362
      %v5422 = vsel %vm5391, %v5357, %v5359
      %v5423 = vsel %vm5391, %v5358, %v5360
      %v5424 = vsel %vm5391, %v5355, %v5357
      %v5425 = vsel %vm5391, %v5356, %v5358
      %v5426 = vsel %vm5391, %v5353, %v5355
      %v5427 = vsel %vm5391, %v5354, %v5356
      %v5428 = vsel %vm5391, %v5351, %v5353
      %v5429 = vsel %vm5391, %v5352, %v5354
      %v5430 = vsel %vm5391, %v5349, %v5351
      %v5431 = vsel %vm5391, %v5350, %v5352
      %v5432 = vsel %vm5391, %v5347, %v5349
      %v5433 = vsel %vm5391, %v5348, %v5350
      %v5434 = vsel %vm5391, %v5345, %v5347
      %v5435 = vsel %vm5391, %v5346, %v5348
      %v5436 = vsel %vm5391, %v5343, %v5345
      %v5437 = vsel %vm5391, %v5344, %v5346
      %v5438 = vsel %vm5391, %v5341, %v5343
      %v5439 = vsel %vm5391, %v5342, %v5344
      %v5440 = vsel %vm5391, %v5339, %v5341
      %v5441 = vsel %vm5391, %v5340, %v5342
      %v5442 = vsel %vm5391, %v5337, %v5339
      %v5443 = vsel %vm5391, %v5338, %v5340
      %v5444 = vsel %vm5391, %v5335, %v5337
      %v5445 = vsel %vm5391, %v5336, %v5338
      %v5446 = vsel %vm5391, %v5333, %v5335
      %v5447 = vsel %vm5391, %v5334, %v5336
      %v5448 = vsel %vm5391, %v5331, %v5333
      %v5449 = vsel %vm5391, %v5332, %v5334
      %v5450 = vsel %vm5391, %v5329, %v5331
      %v5451 = vsel %vm5391, %v5330, %v5332
      %v5452 = vsel %vm5391, %v5327, %v5329
      %v5453 = vsel %vm5391, %v5328, %v5330
      %v5454 = vsel %vm5391, %v5389, %v5327
      %v5455 = vsel %vm5391, %v5390, %v5328
      %v5456 = vmul.f32 %v5452, %v5038
      %v5457 = vmul.f32 %v5453, %v5038
      %v5458 = vmul.f32 %v5450, %v5039
      %v5459 = vmul.f32 %v5451, %v5039
      %v5460 = vmul.f32 %v5448, %v5040
      %v5461 = vmul.f32 %v5449, %v5040
      %v5462 = vmul.f32 %v5446, %v5041
      %v5463 = vmul.f32 %v5447, %v5041
      %v5464 = vmul.f32 %v5444, %v5042
      %v5465 = vmul.f32 %v5445, %v5042
      %v5466 = vmul.f32 %v5442, %v5043
      %v5467 = vmul.f32 %v5443, %v5043
      %v5468 = vmul.f32 %v5440, %v5044
      %v5469 = vmul.f32 %v5441, %v5044
      %v5470 = vmul.f32 %v5438, %v5045
      %v5471 = vmul.f32 %v5439, %v5045
      %v5472 = vmul.f32 %v5436, %v5046
      %v5473 = vmul.f32 %v5437, %v5046
      %v5474 = vmul.f32 %v5434, %v5047
      %v5475 = vmul.f32 %v5435, %v5047
      %v5476 = vmul.f32 %v5432, %v5048
      %v5477 = vmul.f32 %v5433, %v5048
      %v5478 = vmul.f32 %v5430, %v5049
      %v5479 = vmul.f32 %v5431, %v5049
      %v5480 = vmul.f32 %v5428, %v5050
      %v5481 = vmul.f32 %v5429, %v5050
      %v5482 = vmul.f32 %v5426, %v5051
      %v5483 = vmul.f32 %v5427, %v5051
      %v5484 = vmul.f32 %v5424, %v5052
      %v5485 = vmul.f32 %v5425, %v5052
      %v5486 = vmul.f32 %v5422, %v5053
      %v5487 = vmul.f32 %v5423, %v5053
      %v5488 = vmul.f32 %v5420, %v5054
      %v5489 = vmul.f32 %v5421, %v5054
      %v5490 = vmul.f32 %v5418, %v5055
      %v5491 = vmul.f32 %v5419, %v5055
      %v5492 = vmul.f32 %v5416, %v5056
      %v5493 = vmul.f32 %v5417, %v5056
      %v5494 = vmul.f32 %v5414, %v5057
      %v5495 = vmul.f32 %v5415, %v5057
      %v5496 = vmul.f32 %v5412, %v5058
      %v5497 = vmul.f32 %v5413, %v5058
      %v5498 = vmul.f32 %v5410, %v5059
      %v5499 = vmul.f32 %v5411, %v5059
      %v5500 = vmul.f32 %v5408, %v5060
      %v5501 = vmul.f32 %v5409, %v5060
      %v5502 = vmul.f32 %v5406, %v5061
      %v5503 = vmul.f32 %v5407, %v5061
      %v5504 = vmul.f32 %v5404, %v5062
      %v5505 = vmul.f32 %v5405, %v5062
      %v5506 = vmul.f32 %v5402, %v5063
      %v5507 = vmul.f32 %v5403, %v5063
      %v5508 = vmul.f32 %v5400, %v5064
      %v5509 = vmul.f32 %v5401, %v5064
      %v5510 = vmul.f32 %v5398, %v5065
      %v5511 = vmul.f32 %v5399, %v5065
      %v5512 = vmul.f32 %v5396, %v5066
      %v5513 = vmul.f32 %v5397, %v5066
      %v5514 = vmul.f32 %v5394, %v5067
      %v5515 = vmul.f32 %v5395, %v5067
      %v5516 = vmul.f32 %v5392, %v5068
      %v5517 = vmul.f32 %v5393, %v5068
      %v5518 = vmul.f32 %v5454, %v5069
      %v5519 = vmul.f32 %v5455, %v5069
      %v5520 = vpack.c.bf16 %v5458, %v5456
      %v5521 = vpack.c.bf16 %v5459, %v5457
      %v5522 = vpack.c.bf16 %v5462, %v5460
      %v5523 = vpack.c.bf16 %v5463, %v5461
      %v5524 = vpack.c.bf16 %v5466, %v5464
      %v5525 = vpack.c.bf16 %v5467, %v5465
      %v5526 = vpack.c.bf16 %v5470, %v5468
      %v5527 = vpack.c.bf16 %v5471, %v5469
      %v5528 = vpack.c.bf16 %v5474, %v5472
      %v5529 = vpack.c.bf16 %v5475, %v5473
      %v5530 = vpack.c.bf16 %v5478, %v5476
      %v5531 = vpack.c.bf16 %v5479, %v5477
      %v5532 = vpack.c.bf16 %v5482, %v5480
      %v5533 = vpack.c.bf16 %v5483, %v5481
      %v5534 = vpack.c.bf16 %v5486, %v5484
      %v5535 = vpack.c.bf16 %v5487, %v5485
      %v5536 = vpack.c.bf16 %v5490, %v5488
      %v5537 = vpack.c.bf16 %v5491, %v5489
      %v5538 = vpack.c.bf16 %v5494, %v5492
      %v5539 = vpack.c.bf16 %v5495, %v5493
      %v5540 = vpack.c.bf16 %v5498, %v5496
      %v5541 = vpack.c.bf16 %v5499, %v5497
      %v5542 = vpack.c.bf16 %v5502, %v5500
      %v5543 = vpack.c.bf16 %v5503, %v5501
      %v5544 = vpack.c.bf16 %v5506, %v5504
      %v5545 = vpack.c.bf16 %v5507, %v5505
      %v5546 = vpack.c.bf16 %v5510, %v5508
      %v5547 = vpack.c.bf16 %v5511, %v5509
      %v5548 = vpack.c.bf16 %v5514, %v5512
      %v5549 = vpack.c.bf16 %v5515, %v5513
      %v5550 = vpack.c.bf16 %v5518, %v5516
      %v5551 = vpack.c.bf16 %v5519, %v5517
      %v5552 = vld [vmem:[%s4] sm:$0xf]
      %v5553 = vld [vmem:[%s4 + $0x4] sm:$0xf]
      %v5554 = vld [vmem:[%s4 + $0x8] sm:$0xf]
      %v5555 = vld [vmem:[%s4 + $0xc] sm:$0xf]
      %v5556 = vld [vmem:[%s4 + $0x10] sm:$0xf]
      %v5557 = vld [vmem:[%s4 + $0x14] sm:$0xf]
      %v5558 = vld [vmem:[%s4 + $0x18] sm:$0xf]
      %v5559 = vld [vmem:[%s4 + $0x1c] sm:$0xf]
      %v5560 = vld [vmem:[%s4 + $0x20] sm:$0xf]
      %v5561 = vld [vmem:[%s4 + $0x24] sm:$0xf]
      %v5562 = vld [vmem:[%s4 + $0x28] sm:$0xf]
      %v5563 = vld [vmem:[%s4 + $0x2c] sm:$0xf]
      %v5564 = vld [vmem:[%s4 + $0x30] sm:$0xf]
      %v5565 = vld [vmem:[%s4 + $0x34] sm:$0xf]
      %v5566 = vld [vmem:[%s4 + $0x38] sm:$0xf]
      %v5567 = vld [vmem:[%s4 + $0x3c] sm:$0xf]
      %v5568 = vld [vmem:[%s4 + $0x40] sm:$0xf]
      %v5569 = vld [vmem:[%s4 + $0x44] sm:$0xf]
      %v5570 = vld [vmem:[%s4 + $0x48] sm:$0xf]
      %v5571 = vld [vmem:[%s4 + $0x4c] sm:$0xf]
      %v5572 = vld [vmem:[%s4 + $0x50] sm:$0xf]
      %v5573 = vld [vmem:[%s4 + $0x54] sm:$0xf]
      %v5574 = vld [vmem:[%s4 + $0x58] sm:$0xf]
      %v5575 = vld [vmem:[%s4 + $0x5c] sm:$0xf]
      %v5576 = vld [vmem:[%s4 + $0x60] sm:$0xf]
      %v5577 = vld [vmem:[%s4 + $0x64] sm:$0xf]
      %v5578 = vld [vmem:[%s4 + $0x68] sm:$0xf]
      %v5579 = vld [vmem:[%s4 + $0x6c] sm:$0xf]
      %v5580 = vld [vmem:[%s4 + $0x70] sm:$0xf]
      %v5581 = vld [vmem:[%s4 + $0x74] sm:$0xf]
      %v5582 = vld [vmem:[%s4 + $0x78] sm:$0xf]
      %v5583 = vld [vmem:[%s4 + $0x7c] sm:$0xf]
      %v5584 = vld [vmem:[%s4 + $0x80] sm:$0xf]
      %v5585 = vld [vmem:[%s4 + $0x84] sm:$0xf]
      %v5586 = vld [vmem:[%s4 + $0x88] sm:$0xf]
      %v5587 = vld [vmem:[%s4 + $0x8c] sm:$0xf]
      %v5588 = vld [vmem:[%s4 + $0x90] sm:$0xf]
      %v5589 = vld [vmem:[%s4 + $0x94] sm:$0xf]
      %v5590 = vld [vmem:[%s4 + $0x98] sm:$0xf]
      %v5591 = vld [vmem:[%s4 + $0x9c] sm:$0xf]
      %v5592 = vld [vmem:[%s4 + $0xa0] sm:$0xf]
      %v5593 = vld [vmem:[%s4 + $0xa4] sm:$0xf]
      %v5594 = vld [vmem:[%s4 + $0xa8] sm:$0xf]
      %v5595 = vld [vmem:[%s4 + $0xac] sm:$0xf]
      %v5596 = vld [vmem:[%s4 + $0xb0] sm:$0xf]
      %v5597 = vld [vmem:[%s4 + $0xb4] sm:$0xf]
      %v5598 = vld [vmem:[%s4 + $0xb8] sm:$0xf]
      %v5599 = vld [vmem:[%s4 + $0xbc] sm:$0xf]
      %v5600 = vld [vmem:[%s4 + $0xc0] sm:$0xf]
      %v5601 = vld [vmem:[%s4 + $0xc4] sm:$0xf]
      %v5602 = vld [vmem:[%s4 + $0xc8] sm:$0xf]
      %v5603 = vld [vmem:[%s4 + $0xcc] sm:$0xf]
      %v5604 = vld [vmem:[%s4 + $0xd0] sm:$0xf]
      %v5605 = vld [vmem:[%s4 + $0xd4] sm:$0xf]
      %v5606 = vld [vmem:[%s4 + $0xd8] sm:$0xf]
      %v5607 = vld [vmem:[%s4 + $0xdc] sm:$0xf]
      %v5608 = vld [vmem:[%s4 + $0xe0] sm:$0xf]
      %v5609 = vld [vmem:[%s4 + $0xe4] sm:$0xf]
      %v5610 = vld [vmem:[%s4 + $0xe8] sm:$0xf]
      %v5611 = vld [vmem:[%s4 + $0xec] sm:$0xf]
      %v5612 = vld [vmem:[%s4 + $0xf0] sm:$0xf]
      %v5613 = vld [vmem:[%s4 + $0xf4] sm:$0xf]
      %v5614 = vld [vmem:[%s4 + $0xf8] sm:$0xf]
      %v5615 = vld [vmem:[%s4 + $0xfc] sm:$0xf]
      %v5616 = vld [vmem:[%s4 + $0x100] sm:$0xf]
      %v5617 = vld [vmem:[%s4 + $0x104] sm:$0xf]
      %v5618 = vld [vmem:[%s4 + $0x108] sm:$0xf]
      %v5619 = vld [vmem:[%s4 + $0x10c] sm:$0xf]
      %v5620 = vld [vmem:[%s4 + $0x110] sm:$0xf]
      %v5621 = vld [vmem:[%s4 + $0x114] sm:$0xf]
      %v5622 = vld [vmem:[%s4 + $0x118] sm:$0xf]
      %v5623 = vld [vmem:[%s4 + $0x11c] sm:$0xf]
      %v5624 = vld [vmem:[%s4 + $0x120] sm:$0xf]
      %v5625 = vld [vmem:[%s4 + $0x124] sm:$0xf]
      %v5626 = vld [vmem:[%s4 + $0x128] sm:$0xf]
      %v5627 = vld [vmem:[%s4 + $0x12c] sm:$0xf]
      %v5628 = vld [vmem:[%s4 + $0x130] sm:$0xf]
      %v5629 = vld [vmem:[%s4 + $0x134] sm:$0xf]
      %v5630 = vld [vmem:[%s4 + $0x138] sm:$0xf]
      %v5631 = vld [vmem:[%s4 + $0x13c] sm:$0xf]
      %v5632 = vld [vmem:[%s4 + $0x140] sm:$0xf]
      %v5633 = vld [vmem:[%s4 + $0x144] sm:$0xf]
      %v5634 = vld [vmem:[%s4 + $0x148] sm:$0xf]
      %v5635 = vld [vmem:[%s4 + $0x14c] sm:$0xf]
      %v5636 = vld [vmem:[%s4 + $0x150] sm:$0xf]
      %v5637 = vld [vmem:[%s4 + $0x154] sm:$0xf]
      %v5638 = vld [vmem:[%s4 + $0x158] sm:$0xf]
      %v5639 = vld [vmem:[%s4 + $0x15c] sm:$0xf]
      %v5640 = vld [vmem:[%s4 + $0x160] sm:$0xf]
      %v5641 = vld [vmem:[%s4 + $0x164] sm:$0xf]
      %v5642 = vld [vmem:[%s4 + $0x168] sm:$0xf]
      %v5643 = vld [vmem:[%s4 + $0x16c] sm:$0xf]
      %v5644 = vld [vmem:[%s4 + $0x170] sm:$0xf]
      %v5645 = vld [vmem:[%s4 + $0x174] sm:$0xf]
      %v5646 = vld [vmem:[%s4 + $0x178] sm:$0xf]
      %v5647 = vld [vmem:[%s4 + $0x17c] sm:$0xf]
      %v5648 = vld [vmem:[%s4 + $0x180] sm:$0xf]
      %v5649 = vld [vmem:[%s4 + $0x184] sm:$0xf]
      %v5650 = vld [vmem:[%s4 + $0x188] sm:$0xf]
      %v5651 = vld [vmem:[%s4 + $0x18c] sm:$0xf]
      %v5652 = vld [vmem:[%s4 + $0x190] sm:$0xf]
      %v5653 = vld [vmem:[%s4 + $0x194] sm:$0xf]
      %v5654 = vld [vmem:[%s4 + $0x198] sm:$0xf]
      %v5655 = vld [vmem:[%s4 + $0x19c] sm:$0xf]
      %v5656 = vld [vmem:[%s4 + $0x1a0] sm:$0xf]
      %v5657 = vld [vmem:[%s4 + $0x1a4] sm:$0xf]
      %v5658 = vld [vmem:[%s4 + $0x1a8] sm:$0xf]
      %v5659 = vld [vmem:[%s4 + $0x1ac] sm:$0xf]
      %v5660 = vld [vmem:[%s4 + $0x1b0] sm:$0xf]
      %v5661 = vld [vmem:[%s4 + $0x1b4] sm:$0xf]
      %v5662 = vld [vmem:[%s4 + $0x1b8] sm:$0xf]
      %v5663 = vld [vmem:[%s4 + $0x1bc] sm:$0xf]
      %v5664 = vld [vmem:[%s4 + $0x1c0] sm:$0xf]
      %v5665 = vld [vmem:[%s4 + $0x1c4] sm:$0xf]
      %v5666 = vld [vmem:[%s4 + $0x1c8] sm:$0xf]
      %v5667 = vld [vmem:[%s4 + $0x1cc] sm:$0xf]
      %v5668 = vld [vmem:[%s4 + $0x1d0] sm:$0xf]
      %v5669 = vld [vmem:[%s4 + $0x1d4] sm:$0xf]
      %v5670 = vld [vmem:[%s4 + $0x1d8] sm:$0xf]
      %v5671 = vld [vmem:[%s4 + $0x1dc] sm:$0xf]
      %v5672 = vld [vmem:[%s4 + $0x1e0] sm:$0xf]
      %v5673 = vld [vmem:[%s4 + $0x1e4] sm:$0xf]
      %v5674 = vld [vmem:[%s4 + $0x1e8] sm:$0xf]
      %v5675 = vld [vmem:[%s4 + $0x1ec] sm:$0xf]
      %v5676 = vld [vmem:[%s4 + $0x1f0] sm:$0xf]
      %v5677 = vld [vmem:[%s4 + $0x1f4] sm:$0xf]
      %v5678 = vld [vmem:[%s4 + $0x1f8] sm:$0xf]
      %v5679 = vld [vmem:[%s4 + $0x1fc] sm:$0xf]
      %v5680 = vld [vmem:[%s4 + $0x200] sm:$0xf]
      %v5681 = vld [vmem:[%s4 + $0x204] sm:$0xf]
      %v5682 = vld [vmem:[%s4 + $0x208] sm:$0xf]
      %v5683 = vld [vmem:[%s4 + $0x20c] sm:$0xf]
      %v5684 = vld [vmem:[%s4 + $0x210] sm:$0xf]
      %v5685 = vld [vmem:[%s4 + $0x214] sm:$0xf]
      %v5686 = vld [vmem:[%s4 + $0x218] sm:$0xf]
      %v5687 = vld [vmem:[%s4 + $0x21c] sm:$0xf]
      %v5688 = vld [vmem:[%s4 + $0x220] sm:$0xf]
      %v5689 = vld [vmem:[%s4 + $0x224] sm:$0xf]
      %v5690 = vld [vmem:[%s4 + $0x228] sm:$0xf]
      %v5691 = vld [vmem:[%s4 + $0x22c] sm:$0xf]
      %v5692 = vld [vmem:[%s4 + $0x230] sm:$0xf]
      %v5693 = vld [vmem:[%s4 + $0x234] sm:$0xf]
      %v5694 = vld [vmem:[%s4 + $0x238] sm:$0xf]
      %v5695 = vld [vmem:[%s4 + $0x23c] sm:$0xf]
      %v5696 = vld [vmem:[%s4 + $0x240] sm:$0xf]
      %v5697 = vld [vmem:[%s4 + $0x244] sm:$0xf]
      %v5698 = vld [vmem:[%s4 + $0x248] sm:$0xf]
      %v5699 = vld [vmem:[%s4 + $0x24c] sm:$0xf]
      %v5700 = vld [vmem:[%s4 + $0x250] sm:$0xf]
      %v5701 = vld [vmem:[%s4 + $0x254] sm:$0xf]
      %v5702 = vld [vmem:[%s4 + $0x258] sm:$0xf]
      %v5703 = vld [vmem:[%s4 + $0x25c] sm:$0xf]
      %v5704 = vld [vmem:[%s4 + $0x260] sm:$0xf]
      %v5705 = vld [vmem:[%s4 + $0x264] sm:$0xf]
      %v5706 = vld [vmem:[%s4 + $0x268] sm:$0xf]
      %v5707 = vld [vmem:[%s4 + $0x26c] sm:$0xf]
      %v5708 = vld [vmem:[%s4 + $0x270] sm:$0xf]
      %v5709 = vld [vmem:[%s4 + $0x274] sm:$0xf]
      %v5710 = vld [vmem:[%s4 + $0x278] sm:$0xf]
      %v5711 = vld [vmem:[%s4 + $0x27c] sm:$0xf]
      %v5712 = vld [vmem:[%s4 + $0x280] sm:$0xf]
      %v5713 = vld [vmem:[%s4 + $0x284] sm:$0xf]
      %v5714 = vld [vmem:[%s4 + $0x288] sm:$0xf]
      %v5715 = vld [vmem:[%s4 + $0x28c] sm:$0xf]
      %v5716 = vld [vmem:[%s4 + $0x290] sm:$0xf]
      %v5717 = vld [vmem:[%s4 + $0x294] sm:$0xf]
      %v5718 = vld [vmem:[%s4 + $0x298] sm:$0xf]
      %v5719 = vld [vmem:[%s4 + $0x29c] sm:$0xf]
      %v5720 = vld [vmem:[%s4 + $0x2a0] sm:$0xf]
      %v5721 = vld [vmem:[%s4 + $0x2a4] sm:$0xf]
      %v5722 = vld [vmem:[%s4 + $0x2a8] sm:$0xf]
      %v5723 = vld [vmem:[%s4 + $0x2ac] sm:$0xf]
      %v5724 = vld [vmem:[%s4 + $0x2b0] sm:$0xf]
      %v5725 = vld [vmem:[%s4 + $0x2b4] sm:$0xf]
      %v5726 = vld [vmem:[%s4 + $0x2b8] sm:$0xf]
      %v5727 = vld [vmem:[%s4 + $0x2bc] sm:$0xf]
      %v5728 = vld [vmem:[%s4 + $0x2c0] sm:$0xf]
      %v5729 = vld [vmem:[%s4 + $0x2c4] sm:$0xf]
      %v5730 = vld [vmem:[%s4 + $0x2c8] sm:$0xf]
      %v5731 = vld [vmem:[%s4 + $0x2cc] sm:$0xf]
      %v5732 = vld [vmem:[%s4 + $0x2d0] sm:$0xf]
      %v5733 = vld [vmem:[%s4 + $0x2d4] sm:$0xf]
      %v5734 = vld [vmem:[%s4 + $0x2d8] sm:$0xf]
      %v5735 = vld [vmem:[%s4 + $0x2dc] sm:$0xf]
      %v5736 = vld [vmem:[%s4 + $0x2e0] sm:$0xf]
      %v5737 = vld [vmem:[%s4 + $0x2e4] sm:$0xf]
      %v5738 = vld [vmem:[%s4 + $0x2e8] sm:$0xf]
      %v5739 = vld [vmem:[%s4 + $0x2ec] sm:$0xf]
      %v5740 = vld [vmem:[%s4 + $0x2f0] sm:$0xf]
      %v5741 = vld [vmem:[%s4 + $0x2f4] sm:$0xf]
      %v5742 = vld [vmem:[%s4 + $0x2f8] sm:$0xf]
      %v5743 = vld [vmem:[%s4 + $0x2fc] sm:$0xf]
      %v5744 = vld [vmem:[%s4 + $0x300] sm:$0xf]
      %v5745 = vld [vmem:[%s4 + $0x304] sm:$0xf]
      %v5746 = vld [vmem:[%s4 + $0x308] sm:$0xf]
      %v5747 = vld [vmem:[%s4 + $0x30c] sm:$0xf]
      %v5748 = vld [vmem:[%s4 + $0x310] sm:$0xf]
      %v5749 = vld [vmem:[%s4 + $0x314] sm:$0xf]
      %v5750 = vld [vmem:[%s4 + $0x318] sm:$0xf]
      %v5751 = vld [vmem:[%s4 + $0x31c] sm:$0xf]
      %v5752 = vld [vmem:[%s4 + $0x320] sm:$0xf]
      %v5753 = vld [vmem:[%s4 + $0x324] sm:$0xf]
      %v5754 = vld [vmem:[%s4 + $0x328] sm:$0xf]
      %v5755 = vld [vmem:[%s4 + $0x32c] sm:$0xf]
      %v5756 = vld [vmem:[%s4 + $0x330] sm:$0xf]
      %v5757 = vld [vmem:[%s4 + $0x334] sm:$0xf]
      %v5758 = vld [vmem:[%s4 + $0x338] sm:$0xf]
      %v5759 = vld [vmem:[%s4 + $0x33c] sm:$0xf]
      %v5760 = vld [vmem:[%s4 + $0x340] sm:$0xf]
      %v5761 = vld [vmem:[%s4 + $0x344] sm:$0xf]
      %v5762 = vld [vmem:[%s4 + $0x348] sm:$0xf]
      %v5763 = vld [vmem:[%s4 + $0x34c] sm:$0xf]
      %v5764 = vld [vmem:[%s4 + $0x350] sm:$0xf]
      %v5765 = vld [vmem:[%s4 + $0x354] sm:$0xf]
      %v5766 = vld [vmem:[%s4 + $0x358] sm:$0xf]
      %v5767 = vld [vmem:[%s4 + $0x35c] sm:$0xf]
      %v5768 = vld [vmem:[%s4 + $0x360] sm:$0xf]
      %v5769 = vld [vmem:[%s4 + $0x364] sm:$0xf]
      %v5770 = vld [vmem:[%s4 + $0x368] sm:$0xf]
      %v5771 = vld [vmem:[%s4 + $0x36c] sm:$0xf]
      %v5772 = vld [vmem:[%s4 + $0x370] sm:$0xf]
      %v5773 = vld [vmem:[%s4 + $0x374] sm:$0xf]
      %v5774 = vld [vmem:[%s4 + $0x378] sm:$0xf]
      %v5775 = vld [vmem:[%s4 + $0x37c] sm:$0xf]
      %v5776 = vld [vmem:[%s4 + $0x380] sm:$0xf]
      %v5777 = vld [vmem:[%s4 + $0x384] sm:$0xf]
      %v5778 = vld [vmem:[%s4 + $0x388] sm:$0xf]
      %v5779 = vld [vmem:[%s4 + $0x38c] sm:$0xf]
      %v5780 = vld [vmem:[%s4 + $0x390] sm:$0xf]
      %v5781 = vld [vmem:[%s4 + $0x394] sm:$0xf]
      %v5782 = vld [vmem:[%s4 + $0x398] sm:$0xf]
      %v5783 = vld [vmem:[%s4 + $0x39c] sm:$0xf]
      %v5784 = vld [vmem:[%s4 + $0x3a0] sm:$0xf]
      %v5785 = vld [vmem:[%s4 + $0x3a4] sm:$0xf]
      %v5786 = vld [vmem:[%s4 + $0x3a8] sm:$0xf]
      %v5787 = vld [vmem:[%s4 + $0x3ac] sm:$0xf]
      %v5788 = vld [vmem:[%s4 + $0x3b0] sm:$0xf]
      %v5789 = vld [vmem:[%s4 + $0x3b4] sm:$0xf]
      %v5790 = vld [vmem:[%s4 + $0x3b8] sm:$0xf]
      %v5791 = vld [vmem:[%s4 + $0x3bc] sm:$0xf]
      %v5792 = vld [vmem:[%s4 + $0x3c0] sm:$0xf]
      %v5793 = vld [vmem:[%s4 + $0x3c4] sm:$0xf]
      %v5794 = vld [vmem:[%s4 + $0x3c8] sm:$0xf]
      %v5795 = vld [vmem:[%s4 + $0x3cc] sm:$0xf]
      %v5796 = vld [vmem:[%s4 + $0x3d0] sm:$0xf]
      %v5797 = vld [vmem:[%s4 + $0x3d4] sm:$0xf]
      %v5798 = vld [vmem:[%s4 + $0x3d8] sm:$0xf]
      %v5799 = vld [vmem:[%s4 + $0x3dc] sm:$0xf]
      %v5800 = vld [vmem:[%s4 + $0x3e0] sm:$0xf]
      %v5801 = vld [vmem:[%s4 + $0x3e4] sm:$0xf]
      %v5802 = vld [vmem:[%s4 + $0x3e8] sm:$0xf]
      %v5803 = vld [vmem:[%s4 + $0x3ec] sm:$0xf]
      %v5804 = vld [vmem:[%s4 + $0x3f0] sm:$0xf]
      %v5805 = vld [vmem:[%s4 + $0x3f4] sm:$0xf]
      %v5806 = vld [vmem:[%s4 + $0x3f8] sm:$0xf]
      %v5807 = vld [vmem:[%s4 + $0x3fc] sm:$0xf]
      %v5808 = vld [vmem:[%s4 + $0x400] sm:$0xf]
      %v5809 = vld [vmem:[%s4 + $0x404] sm:$0xf]
      %v5810 = vld [vmem:[%s4 + $0x408] sm:$0xf]
      %v5811 = vld [vmem:[%s4 + $0x40c] sm:$0xf]
      %v5812 = vld [vmem:[%s4 + $0x410] sm:$0xf]
      %v5813 = vld [vmem:[%s4 + $0x414] sm:$0xf]
      %v5814 = vld [vmem:[%s4 + $0x418] sm:$0xf]
      %v5815 = vld [vmem:[%s4 + $0x41c] sm:$0xf]
      %v5816 = vld [vmem:[%s4 + $0x420] sm:$0xf]
      %v5817 = vld [vmem:[%s4 + $0x424] sm:$0xf]
      %v5818 = vld [vmem:[%s4 + $0x428] sm:$0xf]
      %v5819 = vld [vmem:[%s4 + $0x42c] sm:$0xf]
      %v5820 = vld [vmem:[%s4 + $0x430] sm:$0xf]
      %v5821 = vld [vmem:[%s4 + $0x434] sm:$0xf]
      %v5822 = vld [vmem:[%s4 + $0x438] sm:$0xf]
      %v5823 = vld [vmem:[%s4 + $0x43c] sm:$0xf]
      %v5824 = vld [vmem:[%s4 + $0x440] sm:$0xf]
      %v5825 = vld [vmem:[%s4 + $0x444] sm:$0xf]
      %v5826 = vld [vmem:[%s4 + $0x448] sm:$0xf]
      %v5827 = vld [vmem:[%s4 + $0x44c] sm:$0xf]
      %v5828 = vld [vmem:[%s4 + $0x450] sm:$0xf]
      %v5829 = vld [vmem:[%s4 + $0x454] sm:$0xf]
      %v5830 = vld [vmem:[%s4 + $0x458] sm:$0xf]
      %v5831 = vld [vmem:[%s4 + $0x45c] sm:$0xf]
      %v5832 = vld [vmem:[%s4 + $0x460] sm:$0xf]
      %v5833 = vld [vmem:[%s4 + $0x464] sm:$0xf]
      %v5834 = vld [vmem:[%s4 + $0x468] sm:$0xf]
      %v5835 = vld [vmem:[%s4 + $0x46c] sm:$0xf]
      %v5836 = vld [vmem:[%s4 + $0x470] sm:$0xf]
      %v5837 = vld [vmem:[%s4 + $0x474] sm:$0xf]
      %v5838 = vld [vmem:[%s4 + $0x478] sm:$0xf]
      %v5839 = vld [vmem:[%s4 + $0x47c] sm:$0xf]
      %v6128 = vunpack.c.l.b16 %v5552
      %v6129 = vunpack.c.l.b16 %v5553
      %v6130 = vunpack.c.l.b16 %v5554
      %v6131 = vunpack.c.l.b16 %v5555
      %v6132 = vunpack.c.l.b16 %v5556
      %v6133 = vunpack.c.l.b16 %v5557
      %v6134 = vunpack.c.l.b16 %v5558
      %v6135 = vunpack.c.l.b16 %v5559
      %v6136 = vunpack.c.l.b16 %v5560
      %v6137 = vunpack.c.l.b16 %v5561
      %v6138 = vunpack.c.l.b16 %v5562
      %v6139 = vunpack.c.l.b16 %v5563
      %v6140 = vunpack.c.l.b16 %v5564
      %v6141 = vunpack.c.l.b16 %v5565
      %v6142 = vunpack.c.l.b16 %v5566
      %v6143 = vunpack.c.l.b16 %v5567
      %v6144 = vunpack.c.l.b16 %v5568
      %v6145 = vunpack.c.l.b16 %v5569
      %v6146 = vunpack.c.l.b16 %v5570
      %v6147 = vunpack.c.l.b16 %v5571
      %v6148 = vunpack.c.l.b16 %v5572
      %v6149 = vunpack.c.l.b16 %v5573
      %v6150 = vunpack.c.l.b16 %v5574
      %v6151 = vunpack.c.l.b16 %v5575
      %v6152 = vunpack.c.l.b16 %v5576
      %v6153 = vunpack.c.l.b16 %v5577
      %v6154 = vunpack.c.l.b16 %v5578
      %v6155 = vunpack.c.l.b16 %v5579
      %v6156 = vunpack.c.l.b16 %v5580
      %v6157 = vunpack.c.l.b16 %v5581
      %v6158 = vunpack.c.l.b16 %v5582
      %v6159 = vunpack.c.l.b16 %v5583
      %v6160 = vunpack.c.l.b16 %v5584
      %v6161 = vunpack.c.l.b16 %v5585
      %v6162 = vunpack.c.l.b16 %v5586
      %v6163 = vunpack.c.l.b16 %v5587
      %v6164 = vunpack.c.l.b16 %v5588
      %v6165 = vunpack.c.l.b16 %v5589
      %v6166 = vunpack.c.l.b16 %v5590
      %v6167 = vunpack.c.l.b16 %v5591
      %v6168 = vunpack.c.l.b16 %v5592
      %v6169 = vunpack.c.l.b16 %v5593
      %v6170 = vunpack.c.l.b16 %v5594
      %v6171 = vunpack.c.l.b16 %v5595
      %v6172 = vunpack.c.l.b16 %v5596
      %v6173 = vunpack.c.l.b16 %v5597
      %v6174 = vunpack.c.l.b16 %v5598
      %v6175 = vunpack.c.l.b16 %v5599
      %v6176 = vunpack.c.l.b16 %v5600
      %v6177 = vunpack.c.l.b16 %v5601
      %v6178 = vunpack.c.l.b16 %v5602
      %v6179 = vunpack.c.l.b16 %v5603
      %v6180 = vunpack.c.l.b16 %v5604
      %v6181 = vunpack.c.l.b16 %v5605
      %v6182 = vunpack.c.l.b16 %v5606
      %v6183 = vunpack.c.l.b16 %v5607
      %v6184 = vunpack.c.l.b16 %v5608
      %v6185 = vunpack.c.l.b16 %v5609
      %v6186 = vunpack.c.l.b16 %v5610
      %v6187 = vunpack.c.l.b16 %v5611
      %v6188 = vunpack.c.l.b16 %v5612
      %v6189 = vunpack.c.l.b16 %v5613
      %v6190 = vunpack.c.l.b16 %v5614
      %v6191 = vunpack.c.l.b16 %v5615
      %v6192 = vunpack.c.l.b16 %v5616
      %v6193 = vunpack.c.l.b16 %v5617
      %v6194 = vunpack.c.l.b16 %v5618
      %v6195 = vunpack.c.l.b16 %v5619
      %v6196 = vunpack.c.l.b16 %v5620
      %v6197 = vunpack.c.l.b16 %v5621
      %v6198 = vunpack.c.l.b16 %v5622
      %v6199 = vunpack.c.l.b16 %v5623
      %v6200 = vunpack.c.l.b16 %v5624
      %v6201 = vunpack.c.l.b16 %v5625
      %v6202 = vunpack.c.l.b16 %v5626
      %v6203 = vunpack.c.l.b16 %v5627
      %v6204 = vunpack.c.l.b16 %v5628
      %v6205 = vunpack.c.l.b16 %v5629
      %v6206 = vunpack.c.l.b16 %v5630
      %v6207 = vunpack.c.l.b16 %v5631
      %v6208 = vunpack.c.l.b16 %v5632
      %v6209 = vunpack.c.l.b16 %v5633
      %v6210 = vunpack.c.l.b16 %v5634
      %v6211 = vunpack.c.l.b16 %v5635
      %v6212 = vunpack.c.l.b16 %v5636
      %v6213 = vunpack.c.l.b16 %v5637
      %v6214 = vunpack.c.l.b16 %v5638
      %v6215 = vunpack.c.l.b16 %v5639
      %v6216 = vunpack.c.l.b16 %v5640
      %v6217 = vunpack.c.l.b16 %v5641
      %v6218 = vunpack.c.l.b16 %v5642
      %v6219 = vunpack.c.l.b16 %v5643
      %v6220 = vunpack.c.l.b16 %v5644
      %v6221 = vunpack.c.l.b16 %v5645
      %v6222 = vunpack.c.l.b16 %v5646
      %v6223 = vunpack.c.l.b16 %v5647
      %v6224 = vunpack.c.l.b16 %v5648
      %v6225 = vunpack.c.l.b16 %v5649
      %v6226 = vunpack.c.l.b16 %v5650
      %v6227 = vunpack.c.l.b16 %v5651
      %v6228 = vunpack.c.l.b16 %v5652
      %v6229 = vunpack.c.l.b16 %v5653
      %v6230 = vunpack.c.l.b16 %v5654
      %v6231 = vunpack.c.l.b16 %v5655
      %v6232 = vunpack.c.l.b16 %v5656
      %v6233 = vunpack.c.l.b16 %v5657
      %v6234 = vunpack.c.l.b16 %v5658
      %v6235 = vunpack.c.l.b16 %v5659
      %v6236 = vunpack.c.l.b16 %v5660
      %v6237 = vunpack.c.l.b16 %v5661
      %v6238 = vunpack.c.l.b16 %v5662
      %v6239 = vunpack.c.l.b16 %v5663
      %v6240 = vunpack.c.l.b16 %v5664
      %v6241 = vunpack.c.l.b16 %v5665
      %v6242 = vunpack.c.l.b16 %v5666
      %v6243 = vunpack.c.l.b16 %v5667
      %v6244 = vunpack.c.l.b16 %v5668
      %v6245 = vunpack.c.l.b16 %v5669
      %v6246 = vunpack.c.l.b16 %v5670
      %v6247 = vunpack.c.l.b16 %v5671
      %v6248 = vunpack.c.l.b16 %v5672
      %v6249 = vunpack.c.l.b16 %v5673
      %v6250 = vunpack.c.l.b16 %v5674
      %v6251 = vunpack.c.l.b16 %v5675
      %v6252 = vunpack.c.l.b16 %v5676
      %v6253 = vunpack.c.l.b16 %v5677
      %v6254 = vunpack.c.l.b16 %v5678
      %v6255 = vunpack.c.l.b16 %v5679
      %v6256 = vunpack.c.l.b16 %v5680
      %v6257 = vunpack.c.l.b16 %v5681
      %v6258 = vunpack.c.l.b16 %v5682
      %v6259 = vunpack.c.l.b16 %v5683
      %v6260 = vunpack.c.l.b16 %v5684
      %v6261 = vunpack.c.l.b16 %v5685
      %v6262 = vunpack.c.l.b16 %v5686
      %v6263 = vunpack.c.l.b16 %v5687
      %v6264 = vunpack.c.l.b16 %v5688
      %v6265 = vunpack.c.l.b16 %v5689
      %v6266 = vunpack.c.l.b16 %v5690
      %v6267 = vunpack.c.l.b16 %v5691
      %v6268 = vunpack.c.l.b16 %v5692
      %v6269 = vunpack.c.l.b16 %v5693
      %v6270 = vunpack.c.l.b16 %v5694
      %v6271 = vunpack.c.l.b16 %v5695
      %v6272 = vunpack.c.l.b16 %v5696
      %v6273 = vunpack.c.l.b16 %v5697
      %v6274 = vunpack.c.l.b16 %v5698
      %v6275 = vunpack.c.l.b16 %v5699
      %v6276 = vunpack.c.l.b16 %v5700
      %v6277 = vunpack.c.l.b16 %v5701
      %v6278 = vunpack.c.l.b16 %v5702
      %v6279 = vunpack.c.l.b16 %v5703
      %v6280 = vunpack.c.l.b16 %v5704
      %v6281 = vunpack.c.l.b16 %v5705
      %v6282 = vunpack.c.l.b16 %v5706
      %v6283 = vunpack.c.l.b16 %v5707
      %v6284 = vunpack.c.l.b16 %v5708
      %v6285 = vunpack.c.l.b16 %v5709
      %v6286 = vunpack.c.l.b16 %v5710
      %v6287 = vunpack.c.l.b16 %v5711
      %v6288 = vunpack.c.l.b16 %v5712
      %v6289 = vunpack.c.l.b16 %v5713
      %v6290 = vunpack.c.l.b16 %v5714
      %v6291 = vunpack.c.l.b16 %v5715
      %v6292 = vunpack.c.l.b16 %v5716
      %v6293 = vunpack.c.l.b16 %v5717
      %v6294 = vunpack.c.l.b16 %v5718
      %v6295 = vunpack.c.l.b16 %v5719
      %v6296 = vunpack.c.l.b16 %v5720
      %v6297 = vunpack.c.l.b16 %v5721
      %v6298 = vunpack.c.l.b16 %v5722
      %v6299 = vunpack.c.l.b16 %v5723
      %v6300 = vunpack.c.l.b16 %v5724
      %v6301 = vunpack.c.l.b16 %v5725
      %v6302 = vunpack.c.l.b16 %v5726
      %v6303 = vunpack.c.l.b16 %v5727
      %v6304 = vunpack.c.l.b16 %v5728
      %v6305 = vunpack.c.l.b16 %v5729
      %v6306 = vunpack.c.l.b16 %v5730
      %v6307 = vunpack.c.l.b16 %v5731
      %v6308 = vunpack.c.l.b16 %v5732
      %v6309 = vunpack.c.l.b16 %v5733
      %v6310 = vunpack.c.l.b16 %v5734
      %v6311 = vunpack.c.l.b16 %v5735
      %v6312 = vunpack.c.l.b16 %v5736
      %v6313 = vunpack.c.l.b16 %v5737
      %v6314 = vunpack.c.l.b16 %v5738
      %v6315 = vunpack.c.l.b16 %v5739
      %v6316 = vunpack.c.l.b16 %v5740
      %v6317 = vunpack.c.l.b16 %v5741
      %v6318 = vunpack.c.l.b16 %v5742
      %v6319 = vunpack.c.l.b16 %v5743
      %v6320 = vunpack.c.l.b16 %v5744
      %v6321 = vunpack.c.l.b16 %v5745
      %v6322 = vunpack.c.l.b16 %v5746
      %v6323 = vunpack.c.l.b16 %v5747
      %v6324 = vunpack.c.l.b16 %v5748
      %v6325 = vunpack.c.l.b16 %v5749
      %v6326 = vunpack.c.l.b16 %v5750
      %v6327 = vunpack.c.l.b16 %v5751
      %v6328 = vunpack.c.l.b16 %v5752
      %v6329 = vunpack.c.l.b16 %v5753
      %v6330 = vunpack.c.l.b16 %v5754
      %v6331 = vunpack.c.l.b16 %v5755
      %v6332 = vunpack.c.l.b16 %v5756
      %v6333 = vunpack.c.l.b16 %v5757
      %v6334 = vunpack.c.l.b16 %v5758
      %v6335 = vunpack.c.l.b16 %v5759
      %v6336 = vunpack.c.l.b16 %v5760
      %v6337 = vunpack.c.l.b16 %v5761
      %v6338 = vunpack.c.l.b16 %v5762
      %v6339 = vunpack.c.l.b16 %v5763
      %v6340 = vunpack.c.l.b16 %v5764
      %v6341 = vunpack.c.l.b16 %v5765
      %v6342 = vunpack.c.l.b16 %v5766
      %v6343 = vunpack.c.l.b16 %v5767
      %v6344 = vunpack.c.l.b16 %v5768
      %v6345 = vunpack.c.l.b16 %v5769
      %v6346 = vunpack.c.l.b16 %v5770
      %v6347 = vunpack.c.l.b16 %v5771
      %v6348 = vunpack.c.l.b16 %v5772
      %v6349 = vunpack.c.l.b16 %v5773
      %v6350 = vunpack.c.l.b16 %v5774
      %v6351 = vunpack.c.l.b16 %v5775
      %v6352 = vunpack.c.l.b16 %v5776
      %v6353 = vunpack.c.l.b16 %v5777
      %v6354 = vunpack.c.l.b16 %v5778
      %v6355 = vunpack.c.l.b16 %v5779
      %v6356 = vunpack.c.l.b16 %v5780
      %v6357 = vunpack.c.l.b16 %v5781
      %v6358 = vunpack.c.l.b16 %v5782
      %v6359 = vunpack.c.l.b16 %v5783
      %v6360 = vunpack.c.l.b16 %v5784
      %v6361 = vunpack.c.l.b16 %v5785
      %v6362 = vunpack.c.l.b16 %v5786
      %v6363 = vunpack.c.l.b16 %v5787
      %v6364 = vunpack.c.l.b16 %v5788
      %v6365 = vunpack.c.l.b16 %v5789
      %v6366 = vunpack.c.l.b16 %v5790
      %v6367 = vunpack.c.l.b16 %v5791
      %v6368 = vunpack.c.l.b16 %v5792
      %v6369 = vunpack.c.l.b16 %v5793
      %v6370 = vunpack.c.l.b16 %v5794
      %v6371 = vunpack.c.l.b16 %v5795
      %v6372 = vunpack.c.l.b16 %v5796
      %v6373 = vunpack.c.l.b16 %v5797
      %v6374 = vunpack.c.l.b16 %v5798
      %v6375 = vunpack.c.l.b16 %v5799
      %v6376 = vunpack.c.l.b16 %v5800
      %v6377 = vunpack.c.l.b16 %v5801
      %v6378 = vunpack.c.l.b16 %v5802
      %v6379 = vunpack.c.l.b16 %v5803
      %v6380 = vunpack.c.l.b16 %v5804
      %v6381 = vunpack.c.l.b16 %v5805
      %v6382 = vunpack.c.l.b16 %v5806
      %v6383 = vunpack.c.l.b16 %v5807
      %v6384 = vunpack.c.l.b16 %v5808
      %v6385 = vunpack.c.l.b16 %v5809
      %v6386 = vunpack.c.l.b16 %v5810
      %v6387 = vunpack.c.l.b16 %v5811
      %v6388 = vunpack.c.l.b16 %v5812
      %v6389 = vunpack.c.l.b16 %v5813
      %v6390 = vunpack.c.l.b16 %v5814
      %v6391 = vunpack.c.l.b16 %v5815
      %v6392 = vunpack.c.l.b16 %v5816
      %v6393 = vunpack.c.l.b16 %v5817
      %v6394 = vunpack.c.l.b16 %v5818
      %v6395 = vunpack.c.l.b16 %v5819
      %v6396 = vunpack.c.l.b16 %v5820
      %v6397 = vunpack.c.l.b16 %v5821
      %v6398 = vunpack.c.l.b16 %v5822
      %v6399 = vunpack.c.l.b16 %v5823
      %v6400 = vunpack.c.l.b16 %v5824
      %v6401 = vunpack.c.l.b16 %v5825
      %v6402 = vunpack.c.l.b16 %v5826
      %v6403 = vunpack.c.l.b16 %v5827
      %v6404 = vunpack.c.l.b16 %v5828
      %v6405 = vunpack.c.l.b16 %v5829
      %v6406 = vunpack.c.l.b16 %v5830
      %v6407 = vunpack.c.l.b16 %v5831
      %v6408 = vunpack.c.l.b16 %v5832
      %v6409 = vunpack.c.l.b16 %v5833
      %v6410 = vunpack.c.l.b16 %v5834
      %v6411 = vunpack.c.l.b16 %v5835
      %v6412 = vunpack.c.l.b16 %v5836
      %v6413 = vunpack.c.l.b16 %v5837
      %v6414 = vunpack.c.l.b16 %v5838
      %v6415 = vunpack.c.l.b16 %v5839
      %v6416 = vpack.c.b16 %v6129, %v6128
      %v6417 = vpack.c.b16 %v6131, %v6130
      %v6418 = vpack.c.b16 %v6133, %v6132
      %v6419 = vpack.c.b16 %v6135, %v6134
      %v6420 = vpack.c.b16 %v6137, %v6136
      %v6421 = vpack.c.b16 %v6139, %v6138
      %v6422 = vpack.c.b16 %v6141, %v6140
      %v6423 = vpack.c.b16 %v6143, %v6142
      %v6424 = vpack.c.b16 %v6145, %v6144
      %v6425 = vpack.c.b16 %v6147, %v6146
      %v6426 = vpack.c.b16 %v6149, %v6148
      %v6427 = vpack.c.b16 %v6151, %v6150
      %v6428 = vpack.c.b16 %v6153, %v6152
      %v6429 = vpack.c.b16 %v6155, %v6154
      %v6430 = vpack.c.b16 %v6157, %v6156
      %v6431 = vpack.c.b16 %v6159, %v6158
      %v6432 = vpack.c.b16 %v6161, %v6160
      %v6433 = vpack.c.b16 %v6163, %v6162
      %v6434 = vpack.c.b16 %v6165, %v6164
      %v6435 = vpack.c.b16 %v6167, %v6166
      %v6436 = vpack.c.b16 %v6169, %v6168
      %v6437 = vpack.c.b16 %v6171, %v6170
      %v6438 = vpack.c.b16 %v6173, %v6172
      %v6439 = vpack.c.b16 %v6175, %v6174
      %v6440 = vpack.c.b16 %v6177, %v6176
      %v6441 = vpack.c.b16 %v6179, %v6178
      %v6442 = vpack.c.b16 %v6181, %v6180
      %v6443 = vpack.c.b16 %v6183, %v6182
      %v6444 = vpack.c.b16 %v6185, %v6184
      %v6445 = vpack.c.b16 %v6187, %v6186
      %v6446 = vpack.c.b16 %v6189, %v6188
      %v6447 = vpack.c.b16 %v6191, %v6190
      %v6448 = vpack.c.b16 %v6193, %v6192
      %v6449 = vpack.c.b16 %v6195, %v6194
      %v6450 = vpack.c.b16 %v6197, %v6196
      %v6451 = vpack.c.b16 %v6199, %v6198
      %v6452 = vpack.c.b16 %v6201, %v6200
      %v6453 = vpack.c.b16 %v6203, %v6202
      %v6454 = vpack.c.b16 %v6205, %v6204
      %v6455 = vpack.c.b16 %v6207, %v6206
      %v6456 = vpack.c.b16 %v6209, %v6208
      %v6457 = vpack.c.b16 %v6211, %v6210
      %v6458 = vpack.c.b16 %v6213, %v6212
      %v6459 = vpack.c.b16 %v6215, %v6214
      %v6460 = vpack.c.b16 %v6217, %v6216
      %v6461 = vpack.c.b16 %v6219, %v6218
      %v6462 = vpack.c.b16 %v6221, %v6220
      %v6463 = vpack.c.b16 %v6223, %v6222
      %v6464 = vpack.c.b16 %v6225, %v6224
      %v6465 = vpack.c.b16 %v6227, %v6226
      %v6466 = vpack.c.b16 %v6229, %v6228
      %v6467 = vpack.c.b16 %v6231, %v6230
      %v6468 = vpack.c.b16 %v6233, %v6232
      %v6469 = vpack.c.b16 %v6235, %v6234
      %v6470 = vpack.c.b16 %v6237, %v6236
      %v6471 = vpack.c.b16 %v6239, %v6238
      %v6472 = vpack.c.b16 %v6241, %v6240
      %v6473 = vpack.c.b16 %v6243, %v6242
      %v6474 = vpack.c.b16 %v6245, %v6244
      %v6475 = vpack.c.b16 %v6247, %v6246
      %v6476 = vpack.c.b16 %v6249, %v6248
      %v6477 = vpack.c.b16 %v6251, %v6250
      %v6478 = vpack.c.b16 %v6253, %v6252
      %v6479 = vpack.c.b16 %v6255, %v6254
      %v6480 = vpack.c.b16 %v6257, %v6256
      %v6481 = vpack.c.b16 %v6259, %v6258
      %v6482 = vpack.c.b16 %v6261, %v6260
      %v6483 = vpack.c.b16 %v6263, %v6262
      %v6484 = vpack.c.b16 %v6265, %v6264
      %v6485 = vpack.c.b16 %v6267, %v6266
      %v6486 = vpack.c.b16 %v6269, %v6268
      %v6487 = vpack.c.b16 %v6271, %v6270
      %v6488 = vpack.c.b16 %v6273, %v6272
      %v6489 = vpack.c.b16 %v6275, %v6274
      %v6490 = vpack.c.b16 %v6277, %v6276
      %v6491 = vpack.c.b16 %v6279, %v6278
      %v6492 = vpack.c.b16 %v6281, %v6280
      %v6493 = vpack.c.b16 %v6283, %v6282
      %v6494 = vpack.c.b16 %v6285, %v6284
      %v6495 = vpack.c.b16 %v6287, %v6286
      %v6496 = vpack.c.b16 %v6289, %v6288
      %v6497 = vpack.c.b16 %v6291, %v6290
      %v6498 = vpack.c.b16 %v6293, %v6292
      %v6499 = vpack.c.b16 %v6295, %v6294
      %v6500 = vpack.c.b16 %v6297, %v6296
      %v6501 = vpack.c.b16 %v6299, %v6298
      %v6502 = vpack.c.b16 %v6301, %v6300
      %v6503 = vpack.c.b16 %v6303, %v6302
      %v6504 = vpack.c.b16 %v6305, %v6304
      %v6505 = vpack.c.b16 %v6307, %v6306
      %v6506 = vpack.c.b16 %v6309, %v6308
      %v6507 = vpack.c.b16 %v6311, %v6310
      %v6508 = vpack.c.b16 %v6313, %v6312
      %v6509 = vpack.c.b16 %v6315, %v6314
      %v6510 = vpack.c.b16 %v6317, %v6316
      %v6511 = vpack.c.b16 %v6319, %v6318
      %v6512 = vpack.c.b16 %v6321, %v6320
      %v6513 = vpack.c.b16 %v6323, %v6322
      %v6514 = vpack.c.b16 %v6325, %v6324
      %v6515 = vpack.c.b16 %v6327, %v6326
      %v6516 = vpack.c.b16 %v6329, %v6328
      %v6517 = vpack.c.b16 %v6331, %v6330
      %v6518 = vpack.c.b16 %v6333, %v6332
      %v6519 = vpack.c.b16 %v6335, %v6334
      %v6520 = vpack.c.b16 %v6337, %v6336
      %v6521 = vpack.c.b16 %v6339, %v6338
      %v6522 = vpack.c.b16 %v6341, %v6340
      %v6523 = vpack.c.b16 %v6343, %v6342
      %v6524 = vpack.c.b16 %v6345, %v6344
      %v6525 = vpack.c.b16 %v6347, %v6346
      %v6526 = vpack.c.b16 %v6349, %v6348
      %v6527 = vpack.c.b16 %v6351, %v6350
      %v6528 = vpack.c.b16 %v6353, %v6352
      %v6529 = vpack.c.b16 %v6355, %v6354
      %v6530 = vpack.c.b16 %v6357, %v6356
      %v6531 = vpack.c.b16 %v6359, %v6358
      %v6532 = vpack.c.b16 %v6361, %v6360
      %v6533 = vpack.c.b16 %v6363, %v6362
      %v6534 = vpack.c.b16 %v6365, %v6364
      %v6535 = vpack.c.b16 %v6367, %v6366
      %v6536 = vpack.c.b16 %v6369, %v6368
      %v6537 = vpack.c.b16 %v6371, %v6370
      %v6538 = vpack.c.b16 %v6373, %v6372
      %v6539 = vpack.c.b16 %v6375, %v6374
      %v6540 = vpack.c.b16 %v6377, %v6376
      %v6541 = vpack.c.b16 %v6379, %v6378
      %v6542 = vpack.c.b16 %v6381, %v6380
      %v6543 = vpack.c.b16 %v6383, %v6382
      %v6544 = vpack.c.b16 %v6385, %v6384
      %v6545 = vpack.c.b16 %v6387, %v6386
      %v6546 = vpack.c.b16 %v6389, %v6388
      %v6547 = vpack.c.b16 %v6391, %v6390
      %v6548 = vpack.c.b16 %v6393, %v6392
      %v6549 = vpack.c.b16 %v6395, %v6394
      %v6550 = vpack.c.b16 %v6397, %v6396
      %v6551 = vpack.c.b16 %v6399, %v6398
      %v6552 = vpack.c.b16 %v6401, %v6400
      %v6553 = vpack.c.b16 %v6403, %v6402
      %v6554 = vpack.c.b16 %v6405, %v6404
      %v6555 = vpack.c.b16 %v6407, %v6406
      %v6556 = vpack.c.b16 %v6409, %v6408
      %v6557 = vpack.c.b16 %v6411, %v6410
      %v6558 = vpack.c.b16 %v6413, %v6412
      %v6559 = vpack.c.b16 %v6415, %v6414
      %6704 = vmatprep.subr.bf16.mxu0 0
      %6705 = vmatpush1.bf16.msra.mxu0 %v6423
      %6706 = vmatprep.subr.bf16.mxu0 0
      %6707 = vmatpush1.bf16.msra.mxu0 %v6422
      %6708 = vmatprep.subr.bf16.mxu0 0
      %6709 = vmatpush1.bf16.msra.mxu0 %v6421
      %6710 = vmatprep.subr.bf16.mxu0 0
      %6711 = vmatpush1.bf16.msra.mxu0 %v6420
      %6712 = vmatprep.subr.bf16.mxu0 0
      %6713 = vmatpush1.bf16.msra.mxu0 %v6419
      %6714 = vmatprep.subr.bf16.mxu0 0
      %6715 = vmatpush1.bf16.msra.mxu0 %v6418
      %6716 = vmatprep.subr.bf16.mxu0 0
      %6717 = vmatpush1.bf16.msra.mxu0 %v6417
      %6718 = vmatprep.subr.bf16.mxu0 0
      %6719 = vmatpush1.bf16.msra.mxu0 %v6416
      %6720 = vmatprep.subr.bf16.mxu0 0
      %6721 = vmatpush2.bf16.msra.mxu0 %v6431
      %6722 = vmatprep.subr.bf16.mxu0 0
      %6723 = vmatpush2.bf16.msra.mxu0 %v6430
      %6724 = vmatprep.subr.bf16.mxu0 0
      %6725 = vmatpush2.bf16.msra.mxu0 %v6429
      %6726 = vmatprep.subr.bf16.mxu0 0
      %6727 = vmatpush2.bf16.msra.mxu0 %v6428
      %6728 = vmatprep.subr.bf16.mxu0 0
      %6729 = vmatpush2.bf16.msra.mxu0 %v6427
      %6730 = vmatprep.subr.bf16.mxu0 0
      %6731 = vmatpush2.bf16.msra.mxu0 %v6426
      %6732 = vmatprep.subr.bf16.mxu0 0
      %6733 = vmatpush2.bf16.msra.mxu0 %v6425
      %6734 = vmatprep.subr.bf16.mxu0 0
      %6735 = vmatpush2.bf16.msra.mxu0 %v6424
      %6736 = vmatprep.mubr.bf16.mxu0 0
      %6737 = vmatmul.mubr.bf16.gmra.mxu0 0
      %v6738 = vpop.f32.mrf.mxu0
      %v6739 = vadd.f32 0.0, %v6738
      %v6740 = vpop.f32.mrf.mxu0
      %v6741 = vpop.f32.mrf.mxu0
      %v6742 = vadd.f32 0.0, %v6741
      %v6743 = vpop.f32.mrf.mxu0
      %6744 = vmatprep.mubr.bf16.mxu0 %v5264
      %6745 = vmatmul.mubr.bf16.gmra.mxu0 %v5263
      %v6746 = vpop.f32.mrf.mxu0
      %v6747 = vadd.f32 0.0, %v6746
      %v6748 = vpop.f32.mrf.mxu0
      %v6749 = vpop.f32.mrf.mxu0
      %v6750 = vadd.f32 0.0, %v6749
      %v6751 = vpop.f32.mrf.mxu0
      %6752 = vmatprep.mubr.bf16.mxu0 %v5266
      %6753 = vmatmul.mubr.bf16.gmra.mxu0 %v5265
      %v6754 = vpop.f32.mrf.mxu0
      %v6755 = vadd.f32 0.0, %v6754
      %v6756 = vpop.f32.mrf.mxu0
      %v6757 = vpop.f32.mrf.mxu0
      %v6758 = vadd.f32 0.0, %v6757
      %v6759 = vpop.f32.mrf.mxu0
      %6760 = vmatprep.mubr.bf16.mxu0 %v5268
      %6761 = vmatmul.mubr.bf16.gmra.mxu0 %v5267
      %v6762 = vpop.f32.mrf.mxu0
      %v6763 = vadd.f32 0.0, %v6762
      %v6764 = vpop.f32.mrf.mxu0
      %v6765 = vpop.f32.mrf.mxu0
      %v6766 = vadd.f32 0.0, %v6765
      %v6767 = vpop.f32.mrf.mxu0
      %6768 = vmatprep.mubr.bf16.mxu0 %v5270
      %6769 = vmatmul.mubr.bf16.gmra.mxu0 %v5269
      %v6770 = vpop.f32.mrf.mxu0
      %v6771 = vadd.f32 0.0, %v6770
      %v6772 = vpop.f32.mrf.mxu0
      %v6773 = vpop.f32.mrf.mxu0
      %v6774 = vadd.f32 0.0, %v6773
      %v6775 = vpop.f32.mrf.mxu0
      %6776 = vmatprep.mubr.bf16.mxu0 %v5272
      %6777 = vmatmul.mubr.bf16.gmra.mxu0 %v5271
      %v6778 = vpop.f32.mrf.mxu0
      %v6779 = vadd.f32 0.0, %v6778
      %v6780 = vpop.f32.mrf.mxu0
      %v6781 = vpop.f32.mrf.mxu0
      %v6782 = vadd.f32 0.0, %v6781
      %v6783 = vpop.f32.mrf.mxu0
      %6784 = vmatprep.mubr.bf16.mxu0 %v5274
      %6785 = vmatmul.mubr.bf16.gmra.mxu0 %v5273
      %v6786 = vpop.f32.mrf.mxu0
      %v6787 = vadd.f32 0.0, %v6786
      %v6788 = vpop.f32.mrf.mxu0
      %v6789 = vpop.f32.mrf.mxu0
      %v6790 = vadd.f32 0.0, %v6789
      %v6791 = vpop.f32.mrf.mxu0
      %6792 = vmatprep.mubr.bf16.mxu0 %v5276
      %6793 = vmatmul.mubr.bf16.gmra.mxu0 %v5275
      %v6794 = vpop.f32.mrf.mxu0
      %v6795 = vadd.f32 0.0, %v6794
      %v6796 = vpop.f32.mrf.mxu0
      %v6797 = vpop.f32.mrf.mxu0
      %v6798 = vadd.f32 0.0, %v6797
      %v6799 = vpop.f32.mrf.mxu0
      %6800 = vmatprep.mubr.bf16.mxu0 %v5278
      %6801 = vmatmul.mubr.bf16.gmra.mxu0 %v5277
      %v6802 = vpop.f32.mrf.mxu0
      %v6803 = vadd.f32 0.0, %v6802
      %v6804 = vpop.f32.mrf.mxu0
      %v6805 = vpop.f32.mrf.mxu0
      %v6806 = vadd.f32 0.0, %v6805
      %v6807 = vpop.f32.mrf.mxu0
      %6808 = vmatprep.mubr.bf16.mxu0 %v5280
      %6809 = vmatmul.mubr.bf16.gmra.mxu0 %v5279
      %v6810 = vpop.f32.mrf.mxu0
      %v6811 = vadd.f32 0.0, %v6810
      %v6812 = vpop.f32.mrf.mxu0
      %v6813 = vpop.f32.mrf.mxu0
      %v6814 = vadd.f32 0.0, %v6813
      %v6815 = vpop.f32.mrf.mxu0
      %6816 = vmatprep.mubr.bf16.mxu0 %v5282
      %6817 = vmatmul.mubr.bf16.gmra.mxu0 %v5281
      %v6818 = vpop.f32.mrf.mxu0
      %v6819 = vadd.f32 0.0, %v6818
      %v6820 = vpop.f32.mrf.mxu0
      %v6821 = vpop.f32.mrf.mxu0
      %v6822 = vadd.f32 0.0, %v6821
      %v6823 = vpop.f32.mrf.mxu0
      %6824 = vmatprep.mubr.bf16.mxu0 %v5284
      %6825 = vmatmul.mubr.bf16.gmra.mxu0 %v5283
      %v6826 = vpop.f32.mrf.mxu0
      %v6827 = vadd.f32 0.0, %v6826
      %v6828 = vpop.f32.mrf.mxu0
      %v6829 = vpop.f32.mrf.mxu0
      %v6830 = vadd.f32 0.0, %v6829
      %v6831 = vpop.f32.mrf.mxu0
      %6832 = vmatprep.mubr.bf16.mxu0 %v5286
      %6833 = vmatmul.mubr.bf16.gmra.mxu0 %v5285
      %v6834 = vpop.f32.mrf.mxu0
      %v6835 = vadd.f32 0.0, %v6834
      %v6836 = vpop.f32.mrf.mxu0
      %v6837 = vpop.f32.mrf.mxu0
      %v6838 = vadd.f32 0.0, %v6837
      %v6839 = vpop.f32.mrf.mxu0
      %6840 = vmatprep.mubr.bf16.mxu0 %v5288
      %6841 = vmatmul.mubr.bf16.gmra.mxu0 %v5287
      %v6842 = vpop.f32.mrf.mxu0
      %v6843 = vadd.f32 0.0, %v6842
      %v6844 = vpop.f32.mrf.mxu0
      %v6845 = vpop.f32.mrf.mxu0
      %v6846 = vadd.f32 0.0, %v6845
      %v6847 = vpop.f32.mrf.mxu0
      %6848 = vmatprep.mubr.bf16.mxu0 %v5290
      %6849 = vmatmul.mubr.bf16.gmra.mxu0 %v5289
      %v6850 = vpop.f32.mrf.mxu0
      %v6851 = vadd.f32 0.0, %v6850
      %v6852 = vpop.f32.mrf.mxu0
      %v6853 = vpop.f32.mrf.mxu0
      %v6854 = vadd.f32 0.0, %v6853
      %v6855 = vpop.f32.mrf.mxu0
      %6856 = vmatprep.mubr.bf16.mxu0 %v5292
      %6857 = vmatmul.mubr.bf16.gmra.mxu0 %v5291
      %v6858 = vpop.f32.mrf.mxu0
      %v6859 = vadd.f32 0.0, %v6858
      %v6860 = vpop.f32.mrf.mxu0
      %v6861 = vpop.f32.mrf.mxu0
      %v6862 = vadd.f32 0.0, %v6861
      %v6863 = vpop.f32.mrf.mxu0
      %6864 = vdwg.mxu0
      %6865 = vmatprep.subr.bf16.mxu0 0
      %6866 = vmatpush1.bf16.msra.mxu0 %v6439
      %6867 = vmatprep.subr.bf16.mxu0 0
      %6868 = vmatpush1.bf16.msra.mxu0 %v6438
      %6869 = vmatprep.subr.bf16.mxu0 0
      %6870 = vmatpush1.bf16.msra.mxu0 %v6437
      %6871 = vmatprep.subr.bf16.mxu0 0
      %6872 = vmatpush1.bf16.msra.mxu0 %v6436
      %6873 = vmatprep.subr.bf16.mxu0 0
      %6874 = vmatpush1.bf16.msra.mxu0 %v6435
      %6875 = vmatprep.subr.bf16.mxu0 0
      %6876 = vmatpush1.bf16.msra.mxu0 %v6434
      %6877 = vmatprep.subr.bf16.mxu0 0
      %6878 = vmatpush1.bf16.msra.mxu0 %v6433
      %6879 = vmatprep.subr.bf16.mxu0 0
      %6880 = vmatpush1.bf16.msra.mxu0 %v6432
      %6881 = vmatprep.subr.bf16.mxu0 0
      %6882 = vmatpush2.bf16.msra.mxu0 %v6447
      %6883 = vmatprep.subr.bf16.mxu0 0
      %6884 = vmatpush2.bf16.msra.mxu0 %v6446
      %6885 = vmatprep.subr.bf16.mxu0 0
      %6886 = vmatpush2.bf16.msra.mxu0 %v6445
      %6887 = vmatprep.subr.bf16.mxu0 0
      %6888 = vmatpush2.bf16.msra.mxu0 %v6444
      %6889 = vmatprep.subr.bf16.mxu0 0
      %6890 = vmatpush2.bf16.msra.mxu0 %v6443
      %6891 = vmatprep.subr.bf16.mxu0 0
      %6892 = vmatpush2.bf16.msra.mxu0 %v6442
      %6893 = vmatprep.subr.bf16.mxu0 0
      %6894 = vmatpush2.bf16.msra.mxu0 %v6441
      %6895 = vmatprep.subr.bf16.mxu0 0
      %6896 = vmatpush2.bf16.msra.mxu0 %v6440
      %6897 = vmatprep.mubr.bf16.mxu0 %v5264
      %6898 = vmatmul.mubr.bf16.gmra.mxu0 %v5263
      %v6899 = vpop.f32.mrf.mxu0
      %v6900 = vadd.f32 %v6739, %v6899
      %v6901 = vpop.f32.mrf.mxu0
      %v6902 = vpop.f32.mrf.mxu0
      %v6903 = vadd.f32 %v6742, %v6902
      %v6904 = vpop.f32.mrf.mxu0
      %6905 = vmatprep.mubr.bf16.mxu0 %v5266
      %6906 = vmatmul.mubr.bf16.gmra.mxu0 %v5265
      %v6907 = vpop.f32.mrf.mxu0
      %v6908 = vadd.f32 %v6747, %v6907
      %v6909 = vpop.f32.mrf.mxu0
      %v6910 = vpop.f32.mrf.mxu0
      %v6911 = vadd.f32 %v6750, %v6910
      %v6912 = vpop.f32.mrf.mxu0
      %6913 = vmatprep.mubr.bf16.mxu0 %v5268
      %6914 = vmatmul.mubr.bf16.gmra.mxu0 %v5267
      %v6915 = vpop.f32.mrf.mxu0
      %v6916 = vadd.f32 %v6755, %v6915
      %v6917 = vpop.f32.mrf.mxu0
      %v6918 = vpop.f32.mrf.mxu0
      %v6919 = vadd.f32 %v6758, %v6918
      %v6920 = vpop.f32.mrf.mxu0
      %6921 = vmatprep.mubr.bf16.mxu0 %v5270
      %6922 = vmatmul.mubr.bf16.gmra.mxu0 %v5269
      %v6923 = vpop.f32.mrf.mxu0
      %v6924 = vadd.f32 %v6763, %v6923
      %v6925 = vpop.f32.mrf.mxu0
      %v6926 = vpop.f32.mrf.mxu0
      %v6927 = vadd.f32 %v6766, %v6926
      %v6928 = vpop.f32.mrf.mxu0
      %6929 = vmatprep.mubr.bf16.mxu0 %v5272
      %6930 = vmatmul.mubr.bf16.gmra.mxu0 %v5271
      %v6931 = vpop.f32.mrf.mxu0
      %v6932 = vadd.f32 %v6771, %v6931
      %v6933 = vpop.f32.mrf.mxu0
      %v6934 = vpop.f32.mrf.mxu0
      %v6935 = vadd.f32 %v6774, %v6934
      %v6936 = vpop.f32.mrf.mxu0
      %6937 = vmatprep.mubr.bf16.mxu0 %v5274
      %6938 = vmatmul.mubr.bf16.gmra.mxu0 %v5273
      %v6939 = vpop.f32.mrf.mxu0
      %v6940 = vadd.f32 %v6779, %v6939
      %v6941 = vpop.f32.mrf.mxu0
      %v6942 = vpop.f32.mrf.mxu0
      %v6943 = vadd.f32 %v6782, %v6942
      %v6944 = vpop.f32.mrf.mxu0
      %6945 = vmatprep.mubr.bf16.mxu0 %v5276
      %6946 = vmatmul.mubr.bf16.gmra.mxu0 %v5275
      %v6947 = vpop.f32.mrf.mxu0
      %v6948 = vadd.f32 %v6787, %v6947
      %v6949 = vpop.f32.mrf.mxu0
      %v6950 = vpop.f32.mrf.mxu0
      %v6951 = vadd.f32 %v6790, %v6950
      %v6952 = vpop.f32.mrf.mxu0
      %6953 = vmatprep.mubr.bf16.mxu0 %v5278
      %6954 = vmatmul.mubr.bf16.gmra.mxu0 %v5277
      %v6955 = vpop.f32.mrf.mxu0
      %v6956 = vadd.f32 %v6795, %v6955
      %v6957 = vpop.f32.mrf.mxu0
      %v6958 = vpop.f32.mrf.mxu0
      %v6959 = vadd.f32 %v6798, %v6958
      %v6960 = vpop.f32.mrf.mxu0
      %6961 = vmatprep.mubr.bf16.mxu0 %v5280
      %6962 = vmatmul.mubr.bf16.gmra.mxu0 %v5279
      %v6963 = vpop.f32.mrf.mxu0
      %v6964 = vadd.f32 %v6803, %v6963
      %v6965 = vpop.f32.mrf.mxu0
      %v6966 = vpop.f32.mrf.mxu0
      %v6967 = vadd.f32 %v6806, %v6966
      %v6968 = vpop.f32.mrf.mxu0
      %6969 = vmatprep.mubr.bf16.mxu0 %v5282
      %6970 = vmatmul.mubr.bf16.gmra.mxu0 %v5281
      %v6971 = vpop.f32.mrf.mxu0
      %v6972 = vadd.f32 %v6811, %v6971
      %v6973 = vpop.f32.mrf.mxu0
      %v6974 = vpop.f32.mrf.mxu0
      %v6975 = vadd.f32 %v6814, %v6974
      %v6976 = vpop.f32.mrf.mxu0
      %6977 = vmatprep.mubr.bf16.mxu0 %v5284
      %6978 = vmatmul.mubr.bf16.gmra.mxu0 %v5283
      %v6979 = vpop.f32.mrf.mxu0
      %v6980 = vadd.f32 %v6819, %v6979
      %v6981 = vpop.f32.mrf.mxu0
      %v6982 = vpop.f32.mrf.mxu0
      %v6983 = vadd.f32 %v6822, %v6982
      %v6984 = vpop.f32.mrf.mxu0
      %6985 = vmatprep.mubr.bf16.mxu0 %v5286
      %6986 = vmatmul.mubr.bf16.gmra.mxu0 %v5285
      %v6987 = vpop.f32.mrf.mxu0
      %v6988 = vadd.f32 %v6827, %v6987
      %v6989 = vpop.f32.mrf.mxu0
      %v6990 = vpop.f32.mrf.mxu0
      %v6991 = vadd.f32 %v6830, %v6990
      %v6992 = vpop.f32.mrf.mxu0
      %6993 = vmatprep.mubr.bf16.mxu0 %v5288
      %6994 = vmatmul.mubr.bf16.gmra.mxu0 %v5287
      %v6995 = vpop.f32.mrf.mxu0
      %v6996 = vadd.f32 %v6835, %v6995
      %v6997 = vpop.f32.mrf.mxu0
      %v6998 = vpop.f32.mrf.mxu0
      %v6999 = vadd.f32 %v6838, %v6998
      %v7000 = vpop.f32.mrf.mxu0
      %7001 = vmatprep.mubr.bf16.mxu0 %v5290
      %7002 = vmatmul.mubr.bf16.gmra.mxu0 %v5289
      %v7003 = vpop.f32.mrf.mxu0
      %v7004 = vadd.f32 %v6843, %v7003
      %v7005 = vpop.f32.mrf.mxu0
      %v7006 = vpop.f32.mrf.mxu0
      %v7007 = vadd.f32 %v6846, %v7006
      %v7008 = vpop.f32.mrf.mxu0
      %7009 = vmatprep.mubr.bf16.mxu0 %v5292
      %7010 = vmatmul.mubr.bf16.gmra.mxu0 %v5291
      %v7011 = vpop.f32.mrf.mxu0
      %v7012 = vadd.f32 %v6851, %v7011
      %v7013 = vpop.f32.mrf.mxu0
      %v7014 = vpop.f32.mrf.mxu0
      %v7015 = vadd.f32 %v6854, %v7014
      %v7016 = vpop.f32.mrf.mxu0
      %7017 = vmatprep.mubr.bf16.mxu0 %v5294
      %7018 = vmatmul.mubr.bf16.gmra.mxu0 %v5293
      %v7019 = vpop.f32.mrf.mxu0
      %v7020 = vadd.f32 %v6859, %v7019
      %v7021 = vpop.f32.mrf.mxu0
      %v7022 = vpop.f32.mrf.mxu0
      %v7023 = vadd.f32 %v6862, %v7022
      %v7024 = vpop.f32.mrf.mxu0
      %7025 = vdwg.mxu0
      %7026 = vmatprep.subr.bf16.mxu0 0
      %7027 = vmatpush1.bf16.msra.mxu0 %v6455
      %7028 = vmatprep.subr.bf16.mxu0 0
      %7029 = vmatpush1.bf16.msra.mxu0 %v6454
      %7030 = vmatprep.subr.bf16.mxu0 0
      %7031 = vmatpush1.bf16.msra.mxu0 %v6453
      %7032 = vmatprep.subr.bf16.mxu0 0
      %7033 = vmatpush1.bf16.msra.mxu0 %v6452
      %7034 = vmatprep.subr.bf16.mxu0 0
      %7035 = vmatpush1.bf16.msra.mxu0 %v6451
      %7036 = vmatprep.subr.bf16.mxu0 0
      %7037 = vmatpush1.bf16.msra.mxu0 %v6450
      %7038 = vmatprep.subr.bf16.mxu0 0
      %7039 = vmatpush1.bf16.msra.mxu0 %v6449
      %7040 = vmatprep.subr.bf16.mxu0 0
      %7041 = vmatpush1.bf16.msra.mxu0 %v6448
      %7042 = vmatprep.subr.bf16.mxu0 0
      %7043 = vmatpush2.bf16.msra.mxu0 %v6463
      %7044 = vmatprep.subr.bf16.mxu0 0
      %7045 = vmatpush2.bf16.msra.mxu0 %v6462
      %7046 = vmatprep.subr.bf16.mxu0 0
      %7047 = vmatpush2.bf16.msra.mxu0 %v6461
      %7048 = vmatprep.subr.bf16.mxu0 0
      %7049 = vmatpush2.bf16.msra.mxu0 %v6460
      %7050 = vmatprep.subr.bf16.mxu0 0
      %7051 = vmatpush2.bf16.msra.mxu0 %v6459
      %7052 = vmatprep.subr.bf16.mxu0 0
      %7053 = vmatpush2.bf16.msra.mxu0 %v6458
      %7054 = vmatprep.subr.bf16.mxu0 0
      %7055 = vmatpush2.bf16.msra.mxu0 %v6457
      %7056 = vmatprep.subr.bf16.mxu0 0
      %7057 = vmatpush2.bf16.msra.mxu0 %v6456
      %7058 = vmatprep.mubr.bf16.mxu0 %v5266
      %7059 = vmatmul.mubr.bf16.gmra.mxu0 %v5265
      %v7060 = vpop.f32.mrf.mxu0
      %v7061 = vadd.f32 %v6900, %v7060
      %v7062 = vpop.f32.mrf.mxu0
      %v7063 = vpop.f32.mrf.mxu0
      %v7064 = vadd.f32 %v6903, %v7063
      %v7065 = vpop.f32.mrf.mxu0
      %7066 = vmatprep.mubr.bf16.mxu0 %v5268
      %7067 = vmatmul.mubr.bf16.gmra.mxu0 %v5267
      %v7068 = vpop.f32.mrf.mxu0
      %v7069 = vadd.f32 %v6908, %v7068
      %v7070 = vpop.f32.mrf.mxu0
      %v7071 = vpop.f32.mrf.mxu0
      %v7072 = vadd.f32 %v6911, %v7071
      %v7073 = vpop.f32.mrf.mxu0
      %7074 = vmatprep.mubr.bf16.mxu0 %v5270
      %7075 = vmatmul.mubr.bf16.gmra.mxu0 %v5269
      %v7076 = vpop.f32.mrf.mxu0
      %v7077 = vadd.f32 %v6916, %v7076
      %v7078 = vpop.f32.mrf.mxu0
      %v7079 = vpop.f32.mrf.mxu0
      %v7080 = vadd.f32 %v6919, %v7079
      %v7081 = vpop.f32.mrf.mxu0
      %7082 = vmatprep.mubr.bf16.mxu0 %v5272
      %7083 = vmatmul.mubr.bf16.gmra.mxu0 %v5271
      %v7084 = vpop.f32.mrf.mxu0
      %v7085 = vadd.f32 %v6924, %v7084
      %v7086 = vpop.f32.mrf.mxu0
      %v7087 = vpop.f32.mrf.mxu0
      %v7088 = vadd.f32 %v6927, %v7087
      %v7089 = vpop.f32.mrf.mxu0
      %7090 = vmatprep.mubr.bf16.mxu0 %v5274
      %7091 = vmatmul.mubr.bf16.gmra.mxu0 %v5273
      %v7092 = vpop.f32.mrf.mxu0
      %v7093 = vadd.f32 %v6932, %v7092
      %v7094 = vpop.f32.mrf.mxu0
      %v7095 = vpop.f32.mrf.mxu0
      %v7096 = vadd.f32 %v6935, %v7095
      %v7097 = vpop.f32.mrf.mxu0
      %7098 = vmatprep.mubr.bf16.mxu0 %v5276
      %7099 = vmatmul.mubr.bf16.gmra.mxu0 %v5275
      %v7100 = vpop.f32.mrf.mxu0
      %v7101 = vadd.f32 %v6940, %v7100
      %v7102 = vpop.f32.mrf.mxu0
      %v7103 = vpop.f32.mrf.mxu0
      %v7104 = vadd.f32 %v6943, %v7103
      %v7105 = vpop.f32.mrf.mxu0
      %7106 = vmatprep.mubr.bf16.mxu0 %v5278
      %7107 = vmatmul.mubr.bf16.gmra.mxu0 %v5277
      %v7108 = vpop.f32.mrf.mxu0
      %v7109 = vadd.f32 %v6948, %v7108
      %v7110 = vpop.f32.mrf.mxu0
      %v7111 = vpop.f32.mrf.mxu0
      %v7112 = vadd.f32 %v6951, %v7111
      %v7113 = vpop.f32.mrf.mxu0
      %7114 = vmatprep.mubr.bf16.mxu0 %v5280
      %7115 = vmatmul.mubr.bf16.gmra.mxu0 %v5279
      %v7116 = vpop.f32.mrf.mxu0
      %v7117 = vadd.f32 %v6956, %v7116
      %v7118 = vpop.f32.mrf.mxu0
      %v7119 = vpop.f32.mrf.mxu0
      %v7120 = vadd.f32 %v6959, %v7119
      %v7121 = vpop.f32.mrf.mxu0
      %7122 = vmatprep.mubr.bf16.mxu0 %v5282
      %7123 = vmatmul.mubr.bf16.gmra.mxu0 %v5281
      %v7124 = vpop.f32.mrf.mxu0
      %v7125 = vadd.f32 %v6964, %v7124
      %v7126 = vpop.f32.mrf.mxu0
      %v7127 = vpop.f32.mrf.mxu0
      %v7128 = vadd.f32 %v6967, %v7127
      %v7129 = vpop.f32.mrf.mxu0
      %7130 = vmatprep.mubr.bf16.mxu0 %v5284
      %7131 = vmatmul.mubr.bf16.gmra.mxu0 %v5283
      %v7132 = vpop.f32.mrf.mxu0
      %v7133 = vadd.f32 %v6972, %v7132
      %v7134 = vpop.f32.mrf.mxu0
      %v7135 = vpop.f32.mrf.mxu0
      %v7136 = vadd.f32 %v6975, %v7135
      %v7137 = vpop.f32.mrf.mxu0
      %7138 = vmatprep.mubr.bf16.mxu0 %v5286
      %7139 = vmatmul.mubr.bf16.gmra.mxu0 %v5285
      %v7140 = vpop.f32.mrf.mxu0
      %v7141 = vadd.f32 %v6980, %v7140
      %v7142 = vpop.f32.mrf.mxu0
      %v7143 = vpop.f32.mrf.mxu0
      %v7144 = vadd.f32 %v6983, %v7143
      %v7145 = vpop.f32.mrf.mxu0
      %7146 = vmatprep.mubr.bf16.mxu0 %v5288
      %7147 = vmatmul.mubr.bf16.gmra.mxu0 %v5287
      %v7148 = vpop.f32.mrf.mxu0
      %v7149 = vadd.f32 %v6988, %v7148
      %v7150 = vpop.f32.mrf.mxu0
      %v7151 = vpop.f32.mrf.mxu0
      %v7152 = vadd.f32 %v6991, %v7151
      %v7153 = vpop.f32.mrf.mxu0
      %7154 = vmatprep.mubr.bf16.mxu0 %v5290
      %7155 = vmatmul.mubr.bf16.gmra.mxu0 %v5289
      %v7156 = vpop.f32.mrf.mxu0
      %v7157 = vadd.f32 %v6996, %v7156
      %v7158 = vpop.f32.mrf.mxu0
      %v7159 = vpop.f32.mrf.mxu0
      %v7160 = vadd.f32 %v6999, %v7159
      %v7161 = vpop.f32.mrf.mxu0
      %7162 = vmatprep.mubr.bf16.mxu0 %v5292
      %7163 = vmatmul.mubr.bf16.gmra.mxu0 %v5291
      %v7164 = vpop.f32.mrf.mxu0
      %v7165 = vadd.f32 %v7004, %v7164
      %v7166 = vpop.f32.mrf.mxu0
      %v7167 = vpop.f32.mrf.mxu0
      %v7168 = vadd.f32 %v7007, %v7167
      %v7169 = vpop.f32.mrf.mxu0
      %7170 = vmatprep.mubr.bf16.mxu0 %v5294
      %7171 = vmatmul.mubr.bf16.gmra.mxu0 %v5293
      %v7172 = vpop.f32.mrf.mxu0
      %v7173 = vadd.f32 %v7012, %v7172
      %v7174 = vpop.f32.mrf.mxu0
      %v7175 = vpop.f32.mrf.mxu0
      %v7176 = vadd.f32 %v7015, %v7175
      %v7177 = vpop.f32.mrf.mxu0
      %7178 = vmatprep.mubr.bf16.mxu0 0
      %7179 = vmatmul.mubr.bf16.gmra.mxu0 0
      %v7180 = vpop.f32.mrf.mxu0
      %v7181 = vadd.f32 %v7020, %v7180
      %v7182 = vpop.f32.mrf.mxu0
      %v7183 = vpop.f32.mrf.mxu0
      %v7184 = vadd.f32 %v7023, %v7183
      %v7185 = vpop.f32.mrf.mxu0
      %7186 = vdwg.mxu0
      %7187 = vmatprep.subr.bf16.mxu0 0
      %7188 = vmatpush1.bf16.msra.mxu0 %v6471
      %7189 = vmatprep.subr.bf16.mxu0 0
      %7190 = vmatpush1.bf16.msra.mxu0 %v6470
      %7191 = vmatprep.subr.bf16.mxu0 0
      %7192 = vmatpush1.bf16.msra.mxu0 %v6469
      %7193 = vmatprep.subr.bf16.mxu0 0
      %7194 = vmatpush1.bf16.msra.mxu0 %v6468
      %7195 = vmatprep.subr.bf16.mxu0 0
      %7196 = vmatpush1.bf16.msra.mxu0 %v6467
      %7197 = vmatprep.subr.bf16.mxu0 0
      %7198 = vmatpush1.bf16.msra.mxu0 %v6466
      %7199 = vmatprep.subr.bf16.mxu0 0
      %7200 = vmatpush1.bf16.msra.mxu0 %v6465
      %7201 = vmatprep.subr.bf16.mxu0 0
      %7202 = vmatpush1.bf16.msra.mxu0 %v6464
      %7203 = vmatprep.subr.bf16.mxu0 0
      %7204 = vmatpush2.bf16.msra.mxu0 %v6479
      %7205 = vmatprep.subr.bf16.mxu0 0
      %7206 = vmatpush2.bf16.msra.mxu0 %v6478
      %7207 = vmatprep.subr.bf16.mxu0 0
      %7208 = vmatpush2.bf16.msra.mxu0 %v6477
      %7209 = vmatprep.subr.bf16.mxu0 0
      %7210 = vmatpush2.bf16.msra.mxu0 %v6476
      %7211 = vmatprep.subr.bf16.mxu0 0
      %7212 = vmatpush2.bf16.msra.mxu0 %v6475
      %7213 = vmatprep.subr.bf16.mxu0 0
      %7214 = vmatpush2.bf16.msra.mxu0 %v6474
      %7215 = vmatprep.subr.bf16.mxu0 0
      %7216 = vmatpush2.bf16.msra.mxu0 %v6473
      %7217 = vmatprep.subr.bf16.mxu0 0
      %7218 = vmatpush2.bf16.msra.mxu0 %v6472
      %7219 = vmatprep.mubr.bf16.mxu0 0
      %7220 = vmatmul.mubr.bf16.gmra.mxu0 0
      %v7221 = vpop.f32.mrf.mxu0
      %v7222 = vadd.f32 %v7061, %v7221
      %v7223 = vpop.f32.mrf.mxu0
      %v7224 = vpop.f32.mrf.mxu0
      %v7225 = vadd.f32 %v7064, %v7224
      %v7226 = vpop.f32.mrf.mxu0
      %7227 = vmatprep.mubr.bf16.mxu0 %v5296
      %7228 = vmatmul.mubr.bf16.gmra.mxu0 %v5295
      %v7229 = vpop.f32.mrf.mxu0
      %v7230 = vadd.f32 %v7069, %v7229
      %v7231 = vpop.f32.mrf.mxu0
      %v7232 = vpop.f32.mrf.mxu0
      %v7233 = vadd.f32 %v7072, %v7232
      %v7234 = vpop.f32.mrf.mxu0
      %7235 = vmatprep.mubr.bf16.mxu0 %v5298
      %7236 = vmatmul.mubr.bf16.gmra.mxu0 %v5297
      %v7237 = vpop.f32.mrf.mxu0
      %v7238 = vadd.f32 %v7077, %v7237
      %v7239 = vpop.f32.mrf.mxu0
      %v7240 = vpop.f32.mrf.mxu0
      %v7241 = vadd.f32 %v7080, %v7240
      %v7242 = vpop.f32.mrf.mxu0
      %7243 = vmatprep.mubr.bf16.mxu0 %v5300
      %7244 = vmatmul.mubr.bf16.gmra.mxu0 %v5299
      %v7245 = vpop.f32.mrf.mxu0
      %v7246 = vadd.f32 %v7085, %v7245
      %v7247 = vpop.f32.mrf.mxu0
      %v7248 = vpop.f32.mrf.mxu0
      %v7249 = vadd.f32 %v7088, %v7248
      %v7250 = vpop.f32.mrf.mxu0
      %7251 = vmatprep.mubr.bf16.mxu0 %v5302
      %7252 = vmatmul.mubr.bf16.gmra.mxu0 %v5301
      %v7253 = vpop.f32.mrf.mxu0
      %v7254 = vadd.f32 %v7093, %v7253
      %v7255 = vpop.f32.mrf.mxu0
      %v7256 = vpop.f32.mrf.mxu0
      %v7257 = vadd.f32 %v7096, %v7256
      %v7258 = vpop.f32.mrf.mxu0
      %7259 = vmatprep.mubr.bf16.mxu0 %v5304
      %7260 = vmatmul.mubr.bf16.gmra.mxu0 %v5303
      %v7261 = vpop.f32.mrf.mxu0
      %v7262 = vadd.f32 %v7101, %v7261
      %v7263 = vpop.f32.mrf.mxu0
      %v7264 = vpop.f32.mrf.mxu0
      %v7265 = vadd.f32 %v7104, %v7264
      %v7266 = vpop.f32.mrf.mxu0
      %7267 = vmatprep.mubr.bf16.mxu0 %v5306
      %7268 = vmatmul.mubr.bf16.gmra.mxu0 %v5305
      %v7269 = vpop.f32.mrf.mxu0
      %v7270 = vadd.f32 %v7109, %v7269
      %v7271 = vpop.f32.mrf.mxu0
      %v7272 = vpop.f32.mrf.mxu0
      %v7273 = vadd.f32 %v7112, %v7272
      %v7274 = vpop.f32.mrf.mxu0
      %7275 = vmatprep.mubr.bf16.mxu0 %v5308
      %7276 = vmatmul.mubr.bf16.gmra.mxu0 %v5307
      %v7277 = vpop.f32.mrf.mxu0
      %v7278 = vadd.f32 %v7117, %v7277
      %v7279 = vpop.f32.mrf.mxu0
      %v7280 = vpop.f32.mrf.mxu0
      %v7281 = vadd.f32 %v7120, %v7280
      %v7282 = vpop.f32.mrf.mxu0
      %7283 = vmatprep.mubr.bf16.mxu0 %v5310
      %7284 = vmatmul.mubr.bf16.gmra.mxu0 %v5309
      %v7285 = vpop.f32.mrf.mxu0
      %v7286 = vadd.f32 %v7125, %v7285
      %v7287 = vpop.f32.mrf.mxu0
      %v7288 = vpop.f32.mrf.mxu0
      %v7289 = vadd.f32 %v7128, %v7288
      %v7290 = vpop.f32.mrf.mxu0
      %7291 = vmatprep.mubr.bf16.mxu0 %v5312
      %7292 = vmatmul.mubr.bf16.gmra.mxu0 %v5311
      %v7293 = vpop.f32.mrf.mxu0
      %v7294 = vadd.f32 %v7133, %v7293
      %v7295 = vpop.f32.mrf.mxu0
      %v7296 = vpop.f32.mrf.mxu0
      %v7297 = vadd.f32 %v7136, %v7296
      %v7298 = vpop.f32.mrf.mxu0
      %7299 = vmatprep.mubr.bf16.mxu0 %v5314
      %7300 = vmatmul.mubr.bf16.gmra.mxu0 %v5313
      %v7301 = vpop.f32.mrf.mxu0
      %v7302 = vadd.f32 %v7141, %v7301
      %v7303 = vpop.f32.mrf.mxu0
      %v7304 = vpop.f32.mrf.mxu0
      %v7305 = vadd.f32 %v7144, %v7304
      %v7306 = vpop.f32.mrf.mxu0
      %7307 = vmatprep.mubr.bf16.mxu0 %v5316
      %7308 = vmatmul.mubr.bf16.gmra.mxu0 %v5315
      %v7309 = vpop.f32.mrf.mxu0
      %v7310 = vadd.f32 %v7149, %v7309
      %v7311 = vpop.f32.mrf.mxu0
      %v7312 = vpop.f32.mrf.mxu0
      %v7313 = vadd.f32 %v7152, %v7312
      %v7314 = vpop.f32.mrf.mxu0
      %7315 = vmatprep.mubr.bf16.mxu0 %v5318
      %7316 = vmatmul.mubr.bf16.gmra.mxu0 %v5317
      %v7317 = vpop.f32.mrf.mxu0
      %v7318 = vadd.f32 %v7157, %v7317
      %v7319 = vpop.f32.mrf.mxu0
      %v7320 = vpop.f32.mrf.mxu0
      %v7321 = vadd.f32 %v7160, %v7320
      %v7322 = vpop.f32.mrf.mxu0
      %7323 = vmatprep.mubr.bf16.mxu0 %v5320
      %7324 = vmatmul.mubr.bf16.gmra.mxu0 %v5319
      %v7325 = vpop.f32.mrf.mxu0
      %v7326 = vadd.f32 %v7165, %v7325
      %v7327 = vpop.f32.mrf.mxu0
      %v7328 = vpop.f32.mrf.mxu0
      %v7329 = vadd.f32 %v7168, %v7328
      %v7330 = vpop.f32.mrf.mxu0
      %7331 = vmatprep.mubr.bf16.mxu0 %v5322
      %7332 = vmatmul.mubr.bf16.gmra.mxu0 %v5321
      %v7333 = vpop.f32.mrf.mxu0
      %v7334 = vadd.f32 %v7173, %v7333
      %v7335 = vpop.f32.mrf.mxu0
      %v7336 = vpop.f32.mrf.mxu0
      %v7337 = vadd.f32 %v7176, %v7336
      %v7338 = vpop.f32.mrf.mxu0
      %7339 = vmatprep.mubr.bf16.mxu0 %v5324
      %7340 = vmatmul.mubr.bf16.gmra.mxu0 %v5323
      %v7341 = vpop.f32.mrf.mxu0
      %v7342 = vadd.f32 %v7181, %v7341
      %v7343 = vpop.f32.mrf.mxu0
      %v7344 = vpop.f32.mrf.mxu0
      %v7345 = vadd.f32 %v7184, %v7344
      %v7346 = vpop.f32.mrf.mxu0
      %7347 = vdwg.mxu0
      %7348 = vmatprep.subr.bf16.mxu0 0
      %7349 = vmatpush1.bf16.msra.mxu0 %v6487
      %7350 = vmatprep.subr.bf16.mxu0 0
      %7351 = vmatpush1.bf16.msra.mxu0 %v6486
      %7352 = vmatprep.subr.bf16.mxu0 0
      %7353 = vmatpush1.bf16.msra.mxu0 %v6485
      %7354 = vmatprep.subr.bf16.mxu0 0
      %7355 = vmatpush1.bf16.msra.mxu0 %v6484
      %7356 = vmatprep.subr.bf16.mxu0 0
      %7357 = vmatpush1.bf16.msra.mxu0 %v6483
      %7358 = vmatprep.subr.bf16.mxu0 0
      %7359 = vmatpush1.bf16.msra.mxu0 %v6482
      %7360 = vmatprep.subr.bf16.mxu0 0
      %7361 = vmatpush1.bf16.msra.mxu0 %v6481
      %7362 = vmatprep.subr.bf16.mxu0 0
      %7363 = vmatpush1.bf16.msra.mxu0 %v6480
      %7364 = vmatprep.subr.bf16.mxu0 0
      %7365 = vmatpush2.bf16.msra.mxu0 %v6495
      %7366 = vmatprep.subr.bf16.mxu0 0
      %7367 = vmatpush2.bf16.msra.mxu0 %v6494
      %7368 = vmatprep.subr.bf16.mxu0 0
      %7369 = vmatpush2.bf16.msra.mxu0 %v6493
      %7370 = vmatprep.subr.bf16.mxu0 0
      %7371 = vmatpush2.bf16.msra.mxu0 %v6492
      %7372 = vmatprep.subr.bf16.mxu0 0
      %7373 = vmatpush2.bf16.msra.mxu0 %v6491
      %7374 = vmatprep.subr.bf16.mxu0 0
      %7375 = vmatpush2.bf16.msra.mxu0 %v6490
      %7376 = vmatprep.subr.bf16.mxu0 0
      %7377 = vmatpush2.bf16.msra.mxu0 %v6489
      %7378 = vmatprep.subr.bf16.mxu0 0
      %7379 = vmatpush2.bf16.msra.mxu0 %v6488
      %7380 = vmatprep.mubr.bf16.mxu0 %v5296
      %7381 = vmatmul.mubr.bf16.gmra.mxu0 %v5295
      %v7382 = vpop.f32.mrf.mxu0
      %v7383 = vadd.f32 %v7222, %v7382
      %v7384 = vpop.f32.mrf.mxu0
      %v7385 = vpop.f32.mrf.mxu0
      %v7386 = vadd.f32 %v7225, %v7385
      %v7387 = vpop.f32.mrf.mxu0
      %7388 = vmatprep.mubr.bf16.mxu0 %v5298
      %7389 = vmatmul.mubr.bf16.gmra.mxu0 %v5297
      %v7390 = vpop.f32.mrf.mxu0
      %v7391 = vadd.f32 %v7230, %v7390
      %v7392 = vpop.f32.mrf.mxu0
      %v7393 = vpop.f32.mrf.mxu0
      %v7394 = vadd.f32 %v7233, %v7393
      %v7395 = vpop.f32.mrf.mxu0
      %7396 = vmatprep.mubr.bf16.mxu0 %v5300
      %7397 = vmatmul.mubr.bf16.gmra.mxu0 %v5299
      %v7398 = vpop.f32.mrf.mxu0
      %v7399 = vadd.f32 %v7238, %v7398
      %v7400 = vpop.f32.mrf.mxu0
      %v7401 = vpop.f32.mrf.mxu0
      %v7402 = vadd.f32 %v7241, %v7401
      %v7403 = vpop.f32.mrf.mxu0
      %7404 = vmatprep.mubr.bf16.mxu0 %v5302
      %7405 = vmatmul.mubr.bf16.gmra.mxu0 %v5301
      %v7406 = vpop.f32.mrf.mxu0
      %v7407 = vadd.f32 %v7246, %v7406
      %v7408 = vpop.f32.mrf.mxu0
      %v7409 = vpop.f32.mrf.mxu0
      %v7410 = vadd.f32 %v7249, %v7409
      %v7411 = vpop.f32.mrf.mxu0
      %7412 = vmatprep.mubr.bf16.mxu0 %v5304
      %7413 = vmatmul.mubr.bf16.gmra.mxu0 %v5303
      %v7414 = vpop.f32.mrf.mxu0
      %v7415 = vadd.f32 %v7254, %v7414
      %v7416 = vpop.f32.mrf.mxu0
      %v7417 = vpop.f32.mrf.mxu0
      %v7418 = vadd.f32 %v7257, %v7417
      %v7419 = vpop.f32.mrf.mxu0
      %7420 = vmatprep.mubr.bf16.mxu0 %v5306
      %7421 = vmatmul.mubr.bf16.gmra.mxu0 %v5305
      %v7422 = vpop.f32.mrf.mxu0
      %v7423 = vadd.f32 %v7262, %v7422
      %v7424 = vpop.f32.mrf.mxu0
      %v7425 = vpop.f32.mrf.mxu0
      %v7426 = vadd.f32 %v7265, %v7425
      %v7427 = vpop.f32.mrf.mxu0
      %7428 = vmatprep.mubr.bf16.mxu0 %v5308
      %7429 = vmatmul.mubr.bf16.gmra.mxu0 %v5307
      %v7430 = vpop.f32.mrf.mxu0
      %v7431 = vadd.f32 %v7270, %v7430
      %v7432 = vpop.f32.mrf.mxu0
      %v7433 = vpop.f32.mrf.mxu0
      %v7434 = vadd.f32 %v7273, %v7433
      %v7435 = vpop.f32.mrf.mxu0
      %7436 = vmatprep.mubr.bf16.mxu0 %v5310
      %7437 = vmatmul.mubr.bf16.gmra.mxu0 %v5309
      %v7438 = vpop.f32.mrf.mxu0
      %v7439 = vadd.f32 %v7278, %v7438
      %v7440 = vpop.f32.mrf.mxu0
      %v7441 = vpop.f32.mrf.mxu0
      %v7442 = vadd.f32 %v7281, %v7441
      %v7443 = vpop.f32.mrf.mxu0
      %7444 = vmatprep.mubr.bf16.mxu0 %v5312
      %7445 = vmatmul.mubr.bf16.gmra.mxu0 %v5311
      %v7446 = vpop.f32.mrf.mxu0
      %v7447 = vadd.f32 %v7286, %v7446
      %v7448 = vpop.f32.mrf.mxu0
      %v7449 = vpop.f32.mrf.mxu0
      %v7450 = vadd.f32 %v7289, %v7449
      %v7451 = vpop.f32.mrf.mxu0
      %7452 = vmatprep.mubr.bf16.mxu0 %v5314
      %7453 = vmatmul.mubr.bf16.gmra.mxu0 %v5313
      %v7454 = vpop.f32.mrf.mxu0
      %v7455 = vadd.f32 %v7294, %v7454
      %v7456 = vpop.f32.mrf.mxu0
      %v7457 = vpop.f32.mrf.mxu0
      %v7458 = vadd.f32 %v7297, %v7457
      %v7459 = vpop.f32.mrf.mxu0
      %7460 = vmatprep.mubr.bf16.mxu0 %v5316
      %7461 = vmatmul.mubr.bf16.gmra.mxu0 %v5315
      %v7462 = vpop.f32.mrf.mxu0
      %v7463 = vadd.f32 %v7302, %v7462
      %v7464 = vpop.f32.mrf.mxu0
      %v7465 = vpop.f32.mrf.mxu0
      %v7466 = vadd.f32 %v7305, %v7465
      %v7467 = vpop.f32.mrf.mxu0
      %7468 = vmatprep.mubr.bf16.mxu0 %v5318
      %7469 = vmatmul.mubr.bf16.gmra.mxu0 %v5317
      %v7470 = vpop.f32.mrf.mxu0
      %v7471 = vadd.f32 %v7310, %v7470
      %v7472 = vpop.f32.mrf.mxu0
      %v7473 = vpop.f32.mrf.mxu0
      %v7474 = vadd.f32 %v7313, %v7473
      %v7475 = vpop.f32.mrf.mxu0
      %7476 = vmatprep.mubr.bf16.mxu0 %v5320
      %7477 = vmatmul.mubr.bf16.gmra.mxu0 %v5319
      %v7478 = vpop.f32.mrf.mxu0
      %v7479 = vadd.f32 %v7318, %v7478
      %v7480 = vpop.f32.mrf.mxu0
      %v7481 = vpop.f32.mrf.mxu0
      %v7482 = vadd.f32 %v7321, %v7481
      %v7483 = vpop.f32.mrf.mxu0
      %7484 = vmatprep.mubr.bf16.mxu0 %v5322
      %7485 = vmatmul.mubr.bf16.gmra.mxu0 %v5321
      %v7486 = vpop.f32.mrf.mxu0
      %v7487 = vadd.f32 %v7326, %v7486
      %v7488 = vpop.f32.mrf.mxu0
      %v7489 = vpop.f32.mrf.mxu0
      %v7490 = vadd.f32 %v7329, %v7489
      %v7491 = vpop.f32.mrf.mxu0
      %7492 = vmatprep.mubr.bf16.mxu0 %v5324
      %7493 = vmatmul.mubr.bf16.gmra.mxu0 %v5323
      %v7494 = vpop.f32.mrf.mxu0
      %v7495 = vadd.f32 %v7334, %v7494
      %v7496 = vpop.f32.mrf.mxu0
      %v7497 = vpop.f32.mrf.mxu0
      %v7498 = vadd.f32 %v7337, %v7497
      %v7499 = vpop.f32.mrf.mxu0
      %7500 = vmatprep.mubr.bf16.mxu0 %v5326
      %7501 = vmatmul.mubr.bf16.gmra.mxu0 %v5325
      %v7502 = vpop.f32.mrf.mxu0
      %v7503 = vadd.f32 %v7342, %v7502
      %v7504 = vpop.f32.mrf.mxu0
      %v7505 = vpop.f32.mrf.mxu0
      %v7506 = vadd.f32 %v7345, %v7505
      %v7507 = vpop.f32.mrf.mxu0
      %7508 = vdwg.mxu0
      %7509 = vmatprep.subr.bf16.mxu0 0
      %7510 = vmatpush1.bf16.msra.mxu0 %v6503
      %7511 = vmatprep.subr.bf16.mxu0 0
      %7512 = vmatpush1.bf16.msra.mxu0 %v6502
      %7513 = vmatprep.subr.bf16.mxu0 0
      %7514 = vmatpush1.bf16.msra.mxu0 %v6501
      %7515 = vmatprep.subr.bf16.mxu0 0
      %7516 = vmatpush1.bf16.msra.mxu0 %v6500
      %7517 = vmatprep.subr.bf16.mxu0 0
      %7518 = vmatpush1.bf16.msra.mxu0 %v6499
      %7519 = vmatprep.subr.bf16.mxu0 0
      %7520 = vmatpush1.bf16.msra.mxu0 %v6498
      %7521 = vmatprep.subr.bf16.mxu0 0
      %7522 = vmatpush1.bf16.msra.mxu0 %v6497
      %7523 = vmatprep.subr.bf16.mxu0 0
      %7524 = vmatpush1.bf16.msra.mxu0 %v6496
      %7525 = vmatprep.subr.bf16.mxu0 0
      %7526 = vmatpush2.bf16.msra.mxu0 %v6511
      %7527 = vmatprep.subr.bf16.mxu0 0
      %7528 = vmatpush2.bf16.msra.mxu0 %v6510
      %7529 = vmatprep.subr.bf16.mxu0 0
      %7530 = vmatpush2.bf16.msra.mxu0 %v6509
      %7531 = vmatprep.subr.bf16.mxu0 0
      %7532 = vmatpush2.bf16.msra.mxu0 %v6508
      %7533 = vmatprep.subr.bf16.mxu0 0
      %7534 = vmatpush2.bf16.msra.mxu0 %v6507
      %7535 = vmatprep.subr.bf16.mxu0 0
      %7536 = vmatpush2.bf16.msra.mxu0 %v6506
      %7537 = vmatprep.subr.bf16.mxu0 0
      %7538 = vmatpush2.bf16.msra.mxu0 %v6505
      %7539 = vmatprep.subr.bf16.mxu0 0
      %7540 = vmatpush2.bf16.msra.mxu0 %v6504
      %7541 = vmatprep.mubr.bf16.mxu0 %v5298
      %7542 = vmatmul.mubr.bf16.gmra.mxu0 %v5297
      %v7543 = vpop.f32.mrf.mxu0
      %v7544 = vadd.f32 %v7383, %v7543
      %v7545 = vpop.f32.mrf.mxu0
      %v7546 = vpop.f32.mrf.mxu0
      %v7547 = vadd.f32 %v7386, %v7546
      %v7548 = vpop.f32.mrf.mxu0
      %7549 = vmatprep.mubr.bf16.mxu0 %v5300
      %7550 = vmatmul.mubr.bf16.gmra.mxu0 %v5299
      %v7551 = vpop.f32.mrf.mxu0
      %v7552 = vadd.f32 %v7391, %v7551
      %v7553 = vpop.f32.mrf.mxu0
      %v7554 = vpop.f32.mrf.mxu0
      %v7555 = vadd.f32 %v7394, %v7554
      %v7556 = vpop.f32.mrf.mxu0
      %7557 = vmatprep.mubr.bf16.mxu0 %v5302
      %7558 = vmatmul.mubr.bf16.gmra.mxu0 %v5301
      %v7559 = vpop.f32.mrf.mxu0
      %v7560 = vadd.f32 %v7399, %v7559
      %v7561 = vpop.f32.mrf.mxu0
      %v7562 = vpop.f32.mrf.mxu0
      %v7563 = vadd.f32 %v7402, %v7562
      %v7564 = vpop.f32.mrf.mxu0
      %7565 = vmatprep.mubr.bf16.mxu0 %v5304
      %7566 = vmatmul.mubr.bf16.gmra.mxu0 %v5303
      %v7567 = vpop.f32.mrf.mxu0
      %v7568 = vadd.f32 %v7407, %v7567
      %v7569 = vpop.f32.mrf.mxu0
      %v7570 = vpop.f32.mrf.mxu0
      %v7571 = vadd.f32 %v7410, %v7570
      %v7572 = vpop.f32.mrf.mxu0
      %7573 = vmatprep.mubr.bf16.mxu0 %v5306
      %7574 = vmatmul.mubr.bf16.gmra.mxu0 %v5305
      %v7575 = vpop.f32.mrf.mxu0
      %v7576 = vadd.f32 %v7415, %v7575
      %v7577 = vpop.f32.mrf.mxu0
      %v7578 = vpop.f32.mrf.mxu0
      %v7579 = vadd.f32 %v7418, %v7578
      %v7580 = vpop.f32.mrf.mxu0
      %7581 = vmatprep.mubr.bf16.mxu0 %v5308
      %7582 = vmatmul.mubr.bf16.gmra.mxu0 %v5307
      %v7583 = vpop.f32.mrf.mxu0
      %v7584 = vadd.f32 %v7423, %v7583
      %v7585 = vpop.f32.mrf.mxu0
      %v7586 = vpop.f32.mrf.mxu0
      %v7587 = vadd.f32 %v7426, %v7586
      %v7588 = vpop.f32.mrf.mxu0
      %7589 = vmatprep.mubr.bf16.mxu0 %v5310
      %7590 = vmatmul.mubr.bf16.gmra.mxu0 %v5309
      %v7591 = vpop.f32.mrf.mxu0
      %v7592 = vadd.f32 %v7431, %v7591
      %v7593 = vpop.f32.mrf.mxu0
      %v7594 = vpop.f32.mrf.mxu0
      %v7595 = vadd.f32 %v7434, %v7594
      %v7596 = vpop.f32.mrf.mxu0
      %7597 = vmatprep.mubr.bf16.mxu0 %v5312
      %7598 = vmatmul.mubr.bf16.gmra.mxu0 %v5311
      %v7599 = vpop.f32.mrf.mxu0
      %v7600 = vadd.f32 %v7439, %v7599
      %v7601 = vpop.f32.mrf.mxu0
      %v7602 = vpop.f32.mrf.mxu0
      %v7603 = vadd.f32 %v7442, %v7602
      %v7604 = vpop.f32.mrf.mxu0
      %7605 = vmatprep.mubr.bf16.mxu0 %v5314
      %7606 = vmatmul.mubr.bf16.gmra.mxu0 %v5313
      %v7607 = vpop.f32.mrf.mxu0
      %v7608 = vadd.f32 %v7447, %v7607
      %v7609 = vpop.f32.mrf.mxu0
      %v7610 = vpop.f32.mrf.mxu0
      %v7611 = vadd.f32 %v7450, %v7610
      %v7612 = vpop.f32.mrf.mxu0
      %7613 = vmatprep.mubr.bf16.mxu0 %v5316
      %7614 = vmatmul.mubr.bf16.gmra.mxu0 %v5315
      %v7615 = vpop.f32.mrf.mxu0
      %v7616 = vadd.f32 %v7455, %v7615
      %v7617 = vpop.f32.mrf.mxu0
      %v7618 = vpop.f32.mrf.mxu0
      %v7619 = vadd.f32 %v7458, %v7618
      %v7620 = vpop.f32.mrf.mxu0
      %7621 = vmatprep.mubr.bf16.mxu0 %v5318
      %7622 = vmatmul.mubr.bf16.gmra.mxu0 %v5317
      %v7623 = vpop.f32.mrf.mxu0
      %v7624 = vadd.f32 %v7463, %v7623
      %v7625 = vpop.f32.mrf.mxu0
      %v7626 = vpop.f32.mrf.mxu0
      %v7627 = vadd.f32 %v7466, %v7626
      %v7628 = vpop.f32.mrf.mxu0
      %7629 = vmatprep.mubr.bf16.mxu0 %v5320
      %7630 = vmatmul.mubr.bf16.gmra.mxu0 %v5319
      %v7631 = vpop.f32.mrf.mxu0
      %v7632 = vadd.f32 %v7471, %v7631
      %v7633 = vpop.f32.mrf.mxu0
      %v7634 = vpop.f32.mrf.mxu0
      %v7635 = vadd.f32 %v7474, %v7634
      %v7636 = vpop.f32.mrf.mxu0
      %7637 = vmatprep.mubr.bf16.mxu0 %v5322
      %7638 = vmatmul.mubr.bf16.gmra.mxu0 %v5321
      %v7639 = vpop.f32.mrf.mxu0
      %v7640 = vadd.f32 %v7479, %v7639
      %v7641 = vpop.f32.mrf.mxu0
      %v7642 = vpop.f32.mrf.mxu0
      %v7643 = vadd.f32 %v7482, %v7642
      %v7644 = vpop.f32.mrf.mxu0
      %7645 = vmatprep.mubr.bf16.mxu0 %v5324
      %7646 = vmatmul.mubr.bf16.gmra.mxu0 %v5323
      %v7647 = vpop.f32.mrf.mxu0
      %v7648 = vadd.f32 %v7487, %v7647
      %v7649 = vpop.f32.mrf.mxu0
      %v7650 = vpop.f32.mrf.mxu0
      %v7651 = vadd.f32 %v7490, %v7650
      %v7652 = vpop.f32.mrf.mxu0
      %7653 = vmatprep.mubr.bf16.mxu0 %v5326
      %7654 = vmatmul.mubr.bf16.gmra.mxu0 %v5325
      %v7655 = vpop.f32.mrf.mxu0
      %v7656 = vadd.f32 %v7495, %v7655
      %v7657 = vpop.f32.mrf.mxu0
      %v7658 = vpop.f32.mrf.mxu0
      %v7659 = vadd.f32 %v7498, %v7658
      %v7660 = vpop.f32.mrf.mxu0
      %7661 = vmatprep.mubr.bf16.mxu0 0
      %7662 = vmatmul.mubr.bf16.gmra.mxu0 0
      %v7663 = vpop.f32.mrf.mxu0
      %v7664 = vadd.f32 %v7503, %v7663
      %v7665 = vpop.f32.mrf.mxu0
      %v7666 = vpop.f32.mrf.mxu0
      %v7667 = vadd.f32 %v7506, %v7666
      %v7668 = vpop.f32.mrf.mxu0
      %7669 = vdwg.mxu0
      %7670 = vmatprep.subr.bf16.mxu0 0
      %7671 = vmatpush1.bf16.msra.mxu0 %v6519
      %7672 = vmatprep.subr.bf16.mxu0 0
      %7673 = vmatpush1.bf16.msra.mxu0 %v6518
      %7674 = vmatprep.subr.bf16.mxu0 0
      %7675 = vmatpush1.bf16.msra.mxu0 %v6517
      %7676 = vmatprep.subr.bf16.mxu0 0
      %7677 = vmatpush1.bf16.msra.mxu0 %v6516
      %7678 = vmatprep.subr.bf16.mxu0 0
      %7679 = vmatpush1.bf16.msra.mxu0 %v6515
      %7680 = vmatprep.subr.bf16.mxu0 0
      %7681 = vmatpush1.bf16.msra.mxu0 %v6514
      %7682 = vmatprep.subr.bf16.mxu0 0
      %7683 = vmatpush1.bf16.msra.mxu0 %v6513
      %7684 = vmatprep.subr.bf16.mxu0 0
      %7685 = vmatpush1.bf16.msra.mxu0 %v6512
      %7686 = vmatprep.subr.bf16.mxu0 0
      %7687 = vmatpush2.bf16.msra.mxu0 %v6527
      %7688 = vmatprep.subr.bf16.mxu0 0
      %7689 = vmatpush2.bf16.msra.mxu0 %v6526
      %7690 = vmatprep.subr.bf16.mxu0 0
      %7691 = vmatpush2.bf16.msra.mxu0 %v6525
      %7692 = vmatprep.subr.bf16.mxu0 0
      %7693 = vmatpush2.bf16.msra.mxu0 %v6524
      %7694 = vmatprep.subr.bf16.mxu0 0
      %7695 = vmatpush2.bf16.msra.mxu0 %v6523
      %7696 = vmatprep.subr.bf16.mxu0 0
      %7697 = vmatpush2.bf16.msra.mxu0 %v6522
      %7698 = vmatprep.subr.bf16.mxu0 0
      %7699 = vmatpush2.bf16.msra.mxu0 %v6521
      %7700 = vmatprep.subr.bf16.mxu0 0
      %7701 = vmatpush2.bf16.msra.mxu0 %v6520
      %7702 = vmatprep.mubr.bf16.mxu0 0
      %7703 = vmatmul.mubr.bf16.gmra.mxu0 0
      %v7704 = vpop.f32.mrf.mxu0
      %v7705 = vadd.f32 %v7544, %v7704
      %v7706 = vpop.f32.mrf.mxu0
      %v7707 = vpop.f32.mrf.mxu0
      %v7708 = vadd.f32 %v7547, %v7707
      %v7709 = vpop.f32.mrf.mxu0
      %7710 = vmatprep.mubr.bf16.mxu0 %v5521
      %7711 = vmatmul.mubr.bf16.gmra.mxu0 %v5520
      %v7712 = vpop.f32.mrf.mxu0
      %v7713 = vadd.f32 %v7552, %v7712
      %v7714 = vpop.f32.mrf.mxu0
      %v7715 = vpop.f32.mrf.mxu0
      %v7716 = vadd.f32 %v7555, %v7715
      %v7717 = vpop.f32.mrf.mxu0
      %7718 = vmatprep.mubr.bf16.mxu0 %v5523
      %7719 = vmatmul.mubr.bf16.gmra.mxu0 %v5522
      %v7720 = vpop.f32.mrf.mxu0
      %v7721 = vadd.f32 %v7560, %v7720
      %v7722 = vpop.f32.mrf.mxu0
      %v7723 = vpop.f32.mrf.mxu0
      %v7724 = vadd.f32 %v7563, %v7723
      %v7725 = vpop.f32.mrf.mxu0
      %7726 = vmatprep.mubr.bf16.mxu0 %v5525
      %7727 = vmatmul.mubr.bf16.gmra.mxu0 %v5524
      %v7728 = vpop.f32.mrf.mxu0
      %v7729 = vadd.f32 %v7568, %v7728
      %v7730 = vpop.f32.mrf.mxu0
      %v7731 = vpop.f32.mrf.mxu0
      %v7732 = vadd.f32 %v7571, %v7731
      %v7733 = vpop.f32.mrf.mxu0
      %7734 = vmatprep.mubr.bf16.mxu0 %v5527
      %7735 = vmatmul.mubr.bf16.gmra.mxu0 %v5526
      %v7736 = vpop.f32.mrf.mxu0
      %v7737 = vadd.f32 %v7576, %v7736
      %v7738 = vpop.f32.mrf.mxu0
      %v7739 = vpop.f32.mrf.mxu0
      %v7740 = vadd.f32 %v7579, %v7739
      %v7741 = vpop.f32.mrf.mxu0
      %7742 = vmatprep.mubr.bf16.mxu0 %v5529
      %7743 = vmatmul.mubr.bf16.gmra.mxu0 %v5528
      %v7744 = vpop.f32.mrf.mxu0
      %v7745 = vadd.f32 %v7584, %v7744
      %v7746 = vpop.f32.mrf.mxu0
      %v7747 = vpop.f32.mrf.mxu0
      %v7748 = vadd.f32 %v7587, %v7747
      %v7749 = vpop.f32.mrf.mxu0
      %7750 = vmatprep.mubr.bf16.mxu0 %v5531
      %7751 = vmatmul.mubr.bf16.gmra.mxu0 %v5530
      %v7752 = vpop.f32.mrf.mxu0
      %v7753 = vadd.f32 %v7592, %v7752
      %v7754 = vpop.f32.mrf.mxu0
      %v7755 = vpop.f32.mrf.mxu0
      %v7756 = vadd.f32 %v7595, %v7755
      %v7757 = vpop.f32.mrf.mxu0
      %7758 = vmatprep.mubr.bf16.mxu0 %v5533
      %7759 = vmatmul.mubr.bf16.gmra.mxu0 %v5532
      %v7760 = vpop.f32.mrf.mxu0
      %v7761 = vadd.f32 %v7600, %v7760
      %v7762 = vpop.f32.mrf.mxu0
      %v7763 = vpop.f32.mrf.mxu0
      %v7764 = vadd.f32 %v7603, %v7763
      %v7765 = vpop.f32.mrf.mxu0
      %7766 = vmatprep.mubr.bf16.mxu0 %v5535
      %7767 = vmatmul.mubr.bf16.gmra.mxu0 %v5534
      %v7768 = vpop.f32.mrf.mxu0
      %v7769 = vadd.f32 %v7608, %v7768
      %v7770 = vpop.f32.mrf.mxu0
      %v7771 = vpop.f32.mrf.mxu0
      %v7772 = vadd.f32 %v7611, %v7771
      %v7773 = vpop.f32.mrf.mxu0
      %7774 = vmatprep.mubr.bf16.mxu0 %v5537
      %7775 = vmatmul.mubr.bf16.gmra.mxu0 %v5536
      %v7776 = vpop.f32.mrf.mxu0
      %v7777 = vadd.f32 %v7616, %v7776
      %v7778 = vpop.f32.mrf.mxu0
      %v7779 = vpop.f32.mrf.mxu0
      %v7780 = vadd.f32 %v7619, %v7779
      %v7781 = vpop.f32.mrf.mxu0
      %7782 = vmatprep.mubr.bf16.mxu0 %v5539
      %7783 = vmatmul.mubr.bf16.gmra.mxu0 %v5538
      %v7784 = vpop.f32.mrf.mxu0
      %v7785 = vadd.f32 %v7624, %v7784
      %v7786 = vpop.f32.mrf.mxu0
      %v7787 = vpop.f32.mrf.mxu0
      %v7788 = vadd.f32 %v7627, %v7787
      %v7789 = vpop.f32.mrf.mxu0
      %7790 = vmatprep.mubr.bf16.mxu0 %v5541
      %7791 = vmatmul.mubr.bf16.gmra.mxu0 %v5540
      %v7792 = vpop.f32.mrf.mxu0
      %v7793 = vadd.f32 %v7632, %v7792
      %v7794 = vpop.f32.mrf.mxu0
      %v7795 = vpop.f32.mrf.mxu0
      %v7796 = vadd.f32 %v7635, %v7795
      %v7797 = vpop.f32.mrf.mxu0
      %7798 = vmatprep.mubr.bf16.mxu0 %v5543
      %7799 = vmatmul.mubr.bf16.gmra.mxu0 %v5542
      %v7800 = vpop.f32.mrf.mxu0
      %v7801 = vadd.f32 %v7640, %v7800
      %v7802 = vpop.f32.mrf.mxu0
      %v7803 = vpop.f32.mrf.mxu0
      %v7804 = vadd.f32 %v7643, %v7803
      %v7805 = vpop.f32.mrf.mxu0
      %7806 = vmatprep.mubr.bf16.mxu0 %v5545
      %7807 = vmatmul.mubr.bf16.gmra.mxu0 %v5544
      %v7808 = vpop.f32.mrf.mxu0
      %v7809 = vadd.f32 %v7648, %v7808
      %v7810 = vpop.f32.mrf.mxu0
      %v7811 = vpop.f32.mrf.mxu0
      %v7812 = vadd.f32 %v7651, %v7811
      %v7813 = vpop.f32.mrf.mxu0
      %7814 = vmatprep.mubr.bf16.mxu0 %v5547
      %7815 = vmatmul.mubr.bf16.gmra.mxu0 %v5546
      %v7816 = vpop.f32.mrf.mxu0
      %v7817 = vadd.f32 %v7656, %v7816
      %v7818 = vpop.f32.mrf.mxu0
      %v7819 = vpop.f32.mrf.mxu0
      %v7820 = vadd.f32 %v7659, %v7819
      %v7821 = vpop.f32.mrf.mxu0
      %7822 = vmatprep.mubr.bf16.mxu0 %v5549
      %7823 = vmatmul.mubr.bf16.gmra.mxu0 %v5548
      %v7824 = vpop.f32.mrf.mxu0
      %v7825 = vadd.f32 %v7664, %v7824
      %v7826 = vpop.f32.mrf.mxu0
      %v7827 = vpop.f32.mrf.mxu0
      %v7828 = vadd.f32 %v7667, %v7827
      %v7829 = vpop.f32.mrf.mxu0
      %7830 = vdwg.mxu0
      %7831 = vmatprep.subr.bf16.mxu0 0
      %7832 = vmatpush1.bf16.msra.mxu0 %v6535
      %7833 = vmatprep.subr.bf16.mxu0 0
      %7834 = vmatpush1.bf16.msra.mxu0 %v6534
      %7835 = vmatprep.subr.bf16.mxu0 0
      %7836 = vmatpush1.bf16.msra.mxu0 %v6533
      %7837 = vmatprep.subr.bf16.mxu0 0
      %7838 = vmatpush1.bf16.msra.mxu0 %v6532
      %7839 = vmatprep.subr.bf16.mxu0 0
      %7840 = vmatpush1.bf16.msra.mxu0 %v6531
      %7841 = vmatprep.subr.bf16.mxu0 0
      %7842 = vmatpush1.bf16.msra.mxu0 %v6530
      %7843 = vmatprep.subr.bf16.mxu0 0
      %7844 = vmatpush1.bf16.msra.mxu0 %v6529
      %7845 = vmatprep.subr.bf16.mxu0 0
      %7846 = vmatpush1.bf16.msra.mxu0 %v6528
      %7847 = vmatprep.subr.bf16.mxu0 0
      %7848 = vmatpush2.bf16.msra.mxu0 %v6543
      %7849 = vmatprep.subr.bf16.mxu0 0
      %7850 = vmatpush2.bf16.msra.mxu0 %v6542
      %7851 = vmatprep.subr.bf16.mxu0 0
      %7852 = vmatpush2.bf16.msra.mxu0 %v6541
      %7853 = vmatprep.subr.bf16.mxu0 0
      %7854 = vmatpush2.bf16.msra.mxu0 %v6540
      %7855 = vmatprep.subr.bf16.mxu0 0
      %7856 = vmatpush2.bf16.msra.mxu0 %v6539
      %7857 = vmatprep.subr.bf16.mxu0 0
      %7858 = vmatpush2.bf16.msra.mxu0 %v6538
      %7859 = vmatprep.subr.bf16.mxu0 0
      %7860 = vmatpush2.bf16.msra.mxu0 %v6537
      %7861 = vmatprep.subr.bf16.mxu0 0
      %7862 = vmatpush2.bf16.msra.mxu0 %v6536
      %7863 = vmatprep.mubr.bf16.mxu0 %v5521
      %7864 = vmatmul.mubr.bf16.gmra.mxu0 %v5520
      %v7865 = vpop.f32.mrf.mxu0
      %v7866 = vadd.f32 %v7705, %v7865
      %v7867 = vpop.f32.mrf.mxu0
      %v7868 = vpop.f32.mrf.mxu0
      %v7869 = vadd.f32 %v7708, %v7868
      %v7870 = vpop.f32.mrf.mxu0
      %7871 = vmatprep.mubr.bf16.mxu0 %v5523
      %7872 = vmatmul.mubr.bf16.gmra.mxu0 %v5522
      %v7873 = vpop.f32.mrf.mxu0
      %v7874 = vadd.f32 %v7713, %v7873
      %v7875 = vpop.f32.mrf.mxu0
      %v7876 = vpop.f32.mrf.mxu0
      %v7877 = vadd.f32 %v7716, %v7876
      %v7878 = vpop.f32.mrf.mxu0
      %7879 = vmatprep.mubr.bf16.mxu0 %v5525
      %7880 = vmatmul.mubr.bf16.gmra.mxu0 %v5524
      %v7881 = vpop.f32.mrf.mxu0
      %v7882 = vadd.f32 %v7721, %v7881
      %v7883 = vpop.f32.mrf.mxu0
      %v7884 = vpop.f32.mrf.mxu0
      %v7885 = vadd.f32 %v7724, %v7884
      %v7886 = vpop.f32.mrf.mxu0
      %7887 = vmatprep.mubr.bf16.mxu0 %v5527
      %7888 = vmatmul.mubr.bf16.gmra.mxu0 %v5526
      %v7889 = vpop.f32.mrf.mxu0
      %v7890 = vadd.f32 %v7729, %v7889
      %v7891 = vpop.f32.mrf.mxu0
      %v7892 = vpop.f32.mrf.mxu0
      %v7893 = vadd.f32 %v7732, %v7892
      %v7894 = vpop.f32.mrf.mxu0
      %7895 = vmatprep.mubr.bf16.mxu0 %v5529
      %7896 = vmatmul.mubr.bf16.gmra.mxu0 %v5528
      %v7897 = vpop.f32.mrf.mxu0
      %v7898 = vadd.f32 %v7737, %v7897
      %v7899 = vpop.f32.mrf.mxu0
      %v7900 = vpop.f32.mrf.mxu0
      %v7901 = vadd.f32 %v7740, %v7900
      %v7902 = vpop.f32.mrf.mxu0
      %7903 = vmatprep.mubr.bf16.mxu0 %v5531
      %7904 = vmatmul.mubr.bf16.gmra.mxu0 %v5530
      %v7905 = vpop.f32.mrf.mxu0
      %v7906 = vadd.f32 %v7745, %v7905
      %v7907 = vpop.f32.mrf.mxu0
      %v7908 = vpop.f32.mrf.mxu0
      %v7909 = vadd.f32 %v7748, %v7908
      %v7910 = vpop.f32.mrf.mxu0
      %7911 = vmatprep.mubr.bf16.mxu0 %v5533
      %7912 = vmatmul.mubr.bf16.gmra.mxu0 %v5532
      %v7913 = vpop.f32.mrf.mxu0
      %v7914 = vadd.f32 %v7753, %v7913
      %v7915 = vpop.f32.mrf.mxu0
      %v7916 = vpop.f32.mrf.mxu0
      %v7917 = vadd.f32 %v7756, %v7916
      %v7918 = vpop.f32.mrf.mxu0
      %7919 = vmatprep.mubr.bf16.mxu0 %v5535
      %7920 = vmatmul.mubr.bf16.gmra.mxu0 %v5534
      %v7921 = vpop.f32.mrf.mxu0
      %v7922 = vadd.f32 %v7761, %v7921
      %v7923 = vpop.f32.mrf.mxu0
      %v7924 = vpop.f32.mrf.mxu0
      %v7925 = vadd.f32 %v7764, %v7924
      %v7926 = vpop.f32.mrf.mxu0
      %7927 = vmatprep.mubr.bf16.mxu0 %v5537
      %7928 = vmatmul.mubr.bf16.gmra.mxu0 %v5536
      %v7929 = vpop.f32.mrf.mxu0
      %v7930 = vadd.f32 %v7769, %v7929
      %v7931 = vpop.f32.mrf.mxu0
      %v7932 = vpop.f32.mrf.mxu0
      %v7933 = vadd.f32 %v7772, %v7932
      %v7934 = vpop.f32.mrf.mxu0
      %7935 = vmatprep.mubr.bf16.mxu0 %v5539
      %7936 = vmatmul.mubr.bf16.gmra.mxu0 %v5538
      %v7937 = vpop.f32.mrf.mxu0
      %v7938 = vadd.f32 %v7777, %v7937
      %v7939 = vpop.f32.mrf.mxu0
      %v7940 = vpop.f32.mrf.mxu0
      %v7941 = vadd.f32 %v7780, %v7940
      %v7942 = vpop.f32.mrf.mxu0
      %7943 = vmatprep.mubr.bf16.mxu0 %v5541
      %7944 = vmatmul.mubr.bf16.gmra.mxu0 %v5540
      %v7945 = vpop.f32.mrf.mxu0
      %v7946 = vadd.f32 %v7785, %v7945
      %v7947 = vpop.f32.mrf.mxu0
      %v7948 = vpop.f32.mrf.mxu0
      %v7949 = vadd.f32 %v7788, %v7948
      %v7950 = vpop.f32.mrf.mxu0
      %7951 = vmatprep.mubr.bf16.mxu0 %v5543
      %7952 = vmatmul.mubr.bf16.gmra.mxu0 %v5542
      %v7953 = vpop.f32.mrf.mxu0
      %v7954 = vadd.f32 %v7793, %v7953
      %v7955 = vpop.f32.mrf.mxu0
      %v7956 = vpop.f32.mrf.mxu0
      %v7957 = vadd.f32 %v7796, %v7956
      %v7958 = vpop.f32.mrf.mxu0
      %7959 = vmatprep.mubr.bf16.mxu0 %v5545
      %7960 = vmatmul.mubr.bf16.gmra.mxu0 %v5544
      %v7961 = vpop.f32.mrf.mxu0
      %v7962 = vadd.f32 %v7801, %v7961
      %v7963 = vpop.f32.mrf.mxu0
      %v7964 = vpop.f32.mrf.mxu0
      %v7965 = vadd.f32 %v7804, %v7964
      %v7966 = vpop.f32.mrf.mxu0
      %7967 = vmatprep.mubr.bf16.mxu0 %v5547
      %7968 = vmatmul.mubr.bf16.gmra.mxu0 %v5546
      %v7969 = vpop.f32.mrf.mxu0
      %v7970 = vadd.f32 %v7809, %v7969
      %v7971 = vpop.f32.mrf.mxu0
      %v7972 = vpop.f32.mrf.mxu0
      %v7973 = vadd.f32 %v7812, %v7972
      %v7974 = vpop.f32.mrf.mxu0
      %7975 = vmatprep.mubr.bf16.mxu0 %v5549
      %7976 = vmatmul.mubr.bf16.gmra.mxu0 %v5548
      %v7977 = vpop.f32.mrf.mxu0
      %v7978 = vadd.f32 %v7817, %v7977
      %v7979 = vpop.f32.mrf.mxu0
      %v7980 = vpop.f32.mrf.mxu0
      %v7981 = vadd.f32 %v7820, %v7980
      %v7982 = vpop.f32.mrf.mxu0
      %7983 = vmatprep.mubr.bf16.mxu0 %v5551
      %7984 = vmatmul.mubr.bf16.gmra.mxu0 %v5550
      %v7985 = vpop.f32.mrf.mxu0
      %v7986 = vadd.f32 %v7825, %v7985
      %v7987 = vpop.f32.mrf.mxu0
      %v7988 = vpop.f32.mrf.mxu0
      %v7989 = vadd.f32 %v7828, %v7988
      %v7990 = vpop.f32.mrf.mxu0
      %7991 = vdwg.mxu0
      %7992 = vmatprep.subr.bf16.mxu0 0
      %7993 = vmatpush1.bf16.msra.mxu0 %v6551
      %7994 = vmatprep.subr.bf16.mxu0 0
      %7995 = vmatpush1.bf16.msra.mxu0 %v6550
      %7996 = vmatprep.subr.bf16.mxu0 0
      %7997 = vmatpush1.bf16.msra.mxu0 %v6549
      %7998 = vmatprep.subr.bf16.mxu0 0
      %7999 = vmatpush1.bf16.msra.mxu0 %v6548
      %8000 = vmatprep.subr.bf16.mxu0 0
      %8001 = vmatpush1.bf16.msra.mxu0 %v6547
      %8002 = vmatprep.subr.bf16.mxu0 0
      %8003 = vmatpush1.bf16.msra.mxu0 %v6546
      %8004 = vmatprep.subr.bf16.mxu0 0
      %8005 = vmatpush1.bf16.msra.mxu0 %v6545
      %8006 = vmatprep.subr.bf16.mxu0 0
      %8007 = vmatpush1.bf16.msra.mxu0 %v6544
      %8008 = vmatprep.subr.bf16.mxu0 0
      %8009 = vmatpush2.bf16.msra.mxu0 %v6559
      %8010 = vmatprep.subr.bf16.mxu0 0
      %8011 = vmatpush2.bf16.msra.mxu0 %v6558
      %8012 = vmatprep.subr.bf16.mxu0 0
      %8013 = vmatpush2.bf16.msra.mxu0 %v6557
      %8014 = vmatprep.subr.bf16.mxu0 0
      %8015 = vmatpush2.bf16.msra.mxu0 %v6556
      %8016 = vmatprep.subr.bf16.mxu0 0
      %8017 = vmatpush2.bf16.msra.mxu0 %v6555
      %8018 = vmatprep.subr.bf16.mxu0 0
      %8019 = vmatpush2.bf16.msra.mxu0 %v6554
      %8020 = vmatprep.subr.bf16.mxu0 0
      %8021 = vmatpush2.bf16.msra.mxu0 %v6553
      %8022 = vmatprep.subr.bf16.mxu0 0
      %8023 = vmatpush2.bf16.msra.mxu0 %v6552
      %8024 = vmatprep.mubr.bf16.mxu0 %v5523
      %8025 = vmatmul.mubr.bf16.gmra.mxu0 %v5522
      %v8026 = vpop.f32.mrf.mxu0
      %v8027 = vadd.f32 %v7866, %v8026
      %v8028 = vpop.f32.mrf.mxu0
      %v8029 = vpop.f32.mrf.mxu0
      %v8030 = vadd.f32 %v7869, %v8029
      %v8031 = vpop.f32.mrf.mxu0
      %8032 = vmatprep.mubr.bf16.mxu0 %v5525
      %8033 = vmatmul.mubr.bf16.gmra.mxu0 %v5524
      %v8034 = vpop.f32.mrf.mxu0
      %v8035 = vadd.f32 %v7874, %v8034
      %v8036 = vpop.f32.mrf.mxu0
      %v8037 = vpop.f32.mrf.mxu0
      %v8038 = vadd.f32 %v7877, %v8037
      %v8039 = vpop.f32.mrf.mxu0
      %8040 = vmatprep.mubr.bf16.mxu0 %v5527
      %8041 = vmatmul.mubr.bf16.gmra.mxu0 %v5526
      %v8042 = vpop.f32.mrf.mxu0
      %v8043 = vadd.f32 %v7882, %v8042
      %v8044 = vpop.f32.mrf.mxu0
      %v8045 = vpop.f32.mrf.mxu0
      %v8046 = vadd.f32 %v7885, %v8045
      %v8047 = vpop.f32.mrf.mxu0
      %8048 = vmatprep.mubr.bf16.mxu0 %v5529
      %8049 = vmatmul.mubr.bf16.gmra.mxu0 %v5528
      %v8050 = vpop.f32.mrf.mxu0
      %v8051 = vadd.f32 %v7890, %v8050
      %v8052 = vpop.f32.mrf.mxu0
      %v8053 = vpop.f32.mrf.mxu0
      %v8054 = vadd.f32 %v7893, %v8053
      %v8055 = vpop.f32.mrf.mxu0
      %8056 = vmatprep.mubr.bf16.mxu0 %v5531
      %8057 = vmatmul.mubr.bf16.gmra.mxu0 %v5530
      %v8058 = vpop.f32.mrf.mxu0
      %v8059 = vadd.f32 %v7898, %v8058
      %v8060 = vpop.f32.mrf.mxu0
      %v8061 = vpop.f32.mrf.mxu0
      %v8062 = vadd.f32 %v7901, %v8061
      %v8063 = vpop.f32.mrf.mxu0
      %8064 = vmatprep.mubr.bf16.mxu0 %v5533
      %8065 = vmatmul.mubr.bf16.gmra.mxu0 %v5532
      %v8066 = vpop.f32.mrf.mxu0
      %v8067 = vadd.f32 %v7906, %v8066
      %v8068 = vpop.f32.mrf.mxu0
      %v8069 = vpop.f32.mrf.mxu0
      %v8070 = vadd.f32 %v7909, %v8069
      %v8071 = vpop.f32.mrf.mxu0
      %8072 = vmatprep.mubr.bf16.mxu0 %v5535
      %8073 = vmatmul.mubr.bf16.gmra.mxu0 %v5534
      %v8074 = vpop.f32.mrf.mxu0
      %v8075 = vadd.f32 %v7914, %v8074
      %v8076 = vpop.f32.mrf.mxu0
      %v8077 = vpop.f32.mrf.mxu0
      %v8078 = vadd.f32 %v7917, %v8077
      %v8079 = vpop.f32.mrf.mxu0
      %8080 = vmatprep.mubr.bf16.mxu0 %v5537
      %8081 = vmatmul.mubr.bf16.gmra.mxu0 %v5536
      %v8082 = vpop.f32.mrf.mxu0
      %v8083 = vadd.f32 %v7922, %v8082
      %v8084 = vpop.f32.mrf.mxu0
      %v8085 = vpop.f32.mrf.mxu0
      %v8086 = vadd.f32 %v7925, %v8085
      %v8087 = vpop.f32.mrf.mxu0
      %8088 = vmatprep.mubr.bf16.mxu0 %v5539
      %8089 = vmatmul.mubr.bf16.gmra.mxu0 %v5538
      %v8090 = vpop.f32.mrf.mxu0
      %v8091 = vadd.f32 %v7930, %v8090
      %v8092 = vpop.f32.mrf.mxu0
      %v8093 = vpop.f32.mrf.mxu0
      %v8094 = vadd.f32 %v7933, %v8093
      %v8095 = vpop.f32.mrf.mxu0
      %8096 = vmatprep.mubr.bf16.mxu0 %v5541
      %8097 = vmatmul.mubr.bf16.gmra.mxu0 %v5540
      %v8098 = vpop.f32.mrf.mxu0
      %v8099 = vadd.f32 %v7938, %v8098
      %v8100 = vpop.f32.mrf.mxu0
      %v8101 = vpop.f32.mrf.mxu0
      %v8102 = vadd.f32 %v7941, %v8101
      %v8103 = vpop.f32.mrf.mxu0
      %8104 = vmatprep.mubr.bf16.mxu0 %v5543
      %8105 = vmatmul.mubr.bf16.gmra.mxu0 %v5542
      %v8106 = vpop.f32.mrf.mxu0
      %v8107 = vadd.f32 %v7946, %v8106
      %v8108 = vpop.f32.mrf.mxu0
      %v8109 = vpop.f32.mrf.mxu0
      %v8110 = vadd.f32 %v7949, %v8109
      %v8111 = vpop.f32.mrf.mxu0
      %8112 = vmatprep.mubr.bf16.mxu0 %v5545
      %8113 = vmatmul.mubr.bf16.gmra.mxu0 %v5544
      %v8114 = vpop.f32.mrf.mxu0
      %v8115 = vadd.f32 %v7954, %v8114
      %v8116 = vpop.f32.mrf.mxu0
      %v8117 = vpop.f32.mrf.mxu0
      %v8118 = vadd.f32 %v7957, %v8117
      %v8119 = vpop.f32.mrf.mxu0
      %8120 = vmatprep.mubr.bf16.mxu0 %v5547
      %8121 = vmatmul.mubr.bf16.gmra.mxu0 %v5546
      %v8122 = vpop.f32.mrf.mxu0
      %v8123 = vadd.f32 %v7962, %v8122
      %v8124 = vpop.f32.mrf.mxu0
      %v8125 = vpop.f32.mrf.mxu0
      %v8126 = vadd.f32 %v7965, %v8125
      %v8127 = vpop.f32.mrf.mxu0
      %8128 = vmatprep.mubr.bf16.mxu0 %v5549
      %8129 = vmatmul.mubr.bf16.gmra.mxu0 %v5548
      %v8130 = vpop.f32.mrf.mxu0
      %v8131 = vadd.f32 %v7970, %v8130
      %v8132 = vpop.f32.mrf.mxu0
      %v8133 = vpop.f32.mrf.mxu0
      %v8134 = vadd.f32 %v7973, %v8133
      %v8135 = vpop.f32.mrf.mxu0
      %8136 = vmatprep.mubr.bf16.mxu0 %v5551
      %8137 = vmatmul.mubr.bf16.gmra.mxu0 %v5550
      %v8138 = vpop.f32.mrf.mxu0
      %v8139 = vadd.f32 %v7978, %v8138
      %v8140 = vpop.f32.mrf.mxu0
      %v8141 = vpop.f32.mrf.mxu0
      %v8142 = vadd.f32 %v7981, %v8141
      %v8143 = vpop.f32.mrf.mxu0
      %8144 = vmatprep.mubr.bf16.mxu0 0
      %8145 = vmatmul.mubr.bf16.gmra.mxu0 0
      %v8146 = vpop.f32.mrf.mxu0
      %v8147 = vadd.f32 %v7986, %v8146
      %v8148 = vpop.f32.mrf.mxu0
      %v8149 = vpop.f32.mrf.mxu0
      %v8150 = vadd.f32 %v7989, %v8149
      %v8151 = vpop.f32.mrf.mxu0
      %8152 = vdwg.mxu0
      %v8153 = vld [vmem:[%s5] sm:$0x1]
      %v8154 = vlaneseq
      %v8155 = vshrl.u32 %v8154, 7
      %v8156 = vsub.s32 0, %v8155
      %v8157 = vrot.slane %v8153, %v8156
      %v8158 = vmul.f32 %v8027, %v8157
      %v8159 = vmul.f32 %v8030, %v8157
      %v8160 = vmul.f32 %v8035, %v8157
      %v8161 = vmul.f32 %v8038, %v8157
      %v8162 = vmul.f32 %v8043, %v8157
      %v8163 = vmul.f32 %v8046, %v8157
      %v8164 = vmul.f32 %v8051, %v8157
      %v8165 = vmul.f32 %v8054, %v8157
      %v8166 = vmul.f32 %v8059, %v8157
      %v8167 = vmul.f32 %v8062, %v8157
      %v8168 = vmul.f32 %v8067, %v8157
      %v8169 = vmul.f32 %v8070, %v8157
      %v8170 = vmul.f32 %v8075, %v8157
      %v8171 = vmul.f32 %v8078, %v8157
      %v8172 = vmul.f32 %v8083, %v8157
      %v8173 = vmul.f32 %v8086, %v8157
      %v8174 = vmul.f32 %v8091, %v8157
      %v8175 = vmul.f32 %v8094, %v8157
      %v8176 = vmul.f32 %v8099, %v8157
      %v8177 = vmul.f32 %v8102, %v8157
      %v8178 = vmul.f32 %v8107, %v8157
      %v8179 = vmul.f32 %v8110, %v8157
      %v8180 = vmul.f32 %v8115, %v8157
      %v8181 = vmul.f32 %v8118, %v8157
      %v8182 = vmul.f32 %v8123, %v8157
      %v8183 = vmul.f32 %v8126, %v8157
      %v8184 = vmul.f32 %v8131, %v8157
      %v8185 = vmul.f32 %v8134, %v8157
      %v8186 = vmul.f32 %v8139, %v8157
      %v8187 = vmul.f32 %v8142, %v8157
      %v8188 = vmul.f32 %v8147, %v8157
      %v8189 = vmul.f32 %v8150, %v8157
      %v8190 = vld [vmem:[%s5 + $0x1] sm:$0x1]
      %v8191 = vlaneseq
      %v8192 = vshrl.u32 %v8191, 7
      %v8193 = vsub.s32 0, %v8192
      %v8194 = vrot.slane %v8190, %v8193
      %v8195 = vadd.f32 %v8158, %v8194
      %v8196 = vadd.f32 %v8159, %v8194
      %v8197 = vadd.f32 %v8160, %v8194
      %v8198 = vadd.f32 %v8161, %v8194
      %v8199 = vadd.f32 %v8162, %v8194
      %v8200 = vadd.f32 %v8163, %v8194
      %v8201 = vadd.f32 %v8164, %v8194
      %v8202 = vadd.f32 %v8165, %v8194
      %v8203 = vadd.f32 %v8166, %v8194
      %v8204 = vadd.f32 %v8167, %v8194
      %v8205 = vadd.f32 %v8168, %v8194
      %v8206 = vadd.f32 %v8169, %v8194
      %v8207 = vadd.f32 %v8170, %v8194
      %v8208 = vadd.f32 %v8171, %v8194
      %v8209 = vadd.f32 %v8172, %v8194
      %v8210 = vadd.f32 %v8173, %v8194
      %v8211 = vadd.f32 %v8174, %v8194
      %v8212 = vadd.f32 %v8175, %v8194
      %v8213 = vadd.f32 %v8176, %v8194
      %v8214 = vadd.f32 %v8177, %v8194
      %v8215 = vadd.f32 %v8178, %v8194
      %v8216 = vadd.f32 %v8179, %v8194
      %v8217 = vadd.f32 %v8180, %v8194
      %v8218 = vadd.f32 %v8181, %v8194
      %v8219 = vadd.f32 %v8182, %v8194
      %v8220 = vadd.f32 %v8183, %v8194
      %v8221 = vadd.f32 %v8184, %v8194
      %v8222 = vadd.f32 %v8185, %v8194
      %v8223 = vadd.f32 %v8186, %v8194
      %v8224 = vadd.f32 %v8187, %v8194
      %v8225 = vadd.f32 %v8188, %v8194
      %v8226 = vadd.f32 %v8189, %v8194
      %v8227 = vmax.f32 %v8195, 0.0
      %v8228 = vmax.f32 %v8196, 0.0
      %v8229 = vmax.f32 %v8197, 0.0
      %v8230 = vmax.f32 %v8198, 0.0
      %v8231 = vmax.f32 %v8199, 0.0
      %v8232 = vmax.f32 %v8200, 0.0
      %v8233 = vmax.f32 %v8201, 0.0
      %v8234 = vmax.f32 %v8202, 0.0
      %v8235 = vmax.f32 %v8203, 0.0
      %v8236 = vmax.f32 %v8204, 0.0
      %v8237 = vmax.f32 %v8205, 0.0
      %v8238 = vmax.f32 %v8206, 0.0
      %v8239 = vmax.f32 %v8207, 0.0
      %v8240 = vmax.f32 %v8208, 0.0
      %v8241 = vmax.f32 %v8209, 0.0
      %v8242 = vmax.f32 %v8210, 0.0
      %v8243 = vmax.f32 %v8211, 0.0
      %v8244 = vmax.f32 %v8212, 0.0
      %v8245 = vmax.f32 %v8213, 0.0
      %v8246 = vmax.f32 %v8214, 0.0
      %v8247 = vmax.f32 %v8215, 0.0
      %v8248 = vmax.f32 %v8216, 0.0
      %v8249 = vmax.f32 %v8217, 0.0
      %v8250 = vmax.f32 %v8218, 0.0
      %v8251 = vmax.f32 %v8219, 0.0
      %v8252 = vmax.f32 %v8220, 0.0
      %v8253 = vmax.f32 %v8221, 0.0
      %v8254 = vmax.f32 %v8222, 0.0
      %v8255 = vmax.f32 %v8223, 0.0
      %v8256 = vmax.f32 %v8224, 0.0
      %v8257 = vmax.f32 %v8225, 0.0
      %v8258 = vmax.f32 %v8226, 0.0
      %v8259 = vrot.slane %v8227, 7
      %v8260 = vrot.slane %v8228, 7
      %v8261 = vrot.slane %v8229, 7
      %v8262 = vrot.slane %v8230, 7
      %v8263 = vrot.slane %v8231, 7
      %v8264 = vrot.slane %v8232, 7
      %v8265 = vrot.slane %v8233, 7
      %v8266 = vrot.slane %v8234, 7
      %v8267 = vrot.slane %v8235, 7
      %v8268 = vrot.slane %v8236, 7
      %v8269 = vrot.slane %v8237, 7
      %v8270 = vrot.slane %v8238, 7
      %v8271 = vrot.slane %v8239, 7
      %v8272 = vrot.slane %v8240, 7
      %v8273 = vrot.slane %v8241, 7
      %v8274 = vrot.slane %v8242, 7
      %v8275 = vrot.slane %v8243, 7
      %v8276 = vrot.slane %v8244, 7
      %v8277 = vrot.slane %v8245, 7
      %v8278 = vrot.slane %v8246, 7
      %v8279 = vrot.slane %v8247, 7
      %v8280 = vrot.slane %v8248, 7
      %v8281 = vrot.slane %v8249, 7
      %v8282 = vrot.slane %v8250, 7
      %v8283 = vrot.slane %v8251, 7
      %v8284 = vrot.slane %v8252, 7
      %v8285 = vrot.slane %v8253, 7
      %v8286 = vrot.slane %v8254, 7
      %v8287 = vrot.slane %v8255, 7
      %v8288 = vrot.slane %v8256, 7
      %v8289 = vrot.slane %v8257, 7
      %v8290 = vrot.slane %v8258, 7
      %v8291 = vsel %vm5134, %v8289, %v8290
      %v8292 = vsel %vm5134, %v8288, %v8289
      %v8293 = vsel %vm5134, %v8287, %v8288
      %v8294 = vsel %vm5134, %v8286, %v8287
      %v8295 = vsel %vm5134, %v8285, %v8286
      %v8296 = vsel %vm5134, %v8284, %v8285
      %v8297 = vsel %vm5134, %v8283, %v8284
      %v8298 = vsel %vm5134, %v8282, %v8283
      %v8299 = vsel %vm5134, %v8281, %v8282
      %v8300 = vsel %vm5134, %v8280, %v8281
      %v8301 = vsel %vm5134, %v8279, %v8280
      %v8302 = vsel %vm5134, %v8278, %v8279
      %v8303 = vsel %vm5134, %v8277, %v8278
      %v8304 = vsel %vm5134, %v8276, %v8277
      %v8305 = vsel %vm5134, %v8275, %v8276
      %v8306 = vsel %vm5134, %v8274, %v8275
      %v8307 = vsel %vm5134, %v8273, %v8274
      %v8308 = vsel %vm5134, %v8272, %v8273
      %v8309 = vsel %vm5134, %v8271, %v8272
      %v8310 = vsel %vm5134, %v8270, %v8271
      %v8311 = vsel %vm5134, %v8269, %v8270
      %v8312 = vsel %vm5134, %v8268, %v8269
      %v8313 = vsel %vm5134, %v8267, %v8268
      %v8314 = vsel %vm5134, %v8266, %v8267
      %v8315 = vsel %vm5134, %v8265, %v8266
      %v8316 = vsel %vm5134, %v8264, %v8265
      %v8317 = vsel %vm5134, %v8263, %v8264
      %v8318 = vsel %vm5134, %v8262, %v8263
      %v8319 = vsel %vm5134, %v8261, %v8262
      %v8320 = vsel %vm5134, %v8260, %v8261
      %v8321 = vsel %vm5134, %v8259, %v8260
      %v8322 = vsel %vm5134, %v8290, %v8259
      %v8323 = vmul.f32 %v8322, %v4942
      %v8324 = vmul.f32 %v8321, %v4943
      %v8325 = vmul.f32 %v8320, %v4944
      %v8326 = vmul.f32 %v8319, %v4945
      %v8327 = vmul.f32 %v8318, %v4946
      %v8328 = vmul.f32 %v8317, %v4947
      %v8329 = vmul.f32 %v8316, %v4948
      %v8330 = vmul.f32 %v8315, %v4949
      %v8331 = vmul.f32 %v8314, %v4950
      %v8332 = vmul.f32 %v8313, %v4951
      %v8333 = vmul.f32 %v8312, %v4952
      %v8334 = vmul.f32 %v8311, %v4953
      %v8335 = vmul.f32 %v8310, %v4954
      %v8336 = vmul.f32 %v8309, %v4955
      %v8337 = vmul.f32 %v8308, %v4956
      %v8338 = vmul.f32 %v8307, %v4957
      %v8339 = vmul.f32 %v8306, %v4958
      %v8340 = vmul.f32 %v8305, %v4959
      %v8341 = vmul.f32 %v8304, %v4960
      %v8342 = vmul.f32 %v8303, %v4961
      %v8343 = vmul.f32 %v8302, %v4962
      %v8344 = vmul.f32 %v8301, %v4963
      %v8345 = vmul.f32 %v8300, %v4964
      %v8346 = vmul.f32 %v8299, %v4965
      %v8347 = vmul.f32 %v8298, %v4966
      %v8348 = vmul.f32 %v8297, %v4967
      %v8349 = vmul.f32 %v8296, %v4968
      %v8350 = vmul.f32 %v8295, %v4969
      %v8351 = vmul.f32 %v8294, %v4970
      %v8352 = vmul.f32 %v8293, %v4971
      %v8353 = vmul.f32 %v8292, %v4972
      %v8354 = vmul.f32 %v8291, %v4973
      %v8355 = vpack.c.bf16 %v8324, %v8323
      %v8356 = vpack.c.bf16 %v8326, %v8325
      %v8357 = vpack.c.bf16 %v8328, %v8327
      %v8358 = vpack.c.bf16 %v8330, %v8329
      %v8359 = vpack.c.bf16 %v8332, %v8331
      %v8360 = vpack.c.bf16 %v8334, %v8333
      %v8361 = vpack.c.bf16 %v8336, %v8335
      %v8362 = vpack.c.bf16 %v8338, %v8337
      %v8363 = vpack.c.bf16 %v8340, %v8339
      %v8364 = vpack.c.bf16 %v8342, %v8341
      %v8365 = vpack.c.bf16 %v8344, %v8343
      %v8366 = vpack.c.bf16 %v8346, %v8345
      %v8367 = vpack.c.bf16 %v8348, %v8347
      %v8368 = vpack.c.bf16 %v8350, %v8349
      %v8369 = vpack.c.bf16 %v8352, %v8351
      %v8370 = vpack.c.bf16 %v8354, %v8353
      %v8371 = vpack.c.bf16 %v8228, %v8227
      %v8372 = vpack.c.bf16 %v8230, %v8229
      %v8373 = vpack.c.bf16 %v8232, %v8231
      %v8374 = vpack.c.bf16 %v8234, %v8233
      %v8375 = vpack.c.bf16 %v8236, %v8235
      %v8376 = vpack.c.bf16 %v8238, %v8237
      %v8377 = vpack.c.bf16 %v8240, %v8239
      %v8378 = vpack.c.bf16 %v8242, %v8241
      %v8379 = vpack.c.bf16 %v8244, %v8243
      %v8380 = vpack.c.bf16 %v8246, %v8245
      %v8381 = vpack.c.bf16 %v8248, %v8247
      %v8382 = vpack.c.bf16 %v8250, %v8249
      %v8383 = vpack.c.bf16 %v8252, %v8251
      %v8384 = vpack.c.bf16 %v8254, %v8253
      %v8385 = vpack.c.bf16 %v8256, %v8255
      %v8386 = vpack.c.bf16 %v8258, %v8257
      %v8387 = vrot.slane %v8227, 1
      %v8388 = vrot.slane %v8228, 1
      %v8389 = vrot.slane %v8229, 1
      %v8390 = vrot.slane %v8230, 1
      %v8391 = vrot.slane %v8231, 1
      %v8392 = vrot.slane %v8232, 1
      %v8393 = vrot.slane %v8233, 1
      %v8394 = vrot.slane %v8234, 1
      %v8395 = vrot.slane %v8235, 1
      %v8396 = vrot.slane %v8236, 1
      %v8397 = vrot.slane %v8237, 1
      %v8398 = vrot.slane %v8238, 1
      %v8399 = vrot.slane %v8239, 1
      %v8400 = vrot.slane %v8240, 1
      %v8401 = vrot.slane %v8241, 1
      %v8402 = vrot.slane %v8242, 1
      %v8403 = vrot.slane %v8243, 1
      %v8404 = vrot.slane %v8244, 1
      %v8405 = vrot.slane %v8245, 1
      %v8406 = vrot.slane %v8246, 1
      %v8407 = vrot.slane %v8247, 1
      %v8408 = vrot.slane %v8248, 1
      %v8409 = vrot.slane %v8249, 1
      %v8410 = vrot.slane %v8250, 1
      %v8411 = vrot.slane %v8251, 1
      %v8412 = vrot.slane %v8252, 1
      %v8413 = vrot.slane %v8253, 1
      %v8414 = vrot.slane %v8254, 1
      %v8415 = vrot.slane %v8255, 1
      %v8416 = vrot.slane %v8256, 1
      %v8417 = vrot.slane %v8257, 1
      %v8418 = vrot.slane %v8258, 1
      %v8419 = vsel %vm5391, %v8417, %v8418
      %v8420 = vsel %vm5391, %v8416, %v8417
      %v8421 = vsel %vm5391, %v8415, %v8416
      %v8422 = vsel %vm5391, %v8414, %v8415
      %v8423 = vsel %vm5391, %v8413, %v8414
      %v8424 = vsel %vm5391, %v8412, %v8413
      %v8425 = vsel %vm5391, %v8411, %v8412
      %v8426 = vsel %vm5391, %v8410, %v8411
      %v8427 = vsel %vm5391, %v8409, %v8410
      %v8428 = vsel %vm5391, %v8408, %v8409
      %v8429 = vsel %vm5391, %v8407, %v8408
      %v8430 = vsel %vm5391, %v8406, %v8407
      %v8431 = vsel %vm5391, %v8405, %v8406
      %v8432 = vsel %vm5391, %v8404, %v8405
      %v8433 = vsel %vm5391, %v8403, %v8404
      %v8434 = vsel %vm5391, %v8402, %v8403
      %v8435 = vsel %vm5391, %v8401, %v8402
      %v8436 = vsel %vm5391, %v8400, %v8401
      %v8437 = vsel %vm5391, %v8399, %v8400
      %v8438 = vsel %vm5391, %v8398, %v8399
      %v8439 = vsel %vm5391, %v8397, %v8398
      %v8440 = vsel %vm5391, %v8396, %v8397
      %v8441 = vsel %vm5391, %v8395, %v8396
      %v8442 = vsel %vm5391, %v8394, %v8395
      %v8443 = vsel %vm5391, %v8393, %v8394
      %v8444 = vsel %vm5391, %v8392, %v8393
      %v8445 = vsel %vm5391, %v8391, %v8392
      %v8446 = vsel %vm5391, %v8390, %v8391
      %v8447 = vsel %vm5391, %v8389, %v8390
      %v8448 = vsel %vm5391, %v8388, %v8389
      %v8449 = vsel %vm5391, %v8387, %v8388
      %v8450 = vsel %vm5391, %v8418, %v8387
      %v8451 = vmul.f32 %v8449, %v5038
      %v8452 = vmul.f32 %v8448, %v5039
      %v8453 = vmul.f32 %v8447, %v5040
      %v8454 = vmul.f32 %v8446, %v5041
      %v8455 = vmul.f32 %v8445, %v5042
      %v8456 = vmul.f32 %v8444, %v5043
      %v8457 = vmul.f32 %v8443, %v5044
      %v8458 = vmul.f32 %v8442, %v5045
      %v8459 = vmul.f32 %v8441, %v5046
      %v8460 = vmul.f32 %v8440, %v5047
      %v8461 = vmul.f32 %v8439, %v5048
      %v8462 = vmul.f32 %v8438, %v5049
      %v8463 = vmul.f32 %v8437, %v5050
      %v8464 = vmul.f32 %v8436, %v5051
      %v8465 = vmul.f32 %v8435, %v5052
      %v8466 = vmul.f32 %v8434, %v5053
      %v8467 = vmul.f32 %v8433, %v5054
      %v8468 = vmul.f32 %v8432, %v5055
      %v8469 = vmul.f32 %v8431, %v5056
      %v8470 = vmul.f32 %v8430, %v5057
      %v8471 = vmul.f32 %v8429, %v5058
      %v8472 = vmul.f32 %v8428, %v5059
      %v8473 = vmul.f32 %v8427, %v5060
      %v8474 = vmul.f32 %v8426, %v5061
      %v8475 = vmul.f32 %v8425, %v5062
      %v8476 = vmul.f32 %v8424, %v5063
      %v8477 = vmul.f32 %v8423, %v5064
      %v8478 = vmul.f32 %v8422, %v5065
      %v8479 = vmul.f32 %v8421, %v5066
      %v8480 = vmul.f32 %v8420, %v5067
      %v8481 = vmul.f32 %v8419, %v5068
      %v8482 = vmul.f32 %v8450, %v5069
      %v8483 = vpack.c.bf16 %v8452, %v8451
      %v8484 = vpack.c.bf16 %v8454, %v8453
      %v8485 = vpack.c.bf16 %v8456, %v8455
      %v8486 = vpack.c.bf16 %v8458, %v8457
      %v8487 = vpack.c.bf16 %v8460, %v8459
      %v8488 = vpack.c.bf16 %v8462, %v8461
      %v8489 = vpack.c.bf16 %v8464, %v8463
      %v8490 = vpack.c.bf16 %v8466, %v8465
      %v8491 = vpack.c.bf16 %v8468, %v8467
      %v8492 = vpack.c.bf16 %v8470, %v8469
      %v8493 = vpack.c.bf16 %v8472, %v8471
      %v8494 = vpack.c.bf16 %v8474, %v8473
      %v8495 = vpack.c.bf16 %v8476, %v8475
      %v8496 = vpack.c.bf16 %v8478, %v8477
      %v8497 = vpack.c.bf16 %v8480, %v8479
      %v8498 = vpack.c.bf16 %v8482, %v8481
      %v8499 = vld [vmem:[%s6] sm:$0xf]
      %v8500 = vld [vmem:[%s6 + $0x4] sm:$0xf]
      %v8501 = vld [vmem:[%s6 + $0x8] sm:$0xf]
      %v8502 = vld [vmem:[%s6 + $0xc] sm:$0xf]
      %v8503 = vld [vmem:[%s6 + $0x10] sm:$0xf]
      %v8504 = vld [vmem:[%s6 + $0x14] sm:$0xf]
      %v8505 = vld [vmem:[%s6 + $0x18] sm:$0xf]
      %v8506 = vld [vmem:[%s6 + $0x1c] sm:$0xf]
      %v8507 = vld [vmem:[%s6 + $0x20] sm:$0xf]
      %v8508 = vld [vmem:[%s6 + $0x24] sm:$0xf]
      %v8509 = vld [vmem:[%s6 + $0x28] sm:$0xf]
      %v8510 = vld [vmem:[%s6 + $0x2c] sm:$0xf]
      %v8511 = vld [vmem:[%s6 + $0x30] sm:$0xf]
      %v8512 = vld [vmem:[%s6 + $0x34] sm:$0xf]
      %v8513 = vld [vmem:[%s6 + $0x38] sm:$0xf]
      %v8514 = vld [vmem:[%s6 + $0x3c] sm:$0xf]
      %v8515 = vld [vmem:[%s6 + $0x40] sm:$0xf]
      %v8516 = vld [vmem:[%s6 + $0x44] sm:$0xf]
      %v8517 = vld [vmem:[%s6 + $0x48] sm:$0xf]
      %v8518 = vld [vmem:[%s6 + $0x4c] sm:$0xf]
      %v8519 = vld [vmem:[%s6 + $0x50] sm:$0xf]
      %v8520 = vld [vmem:[%s6 + $0x54] sm:$0xf]
      %v8521 = vld [vmem:[%s6 + $0x58] sm:$0xf]
      %v8522 = vld [vmem:[%s6 + $0x5c] sm:$0xf]
      %v8523 = vld [vmem:[%s6 + $0x60] sm:$0xf]
      %v8524 = vld [vmem:[%s6 + $0x64] sm:$0xf]
      %v8525 = vld [vmem:[%s6 + $0x68] sm:$0xf]
      %v8526 = vld [vmem:[%s6 + $0x6c] sm:$0xf]
      %v8527 = vld [vmem:[%s6 + $0x70] sm:$0xf]
      %v8528 = vld [vmem:[%s6 + $0x74] sm:$0xf]
      %v8529 = vld [vmem:[%s6 + $0x78] sm:$0xf]
      %v8530 = vld [vmem:[%s6 + $0x7c] sm:$0xf]
      %v8531 = vld [vmem:[%s6 + $0x80] sm:$0xf]
      %v8532 = vld [vmem:[%s6 + $0x84] sm:$0xf]
      %v8533 = vld [vmem:[%s6 + $0x88] sm:$0xf]
      %v8534 = vld [vmem:[%s6 + $0x8c] sm:$0xf]
      %v8535 = vld [vmem:[%s6 + $0x90] sm:$0xf]
      %v8536 = vld [vmem:[%s6 + $0x94] sm:$0xf]
      %v8537 = vld [vmem:[%s6 + $0x98] sm:$0xf]
      %v8538 = vld [vmem:[%s6 + $0x9c] sm:$0xf]
      %v8539 = vld [vmem:[%s6 + $0xa0] sm:$0xf]
      %v8540 = vld [vmem:[%s6 + $0xa4] sm:$0xf]
      %v8541 = vld [vmem:[%s6 + $0xa8] sm:$0xf]
      %v8542 = vld [vmem:[%s6 + $0xac] sm:$0xf]
      %v8543 = vld [vmem:[%s6 + $0xb0] sm:$0xf]
      %v8544 = vld [vmem:[%s6 + $0xb4] sm:$0xf]
      %v8545 = vld [vmem:[%s6 + $0xb8] sm:$0xf]
      %v8546 = vld [vmem:[%s6 + $0xbc] sm:$0xf]
      %v8547 = vld [vmem:[%s6 + $0xc0] sm:$0xf]
      %v8548 = vld [vmem:[%s6 + $0xc4] sm:$0xf]
      %v8549 = vld [vmem:[%s6 + $0xc8] sm:$0xf]
      %v8550 = vld [vmem:[%s6 + $0xcc] sm:$0xf]
      %v8551 = vld [vmem:[%s6 + $0xd0] sm:$0xf]
      %v8552 = vld [vmem:[%s6 + $0xd4] sm:$0xf]
      %v8553 = vld [vmem:[%s6 + $0xd8] sm:$0xf]
      %v8554 = vld [vmem:[%s6 + $0xdc] sm:$0xf]
      %v8555 = vld [vmem:[%s6 + $0xe0] sm:$0xf]
      %v8556 = vld [vmem:[%s6 + $0xe4] sm:$0xf]
      %v8557 = vld [vmem:[%s6 + $0xe8] sm:$0xf]
      %v8558 = vld [vmem:[%s6 + $0xec] sm:$0xf]
      %v8559 = vld [vmem:[%s6 + $0xf0] sm:$0xf]
      %v8560 = vld [vmem:[%s6 + $0xf4] sm:$0xf]
      %v8561 = vld [vmem:[%s6 + $0xf8] sm:$0xf]
      %v8562 = vld [vmem:[%s6 + $0xfc] sm:$0xf]
      %v8563 = vld [vmem:[%s6 + $0x100] sm:$0xf]
      %v8564 = vld [vmem:[%s6 + $0x104] sm:$0xf]
      %v8565 = vld [vmem:[%s6 + $0x108] sm:$0xf]
      %v8566 = vld [vmem:[%s6 + $0x10c] sm:$0xf]
      %v8567 = vld [vmem:[%s6 + $0x110] sm:$0xf]
      %v8568 = vld [vmem:[%s6 + $0x114] sm:$0xf]
      %v8569 = vld [vmem:[%s6 + $0x118] sm:$0xf]
      %v8570 = vld [vmem:[%s6 + $0x11c] sm:$0xf]
      %v8571 = vld [vmem:[%s6 + $0x120] sm:$0xf]
      %v8572 = vld [vmem:[%s6 + $0x124] sm:$0xf]
      %v8573 = vld [vmem:[%s6 + $0x128] sm:$0xf]
      %v8574 = vld [vmem:[%s6 + $0x12c] sm:$0xf]
      %v8575 = vld [vmem:[%s6 + $0x130] sm:$0xf]
      %v8576 = vld [vmem:[%s6 + $0x134] sm:$0xf]
      %v8577 = vld [vmem:[%s6 + $0x138] sm:$0xf]
      %v8578 = vld [vmem:[%s6 + $0x13c] sm:$0xf]
      %v8579 = vld [vmem:[%s6 + $0x140] sm:$0xf]
      %v8580 = vld [vmem:[%s6 + $0x144] sm:$0xf]
      %v8581 = vld [vmem:[%s6 + $0x148] sm:$0xf]
      %v8582 = vld [vmem:[%s6 + $0x14c] sm:$0xf]
      %v8583 = vld [vmem:[%s6 + $0x150] sm:$0xf]
      %v8584 = vld [vmem:[%s6 + $0x154] sm:$0xf]
      %v8585 = vld [vmem:[%s6 + $0x158] sm:$0xf]
      %v8586 = vld [vmem:[%s6 + $0x15c] sm:$0xf]
      %v8587 = vld [vmem:[%s6 + $0x160] sm:$0xf]
      %v8588 = vld [vmem:[%s6 + $0x164] sm:$0xf]
      %v8589 = vld [vmem:[%s6 + $0x168] sm:$0xf]
      %v8590 = vld [vmem:[%s6 + $0x16c] sm:$0xf]
      %v8591 = vld [vmem:[%s6 + $0x170] sm:$0xf]
      %v8592 = vld [vmem:[%s6 + $0x174] sm:$0xf]
      %v8593 = vld [vmem:[%s6 + $0x178] sm:$0xf]
      %v8594 = vld [vmem:[%s6 + $0x17c] sm:$0xf]
      %v8595 = vld [vmem:[%s6 + $0x180] sm:$0xf]
      %v8596 = vld [vmem:[%s6 + $0x184] sm:$0xf]
      %v8597 = vld [vmem:[%s6 + $0x188] sm:$0xf]
      %v8598 = vld [vmem:[%s6 + $0x18c] sm:$0xf]
      %v8599 = vld [vmem:[%s6 + $0x190] sm:$0xf]
      %v8600 = vld [vmem:[%s6 + $0x194] sm:$0xf]
      %v8601 = vld [vmem:[%s6 + $0x198] sm:$0xf]
      %v8602 = vld [vmem:[%s6 + $0x19c] sm:$0xf]
      %v8603 = vld [vmem:[%s6 + $0x1a0] sm:$0xf]
      %v8604 = vld [vmem:[%s6 + $0x1a4] sm:$0xf]
      %v8605 = vld [vmem:[%s6 + $0x1a8] sm:$0xf]
      %v8606 = vld [vmem:[%s6 + $0x1ac] sm:$0xf]
      %v8607 = vld [vmem:[%s6 + $0x1b0] sm:$0xf]
      %v8608 = vld [vmem:[%s6 + $0x1b4] sm:$0xf]
      %v8609 = vld [vmem:[%s6 + $0x1b8] sm:$0xf]
      %v8610 = vld [vmem:[%s6 + $0x1bc] sm:$0xf]
      %v8611 = vld [vmem:[%s6 + $0x1c0] sm:$0xf]
      %v8612 = vld [vmem:[%s6 + $0x1c4] sm:$0xf]
      %v8613 = vld [vmem:[%s6 + $0x1c8] sm:$0xf]
      %v8614 = vld [vmem:[%s6 + $0x1cc] sm:$0xf]
      %v8615 = vld [vmem:[%s6 + $0x1d0] sm:$0xf]
      %v8616 = vld [vmem:[%s6 + $0x1d4] sm:$0xf]
      %v8617 = vld [vmem:[%s6 + $0x1d8] sm:$0xf]
      %v8618 = vld [vmem:[%s6 + $0x1dc] sm:$0xf]
      %v8619 = vld [vmem:[%s6 + $0x1e0] sm:$0xf]
      %v8620 = vld [vmem:[%s6 + $0x1e4] sm:$0xf]
      %v8621 = vld [vmem:[%s6 + $0x1e8] sm:$0xf]
      %v8622 = vld [vmem:[%s6 + $0x1ec] sm:$0xf]
      %v8623 = vld [vmem:[%s6 + $0x1f0] sm:$0xf]
      %v8624 = vld [vmem:[%s6 + $0x1f4] sm:$0xf]
      %v8625 = vld [vmem:[%s6 + $0x1f8] sm:$0xf]
      %v8626 = vld [vmem:[%s6 + $0x1fc] sm:$0xf]
      %v8627 = vld [vmem:[%s6 + $0x200] sm:$0xf]
      %v8628 = vld [vmem:[%s6 + $0x204] sm:$0xf]
      %v8629 = vld [vmem:[%s6 + $0x208] sm:$0xf]
      %v8630 = vld [vmem:[%s6 + $0x20c] sm:$0xf]
      %v8631 = vld [vmem:[%s6 + $0x210] sm:$0xf]
      %v8632 = vld [vmem:[%s6 + $0x214] sm:$0xf]
      %v8633 = vld [vmem:[%s6 + $0x218] sm:$0xf]
      %v8634 = vld [vmem:[%s6 + $0x21c] sm:$0xf]
      %v8635 = vld [vmem:[%s6 + $0x220] sm:$0xf]
      %v8636 = vld [vmem:[%s6 + $0x224] sm:$0xf]
      %v8637 = vld [vmem:[%s6 + $0x228] sm:$0xf]
      %v8638 = vld [vmem:[%s6 + $0x22c] sm:$0xf]
      %v8639 = vld [vmem:[%s6 + $0x230] sm:$0xf]
      %v8640 = vld [vmem:[%s6 + $0x234] sm:$0xf]
      %v8641 = vld [vmem:[%s6 + $0x238] sm:$0xf]
      %v8642 = vld [vmem:[%s6 + $0x23c] sm:$0xf]
      %v8787 = vunpack.c.l.b16 %v8499
      %v8788 = vunpack.c.l.b16 %v8500
      %v8789 = vunpack.c.l.b16 %v8501
      %v8790 = vunpack.c.l.b16 %v8502
      %v8791 = vunpack.c.l.b16 %v8503
      %v8792 = vunpack.c.l.b16 %v8504
      %v8793 = vunpack.c.l.b16 %v8505
      %v8794 = vunpack.c.l.b16 %v8506
      %v8795 = vunpack.c.l.b16 %v8507
      %v8796 = vunpack.c.l.b16 %v8508
      %v8797 = vunpack.c.l.b16 %v8509
      %v8798 = vunpack.c.l.b16 %v8510
      %v8799 = vunpack.c.l.b16 %v8511
      %v8800 = vunpack.c.l.b16 %v8512
      %v8801 = vunpack.c.l.b16 %v8513
      %v8802 = vunpack.c.l.b16 %v8514
      %v8803 = vunpack.c.l.b16 %v8515
      %v8804 = vunpack.c.l.b16 %v8516
      %v8805 = vunpack.c.l.b16 %v8517
      %v8806 = vunpack.c.l.b16 %v8518
      %v8807 = vunpack.c.l.b16 %v8519
      %v8808 = vunpack.c.l.b16 %v8520
      %v8809 = vunpack.c.l.b16 %v8521
      %v8810 = vunpack.c.l.b16 %v8522
      %v8811 = vunpack.c.l.b16 %v8523
      %v8812 = vunpack.c.l.b16 %v8524
      %v8813 = vunpack.c.l.b16 %v8525
      %v8814 = vunpack.c.l.b16 %v8526
      %v8815 = vunpack.c.l.b16 %v8527
      %v8816 = vunpack.c.l.b16 %v8528
      %v8817 = vunpack.c.l.b16 %v8529
      %v8818 = vunpack.c.l.b16 %v8530
      %v8819 = vunpack.c.l.b16 %v8531
      %v8820 = vunpack.c.l.b16 %v8532
      %v8821 = vunpack.c.l.b16 %v8533
      %v8822 = vunpack.c.l.b16 %v8534
      %v8823 = vunpack.c.l.b16 %v8535
      %v8824 = vunpack.c.l.b16 %v8536
      %v8825 = vunpack.c.l.b16 %v8537
      %v8826 = vunpack.c.l.b16 %v8538
      %v8827 = vunpack.c.l.b16 %v8539
      %v8828 = vunpack.c.l.b16 %v8540
      %v8829 = vunpack.c.l.b16 %v8541
      %v8830 = vunpack.c.l.b16 %v8542
      %v8831 = vunpack.c.l.b16 %v8543
      %v8832 = vunpack.c.l.b16 %v8544
      %v8833 = vunpack.c.l.b16 %v8545
      %v8834 = vunpack.c.l.b16 %v8546
      %v8835 = vunpack.c.l.b16 %v8547
      %v8836 = vunpack.c.l.b16 %v8548
      %v8837 = vunpack.c.l.b16 %v8549
      %v8838 = vunpack.c.l.b16 %v8550
      %v8839 = vunpack.c.l.b16 %v8551
      %v8840 = vunpack.c.l.b16 %v8552
      %v8841 = vunpack.c.l.b16 %v8553
      %v8842 = vunpack.c.l.b16 %v8554
      %v8843 = vunpack.c.l.b16 %v8555
      %v8844 = vunpack.c.l.b16 %v8556
      %v8845 = vunpack.c.l.b16 %v8557
      %v8846 = vunpack.c.l.b16 %v8558
      %v8847 = vunpack.c.l.b16 %v8559
      %v8848 = vunpack.c.l.b16 %v8560
      %v8849 = vunpack.c.l.b16 %v8561
      %v8850 = vunpack.c.l.b16 %v8562
      %v8851 = vunpack.c.l.b16 %v8563
      %v8852 = vunpack.c.l.b16 %v8564
      %v8853 = vunpack.c.l.b16 %v8565
      %v8854 = vunpack.c.l.b16 %v8566
      %v8855 = vunpack.c.l.b16 %v8567
      %v8856 = vunpack.c.l.b16 %v8568
      %v8857 = vunpack.c.l.b16 %v8569
      %v8858 = vunpack.c.l.b16 %v8570
      %v8859 = vunpack.c.l.b16 %v8571
      %v8860 = vunpack.c.l.b16 %v8572
      %v8861 = vunpack.c.l.b16 %v8573
      %v8862 = vunpack.c.l.b16 %v8574
      %v8863 = vunpack.c.l.b16 %v8575
      %v8864 = vunpack.c.l.b16 %v8576
      %v8865 = vunpack.c.l.b16 %v8577
      %v8866 = vunpack.c.l.b16 %v8578
      %v8867 = vunpack.c.l.b16 %v8579
      %v8868 = vunpack.c.l.b16 %v8580
      %v8869 = vunpack.c.l.b16 %v8581
      %v8870 = vunpack.c.l.b16 %v8582
      %v8871 = vunpack.c.l.b16 %v8583
      %v8872 = vunpack.c.l.b16 %v8584
      %v8873 = vunpack.c.l.b16 %v8585
      %v8874 = vunpack.c.l.b16 %v8586
      %v8875 = vunpack.c.l.b16 %v8587
      %v8876 = vunpack.c.l.b16 %v8588
      %v8877 = vunpack.c.l.b16 %v8589
      %v8878 = vunpack.c.l.b16 %v8590
      %v8879 = vunpack.c.l.b16 %v8591
      %v8880 = vunpack.c.l.b16 %v8592
      %v8881 = vunpack.c.l.b16 %v8593
      %v8882 = vunpack.c.l.b16 %v8594
      %v8883 = vunpack.c.l.b16 %v8595
      %v8884 = vunpack.c.l.b16 %v8596
      %v8885 = vunpack.c.l.b16 %v8597
      %v8886 = vunpack.c.l.b16 %v8598
      %v8887 = vunpack.c.l.b16 %v8599
      %v8888 = vunpack.c.l.b16 %v8600
      %v8889 = vunpack.c.l.b16 %v8601
      %v8890 = vunpack.c.l.b16 %v8602
      %v8891 = vunpack.c.l.b16 %v8603
      %v8892 = vunpack.c.l.b16 %v8604
      %v8893 = vunpack.c.l.b16 %v8605
      %v8894 = vunpack.c.l.b16 %v8606
      %v8895 = vunpack.c.l.b16 %v8607
      %v8896 = vunpack.c.l.b16 %v8608
      %v8897 = vunpack.c.l.b16 %v8609
      %v8898 = vunpack.c.l.b16 %v8610
      %v8899 = vunpack.c.l.b16 %v8611
      %v8900 = vunpack.c.l.b16 %v8612
      %v8901 = vunpack.c.l.b16 %v8613
      %v8902 = vunpack.c.l.b16 %v8614
      %v8903 = vunpack.c.l.b16 %v8615
      %v8904 = vunpack.c.l.b16 %v8616
      %v8905 = vunpack.c.l.b16 %v8617
      %v8906 = vunpack.c.l.b16 %v8618
      %v8907 = vunpack.c.l.b16 %v8619
      %v8908 = vunpack.c.l.b16 %v8620
      %v8909 = vunpack.c.l.b16 %v8621
      %v8910 = vunpack.c.l.b16 %v8622
      %v8911 = vunpack.c.l.b16 %v8623
      %v8912 = vunpack.c.l.b16 %v8624
      %v8913 = vunpack.c.l.b16 %v8625
      %v8914 = vunpack.c.l.b16 %v8626
      %v8915 = vunpack.c.l.b16 %v8627
      %v8916 = vunpack.c.l.b16 %v8628
      %v8917 = vunpack.c.l.b16 %v8629
      %v8918 = vunpack.c.l.b16 %v8630
      %v8919 = vunpack.c.l.b16 %v8631
      %v8920 = vunpack.c.l.b16 %v8632
      %v8921 = vunpack.c.l.b16 %v8633
      %v8922 = vunpack.c.l.b16 %v8634
      %v8923 = vunpack.c.l.b16 %v8635
      %v8924 = vunpack.c.l.b16 %v8636
      %v8925 = vunpack.c.l.b16 %v8637
      %v8926 = vunpack.c.l.b16 %v8638
      %v8927 = vunpack.c.l.b16 %v8639
      %v8928 = vunpack.c.l.b16 %v8640
      %v8929 = vunpack.c.l.b16 %v8641
      %v8930 = vunpack.c.l.b16 %v8642
      %v8931 = vpack.c.b16 %v8788, %v8787
      %v8932 = vpack.c.b16 %v8790, %v8789
      %v8933 = vpack.c.b16 %v8792, %v8791
      %v8934 = vpack.c.b16 %v8794, %v8793
      %v8935 = vpack.c.b16 %v8796, %v8795
      %v8936 = vpack.c.b16 %v8798, %v8797
      %v8937 = vpack.c.b16 %v8800, %v8799
      %v8938 = vpack.c.b16 %v8802, %v8801
      %v8939 = vpack.c.b16 %v8804, %v8803
      %v8940 = vpack.c.b16 %v8806, %v8805
      %v8941 = vpack.c.b16 %v8808, %v8807
      %v8942 = vpack.c.b16 %v8810, %v8809
      %v8943 = vpack.c.b16 %v8812, %v8811
      %v8944 = vpack.c.b16 %v8814, %v8813
      %v8945 = vpack.c.b16 %v8816, %v8815
      %v8946 = vpack.c.b16 %v8818, %v8817
      %v8947 = vpack.c.b16 %v8820, %v8819
      %v8948 = vpack.c.b16 %v8822, %v8821
      %v8949 = vpack.c.b16 %v8824, %v8823
      %v8950 = vpack.c.b16 %v8826, %v8825
      %v8951 = vpack.c.b16 %v8828, %v8827
      %v8952 = vpack.c.b16 %v8830, %v8829
      %v8953 = vpack.c.b16 %v8832, %v8831
      %v8954 = vpack.c.b16 %v8834, %v8833
      %v8955 = vpack.c.b16 %v8836, %v8835
      %v8956 = vpack.c.b16 %v8838, %v8837
      %v8957 = vpack.c.b16 %v8840, %v8839
      %v8958 = vpack.c.b16 %v8842, %v8841
      %v8959 = vpack.c.b16 %v8844, %v8843
      %v8960 = vpack.c.b16 %v8846, %v8845
      %v8961 = vpack.c.b16 %v8848, %v8847
      %v8962 = vpack.c.b16 %v8850, %v8849
      %v8963 = vpack.c.b16 %v8852, %v8851
      %v8964 = vpack.c.b16 %v8854, %v8853
      %v8965 = vpack.c.b16 %v8856, %v8855
      %v8966 = vpack.c.b16 %v8858, %v8857
      %v8967 = vpack.c.b16 %v8860, %v8859
      %v8968 = vpack.c.b16 %v8862, %v8861
      %v8969 = vpack.c.b16 %v8864, %v8863
      %v8970 = vpack.c.b16 %v8866, %v8865
      %v8971 = vpack.c.b16 %v8868, %v8867
      %v8972 = vpack.c.b16 %v8870, %v8869
      %v8973 = vpack.c.b16 %v8872, %v8871
      %v8974 = vpack.c.b16 %v8874, %v8873
      %v8975 = vpack.c.b16 %v8876, %v8875
      %v8976 = vpack.c.b16 %v8878, %v8877
      %v8977 = vpack.c.b16 %v8880, %v8879
      %v8978 = vpack.c.b16 %v8882, %v8881
      %v8979 = vpack.c.b16 %v8884, %v8883
      %v8980 = vpack.c.b16 %v8886, %v8885
      %v8981 = vpack.c.b16 %v8888, %v8887
      %v8982 = vpack.c.b16 %v8890, %v8889
      %v8983 = vpack.c.b16 %v8892, %v8891
      %v8984 = vpack.c.b16 %v8894, %v8893
      %v8985 = vpack.c.b16 %v8896, %v8895
      %v8986 = vpack.c.b16 %v8898, %v8897
      %v8987 = vpack.c.b16 %v8900, %v8899
      %v8988 = vpack.c.b16 %v8902, %v8901
      %v8989 = vpack.c.b16 %v8904, %v8903
      %v8990 = vpack.c.b16 %v8906, %v8905
      %v8991 = vpack.c.b16 %v8908, %v8907
      %v8992 = vpack.c.b16 %v8910, %v8909
      %v8993 = vpack.c.b16 %v8912, %v8911
      %v8994 = vpack.c.b16 %v8914, %v8913
      %v8995 = vpack.c.b16 %v8916, %v8915
      %v8996 = vpack.c.b16 %v8918, %v8917
      %v8997 = vpack.c.b16 %v8920, %v8919
      %v8998 = vpack.c.b16 %v8922, %v8921
      %v8999 = vpack.c.b16 %v8924, %v8923
      %v9000 = vpack.c.b16 %v8926, %v8925
      %v9001 = vpack.c.b16 %v8928, %v8927
      %v9002 = vpack.c.b16 %v8930, %v8929
      %9075 = vmatprep.subr.bf16.mxu0 0
      %9076 = vmatpush1.bf16.msra.mxu0 %v8938
      %9077 = vmatprep.subr.bf16.mxu0 0
      %9078 = vmatpush1.bf16.msra.mxu0 %v8937
      %9079 = vmatprep.subr.bf16.mxu0 0
      %9080 = vmatpush1.bf16.msra.mxu0 %v8936
      %9081 = vmatprep.subr.bf16.mxu0 0
      %9082 = vmatpush1.bf16.msra.mxu0 %v8935
      %9083 = vmatprep.subr.bf16.mxu0 0
      %9084 = vmatpush1.bf16.msra.mxu0 %v8934
      %9085 = vmatprep.subr.bf16.mxu0 0
      %9086 = vmatpush1.bf16.msra.mxu0 %v8933
      %9087 = vmatprep.subr.bf16.mxu0 0
      %9088 = vmatpush1.bf16.msra.mxu0 %v8932
      %9089 = vmatprep.subr.bf16.mxu0 0
      %9090 = vmatpush1.bf16.msra.mxu0 %v8931
      %9091 = vmatprep.subr.bf16.mxu0 0
      %9092 = vmatpush2.bf16.msra.mxu0 %v8946
      %9093 = vmatprep.subr.bf16.mxu0 0
      %9094 = vmatpush2.bf16.msra.mxu0 %v8945
      %9095 = vmatprep.subr.bf16.mxu0 0
      %9096 = vmatpush2.bf16.msra.mxu0 %v8944
      %9097 = vmatprep.subr.bf16.mxu0 0
      %9098 = vmatpush2.bf16.msra.mxu0 %v8943
      %9099 = vmatprep.subr.bf16.mxu0 0
      %9100 = vmatpush2.bf16.msra.mxu0 %v8942
      %9101 = vmatprep.subr.bf16.mxu0 0
      %9102 = vmatpush2.bf16.msra.mxu0 %v8941
      %9103 = vmatprep.subr.bf16.mxu0 0
      %9104 = vmatpush2.bf16.msra.mxu0 %v8940
      %9105 = vmatprep.subr.bf16.mxu0 0
      %9106 = vmatpush2.bf16.msra.mxu0 %v8939
      %9107 = vmatprep.mubr.bf16.mxu0 %v8355
      %9108 = vmatmul.mubr.bf16.gmra.mxu0 0
      %v9109 = vpop.f32.mrf.mxu0
      %v9110 = vadd.f32 0.0, %v9109
      %v9111 = vpop.f32.mrf.mxu0
      %v9112 = vpop.f32.mrf.mxu0
      %v9113 = vadd.f32 0.0, %v9112
      %v9114 = vpop.f32.mrf.mxu0
      %9115 = vmatprep.mubr.bf16.mxu0 %v8356
      %9116 = vmatmul.mubr.bf16.gmra.mxu0 %v8355
      %v9117 = vpop.f32.mrf.mxu0
      %v9118 = vadd.f32 0.0, %v9117
      %v9119 = vpop.f32.mrf.mxu0
      %v9120 = vpop.f32.mrf.mxu0
      %v9121 = vadd.f32 0.0, %v9120
      %v9122 = vpop.f32.mrf.mxu0
      %9123 = vmatprep.mubr.bf16.mxu0 %v8357
      %9124 = vmatmul.mubr.bf16.gmra.mxu0 %v8356
      %v9125 = vpop.f32.mrf.mxu0
      %v9126 = vadd.f32 0.0, %v9125
      %v9127 = vpop.f32.mrf.mxu0
      %v9128 = vpop.f32.mrf.mxu0
      %v9129 = vadd.f32 0.0, %v9128
      %v9130 = vpop.f32.mrf.mxu0
      %9131 = vmatprep.mubr.bf16.mxu0 %v8358
      %9132 = vmatmul.mubr.bf16.gmra.mxu0 %v8357
      %v9133 = vpop.f32.mrf.mxu0
      %v9134 = vadd.f32 0.0, %v9133
      %v9135 = vpop.f32.mrf.mxu0
      %v9136 = vpop.f32.mrf.mxu0
      %v9137 = vadd.f32 0.0, %v9136
      %v9138 = vpop.f32.mrf.mxu0
      %9139 = vmatprep.mubr.bf16.mxu0 %v8359
      %9140 = vmatmul.mubr.bf16.gmra.mxu0 %v8358
      %v9141 = vpop.f32.mrf.mxu0
      %v9142 = vadd.f32 0.0, %v9141
      %v9143 = vpop.f32.mrf.mxu0
      %v9144 = vpop.f32.mrf.mxu0
      %v9145 = vadd.f32 0.0, %v9144
      %v9146 = vpop.f32.mrf.mxu0
      %9147 = vmatprep.mubr.bf16.mxu0 %v8360
      %9148 = vmatmul.mubr.bf16.gmra.mxu0 %v8359
      %v9149 = vpop.f32.mrf.mxu0
      %v9150 = vadd.f32 0.0, %v9149
      %v9151 = vpop.f32.mrf.mxu0
      %v9152 = vpop.f32.mrf.mxu0
      %v9153 = vadd.f32 0.0, %v9152
      %v9154 = vpop.f32.mrf.mxu0
      %9155 = vmatprep.mubr.bf16.mxu0 %v8361
      %9156 = vmatmul.mubr.bf16.gmra.mxu0 %v8360
      %v9157 = vpop.f32.mrf.mxu0
      %v9158 = vadd.f32 0.0, %v9157
      %v9159 = vpop.f32.mrf.mxu0
      %v9160 = vpop.f32.mrf.mxu0
      %v9161 = vadd.f32 0.0, %v9160
      %v9162 = vpop.f32.mrf.mxu0
      %9163 = vmatprep.mubr.bf16.mxu0 %v8362
      %9164 = vmatmul.mubr.bf16.gmra.mxu0 %v8361
      %v9165 = vpop.f32.mrf.mxu0
      %v9166 = vadd.f32 0.0, %v9165
      %v9167 = vpop.f32.mrf.mxu0
      %v9168 = vpop.f32.mrf.mxu0
      %v9169 = vadd.f32 0.0, %v9168
      %v9170 = vpop.f32.mrf.mxu0
      %9171 = vmatprep.mubr.bf16.mxu0 %v8363
      %9172 = vmatmul.mubr.bf16.gmra.mxu0 %v8362
      %v9173 = vpop.f32.mrf.mxu0
      %v9174 = vadd.f32 0.0, %v9173
      %v9175 = vpop.f32.mrf.mxu0
      %v9176 = vpop.f32.mrf.mxu0
      %v9177 = vadd.f32 0.0, %v9176
      %v9178 = vpop.f32.mrf.mxu0
      %9179 = vmatprep.mubr.bf16.mxu0 %v8364
      %9180 = vmatmul.mubr.bf16.gmra.mxu0 %v8363
      %v9181 = vpop.f32.mrf.mxu0
      %v9182 = vadd.f32 0.0, %v9181
      %v9183 = vpop.f32.mrf.mxu0
      %v9184 = vpop.f32.mrf.mxu0
      %v9185 = vadd.f32 0.0, %v9184
      %v9186 = vpop.f32.mrf.mxu0
      %9187 = vmatprep.mubr.bf16.mxu0 %v8365
      %9188 = vmatmul.mubr.bf16.gmra.mxu0 %v8364
      %v9189 = vpop.f32.mrf.mxu0
      %v9190 = vadd.f32 0.0, %v9189
      %v9191 = vpop.f32.mrf.mxu0
      %v9192 = vpop.f32.mrf.mxu0
      %v9193 = vadd.f32 0.0, %v9192
      %v9194 = vpop.f32.mrf.mxu0
      %9195 = vmatprep.mubr.bf16.mxu0 %v8366
      %9196 = vmatmul.mubr.bf16.gmra.mxu0 %v8365
      %v9197 = vpop.f32.mrf.mxu0
      %v9198 = vadd.f32 0.0, %v9197
      %v9199 = vpop.f32.mrf.mxu0
      %v9200 = vpop.f32.mrf.mxu0
      %v9201 = vadd.f32 0.0, %v9200
      %v9202 = vpop.f32.mrf.mxu0
      %9203 = vmatprep.mubr.bf16.mxu0 %v8367
      %9204 = vmatmul.mubr.bf16.gmra.mxu0 %v8366
      %v9205 = vpop.f32.mrf.mxu0
      %v9206 = vadd.f32 0.0, %v9205
      %v9207 = vpop.f32.mrf.mxu0
      %v9208 = vpop.f32.mrf.mxu0
      %v9209 = vadd.f32 0.0, %v9208
      %v9210 = vpop.f32.mrf.mxu0
      %9211 = vmatprep.mubr.bf16.mxu0 %v8368
      %9212 = vmatmul.mubr.bf16.gmra.mxu0 %v8367
      %v9213 = vpop.f32.mrf.mxu0
      %v9214 = vadd.f32 0.0, %v9213
      %v9215 = vpop.f32.mrf.mxu0
      %v9216 = vpop.f32.mrf.mxu0
      %v9217 = vadd.f32 0.0, %v9216
      %v9218 = vpop.f32.mrf.mxu0
      %9219 = vmatprep.mubr.bf16.mxu0 %v8369
      %9220 = vmatmul.mubr.bf16.gmra.mxu0 %v8368
      %v9221 = vpop.f32.mrf.mxu0
      %v9222 = vadd.f32 0.0, %v9221
      %v9223 = vpop.f32.mrf.mxu0
      %v9224 = vpop.f32.mrf.mxu0
      %v9225 = vadd.f32 0.0, %v9224
      %v9226 = vpop.f32.mrf.mxu0
      %9227 = vmatprep.mubr.bf16.mxu0 %v8370
      %9228 = vmatmul.mubr.bf16.gmra.mxu0 %v8369
      %v9229 = vpop.f32.mrf.mxu0
      %v9230 = vadd.f32 0.0, %v9229
      %v9231 = vpop.f32.mrf.mxu0
      %v9232 = vpop.f32.mrf.mxu0
      %v9233 = vadd.f32 0.0, %v9232
      %v9234 = vpop.f32.mrf.mxu0
      %9235 = vdwg.mxu0
      %9236 = vmatprep.subr.bf16.mxu0 0
      %9237 = vmatpush1.bf16.msra.mxu0 %v8954
      %9238 = vmatprep.subr.bf16.mxu0 0
      %9239 = vmatpush1.bf16.msra.mxu0 %v8953
      %9240 = vmatprep.subr.bf16.mxu0 0
      %9241 = vmatpush1.bf16.msra.mxu0 %v8952
      %9242 = vmatprep.subr.bf16.mxu0 0
      %9243 = vmatpush1.bf16.msra.mxu0 %v8951
      %9244 = vmatprep.subr.bf16.mxu0 0
      %9245 = vmatpush1.bf16.msra.mxu0 %v8950
      %9246 = vmatprep.subr.bf16.mxu0 0
      %9247 = vmatpush1.bf16.msra.mxu0 %v8949
      %9248 = vmatprep.subr.bf16.mxu0 0
      %9249 = vmatpush1.bf16.msra.mxu0 %v8948
      %9250 = vmatprep.subr.bf16.mxu0 0
      %9251 = vmatpush1.bf16.msra.mxu0 %v8947
      %9252 = vmatprep.subr.bf16.mxu0 0
      %9253 = vmatpush2.bf16.msra.mxu0 %v8962
      %9254 = vmatprep.subr.bf16.mxu0 0
      %9255 = vmatpush2.bf16.msra.mxu0 %v8961
      %9256 = vmatprep.subr.bf16.mxu0 0
      %9257 = vmatpush2.bf16.msra.mxu0 %v8960
      %9258 = vmatprep.subr.bf16.mxu0 0
      %9259 = vmatpush2.bf16.msra.mxu0 %v8959
      %9260 = vmatprep.subr.bf16.mxu0 0
      %9261 = vmatpush2.bf16.msra.mxu0 %v8958
      %9262 = vmatprep.subr.bf16.mxu0 0
      %9263 = vmatpush2.bf16.msra.mxu0 %v8957
      %9264 = vmatprep.subr.bf16.mxu0 0
      %9265 = vmatpush2.bf16.msra.mxu0 %v8956
      %9266 = vmatprep.subr.bf16.mxu0 0
      %9267 = vmatpush2.bf16.msra.mxu0 %v8955
      %9268 = vmatprep.mubr.bf16.mxu0 0
      %9269 = vmatmul.mubr.bf16.gmra.mxu0 %v8356
      %v9270 = vpop.f32.mrf.mxu0
      %v9271 = vadd.f32 %v9110, %v9270
      %v9272 = vpop.f32.mrf.mxu0
      %v9273 = vpop.f32.mrf.mxu0
      %v9274 = vadd.f32 %v9113, %v9273
      %v9275 = vpop.f32.mrf.mxu0
      %9276 = vmatprep.mubr.bf16.mxu0 %v8371
      %9277 = vmatmul.mubr.bf16.gmra.mxu0 %v8357
      %v9278 = vpop.f32.mrf.mxu0
      %v9279 = vadd.f32 %v9118, %v9278
      %v9280 = vpop.f32.mrf.mxu0
      %v9281 = vpop.f32.mrf.mxu0
      %v9282 = vadd.f32 %v9121, %v9281
      %v9283 = vpop.f32.mrf.mxu0
      %9284 = vmatprep.mubr.bf16.mxu0 %v8372
      %9285 = vmatmul.mubr.bf16.gmra.mxu0 %v8358
      %v9286 = vpop.f32.mrf.mxu0
      %v9287 = vadd.f32 %v9126, %v9286
      %v9288 = vpop.f32.mrf.mxu0
      %v9289 = vpop.f32.mrf.mxu0
      %v9290 = vadd.f32 %v9129, %v9289
      %v9291 = vpop.f32.mrf.mxu0
      %9292 = vmatprep.mubr.bf16.mxu0 %v8373
      %9293 = vmatmul.mubr.bf16.gmra.mxu0 %v8359
      %v9294 = vpop.f32.mrf.mxu0
      %v9295 = vadd.f32 %v9134, %v9294
      %v9296 = vpop.f32.mrf.mxu0
      %v9297 = vpop.f32.mrf.mxu0
      %v9298 = vadd.f32 %v9137, %v9297
      %v9299 = vpop.f32.mrf.mxu0
      %9300 = vmatprep.mubr.bf16.mxu0 %v8374
      %9301 = vmatmul.mubr.bf16.gmra.mxu0 %v8360
      %v9302 = vpop.f32.mrf.mxu0
      %v9303 = vadd.f32 %v9142, %v9302
      %v9304 = vpop.f32.mrf.mxu0
      %v9305 = vpop.f32.mrf.mxu0
      %v9306 = vadd.f32 %v9145, %v9305
      %v9307 = vpop.f32.mrf.mxu0
      %9308 = vmatprep.mubr.bf16.mxu0 %v8375
      %9309 = vmatmul.mubr.bf16.gmra.mxu0 %v8361
      %v9310 = vpop.f32.mrf.mxu0
      %v9311 = vadd.f32 %v9150, %v9310
      %v9312 = vpop.f32.mrf.mxu0
      %v9313 = vpop.f32.mrf.mxu0
      %v9314 = vadd.f32 %v9153, %v9313
      %v9315 = vpop.f32.mrf.mxu0
      %9316 = vmatprep.mubr.bf16.mxu0 %v8376
      %9317 = vmatmul.mubr.bf16.gmra.mxu0 %v8362
      %v9318 = vpop.f32.mrf.mxu0
      %v9319 = vadd.f32 %v9158, %v9318
      %v9320 = vpop.f32.mrf.mxu0
      %v9321 = vpop.f32.mrf.mxu0
      %v9322 = vadd.f32 %v9161, %v9321
      %v9323 = vpop.f32.mrf.mxu0
      %9324 = vmatprep.mubr.bf16.mxu0 %v8377
      %9325 = vmatmul.mubr.bf16.gmra.mxu0 %v8363
      %v9326 = vpop.f32.mrf.mxu0
      %v9327 = vadd.f32 %v9166, %v9326
      %v9328 = vpop.f32.mrf.mxu0
      %v9329 = vpop.f32.mrf.mxu0
      %v9330 = vadd.f32 %v9169, %v9329
      %v9331 = vpop.f32.mrf.mxu0
      %9332 = vmatprep.mubr.bf16.mxu0 %v8378
      %9333 = vmatmul.mubr.bf16.gmra.mxu0 %v8364
      %v9334 = vpop.f32.mrf.mxu0
      %v9335 = vadd.f32 %v9174, %v9334
      %v9336 = vpop.f32.mrf.mxu0
      %v9337 = vpop.f32.mrf.mxu0
      %v9338 = vadd.f32 %v9177, %v9337
      %v9339 = vpop.f32.mrf.mxu0
      %9340 = vmatprep.mubr.bf16.mxu0 %v8379
      %9341 = vmatmul.mubr.bf16.gmra.mxu0 %v8365
      %v9342 = vpop.f32.mrf.mxu0
      %v9343 = vadd.f32 %v9182, %v9342
      %v9344 = vpop.f32.mrf.mxu0
      %v9345 = vpop.f32.mrf.mxu0
      %v9346 = vadd.f32 %v9185, %v9345
      %v9347 = vpop.f32.mrf.mxu0
      %9348 = vmatprep.mubr.bf16.mxu0 %v8380
      %9349 = vmatmul.mubr.bf16.gmra.mxu0 %v8366
      %v9350 = vpop.f32.mrf.mxu0
      %v9351 = vadd.f32 %v9190, %v9350
      %v9352 = vpop.f32.mrf.mxu0
      %v9353 = vpop.f32.mrf.mxu0
      %v9354 = vadd.f32 %v9193, %v9353
      %v9355 = vpop.f32.mrf.mxu0
      %9356 = vmatprep.mubr.bf16.mxu0 %v8381
      %9357 = vmatmul.mubr.bf16.gmra.mxu0 %v8367
      %v9358 = vpop.f32.mrf.mxu0
      %v9359 = vadd.f32 %v9198, %v9358
      %v9360 = vpop.f32.mrf.mxu0
      %v9361 = vpop.f32.mrf.mxu0
      %v9362 = vadd.f32 %v9201, %v9361
      %v9363 = vpop.f32.mrf.mxu0
      %9364 = vmatprep.mubr.bf16.mxu0 %v8382
      %9365 = vmatmul.mubr.bf16.gmra.mxu0 %v8368
      %v9366 = vpop.f32.mrf.mxu0
      %v9367 = vadd.f32 %v9206, %v9366
      %v9368 = vpop.f32.mrf.mxu0
      %v9369 = vpop.f32.mrf.mxu0
      %v9370 = vadd.f32 %v9209, %v9369
      %v9371 = vpop.f32.mrf.mxu0
      %9372 = vmatprep.mubr.bf16.mxu0 %v8383
      %9373 = vmatmul.mubr.bf16.gmra.mxu0 %v8369
      %v9374 = vpop.f32.mrf.mxu0
      %v9375 = vadd.f32 %v9214, %v9374
      %v9376 = vpop.f32.mrf.mxu0
      %v9377 = vpop.f32.mrf.mxu0
      %v9378 = vadd.f32 %v9217, %v9377
      %v9379 = vpop.f32.mrf.mxu0
      %9380 = vmatprep.mubr.bf16.mxu0 %v8384
      %9381 = vmatmul.mubr.bf16.gmra.mxu0 %v8370
      %v9382 = vpop.f32.mrf.mxu0
      %v9383 = vadd.f32 %v9222, %v9382
      %v9384 = vpop.f32.mrf.mxu0
      %v9385 = vpop.f32.mrf.mxu0
      %v9386 = vadd.f32 %v9225, %v9385
      %v9387 = vpop.f32.mrf.mxu0
      %9388 = vmatprep.mubr.bf16.mxu0 %v8385
      %9389 = vmatmul.mubr.bf16.gmra.mxu0 0
      %v9390 = vpop.f32.mrf.mxu0
      %v9391 = vadd.f32 %v9230, %v9390
      %v9392 = vpop.f32.mrf.mxu0
      %v9393 = vpop.f32.mrf.mxu0
      %v9394 = vadd.f32 %v9233, %v9393
      %v9395 = vpop.f32.mrf.mxu0
      %9396 = vdwg.mxu0
      %9397 = vmatprep.subr.bf16.mxu0 0
      %9398 = vmatpush1.bf16.msra.mxu0 %v8970
      %9399 = vmatprep.subr.bf16.mxu0 0
      %9400 = vmatpush1.bf16.msra.mxu0 %v8969
      %9401 = vmatprep.subr.bf16.mxu0 0
      %9402 = vmatpush1.bf16.msra.mxu0 %v8968
      %9403 = vmatprep.subr.bf16.mxu0 0
      %9404 = vmatpush1.bf16.msra.mxu0 %v8967
      %9405 = vmatprep.subr.bf16.mxu0 0
      %9406 = vmatpush1.bf16.msra.mxu0 %v8966
      %9407 = vmatprep.subr.bf16.mxu0 0
      %9408 = vmatpush1.bf16.msra.mxu0 %v8965
      %9409 = vmatprep.subr.bf16.mxu0 0
      %9410 = vmatpush1.bf16.msra.mxu0 %v8964
      %9411 = vmatprep.subr.bf16.mxu0 0
      %9412 = vmatpush1.bf16.msra.mxu0 %v8963
      %9413 = vmatprep.subr.bf16.mxu0 0
      %9414 = vmatpush2.bf16.msra.mxu0 %v8978
      %9415 = vmatprep.subr.bf16.mxu0 0
      %9416 = vmatpush2.bf16.msra.mxu0 %v8977
      %9417 = vmatprep.subr.bf16.mxu0 0
      %9418 = vmatpush2.bf16.msra.mxu0 %v8976
      %9419 = vmatprep.subr.bf16.mxu0 0
      %9420 = vmatpush2.bf16.msra.mxu0 %v8975
      %9421 = vmatprep.subr.bf16.mxu0 0
      %9422 = vmatpush2.bf16.msra.mxu0 %v8974
      %9423 = vmatprep.subr.bf16.mxu0 0
      %9424 = vmatpush2.bf16.msra.mxu0 %v8973
      %9425 = vmatprep.subr.bf16.mxu0 0
      %9426 = vmatpush2.bf16.msra.mxu0 %v8972
      %9427 = vmatprep.subr.bf16.mxu0 0
      %9428 = vmatpush2.bf16.msra.mxu0 %v8971
      %9429 = vmatprep.mubr.bf16.mxu0 %v8372
      %9430 = vmatmul.mubr.bf16.gmra.mxu0 %v8371
      %v9431 = vpop.f32.mrf.mxu0
      %v9432 = vadd.f32 %v9271, %v9431
      %v9433 = vpop.f32.mrf.mxu0
      %v9434 = vpop.f32.mrf.mxu0
      %v9435 = vadd.f32 %v9274, %v9434
      %v9436 = vpop.f32.mrf.mxu0
      %9437 = vmatprep.mubr.bf16.mxu0 %v8373
      %9438 = vmatmul.mubr.bf16.gmra.mxu0 %v8372
      %v9439 = vpop.f32.mrf.mxu0
      %v9440 = vadd.f32 %v9279, %v9439
      %v9441 = vpop.f32.mrf.mxu0
      %v9442 = vpop.f32.mrf.mxu0
      %v9443 = vadd.f32 %v9282, %v9442
      %v9444 = vpop.f32.mrf.mxu0
      %9445 = vmatprep.mubr.bf16.mxu0 %v8374
      %9446 = vmatmul.mubr.bf16.gmra.mxu0 %v8373
      %v9447 = vpop.f32.mrf.mxu0
      %v9448 = vadd.f32 %v9287, %v9447
      %v9449 = vpop.f32.mrf.mxu0
      %v9450 = vpop.f32.mrf.mxu0
      %v9451 = vadd.f32 %v9290, %v9450
      %v9452 = vpop.f32.mrf.mxu0
      %9453 = vmatprep.mubr.bf16.mxu0 %v8375
      %9454 = vmatmul.mubr.bf16.gmra.mxu0 %v8374
      %v9455 = vpop.f32.mrf.mxu0
      %v9456 = vadd.f32 %v9295, %v9455
      %v9457 = vpop.f32.mrf.mxu0
      %v9458 = vpop.f32.mrf.mxu0
      %v9459 = vadd.f32 %v9298, %v9458
      %v9460 = vpop.f32.mrf.mxu0
      %9461 = vmatprep.mubr.bf16.mxu0 %v8376
      %9462 = vmatmul.mubr.bf16.gmra.mxu0 %v8375
      %v9463 = vpop.f32.mrf.mxu0
      %v9464 = vadd.f32 %v9303, %v9463
      %v9465 = vpop.f32.mrf.mxu0
      %v9466 = vpop.f32.mrf.mxu0
      %v9467 = vadd.f32 %v9306, %v9466
      %v9468 = vpop.f32.mrf.mxu0
      %9469 = vmatprep.mubr.bf16.mxu0 %v8377
      %9470 = vmatmul.mubr.bf16.gmra.mxu0 %v8376
      %v9471 = vpop.f32.mrf.mxu0
      %v9472 = vadd.f32 %v9311, %v9471
      %v9473 = vpop.f32.mrf.mxu0
      %v9474 = vpop.f32.mrf.mxu0
      %v9475 = vadd.f32 %v9314, %v9474
      %v9476 = vpop.f32.mrf.mxu0
      %9477 = vmatprep.mubr.bf16.mxu0 %v8378
      %9478 = vmatmul.mubr.bf16.gmra.mxu0 %v8377
      %v9479 = vpop.f32.mrf.mxu0
      %v9480 = vadd.f32 %v9319, %v9479
      %v9481 = vpop.f32.mrf.mxu0
      %v9482 = vpop.f32.mrf.mxu0
      %v9483 = vadd.f32 %v9322, %v9482
      %v9484 = vpop.f32.mrf.mxu0
      %9485 = vmatprep.mubr.bf16.mxu0 %v8379
      %9486 = vmatmul.mubr.bf16.gmra.mxu0 %v8378
      %v9487 = vpop.f32.mrf.mxu0
      %v9488 = vadd.f32 %v9327, %v9487
      %v9489 = vpop.f32.mrf.mxu0
      %v9490 = vpop.f32.mrf.mxu0
      %v9491 = vadd.f32 %v9330, %v9490
      %v9492 = vpop.f32.mrf.mxu0
      %9493 = vmatprep.mubr.bf16.mxu0 %v8380
      %9494 = vmatmul.mubr.bf16.gmra.mxu0 %v8379
      %v9495 = vpop.f32.mrf.mxu0
      %v9496 = vadd.f32 %v9335, %v9495
      %v9497 = vpop.f32.mrf.mxu0
      %v9498 = vpop.f32.mrf.mxu0
      %v9499 = vadd.f32 %v9338, %v9498
      %v9500 = vpop.f32.mrf.mxu0
      %9501 = vmatprep.mubr.bf16.mxu0 %v8381
      %9502 = vmatmul.mubr.bf16.gmra.mxu0 %v8380
      %v9503 = vpop.f32.mrf.mxu0
      %v9504 = vadd.f32 %v9343, %v9503
      %v9505 = vpop.f32.mrf.mxu0
      %v9506 = vpop.f32.mrf.mxu0
      %v9507 = vadd.f32 %v9346, %v9506
      %v9508 = vpop.f32.mrf.mxu0
      %9509 = vmatprep.mubr.bf16.mxu0 %v8382
      %9510 = vmatmul.mubr.bf16.gmra.mxu0 %v8381
      %v9511 = vpop.f32.mrf.mxu0
      %v9512 = vadd.f32 %v9351, %v9511
      %v9513 = vpop.f32.mrf.mxu0
      %v9514 = vpop.f32.mrf.mxu0
      %v9515 = vadd.f32 %v9354, %v9514
      %v9516 = vpop.f32.mrf.mxu0
      %9517 = vmatprep.mubr.bf16.mxu0 %v8383
      %9518 = vmatmul.mubr.bf16.gmra.mxu0 %v8382
      %v9519 = vpop.f32.mrf.mxu0
      %v9520 = vadd.f32 %v9359, %v9519
      %v9521 = vpop.f32.mrf.mxu0
      %v9522 = vpop.f32.mrf.mxu0
      %v9523 = vadd.f32 %v9362, %v9522
      %v9524 = vpop.f32.mrf.mxu0
      %9525 = vmatprep.mubr.bf16.mxu0 %v8384
      %9526 = vmatmul.mubr.bf16.gmra.mxu0 %v8383
      %v9527 = vpop.f32.mrf.mxu0
      %v9528 = vadd.f32 %v9367, %v9527
      %v9529 = vpop.f32.mrf.mxu0
      %v9530 = vpop.f32.mrf.mxu0
      %v9531 = vadd.f32 %v9370, %v9530
      %v9532 = vpop.f32.mrf.mxu0
      %9533 = vmatprep.mubr.bf16.mxu0 %v8385
      %9534 = vmatmul.mubr.bf16.gmra.mxu0 %v8384
      %v9535 = vpop.f32.mrf.mxu0
      %v9536 = vadd.f32 %v9375, %v9535
      %v9537 = vpop.f32.mrf.mxu0
      %v9538 = vpop.f32.mrf.mxu0
      %v9539 = vadd.f32 %v9378, %v9538
      %v9540 = vpop.f32.mrf.mxu0
      %9541 = vmatprep.mubr.bf16.mxu0 %v8386
      %9542 = vmatmul.mubr.bf16.gmra.mxu0 %v8385
      %v9543 = vpop.f32.mrf.mxu0
      %v9544 = vadd.f32 %v9383, %v9543
      %v9545 = vpop.f32.mrf.mxu0
      %v9546 = vpop.f32.mrf.mxu0
      %v9547 = vadd.f32 %v9386, %v9546
      %v9548 = vpop.f32.mrf.mxu0
      %9549 = vmatprep.mubr.bf16.mxu0 0
      %9550 = vmatmul.mubr.bf16.gmra.mxu0 %v8386
      %v9551 = vpop.f32.mrf.mxu0
      %v9552 = vadd.f32 %v9391, %v9551
      %v9553 = vpop.f32.mrf.mxu0
      %v9554 = vpop.f32.mrf.mxu0
      %v9555 = vadd.f32 %v9394, %v9554
      %v9556 = vpop.f32.mrf.mxu0
      %9557 = vdwg.mxu0
      %9558 = vmatprep.subr.bf16.mxu0 0
      %9559 = vmatpush1.bf16.msra.mxu0 %v8986
      %9560 = vmatprep.subr.bf16.mxu0 0
      %9561 = vmatpush1.bf16.msra.mxu0 %v8985
      %9562 = vmatprep.subr.bf16.mxu0 0
      %9563 = vmatpush1.bf16.msra.mxu0 %v8984
      %9564 = vmatprep.subr.bf16.mxu0 0
      %9565 = vmatpush1.bf16.msra.mxu0 %v8983
      %9566 = vmatprep.subr.bf16.mxu0 0
      %9567 = vmatpush1.bf16.msra.mxu0 %v8982
      %9568 = vmatprep.subr.bf16.mxu0 0
      %9569 = vmatpush1.bf16.msra.mxu0 %v8981
      %9570 = vmatprep.subr.bf16.mxu0 0
      %9571 = vmatpush1.bf16.msra.mxu0 %v8980
      %9572 = vmatprep.subr.bf16.mxu0 0
      %9573 = vmatpush1.bf16.msra.mxu0 %v8979
      %9574 = vmatprep.subr.bf16.mxu0 0
      %9575 = vmatpush2.bf16.msra.mxu0 %v8994
      %9576 = vmatprep.subr.bf16.mxu0 0
      %9577 = vmatpush2.bf16.msra.mxu0 %v8993
      %9578 = vmatprep.subr.bf16.mxu0 0
      %9579 = vmatpush2.bf16.msra.mxu0 %v8992
      %9580 = vmatprep.subr.bf16.mxu0 0
      %9581 = vmatpush2.bf16.msra.mxu0 %v8991
      %9582 = vmatprep.subr.bf16.mxu0 0
      %9583 = vmatpush2.bf16.msra.mxu0 %v8990
      %9584 = vmatprep.subr.bf16.mxu0 0
      %9585 = vmatpush2.bf16.msra.mxu0 %v8989
      %9586 = vmatprep.subr.bf16.mxu0 0
      %9587 = vmatpush2.bf16.msra.mxu0 %v8988
      %9588 = vmatprep.subr.bf16.mxu0 0
      %9589 = vmatpush2.bf16.msra.mxu0 %v8987
      %9590 = vmatprep.mubr.bf16.mxu0 %v8483
      %9591 = vmatmul.mubr.bf16.gmra.mxu0 0
      %v9592 = vpop.f32.mrf.mxu0
      %v9593 = vadd.f32 %v9432, %v9592
      %v9594 = vpop.f32.mrf.mxu0
      %v9595 = vpop.f32.mrf.mxu0
      %v9596 = vadd.f32 %v9435, %v9595
      %v9597 = vpop.f32.mrf.mxu0
      %9598 = vmatprep.mubr.bf16.mxu0 %v8484
      %9599 = vmatmul.mubr.bf16.gmra.mxu0 %v8483
      %v9600 = vpop.f32.mrf.mxu0
      %v9601 = vadd.f32 %v9440, %v9600
      %v9602 = vpop.f32.mrf.mxu0
      %v9603 = vpop.f32.mrf.mxu0
      %v9604 = vadd.f32 %v9443, %v9603
      %v9605 = vpop.f32.mrf.mxu0
      %9606 = vmatprep.mubr.bf16.mxu0 %v8485
      %9607 = vmatmul.mubr.bf16.gmra.mxu0 %v8484
      %v9608 = vpop.f32.mrf.mxu0
      %v9609 = vadd.f32 %v9448, %v9608
      %v9610 = vpop.f32.mrf.mxu0
      %v9611 = vpop.f32.mrf.mxu0
      %v9612 = vadd.f32 %v9451, %v9611
      %v9613 = vpop.f32.mrf.mxu0
      %9614 = vmatprep.mubr.bf16.mxu0 %v8486
      %9615 = vmatmul.mubr.bf16.gmra.mxu0 %v8485
      %v9616 = vpop.f32.mrf.mxu0
      %v9617 = vadd.f32 %v9456, %v9616
      %v9618 = vpop.f32.mrf.mxu0
      %v9619 = vpop.f32.mrf.mxu0
      %v9620 = vadd.f32 %v9459, %v9619
      %v9621 = vpop.f32.mrf.mxu0
      %9622 = vmatprep.mubr.bf16.mxu0 %v8487
      %9623 = vmatmul.mubr.bf16.gmra.mxu0 %v8486
      %v9624 = vpop.f32.mrf.mxu0
      %v9625 = vadd.f32 %v9464, %v9624
      %v9626 = vpop.f32.mrf.mxu0
      %v9627 = vpop.f32.mrf.mxu0
      %v9628 = vadd.f32 %v9467, %v9627
      %v9629 = vpop.f32.mrf.mxu0
      %9630 = vmatprep.mubr.bf16.mxu0 %v8488
      %9631 = vmatmul.mubr.bf16.gmra.mxu0 %v8487
      %v9632 = vpop.f32.mrf.mxu0
      %v9633 = vadd.f32 %v9472, %v9632
      %v9634 = vpop.f32.mrf.mxu0
      %v9635 = vpop.f32.mrf.mxu0
      %v9636 = vadd.f32 %v9475, %v9635
      %v9637 = vpop.f32.mrf.mxu0
      %9638 = vmatprep.mubr.bf16.mxu0 %v8489
      %9639 = vmatmul.mubr.bf16.gmra.mxu0 %v8488
      %v9640 = vpop.f32.mrf.mxu0
      %v9641 = vadd.f32 %v9480, %v9640
      %v9642 = vpop.f32.mrf.mxu0
      %v9643 = vpop.f32.mrf.mxu0
      %v9644 = vadd.f32 %v9483, %v9643
      %v9645 = vpop.f32.mrf.mxu0
      %9646 = vmatprep.mubr.bf16.mxu0 %v8490
      %9647 = vmatmul.mubr.bf16.gmra.mxu0 %v8489
      %v9648 = vpop.f32.mrf.mxu0
      %v9649 = vadd.f32 %v9488, %v9648
      %v9650 = vpop.f32.mrf.mxu0
      %v9651 = vpop.f32.mrf.mxu0
      %v9652 = vadd.f32 %v9491, %v9651
      %v9653 = vpop.f32.mrf.mxu0
      %9654 = vmatprep.mubr.bf16.mxu0 %v8491
      %9655 = vmatmul.mubr.bf16.gmra.mxu0 %v8490
      %v9656 = vpop.f32.mrf.mxu0
      %v9657 = vadd.f32 %v9496, %v9656
      %v9658 = vpop.f32.mrf.mxu0
      %v9659 = vpop.f32.mrf.mxu0
      %v9660 = vadd.f32 %v9499, %v9659
      %v9661 = vpop.f32.mrf.mxu0
      %9662 = vmatprep.mubr.bf16.mxu0 %v8492
      %9663 = vmatmul.mubr.bf16.gmra.mxu0 %v8491
      %v9664 = vpop.f32.mrf.mxu0
      %v9665 = vadd.f32 %v9504, %v9664
      %v9666 = vpop.f32.mrf.mxu0
      %v9667 = vpop.f32.mrf.mxu0
      %v9668 = vadd.f32 %v9507, %v9667
      %v9669 = vpop.f32.mrf.mxu0
      %9670 = vmatprep.mubr.bf16.mxu0 %v8493
      %9671 = vmatmul.mubr.bf16.gmra.mxu0 %v8492
      %v9672 = vpop.f32.mrf.mxu0
      %v9673 = vadd.f32 %v9512, %v9672
      %v9674 = vpop.f32.mrf.mxu0
      %v9675 = vpop.f32.mrf.mxu0
      %v9676 = vadd.f32 %v9515, %v9675
      %v9677 = vpop.f32.mrf.mxu0
      %9678 = vmatprep.mubr.bf16.mxu0 %v8494
      %9679 = vmatmul.mubr.bf16.gmra.mxu0 %v8493
      %v9680 = vpop.f32.mrf.mxu0
      %v9681 = vadd.f32 %v9520, %v9680
      %v9682 = vpop.f32.mrf.mxu0
      %v9683 = vpop.f32.mrf.mxu0
      %v9684 = vadd.f32 %v9523, %v9683
      %v9685 = vpop.f32.mrf.mxu0
      %9686 = vmatprep.mubr.bf16.mxu0 %v8495
      %9687 = vmatmul.mubr.bf16.gmra.mxu0 %v8494
      %v9688 = vpop.f32.mrf.mxu0
      %v9689 = vadd.f32 %v9528, %v9688
      %v9690 = vpop.f32.mrf.mxu0
      %v9691 = vpop.f32.mrf.mxu0
      %v9692 = vadd.f32 %v9531, %v9691
      %v9693 = vpop.f32.mrf.mxu0
      %9694 = vmatprep.mubr.bf16.mxu0 %v8496
      %9695 = vmatmul.mubr.bf16.gmra.mxu0 %v8495
      %v9696 = vpop.f32.mrf.mxu0
      %v9697 = vadd.f32 %v9536, %v9696
      %v9698 = vpop.f32.mrf.mxu0
      %v9699 = vpop.f32.mrf.mxu0
      %v9700 = vadd.f32 %v9539, %v9699
      %v9701 = vpop.f32.mrf.mxu0
      %9702 = vmatprep.mubr.bf16.mxu0 %v8497
      %9703 = vmatmul.mubr.bf16.gmra.mxu0 %v8496
      %v9704 = vpop.f32.mrf.mxu0
      %v9705 = vadd.f32 %v9544, %v9704
      %v9706 = vpop.f32.mrf.mxu0
      %v9707 = vpop.f32.mrf.mxu0
      %v9708 = vadd.f32 %v9547, %v9707
      %v9709 = vpop.f32.mrf.mxu0
      %9710 = vmatprep.mubr.bf16.mxu0 %v8498
      %9711 = vmatmul.mubr.bf16.gmra.mxu0 %v8497
      %v9712 = vpop.f32.mrf.mxu0
      %v9713 = vadd.f32 %v9552, %v9712
      %v9714 = vpop.f32.mrf.mxu0
      %v9715 = vpop.f32.mrf.mxu0
      %v9716 = vadd.f32 %v9555, %v9715
      %v9717 = vpop.f32.mrf.mxu0
      %9718 = vdwg.mxu0
      %9719 = vmatprep.subr.bf16.mxu0 0
      %9720 = vmatpush1.bf16.msra.mxu0 %v9002
      %9721 = vmatprep.subr.bf16.mxu0 0
      %9722 = vmatpush1.bf16.msra.mxu0 %v9001
      %9723 = vmatprep.subr.bf16.mxu0 0
      %9724 = vmatpush1.bf16.msra.mxu0 %v9000
      %9725 = vmatprep.subr.bf16.mxu0 0
      %9726 = vmatpush1.bf16.msra.mxu0 %v8999
      %9727 = vmatprep.subr.bf16.mxu0 0
      %9728 = vmatpush1.bf16.msra.mxu0 %v8998
      %9729 = vmatprep.subr.bf16.mxu0 0
      %9730 = vmatpush1.bf16.msra.mxu0 %v8997
      %9731 = vmatprep.subr.bf16.mxu0 0
      %9732 = vmatpush1.bf16.msra.mxu0 %v8996
      %9733 = vmatprep.subr.bf16.mxu0 0
      %9734 = vmatpush1.bf16.msra.mxu0 %v8995
      %9735 = vmatprep.subr.bf16.mxu0 0
      %9736 = vmatpush2.bf16.msra.mxu0 0
      %9737 = vmatprep.subr.bf16.mxu0 0
      %9738 = vmatpush2.bf16.msra.mxu0 0
      %9739 = vmatprep.subr.bf16.mxu0 0
      %9740 = vmatpush2.bf16.msra.mxu0 0
      %9741 = vmatprep.subr.bf16.mxu0 0
      %9742 = vmatpush2.bf16.msra.mxu0 0
      %9743 = vmatprep.subr.bf16.mxu0 0
      %9744 = vmatpush2.bf16.msra.mxu0 0
      %9745 = vmatprep.subr.bf16.mxu0 0
      %9746 = vmatpush2.bf16.msra.mxu0 0
      %9747 = vmatprep.subr.bf16.mxu0 0
      %9748 = vmatpush2.bf16.msra.mxu0 0
      %9749 = vmatprep.subr.bf16.mxu0 0
      %9750 = vmatpush2.bf16.msra.mxu0 0
      %9751 = vmatprep.mubr.bf16.mxu0 0
      %9752 = vmatmul.mubr.bf16.gmra.mxu0 %v8484
      %v9753 = vpop.f32.mrf.mxu0
      %v9754 = vadd.f32 %v9593, %v9753
      %v9755 = vpop.f32.mrf.mxu0
      %v9756 = vpop.f32.mrf.mxu0
      %v9757 = vadd.f32 %v9596, %v9756
      %v9758 = vpop.f32.mrf.mxu0
      %9759 = vmatprep.mubr.bf16.mxu0 0
      %9760 = vmatmul.mubr.bf16.gmra.mxu0 %v8485
      %v9761 = vpop.f32.mrf.mxu0
      %v9762 = vadd.f32 %v9601, %v9761
      %v9763 = vpop.f32.mrf.mxu0
      %v9764 = vpop.f32.mrf.mxu0
      %v9765 = vadd.f32 %v9604, %v9764
      %v9766 = vpop.f32.mrf.mxu0
      %9767 = vmatprep.mubr.bf16.mxu0 0
      %9768 = vmatmul.mubr.bf16.gmra.mxu0 %v8486
      %v9769 = vpop.f32.mrf.mxu0
      %v9770 = vadd.f32 %v9609, %v9769
      %v9771 = vpop.f32.mrf.mxu0
      %v9772 = vpop.f32.mrf.mxu0
      %v9773 = vadd.f32 %v9612, %v9772
      %v9774 = vpop.f32.mrf.mxu0
      %9775 = vmatprep.mubr.bf16.mxu0 0
      %9776 = vmatmul.mubr.bf16.gmra.mxu0 %v8487
      %v9777 = vpop.f32.mrf.mxu0
      %v9778 = vadd.f32 %v9617, %v9777
      %v9779 = vpop.f32.mrf.mxu0
      %v9780 = vpop.f32.mrf.mxu0
      %v9781 = vadd.f32 %v9620, %v9780
      %v9782 = vpop.f32.mrf.mxu0
      %9783 = vmatprep.mubr.bf16.mxu0 0
      %9784 = vmatmul.mubr.bf16.gmra.mxu0 %v8488
      %v9785 = vpop.f32.mrf.mxu0
      %v9786 = vadd.f32 %v9625, %v9785
      %v9787 = vpop.f32.mrf.mxu0
      %v9788 = vpop.f32.mrf.mxu0
      %v9789 = vadd.f32 %v9628, %v9788
      %v9790 = vpop.f32.mrf.mxu0
      %9791 = vmatprep.mubr.bf16.mxu0 0
      %9792 = vmatmul.mubr.bf16.gmra.mxu0 %v8489
      %v9793 = vpop.f32.mrf.mxu0
      %v9794 = vadd.f32 %v9633, %v9793
      %v9795 = vpop.f32.mrf.mxu0
      %v9796 = vpop.f32.mrf.mxu0
      %v9797 = vadd.f32 %v9636, %v9796
      %v9798 = vpop.f32.mrf.mxu0
      %9799 = vmatprep.mubr.bf16.mxu0 0
      %9800 = vmatmul.mubr.bf16.gmra.mxu0 %v8490
      %v9801 = vpop.f32.mrf.mxu0
      %v9802 = vadd.f32 %v9641, %v9801
      %v9803 = vpop.f32.mrf.mxu0
      %v9804 = vpop.f32.mrf.mxu0
      %v9805 = vadd.f32 %v9644, %v9804
      %v9806 = vpop.f32.mrf.mxu0
      %9807 = vmatprep.mubr.bf16.mxu0 0
      %9808 = vmatmul.mubr.bf16.gmra.mxu0 %v8491
      %v9809 = vpop.f32.mrf.mxu0
      %v9810 = vadd.f32 %v9649, %v9809
      %v9811 = vpop.f32.mrf.mxu0
      %v9812 = vpop.f32.mrf.mxu0
      %v9813 = vadd.f32 %v9652, %v9812
      %v9814 = vpop.f32.mrf.mxu0
      %9815 = vmatprep.mubr.bf16.mxu0 0
      %9816 = vmatmul.mubr.bf16.gmra.mxu0 %v8492
      %v9817 = vpop.f32.mrf.mxu0
      %v9818 = vadd.f32 %v9657, %v9817
      %v9819 = vpop.f32.mrf.mxu0
      %v9820 = vpop.f32.mrf.mxu0
      %v9821 = vadd.f32 %v9660, %v9820
      %v9822 = vpop.f32.mrf.mxu0
      %9823 = vmatprep.mubr.bf16.mxu0 0
      %9824 = vmatmul.mubr.bf16.gmra.mxu0 %v8493
      %v9825 = vpop.f32.mrf.mxu0
      %v9826 = vadd.f32 %v9665, %v9825
      %v9827 = vpop.f32.mrf.mxu0
      %v9828 = vpop.f32.mrf.mxu0
      %v9829 = vadd.f32 %v9668, %v9828
      %v9830 = vpop.f32.mrf.mxu0
      %9831 = vmatprep.mubr.bf16.mxu0 0
      %9832 = vmatmul.mubr.bf16.gmra.mxu0 %v8494
      %v9833 = vpop.f32.mrf.mxu0
      %v9834 = vadd.f32 %v9673, %v9833
      %v9835 = vpop.f32.mrf.mxu0
      %v9836 = vpop.f32.mrf.mxu0
      %v9837 = vadd.f32 %v9676, %v9836
      %v9838 = vpop.f32.mrf.mxu0
      %9839 = vmatprep.mubr.bf16.mxu0 0
      %9840 = vmatmul.mubr.bf16.gmra.mxu0 %v8495
      %v9841 = vpop.f32.mrf.mxu0
      %v9842 = vadd.f32 %v9681, %v9841
      %v9843 = vpop.f32.mrf.mxu0
      %v9844 = vpop.f32.mrf.mxu0
      %v9845 = vadd.f32 %v9684, %v9844
      %v9846 = vpop.f32.mrf.mxu0
      %9847 = vmatprep.mubr.bf16.mxu0 0
      %9848 = vmatmul.mubr.bf16.gmra.mxu0 %v8496
      %v9849 = vpop.f32.mrf.mxu0
      %v9850 = vadd.f32 %v9689, %v9849
      %v9851 = vpop.f32.mrf.mxu0
      %v9852 = vpop.f32.mrf.mxu0
      %v9853 = vadd.f32 %v9692, %v9852
      %v9854 = vpop.f32.mrf.mxu0
      %9855 = vmatprep.mubr.bf16.mxu0 0
      %9856 = vmatmul.mubr.bf16.gmra.mxu0 %v8497
      %v9857 = vpop.f32.mrf.mxu0
      %v9858 = vadd.f32 %v9697, %v9857
      %v9859 = vpop.f32.mrf.mxu0
      %v9860 = vpop.f32.mrf.mxu0
      %v9861 = vadd.f32 %v9700, %v9860
      %v9862 = vpop.f32.mrf.mxu0
      %9863 = vmatprep.mubr.bf16.mxu0 0
      %9864 = vmatmul.mubr.bf16.gmra.mxu0 %v8498
      %v9865 = vpop.f32.mrf.mxu0
      %v9866 = vadd.f32 %v9705, %v9865
      %v9867 = vpop.f32.mrf.mxu0
      %v9868 = vpop.f32.mrf.mxu0
      %v9869 = vadd.f32 %v9708, %v9868
      %v9870 = vpop.f32.mrf.mxu0
      %9871 = vmatprep.mubr.bf16.mxu0 0
      %9872 = vmatmul.mubr.bf16.gmra.mxu0 0
      %v9873 = vpop.f32.mrf.mxu0
      %v9874 = vadd.f32 %v9713, %v9873
      %v9875 = vpop.f32.mrf.mxu0
      %v9876 = vpop.f32.mrf.mxu0
      %v9877 = vadd.f32 %v9716, %v9876
      %v9878 = vpop.f32.mrf.mxu0
      %9879 = vdwg.mxu0
      %v9880 = vld [vmem:[%s7] sm:$0x1]
      %v9881 = vlaneseq
      %v9882 = vshrl.u32 %v9881, 7
      %v9883 = vsub.s32 0, %v9882
      %v9884 = vrot.slane %v9880, %v9883
      %v9885 = vmul.f32 %v9754, %v9884
      %v9886 = vmul.f32 %v9757, %v9884
      %v9887 = vmul.f32 %v9762, %v9884
      %v9888 = vmul.f32 %v9765, %v9884
      %v9889 = vmul.f32 %v9770, %v9884
      %v9890 = vmul.f32 %v9773, %v9884
      %v9891 = vmul.f32 %v9778, %v9884
      %v9892 = vmul.f32 %v9781, %v9884
      %v9893 = vmul.f32 %v9786, %v9884
      %v9894 = vmul.f32 %v9789, %v9884
      %v9895 = vmul.f32 %v9794, %v9884
      %v9896 = vmul.f32 %v9797, %v9884
      %v9897 = vmul.f32 %v9802, %v9884
      %v9898 = vmul.f32 %v9805, %v9884
      %v9899 = vmul.f32 %v9810, %v9884
      %v9900 = vmul.f32 %v9813, %v9884
      %v9901 = vmul.f32 %v9818, %v9884
      %v9902 = vmul.f32 %v9821, %v9884
      %v9903 = vmul.f32 %v9826, %v9884
      %v9904 = vmul.f32 %v9829, %v9884
      %v9905 = vmul.f32 %v9834, %v9884
      %v9906 = vmul.f32 %v9837, %v9884
      %v9907 = vmul.f32 %v9842, %v9884
      %v9908 = vmul.f32 %v9845, %v9884
      %v9909 = vmul.f32 %v9850, %v9884
      %v9910 = vmul.f32 %v9853, %v9884
      %v9911 = vmul.f32 %v9858, %v9884
      %v9912 = vmul.f32 %v9861, %v9884
      %v9913 = vmul.f32 %v9866, %v9884
      %v9914 = vmul.f32 %v9869, %v9884
      %v9915 = vmul.f32 %v9874, %v9884
      %v9916 = vmul.f32 %v9877, %v9884
      %v9917 = vld [vmem:[%s7 + $0x1] sm:$0x1]
      %v9918 = vlaneseq
      %v9919 = vshrl.u32 %v9918, 7
      %v9920 = vsub.s32 0, %v9919
      %v9921 = vrot.slane %v9917, %v9920
      %v9922 = vadd.f32 %v9885, %v9921
      %v9923 = vadd.f32 %v9886, %v9921
      %v9924 = vadd.f32 %v9887, %v9921
      %v9925 = vadd.f32 %v9888, %v9921
      %v9926 = vadd.f32 %v9889, %v9921
      %v9927 = vadd.f32 %v9890, %v9921
      %v9928 = vadd.f32 %v9891, %v9921
      %v9929 = vadd.f32 %v9892, %v9921
      %v9930 = vadd.f32 %v9893, %v9921
      %v9931 = vadd.f32 %v9894, %v9921
      %v9932 = vadd.f32 %v9895, %v9921
      %v9933 = vadd.f32 %v9896, %v9921
      %v9934 = vadd.f32 %v9897, %v9921
      %v9935 = vadd.f32 %v9898, %v9921
      %v9936 = vadd.f32 %v9899, %v9921
      %v9937 = vadd.f32 %v9900, %v9921
      %v9938 = vadd.f32 %v9901, %v9921
      %v9939 = vadd.f32 %v9902, %v9921
      %v9940 = vadd.f32 %v9903, %v9921
      %v9941 = vadd.f32 %v9904, %v9921
      %v9942 = vadd.f32 %v9905, %v9921
      %v9943 = vadd.f32 %v9906, %v9921
      %v9944 = vadd.f32 %v9907, %v9921
      %v9945 = vadd.f32 %v9908, %v9921
      %v9946 = vadd.f32 %v9909, %v9921
      %v9947 = vadd.f32 %v9910, %v9921
      %v9948 = vadd.f32 %v9911, %v9921
      %v9949 = vadd.f32 %v9912, %v9921
      %v9950 = vadd.f32 %v9913, %v9921
      %v9951 = vadd.f32 %v9914, %v9921
      %v9952 = vadd.f32 %v9915, %v9921
      %v9953 = vadd.f32 %v9916, %v9921
      %v9954 = vmax.f32 %v9922, 0.0
      %v9955 = vmax.f32 %v9923, 0.0
      %v9956 = vmax.f32 %v9924, 0.0
      %v9957 = vmax.f32 %v9925, 0.0
      %v9958 = vmax.f32 %v9926, 0.0
      %v9959 = vmax.f32 %v9927, 0.0
      %v9960 = vmax.f32 %v9928, 0.0
      %v9961 = vmax.f32 %v9929, 0.0
      %v9962 = vmax.f32 %v9930, 0.0
      %v9963 = vmax.f32 %v9931, 0.0
      %v9964 = vmax.f32 %v9932, 0.0
      %v9965 = vmax.f32 %v9933, 0.0
      %v9966 = vmax.f32 %v9934, 0.0
      %v9967 = vmax.f32 %v9935, 0.0
      %v9968 = vmax.f32 %v9936, 0.0
      %v9969 = vmax.f32 %v9937, 0.0
      %v9970 = vmax.f32 %v9938, 0.0
      %v9971 = vmax.f32 %v9939, 0.0
      %v9972 = vmax.f32 %v9940, 0.0
      %v9973 = vmax.f32 %v9941, 0.0
      %v9974 = vmax.f32 %v9942, 0.0
      %v9975 = vmax.f32 %v9943, 0.0
      %v9976 = vmax.f32 %v9944, 0.0
      %v9977 = vmax.f32 %v9945, 0.0
      %v9978 = vmax.f32 %v9946, 0.0
      %v9979 = vmax.f32 %v9947, 0.0
      %v9980 = vmax.f32 %v9948, 0.0
      %v9981 = vmax.f32 %v9949, 0.0
      %v9982 = vmax.f32 %v9950, 0.0
      %v9983 = vmax.f32 %v9951, 0.0
      %v9984 = vmax.f32 %v9952, 0.0
      %v9985 = vmax.f32 %v9953, 0.0
      %9986 = vxpose.xlu0.b32.start [1/16] %v9954, 128
      %9987 = vxpose.xlu0.b32.cont [2/16] %v9955, 128
      %9988 = vxpose.xlu0.b32.cont [3/16] %v9956, 128
      %9989 = vxpose.xlu0.b32.cont [4/16] %v9957, 128
      %9990 = vxpose.xlu0.b32.cont [5/16] %v9958, 128
      %9991 = vxpose.xlu0.b32.cont [6/16] %v9959, 128
      %9992 = vxpose.xlu0.b32.cont [7/16] %v9960, 128
      %9993 = vxpose.xlu0.b32.cont [8/16] %v9961, 128
      %9994 = vxpose.xlu0.b32.cont [9/16] %v9962, 128
      %9995 = vxpose.xlu0.b32.cont [10/16] %v9963, 128
      %9996 = vxpose.xlu0.b32.cont [11/16] %v9964, 128
      %9997 = vxpose.xlu0.b32.cont [12/16] %v9965, 128
      %9998 = vxpose.xlu0.b32.cont [13/16] %v9966, 128
      %9999 = vxpose.xlu0.b32.cont [14/16] %v9967, 128
      %10000 = vxpose.xlu0.b32.cont [15/16] %v9968, 128
      %10001 = vxpose.xlu0.b32.end [16/16] %v9969, 128
      %v10002 = vpop.trf.xlu0
      %v10003 = vpop.trf.xlu0
      %v10004 = vpop.trf.xlu0
      %v10005 = vpop.trf.xlu0
      %v10006 = vpop.trf.xlu0
      %v10007 = vpop.trf.xlu0
      %v10008 = vpop.trf.xlu0
      %v10009 = vpop.trf.xlu0
      %v10010 = vpop.trf.xlu0
      %v10011 = vpop.trf.xlu0
      %v10012 = vpop.trf.xlu0
      %v10013 = vpop.trf.xlu0
      %v10014 = vpop.trf.xlu0
      %v10015 = vpop.trf.xlu0
      %v10016 = vpop.trf.xlu0
      %v10017 = vpop.trf.xlu0
      %10018 = vxpose.xlu0.b32.start [1/16] %v9970, 128
      %10019 = vxpose.xlu0.b32.cont [2/16] %v9971, 128
      %10020 = vxpose.xlu0.b32.cont [3/16] %v9972, 128
      %10021 = vxpose.xlu0.b32.cont [4/16] %v9973, 128
      %10022 = vxpose.xlu0.b32.cont [5/16] %v9974, 128
      %10023 = vxpose.xlu0.b32.cont [6/16] %v9975, 128
      %10024 = vxpose.xlu0.b32.cont [7/16] %v9976, 128
      %10025 = vxpose.xlu0.b32.cont [8/16] %v9977, 128
      %10026 = vxpose.xlu0.b32.cont [9/16] %v9978, 128
      %10027 = vxpose.xlu0.b32.cont [10/16] %v9979, 128
      %10028 = vxpose.xlu0.b32.cont [11/16] %v9980, 128
      %10029 = vxpose.xlu0.b32.cont [12/16] %v9981, 128
      %10030 = vxpose.xlu0.b32.cont [13/16] %v9982, 128
      %10031 = vxpose.xlu0.b32.cont [14/16] %v9983, 128
      %10032 = vxpose.xlu0.b32.cont [15/16] %v9984, 128
      %10033 = vxpose.xlu0.b32.end [16/16] %v9985, 128
      %v10034 = vpop.trf.xlu0
      %v10035 = vpop.trf.xlu0
      %v10036 = vpop.trf.xlu0
      %v10037 = vpop.trf.xlu0
      %v10038 = vpop.trf.xlu0
      %v10039 = vpop.trf.xlu0
      %v10040 = vpop.trf.xlu0
      %v10041 = vpop.trf.xlu0
      %v10042 = vpop.trf.xlu0
      %v10043 = vpop.trf.xlu0
      %v10044 = vpop.trf.xlu0
      %v10045 = vpop.trf.xlu0
      %v10046 = vpop.trf.xlu0
      %v10047 = vpop.trf.xlu0
      %v10048 = vpop.trf.xlu0
      %v10049 = vpop.trf.xlu0
      %10050 = vst [vmem:[%s305] sm:$0xff] %v10002
      %10051 = vst [vmem:[%s305 + $0x8] sm:$0xff] %v10034
      %10052 = vst [vmem:[%s305 + $0x10] sm:$0xff] %v10003
      %10053 = vst [vmem:[%s305 + $0x18] sm:$0xff] %v10035
      %10054 = vst [vmem:[%s305 + $0x20] sm:$0xff] %v10004
      %10055 = vst [vmem:[%s305 + $0x28] sm:$0xff] %v10036
      %10056 = vst [vmem:[%s305 + $0x30] sm:$0xff] %v10005
      %10057 = vst [vmem:[%s305 + $0x38] sm:$0xff] %v10037
      %10058 = vst [vmem:[%s305 + $0x40] sm:$0xff] %v10006
      %10059 = vst [vmem:[%s305 + $0x48] sm:$0xff] %v10038
      %10060 = vst [vmem:[%s305 + $0x50] sm:$0xff] %v10007
      %10061 = vst [vmem:[%s305 + $0x58] sm:$0xff] %v10039
      %10062 = vst [vmem:[%s305 + $0x60] sm:$0xff] %v10008
      %10063 = vst [vmem:[%s305 + $0x68] sm:$0xff] %v10040
      %10064 = vst [vmem:[%s305 + $0x70] sm:$0xff] %v10009
      %10065 = vst [vmem:[%s305 + $0x78] sm:$0xff] %v10041
      %10066 = vst [vmem:[%s305 + $0x80] sm:$0xff] %v10010
      %10067 = vst [vmem:[%s305 + $0x88] sm:$0xff] %v10042
      %10068 = vst [vmem:[%s305 + $0x90] sm:$0xff] %v10011
      %10069 = vst [vmem:[%s305 + $0x98] sm:$0xff] %v10043
      %10070 = vst [vmem:[%s305 + $0xa0] sm:$0xff] %v10012
      %10071 = vst [vmem:[%s305 + $0xa8] sm:$0xff] %v10044
      %10072 = vst [vmem:[%s305 + $0xb0] sm:$0xff] %v10013
      %10073 = vst [vmem:[%s305 + $0xb8] sm:$0xff] %v10045
      %p10074 = scmp.lt.s32.totalorder %s19, 1
      %s10075 = scalar_select %p10074, %s19, 1
      %s10076 = smul.addr %s10075, 24
      %s10077 = smul.addr %s10076, 8
      %s10078 = scalar_lea.vmem %s8, %s10077
      // Predicated region
      $region53: #{trans_shufflenet_forward.1} parent=51 // pred_check
        %p10079 = pneg %p210
      $region54: #{trans_shufflenet_forward.1} parent=51 // pred_check_branch
        %10081 = sbr.rel (%p10079) target = $region56
      $region55: #{trans_shufflenet_forward.1} parent=51 // pred_region
        _
      $region56: #{trans_shufflenet_forward.1} parent=51 // pred_fallthru
        _
    $region52: #{trans_shufflenet_forward.1} parent=5 // pred_fallthru
      _
    %p10082 = scmp.le.s32.totalorder 2, %s14
    // Predicated region
    $region57: #{trans_shufflenet_forward.1} parent=5 // pred_check
      %p10083 = pneg %p10082
    $region58: #{trans_shufflenet_forward.1} parent=5 // pred_check_branch
      %10085 = sbr.rel (%p10083) target = $region60
    $region59: #{trans_shufflenet_forward.1} parent=5 // pred_region
      %s10086 = ssub.s32 %s14, 2
      // Predicated region
      $region61: #{trans_shufflenet_forward.1} parent=59 // pred_check
        %p10087 = pneg %p216
      $region62: #{trans_shufflenet_forward.1} parent=59 // pred_check_branch
        %10089 = sbr.rel (%p10087) target = $region64
      $region63: #{trans_shufflenet_forward.1} parent=59 // pred_region
        %p10090 = scmp.lt.s32.totalorder %s20, 1
        %s10091 = scalar_select %p10090, %s20, 1
        %s10092 = smul.addr %s10091, 24
        %s10093 = smul.addr %s10092, 8
        %s10094 = scalar_lea.vmem %s8, %s10093
      $region64: #{trans_shufflenet_forward.1} parent=59 // pred_fallthru
        _
    $region60: #{trans_shufflenet_forward.1} parent=5 // pred_fallthru
      _
  $region6: #{trans_shufflenet_forward.1} parent=0 // loop_footer
    %s18 = sadd.s32 1, %s14
  $region7: #{trans_shufflenet_forward.1} parent=0 // loop_footer_branch
    %13 = sbr.rel target = $region3
  $region8: #{trans_shufflenet_forward.1} parent=0 // loop_exit
    _

</llo_original>
